<compile_context>
chip_gen: v5e
topology: v5e:2x2
jax: 0.10.0
libtpu: 0.0.40
codegen_flags: <defaults>
</compile_context>

<pallas_src>
import functools

import jax
import jax.numpy as jnp
from jax import lax
from jax.experimental import pallas as pl
from jax.experimental.pallas import tpu as pltpu

KSIZE = 4  # Conv2d kernel size fixed by the module.


def _conv_out(n, stride):
    return (n - KSIZE) // stride + 1


def _banded_weight(w_hwio, win, stride):
    """HWIO conv weight (K, K, Cin, Cout) -> per-row-tap banded matmul weights.

    Returns (K, win*Cin, wout*Cout) with
      band[kh, w*Cin + c, wo*Cout + d] = w_hwio[kh, w - stride*wo, c, d]
    (zero outside the band).  Folds the whole kw/stride/c_in contraction of
    one conv row-tap into a single lane-direction matmul, so the kernel never
    gathers strided lanes.
    """
    k, _, cin, cout = w_hwio.shape
    wout = _conv_out(win, stride)
    blocks = []
    for wo in range(wout):
        blk = jnp.zeros((k, win, cin, cout), w_hwio.dtype)
        blk = blk.at[:, stride * wo:stride * wo + k, :, :].set(w_hwio)
        blocks.append(blk)
    band = jnp.stack(blocks, axis=3)                 # (K, win, Cin, wout, Cout)
    return band.reshape(k, win * cin, wout * cout)


def _make_encoder_kernel(BT, H, W, C, D1, D2, D3, stride):
    """Builds the fused 3-layer conv kernel for one batch tile of BT images."""
    OH1, OW1 = _conv_out(H, stride), _conv_out(W, stride)
    OH2, OW2 = _conv_out(OH1, stride), _conv_out(OW1, stride)
    OH3, OW3 = _conv_out(OH2, stride), _conv_out(OW2, stride)
    L1, L2, L3 = OW1 * D1, OW2 * D2, OW3 * D3

    # Stride-1 ("a-trous") row counts over the flattened (BT*H, W*C) row axis.
    # True layer-l output row ho of image b lives at stride-1 row
    # H*b + (stride**l)*ho; rows that straddle image boundaries are computed
    # but never referenced by the rows we keep.
    RX = BT * H
    R1 = RX - (KSIZE - 1)                       # layer-1 stride-1 rows
    R2 = R1 - (KSIZE - 1) * stride              # layer-2 stride-1 rows
    R3 = R2 - (KSIZE - 1) * stride * stride     # layer-3 stride-1 rows
    sel_step = stride ** 3                      # true l3 row ho -> stride-1 row

    assert min(R1, R2, R3) > 0, "batch tile too small for this geometry"
    # Rows we decimate out at the very end must exist (row-geometry invariant).
    assert H * (BT - 1) + sel_step * (OH3 - 1) < R3, "row geometry invariant"

    def band_layer(src_ref, w_ref, b_ref, r_out, dil):
        # One conv layer = 4 shifted contiguous row slices x banded matmuls:
        #   out[r, :] = ReLU( sum_kh src[r + dil*kh, :] @ W_band[kh] + bias )
        acc = jnp.dot(src_ref[0:r_out, :], w_ref[0],
                      preferred_element_type=jnp.float32,
                      precision=lax.Precision.HIGHEST)
        for kh in range(1, KSIZE):
            acc = acc + jnp.dot(src_ref[kh * dil:kh * dil + r_out, :],
                                w_ref[kh],
                                preferred_element_type=jnp.float32,
                                precision=lax.Precision.HIGHEST)
        return jnp.maximum(acc + b_ref[...], 0.0)

    def kernel(x_ref, w1_ref, b1_ref, w2_ref, b2_ref, w3_ref, b3_ref,
               o_ref, h1_ref, h2_ref, h3_ref):
        # x_ref : (BT*H, W*C)   lane-dense image rows (lane = w*C + c)
        # wK_ref: (4, Lin, Lout) banded per-row-tap weights; bK_ref: (1, Lout)
        # hK_ref: VMEM scratch holding layer-K stride-1 (dilated) rows.
        h1_ref[...] = band_layer(x_ref, w1_ref, b1_ref, R1, 1)
        h2_ref[...] = band_layer(h1_ref, w2_ref, b2_ref, R2, stride)
        h3_ref[...] = band_layer(h2_ref, w3_ref, b3_ref, R3, stride * stride)

        # Decimate + pack: true output row ho of image b is stride-1 row
        # H*b + sel_step*ho.  Grab all BT of them at once per ho with a 0/1
        # selection matmul (bulk, no per-image slicing/relayout), then
        # lane-concat the OH3 groups into one 128-wide embedding per image.
        b_idx = lax.broadcasted_iota(jnp.int32, (BT, R3), 0)
        g_idx = lax.broadcasted_iota(jnp.int32, (BT, R3), 1)
        pieces = []
        for ho in range(OH3):
            sel = (g_idx == b_idx * H + sel_step * ho).astype(jnp.float32)
            pieces.append(jnp.dot(sel, h3_ref[...],
                                  preferred_element_type=jnp.float32,
                                  precision=lax.Precision.HIGHEST))
        o_ref[...] = jnp.concatenate(pieces, axis=1)    # (BT, OH3*OW3*D3)

    geom = dict(OH1=OH1, OW1=OW1, OH2=OH2, OW2=OW2, OH3=OH3, OW3=OW3,
                L1=L1, L2=L2, L3=L3, R1=R1, R2=R2, R3=R3)
    return kernel, geom


@functools.partial(jax.jit, static_argnames=("stride", "block_b"))
def tiny_observation_encoder_forward(obs_nchw, params, *, stride, block_b=8):
    """obs_nchw: (B, C, 32, 32) float32. Returns (B, 4*depth, 2, 2)."""
    B, C, H, W = obs_nchw.shape
    assert (H, W) == (32, 32), "module asserts 32x32 observations"
    (w1, b1), (w2, b2), (w3, b3) = params
    D1, D2, D3 = w1.shape[-1], w2.shape[-1], w3.shape[-1]

    # Batch tile: BT images per grid step; their rows are folded into the M
    # dimension of every matmul.  Pad B up to a multiple of BT.
    BT = B if B < block_b else block_b
    Bp = pl.cdiv(B, BT) * BT
    assert BT == Bp or BT % 8 == 0          # keeps the (BT, 128) output block legal
    if Bp != B:
        obs_nchw = jnp.pad(obs_nchw, ((0, Bp - B), (0, 0), (0, 0), (0, 0)))

    kernel, g = _make_encoder_kernel(BT, H, W, C, D1, D2, D3, stride)
    OH3, OW3 = g["OH3"], g["OW3"]
    L1, L2, L3 = g["L1"], g["L2"], g["L3"]
    R1, R2, R3 = g["R1"], g["R2"], g["R3"]

    # Wrapper-side layout plumbing only:
    #  * NCHW -> lane-dense rows: one image row = one (W*C)=128-lane vector.
    x = jnp.transpose(obs_nchw, (0, 2, 3, 1)).reshape(Bp * H, W * C)
    #  * HWIO conv weights -> banded per-row-tap matmul weights; biases tiled
    #    across the lane-dense (wo, c_out) output layout.
    w1b = _banded_weight(w1, W, stride)          # (4, W*C, L1)
    w2b = _banded_weight(w2, g["OW1"], stride)   # (4, L1,  L2)
    w3b = _banded_weight(w3, g["OW2"], stride)   # (4, L2,  L3)
    b1r = jnp.tile(b1, g["OW1"]).reshape(1, L1)
    b2r = jnp.tile(b2, g["OW2"]).reshape(1, L2)
    b3r = jnp.tile(b3, g["OW3"]).reshape(1, L3)

    out_feat = OH3 * OW3 * D3                    # = 128 for depth=8
    out = pl.pallas_call(
        kernel,
        out_shape=jax.ShapeDtypeStruct((Bp, out_feat), jnp.float32),
        grid=(Bp // BT,),
        in_specs=[
            pl.BlockSpec((BT * H, W * C), lambda i: (i, 0)),
            # Grid-invariant weights/biases (constant index maps).
            # TODO(synk): pipeline_mode=pl.Buffered(1) on these six specs to
            # drop their second pipeline buffer (~0.5 MB VMEM) once verified.
            pl.BlockSpec(w1b.shape, lambda i: (0, 0, 0)),
            pl.BlockSpec(b1r.shape, lambda i: (0, 0)),
            pl.BlockSpec(w2b.shape, lambda i: (0, 0, 0)),
            pl.BlockSpec(b2r.shape, lambda i: (0, 0)),
            pl.BlockSpec(w3b.shape, lambda i: (0, 0, 0)),
            pl.BlockSpec(b3r.shape, lambda i: (0, 0)),
        ],
        out_specs=pl.BlockSpec((BT, out_feat), lambda i: (i, 0)),
        scratch_shapes=[
            pltpu.VMEM((R1, L1), jnp.float32),   # layer-1 stride-1 rows
            pltpu.VMEM((R2, L2), jnp.float32),   # layer-2 stride-1 rows
            pltpu.VMEM((R3, L3), jnp.float32),   # layer-3 stride-1 rows
        ],
        compiler_params=pltpu.CompilerParams(
            dimension_semantics=("parallel",)),
    )(x, w1b, b1r, w2b, b2r, w3b, b3r)

    # (Bp, OH3*OW3*D3) -> (B, OH3, OW3, D3) -> NCHW, matching PyTorch.
    out = out[:B].reshape(B, OH3, OW3, D3)
    return jnp.transpose(out, (0, 3, 1, 2))


def init_params(key, in_channels, depth):
    """Deterministic synthetic params, HWIO layout, kernel 4x4."""
    chans = [in_channels, depth, 2 * depth, 4 * depth]
    params = []
    for i in range(3):
        key, kw, kb = jax.random.split(key, 3)
        w = 0.05 * jax.random.normal(kw, (KSIZE, KSIZE, chans[i], chans[i + 1]),
                                     jnp.float32)
        b = 0.05 * jax.random.normal(kb, (chans[i + 1],), jnp.float32)
        params.append((w, b))
    return params


def _reference_forward(obs_nchw, params, stride):
    """Pure-JAX reference (conv + bias + ReLU), for correctness check."""
    x = jnp.transpose(obs_nchw, (0, 2, 3, 1))
    for w_hwio, b in params:
        x = lax.conv_general_dilated(
            x, w_hwio, window_strides=(stride, stride), padding="VALID",
            dimension_numbers=("NHWC", "HWIO", "NHWC"),
            precision=lax.Precision.HIGHEST)
        x = jnp.maximum(x + b, 0.0)
    return jnp.transpose(x, (0, 3, 1, 2))


if __name__ == "__main__":
    # Module config: shape=(4, 32, 32) (spatial fixed at 32 by the module
    # assertion), depth=8, stride=2, activation=ReLU.
    batch, in_channels, depth, stride = 2, 4, 8, 2

    key = jax.random.PRNGKey(0)
    key, k_obs = jax.random.split(key)
    obs = jax.random.normal(k_obs, (batch, in_channels, 32, 32), jnp.float32)
    params = init_params(key, in_channels, depth)

    embed = tiny_observation_encoder_forward(obs, params, stride=stride)
    embed = jax.block_until_ready(embed)

    expected_shape = (batch, 4 * depth, 2, 2)
    assert embed.shape == expected_shape, (embed.shape, expected_shape)

    ref = jax.block_until_ready(_reference_forward(obs, params, stride))
    assert jnp.allclose(embed, ref, atol=1e-3, rtol=1e-3), (
        "mismatch vs reference; max abs err = %f"
        % float(jnp.max(jnp.abs(embed - ref))))

    print("KERNEL_OK")
</pallas_src>

<mosaic_0001>
module attributes {stable_mosaic.version = 11 : i64} {
  func.func @kernel(%arg0: i32, %arg1: memref<64x128xf32, #tpu.memory_space<vmem>>, %arg2: memref<4x128x120xf32, #tpu.memory_space<vmem>>, %arg3: memref<1x120xf32, #tpu.memory_space<vmem>>, %arg4: memref<4x120x96xf32, #tpu.memory_space<vmem>>, %arg5: memref<1x96xf32, #tpu.memory_space<vmem>>, %arg6: memref<4x96x64xf32, #tpu.memory_space<vmem>>, %arg7: memref<1x64xf32, #tpu.memory_space<vmem>>, %arg8: memref<2x128xf32, #tpu.memory_space<vmem>>, %arg9: memref<61x120xf32, #tpu.memory_space<vmem>>, %arg10: memref<55x96xf32, #tpu.memory_space<vmem>>, %arg11: memref<43x64xf32, #tpu.memory_space<vmem>>) attributes {dimension_semantics = [#tpu.dimension_semantics<parallel>], iteration_bounds = array<i64: 1>, scalar_prefetch = 0 : i64, scratch_operands = 3 : i64, tpu.core_type = #tpu.core_type<tc>, window_params = [{transform_indices = @transform_0, window_bounds = array<i64: 64, 128>}, {pipeline_mode = #tpu.pipeline_mode<synchronous>, transform_indices = @transform_1, window_bounds = array<i64: 4, 128, 120>}, {pipeline_mode = #tpu.pipeline_mode<synchronous>, transform_indices = @transform_2, window_bounds = array<i64: 1, 120>}, {pipeline_mode = #tpu.pipeline_mode<synchronous>, transform_indices = @transform_3, window_bounds = array<i64: 4, 120, 96>}, {pipeline_mode = #tpu.pipeline_mode<synchronous>, transform_indices = @transform_4, window_bounds = array<i64: 1, 96>}, {pipeline_mode = #tpu.pipeline_mode<synchronous>, transform_indices = @transform_5, window_bounds = array<i64: 4, 96, 64>}, {pipeline_mode = #tpu.pipeline_mode<synchronous>, transform_indices = @transform_6, window_bounds = array<i64: 1, 64>}, {transform_indices = @transform_7, window_bounds = array<i64: 2, 128>}]} {
    %c0 = arith.constant 0 : index
    %c0_0 = arith.constant 0 : index
    %0 = vector.load %arg1[%c0, %c0_0] : memref<64x128xf32, #tpu.memory_space<vmem>>, vector<61x128xf32>
    %c0_1 = arith.constant 0 : index
    %c0_2 = arith.constant 0 : index
    %c0_3 = arith.constant 0 : index
    %1 = vector.load %arg2[%c0_1, %c0_2, %c0_3] : memref<4x128x120xf32, #tpu.memory_space<vmem>>, vector<1x128x120xf32>
    %2 = vector.shape_cast %1 : vector<1x128x120xf32> to vector<128x120xf32>
    %cst = arith.constant dense<0.000000e+00> : vector<61x120xf32>
    %3 = tpu.matmul %0, %2, %cst {dimension_numbers = #tpu.dot_dimension_numbers<[1], [0], [0], [1], [0, 0, 1, 1], [], []>, precision = #tpu.contract_precision<fp32>} : vector<61x128xf32>, vector<128x120xf32>, vector<61x120xf32> -> vector<61x120xf32>
    %c1 = arith.constant 1 : index
    %c0_4 = arith.constant 0 : index
    %4 = vector.load %arg1[%c1, %c0_4] : memref<64x128xf32, #tpu.memory_space<vmem>>, vector<61x128xf32>
    %c1_5 = arith.constant 1 : index
    %c0_6 = arith.constant 0 : index
    %c0_7 = arith.constant 0 : index
    %5 = vector.load %arg2[%c1_5, %c0_6, %c0_7] : memref<4x128x120xf32, #tpu.memory_space<vmem>>, vector<1x128x120xf32>
    %6 = vector.shape_cast %5 : vector<1x128x120xf32> to vector<128x120xf32>
    %cst_8 = arith.constant dense<0.000000e+00> : vector<61x120xf32>
    %7 = tpu.matmul %4, %6, %cst_8 {dimension_numbers = #tpu.dot_dimension_numbers<[1], [0], [0], [1], [0, 0, 1, 1], [], []>, precision = #tpu.contract_precision<fp32>} : vector<61x128xf32>, vector<128x120xf32>, vector<61x120xf32> -> vector<61x120xf32>
    %8 = arith.addf %3, %7 : vector<61x120xf32>
    %c2 = arith.constant 2 : index
    %c0_9 = arith.constant 0 : index
    %9 = vector.load %arg1[%c2, %c0_9] : memref<64x128xf32, #tpu.memory_space<vmem>>, vector<61x128xf32>
    %c2_10 = arith.constant 2 : index
    %c0_11 = arith.constant 0 : index
    %c0_12 = arith.constant 0 : index
    %10 = vector.load %arg2[%c2_10, %c0_11, %c0_12] : memref<4x128x120xf32, #tpu.memory_space<vmem>>, vector<1x128x120xf32>
    %11 = vector.shape_cast %10 : vector<1x128x120xf32> to vector<128x120xf32>
    %cst_13 = arith.constant dense<0.000000e+00> : vector<61x120xf32>
    %12 = tpu.matmul %9, %11, %cst_13 {dimension_numbers = #tpu.dot_dimension_numbers<[1], [0], [0], [1], [0, 0, 1, 1], [], []>, precision = #tpu.contract_precision<fp32>} : vector<61x128xf32>, vector<128x120xf32>, vector<61x120xf32> -> vector<61x120xf32>
    %13 = arith.addf %8, %12 : vector<61x120xf32>
    %c3 = arith.constant 3 : index
    %c0_14 = arith.constant 0 : index
    %14 = vector.load %arg1[%c3, %c0_14] : memref<64x128xf32, #tpu.memory_space<vmem>>, vector<61x128xf32>
    %c3_15 = arith.constant 3 : index
    %c0_16 = arith.constant 0 : index
    %c0_17 = arith.constant 0 : index
    %15 = vector.load %arg2[%c3_15, %c0_16, %c0_17] : memref<4x128x120xf32, #tpu.memory_space<vmem>>, vector<1x128x120xf32>
    %16 = vector.shape_cast %15 : vector<1x128x120xf32> to vector<128x120xf32>
    %cst_18 = arith.constant dense<0.000000e+00> : vector<61x120xf32>
    %17 = tpu.matmul %14, %16, %cst_18 {dimension_numbers = #tpu.dot_dimension_numbers<[1], [0], [0], [1], [0, 0, 1, 1], [], []>, precision = #tpu.contract_precision<fp32>} : vector<61x128xf32>, vector<128x120xf32>, vector<61x120xf32> -> vector<61x120xf32>
    %18 = arith.addf %13, %17 : vector<61x120xf32>
    %c0_19 = arith.constant 0 : index
    %c0_20 = arith.constant 0 : index
    %19 = vector.load %arg3[%c0_19, %c0_20] : memref<1x120xf32, #tpu.memory_space<vmem>>, vector<1x120xf32>
    %20 = vector.broadcast %19 : vector<1x120xf32> to vector<61x120xf32>
    %21 = arith.addf %18, %20 : vector<61x120xf32>
    %cst_21 = arith.constant 0.000000e+00 : f32
    %22 = vector.broadcast %cst_21 : f32 to vector<61x120xf32>
    %23 = arith.maximumf %21, %22 : vector<61x120xf32>
    %c0_22 = arith.constant 0 : index
    %c0_23 = arith.constant 0 : index
    %24 = vector.load %arg9[%c0_22, %c0_23] : memref<61x120xf32, #tpu.memory_space<vmem>>, vector<61x120xf32>
    tpu.vector_store %arg9[%c0_22, %c0_23], %23 {strides = array<i32>} : memref<61x120xf32, #tpu.memory_space<vmem>>, vector<61x120xf32>,
    %c0_24 = arith.constant 0 : index
    %c0_25 = arith.constant 0 : index
    %25 = vector.load %arg9[%c0_24, %c0_25] : memref<61x120xf32, #tpu.memory_space<vmem>>, vector<55x120xf32>
    %c0_26 = arith.constant 0 : index
    %c0_27 = arith.constant 0 : index
    %c0_28 = arith.constant 0 : index
    %26 = vector.load %arg4[%c0_26, %c0_27, %c0_28] : memref<4x120x96xf32, #tpu.memory_space<vmem>>, vector<1x120x96xf32>
    %27 = vector.shape_cast %26 : vector<1x120x96xf32> to vector<120x96xf32>
    %cst_29 = arith.constant dense<0.000000e+00> : vector<55x96xf32>
    %28 = tpu.matmul %25, %27, %cst_29 {dimension_numbers = #tpu.dot_dimension_numbers<[1], [0], [0], [1], [0, 0, 1, 1], [], []>, precision = #tpu.contract_precision<fp32>} : vector<55x120xf32>, vector<120x96xf32>, vector<55x96xf32> -> vector<55x96xf32>
    %c2_30 = arith.constant 2 : index
    %c0_31 = arith.constant 0 : index
    %29 = vector.load %arg9[%c2_30, %c0_31] : memref<61x120xf32, #tpu.memory_space<vmem>>, vector<55x120xf32>
    %c1_32 = arith.constant 1 : index
    %c0_33 = arith.constant 0 : index
    %c0_34 = arith.constant 0 : index
    %30 = vector.load %arg4[%c1_32, %c0_33, %c0_34] : memref<4x120x96xf32, #tpu.memory_space<vmem>>, vector<1x120x96xf32>
    %31 = vector.shape_cast %30 : vector<1x120x96xf32> to vector<120x96xf32>
    %cst_35 = arith.constant dense<0.000000e+00> : vector<55x96xf32>
    %32 = tpu.matmul %29, %31, %cst_35 {dimension_numbers = #tpu.dot_dimension_numbers<[1], [0], [0], [1], [0, 0, 1, 1], [], []>, precision = #tpu.contract_precision<fp32>} : vector<55x120xf32>, vector<120x96xf32>, vector<55x96xf32> -> vector<55x96xf32>
    %33 = arith.addf %28, %32 : vector<55x96xf32>
    %c4 = arith.constant 4 : index
    %c0_36 = arith.constant 0 : index
    %34 = vector.load %arg9[%c4, %c0_36] : memref<61x120xf32, #tpu.memory_space<vmem>>, vector<55x120xf32>
    %c2_37 = arith.constant 2 : index
    %c0_38 = arith.constant 0 : index
    %c0_39 = arith.constant 0 : index
    %35 = vector.load %arg4[%c2_37, %c0_38, %c0_39] : memref<4x120x96xf32, #tpu.memory_space<vmem>>, vector<1x120x96xf32>
    %36 = vector.shape_cast %35 : vector<1x120x96xf32> to vector<120x96xf32>
    %cst_40 = arith.constant dense<0.000000e+00> : vector<55x96xf32>
    %37 = tpu.matmul %34, %36, %cst_40 {dimension_numbers = #tpu.dot_dimension_numbers<[1], [0], [0], [1], [0, 0, 1, 1], [], []>, precision = #tpu.contract_precision<fp32>} : vector<55x120xf32>, vector<120x96xf32>, vector<55x96xf32> -> vector<55x96xf32>
    %38 = arith.addf %33, %37 : vector<55x96xf32>
    %c6 = arith.constant 6 : index
    %c0_41 = arith.constant 0 : index
    %39 = vector.load %arg9[%c6, %c0_41] : memref<61x120xf32, #tpu.memory_space<vmem>>, vector<55x120xf32>
    %c3_42 = arith.constant 3 : index
    %c0_43 = arith.constant 0 : index
    %c0_44 = arith.constant 0 : index
    %40 = vector.load %arg4[%c3_42, %c0_43, %c0_44] : memref<4x120x96xf32, #tpu.memory_space<vmem>>, vector<1x120x96xf32>
    %41 = vector.shape_cast %40 : vector<1x120x96xf32> to vector<120x96xf32>
    %cst_45 = arith.constant dense<0.000000e+00> : vector<55x96xf32>
    %42 = tpu.matmul %39, %41, %cst_45 {dimension_numbers = #tpu.dot_dimension_numbers<[1], [0], [0], [1], [0, 0, 1, 1], [], []>, precision = #tpu.contract_precision<fp32>} : vector<55x120xf32>, vector<120x96xf32>, vector<55x96xf32> -> vector<55x96xf32>
    %43 = arith.addf %38, %42 : vector<55x96xf32>
    %c0_46 = arith.constant 0 : index
    %c0_47 = arith.constant 0 : index
    %44 = vector.load %arg5[%c0_46, %c0_47] : memref<1x96xf32, #tpu.memory_space<vmem>>, vector<1x96xf32>
    %45 = vector.broadcast %44 : vector<1x96xf32> to vector<55x96xf32>
    %46 = arith.addf %43, %45 : vector<55x96xf32>
    %cst_48 = arith.constant 0.000000e+00 : f32
    %47 = vector.broadcast %cst_48 : f32 to vector<55x96xf32>
    %48 = arith.maximumf %46, %47 : vector<55x96xf32>
    %c0_49 = arith.constant 0 : index
    %c0_50 = arith.constant 0 : index
    %49 = vector.load %arg10[%c0_49, %c0_50] : memref<55x96xf32, #tpu.memory_space<vmem>>, vector<55x96xf32>
    tpu.vector_store %arg10[%c0_49, %c0_50], %48 {strides = array<i32>} : memref<55x96xf32, #tpu.memory_space<vmem>>, vector<55x96xf32>,
    %c0_51 = arith.constant 0 : index
    %c0_52 = arith.constant 0 : index
    %50 = vector.load %arg10[%c0_51, %c0_52] : memref<55x96xf32, #tpu.memory_space<vmem>>, vector<43x96xf32>
    %c0_53 = arith.constant 0 : index
    %c0_54 = arith.constant 0 : index
    %c0_55 = arith.constant 0 : index
    %51 = vector.load %arg6[%c0_53, %c0_54, %c0_55] : memref<4x96x64xf32, #tpu.memory_space<vmem>>, vector<1x96x64xf32>
    %52 = vector.shape_cast %51 : vector<1x96x64xf32> to vector<96x64xf32>
    %cst_56 = arith.constant dense<0.000000e+00> : vector<43x64xf32>
    %53 = tpu.matmul %50, %52, %cst_56 {dimension_numbers = #tpu.dot_dimension_numbers<[1], [0], [0], [1], [0, 0, 1, 1], [], []>, precision = #tpu.contract_precision<fp32>} : vector<43x96xf32>, vector<96x64xf32>, vector<43x64xf32> -> vector<43x64xf32>
    %c4_57 = arith.constant 4 : index
    %c0_58 = arith.constant 0 : index
    %54 = vector.load %arg10[%c4_57, %c0_58] : memref<55x96xf32, #tpu.memory_space<vmem>>, vector<43x96xf32>
    %c1_59 = arith.constant 1 : index
    %c0_60 = arith.constant 0 : index
    %c0_61 = arith.constant 0 : index
    %55 = vector.load %arg6[%c1_59, %c0_60, %c0_61] : memref<4x96x64xf32, #tpu.memory_space<vmem>>, vector<1x96x64xf32>
    %56 = vector.shape_cast %55 : vector<1x96x64xf32> to vector<96x64xf32>
    %cst_62 = arith.constant dense<0.000000e+00> : vector<43x64xf32>
    %57 = tpu.matmul %54, %56, %cst_62 {dimension_numbers = #tpu.dot_dimension_numbers<[1], [0], [0], [1], [0, 0, 1, 1], [], []>, precision = #tpu.contract_precision<fp32>} : vector<43x96xf32>, vector<96x64xf32>, vector<43x64xf32> -> vector<43x64xf32>
    %58 = arith.addf %53, %57 : vector<43x64xf32>
    %c8 = arith.constant 8 : index
    %c0_63 = arith.constant 0 : index
    %59 = vector.load %arg10[%c8, %c0_63] : memref<55x96xf32, #tpu.memory_space<vmem>>, vector<43x96xf32>
    %c2_64 = arith.constant 2 : index
    %c0_65 = arith.constant 0 : index
    %c0_66 = arith.constant 0 : index
    %60 = vector.load %arg6[%c2_64, %c0_65, %c0_66] : memref<4x96x64xf32, #tpu.memory_space<vmem>>, vector<1x96x64xf32>
    %61 = vector.shape_cast %60 : vector<1x96x64xf32> to vector<96x64xf32>
    %cst_67 = arith.constant dense<0.000000e+00> : vector<43x64xf32>
    %62 = tpu.matmul %59, %61, %cst_67 {dimension_numbers = #tpu.dot_dimension_numbers<[1], [0], [0], [1], [0, 0, 1, 1], [], []>, precision = #tpu.contract_precision<fp32>} : vector<43x96xf32>, vector<96x64xf32>, vector<43x64xf32> -> vector<43x64xf32>
    %63 = arith.addf %58, %62 : vector<43x64xf32>
    %c12 = arith.constant 12 : index
    %c0_68 = arith.constant 0 : index
    %64 = vector.load %arg10[%c12, %c0_68] : memref<55x96xf32, #tpu.memory_space<vmem>>, vector<43x96xf32>
    %c3_69 = arith.constant 3 : index
    %c0_70 = arith.constant 0 : index
    %c0_71 = arith.constant 0 : index
    %65 = vector.load %arg6[%c3_69, %c0_70, %c0_71] : memref<4x96x64xf32, #tpu.memory_space<vmem>>, vector<1x96x64xf32>
    %66 = vector.shape_cast %65 : vector<1x96x64xf32> to vector<96x64xf32>
    %cst_72 = arith.constant dense<0.000000e+00> : vector<43x64xf32>
    %67 = tpu.matmul %64, %66, %cst_72 {dimension_numbers = #tpu.dot_dimension_numbers<[1], [0], [0], [1], [0, 0, 1, 1], [], []>, precision = #tpu.contract_precision<fp32>} : vector<43x96xf32>, vector<96x64xf32>, vector<43x64xf32> -> vector<43x64xf32>
    %68 = arith.addf %63, %67 : vector<43x64xf32>
    %c0_73 = arith.constant 0 : index
    %c0_74 = arith.constant 0 : index
    %69 = vector.load %arg7[%c0_73, %c0_74] : memref<1x64xf32, #tpu.memory_space<vmem>>, vector<1x64xf32>
    %70 = vector.broadcast %69 : vector<1x64xf32> to vector<43x64xf32>
    %71 = arith.addf %68, %70 : vector<43x64xf32>
    %cst_75 = arith.constant 0.000000e+00 : f32
    %72 = vector.broadcast %cst_75 : f32 to vector<43x64xf32>
    %73 = arith.maximumf %71, %72 : vector<43x64xf32>
    %c0_76 = arith.constant 0 : index
    %c0_77 = arith.constant 0 : index
    %74 = vector.load %arg11[%c0_76, %c0_77] : memref<43x64xf32, #tpu.memory_space<vmem>>, vector<43x64xf32>
    tpu.vector_store %arg11[%c0_76, %c0_77], %73 {strides = array<i32>} : memref<43x64xf32, #tpu.memory_space<vmem>>, vector<43x64xf32>,
    %75 = tpu.iota {dimensions = array<i32: 0>} : vector<2x43xi32>
    %76 = tpu.iota {dimensions = array<i32: 1>} : vector<2x43xi32>
    %c32_i32 = arith.constant 32 : i32
    %77 = vector.broadcast %c32_i32 : i32 to vector<2x43xi32>
    %78 = arith.muli %75, %77 : vector<2x43xi32>
    %c0_i32 = arith.constant 0 : i32
    %79 = vector.broadcast %c0_i32 : i32 to vector<2x43xi32>
    %80 = arith.addi %78, %79 : vector<2x43xi32>
    %81 = arith.cmpi eq, %76, %80 : vector<2x43xi32>
    %82 = arith.extui %81 : vector<2x43xi1> to vector<2x43xi32>
    %83 = arith.sitofp %82 : vector<2x43xi32> to vector<2x43xf32>
    %c0_78 = arith.constant 0 : index
    %c0_79 = arith.constant 0 : index
    %84 = vector.load %arg11[%c0_78, %c0_79] : memref<43x64xf32, #tpu.memory_space<vmem>>, vector<43x64xf32>
    %cst_80 = arith.constant dense<0.000000e+00> : vector<2x64xf32>
    %85 = tpu.matmul %83, %84, %cst_80 {dimension_numbers = #tpu.dot_dimension_numbers<[1], [0], [0], [1], [0, 0, 1, 1], [], []>, precision = #tpu.contract_precision<fp32>} : vector<2x43xf32>, vector<43x64xf32>, vector<2x64xf32> -> vector<2x64xf32>
    %c32_i32_81 = arith.constant 32 : i32
    %86 = vector.broadcast %c32_i32_81 : i32 to vector<2x43xi32>
    %87 = arith.muli %75, %86 : vector<2x43xi32>
    %c8_i32 = arith.constant 8 : i32
    %88 = vector.broadcast %c8_i32 : i32 to vector<2x43xi32>
    %89 = arith.addi %87, %88 : vector<2x43xi32>
    %90 = arith.cmpi eq, %76, %89 : vector<2x43xi32>
    %91 = arith.extui %90 : vector<2x43xi1> to vector<2x43xi32>
    %92 = arith.sitofp %91 : vector<2x43xi32> to vector<2x43xf32>
    %c0_82 = arith.constant 0 : index
    %c0_83 = arith.constant 0 : index
    %93 = vector.load %arg11[%c0_82, %c0_83] : memref<43x64xf32, #tpu.memory_space<vmem>>, vector<43x64xf32>
    %cst_84 = arith.constant dense<0.000000e+00> : vector<2x64xf32>
    %94 = tpu.matmul %92, %93, %cst_84 {dimension_numbers = #tpu.dot_dimension_numbers<[1], [0], [0], [1], [0, 0, 1, 1], [], []>, precision = #tpu.contract_precision<fp32>} : vector<2x43xf32>, vector<43x64xf32>, vector<2x64xf32> -> vector<2x64xf32>
    %95 = tpu.concatenate %85, %94 in 1 : vector<2x64xf32>, vector<2x64xf32> -> vector<2x128xf32>
    %c0_85 = arith.constant 0 : index
    %c0_86 = arith.constant 0 : index
    %96 = vector.load %arg8[%c0_85, %c0_86] : memref<2x128xf32, #tpu.memory_space<vmem>>, vector<2x128xf32>
    tpu.vector_store %arg8[%c0_85, %c0_86], %95 {strides = array<i32>} : memref<2x128xf32, #tpu.memory_space<vmem>>, vector<2x128xf32>,
    return
  }
  func.func @transform_0(%arg0: i32) -> (i32, i32) {
    %c0_i32 = arith.constant 0 : i32
    %c0_i32_0 = arith.constant 0 : i32
    return %arg0, %c0_i32 : i32, i32
  }
  func.func @transform_1(%arg0: i32) -> (i32, i32, i32) {
    %c0_i32 = arith.constant 0 : i32
    %c0_i32_0 = arith.constant 0 : i32
    %c0_i32_1 = arith.constant 0 : i32
    %c0_i32_2 = arith.constant 0 : i32
    return %c0_i32, %c0_i32_0, %c0_i32_1 : i32, i32, i32
  }
  func.func @transform_2(%arg0: i32) -> (i32, i32) {
    %c0_i32 = arith.constant 0 : i32
    %c0_i32_0 = arith.constant 0 : i32
    %c0_i32_1 = arith.constant 0 : i32
    return %c0_i32, %c0_i32_0 : i32, i32
  }
  func.func @transform_3(%arg0: i32) -> (i32, i32, i32) {
    %c0_i32 = arith.constant 0 : i32
    %c0_i32_0 = arith.constant 0 : i32
    %c0_i32_1 = arith.constant 0 : i32
    %c0_i32_2 = arith.constant 0 : i32
    return %c0_i32, %c0_i32_0, %c0_i32_1 : i32, i32, i32
  }
  func.func @transform_4(%arg0: i32) -> (i32, i32) {
    %c0_i32 = arith.constant 0 : i32
    %c0_i32_0 = arith.constant 0 : i32
    %c0_i32_1 = arith.constant 0 : i32
    return %c0_i32, %c0_i32_0 : i32, i32
  }
  func.func @transform_5(%arg0: i32) -> (i32, i32, i32) {
    %c0_i32 = arith.constant 0 : i32
    %c0_i32_0 = arith.constant 0 : i32
    %c0_i32_1 = arith.constant 0 : i32
    %c0_i32_2 = arith.constant 0 : i32
    return %c0_i32, %c0_i32_0, %c0_i32_1 : i32, i32, i32
  }
  func.func @transform_6(%arg0: i32) -> (i32, i32) {
    %c0_i32 = arith.constant 0 : i32
    %c0_i32_0 = arith.constant 0 : i32
    %c0_i32_1 = arith.constant 0 : i32
    return %c0_i32, %c0_i32_0 : i32, i32
  }
  func.func @transform_7(%arg0: i32) -> (i32, i32) {
    %c0_i32 = arith.constant 0 : i32
    %c0_i32_0 = arith.constant 0 : i32
    return %arg0, %c0_i32 : i32, i32
  }
}

</mosaic_0001>

<llo_original>
// kernel: tile.18
$region0: #{tile.18}
  #allocation0 [shape = 's32[1]{0}', space=sflag, size = 0x4, scoped, tag = 'scoped memory for tile.18']
  %s0 = inlined_call_operand.vmem [shape: f32[8], index: 0, kind: input, shape index: {}]
  %s1 = inlined_call_operand.vmem [shape: f32[15,8], index: 1, kind: output, shape index: {}]
  // Predicated region
  $region2: #{tile.18} parent=0 // pred_check
    _
  $region3: #{tile.18} parent=0 // pred_check_branch
    %3 = sbr.rel (0) target = $region5
  $region4: #{tile.18} parent=0 // pred_region
    _
  $region5: #{tile.18} parent=0 // pred_fallthru
    _
  %v4 = vld [vmem:[%s0] ss:$0 sm:$0xff]
  %5 = vst [vmem:[%s1] sm:$0xff] %v4
  %s6 = scalar_lea.vmem %s1, 8
  %7 = vst [vmem:[%s6] sm:$0xff] %v4

// kernel: tile.19
$region0: #{tile.19}
  %s0 = inlined_call_operand.vmem [shape: f32[15,8], index: 0, kind: input, shape index: {}]
  %s1 = inlined_call_operand.vmem [shape: f32[1,120], index: 1, kind: output, shape index: {}]
  $region1: #{tile.19} parent=0
    #allocation0 [shape = 'u8[4096]{0}', space=vmem, size = 0x1000, scoped, tag = 'scoped mem for output reshape']
    %v2 = vld [vmem:[%s0] sm:$0x1]
    %vm3 = vcmask 64512
    %4 = vst.msk [vmem:[#allocation0] sm:$0x1] %vm3, %v2
    %s5 = scalar_lea.vmem %s0, 14
    %v6 = vld [vmem:[%s5] sm:$0x1]
    %7 = vrot.lane.b32.xlu0 %v6, 112
    %v8 = vpop.permute.xlu0 %7
    %vm9 = vcmask 982912
    %10 = vst.msk [vmem:[#allocation0] sm:$0x1] %vm9, %v8
    %s11 = scalar_lea.vmem %s0, 13
    %v12 = vld [vmem:[%s11] sm:$0x1]
    %13 = vrot.lane.b32.xlu0 %v12, 104
    %v14 = vpop.permute.xlu0 %13
    %vm15 = vcmask 917312
    %16 = vst.msk [vmem:[#allocation0] sm:$0x1] %vm15, %v14
    %s17 = scalar_lea.vmem %s0, 12
    %v18 = vld [vmem:[%s17] sm:$0x1]
    %19 = vrot.lane.b32.xlu0 %v18, 96
    %v20 = vpop.permute.xlu0 %19
    %vm21 = vcmask 851712
    %22 = vst.msk [vmem:[#allocation0] sm:$0x1] %vm21, %v20
    %s23 = scalar_lea.vmem %s0, 11
    %v24 = vld [vmem:[%s23] sm:$0x1]
    %25 = vrot.lane.b32.xlu0 %v24, 88
    %v26 = vpop.permute.xlu0 %25
    %vm27 = vcmask 786112
    %28 = vst.msk [vmem:[#allocation0] sm:$0x1] %vm27, %v26
    %s29 = scalar_lea.vmem %s0, 10
    %v30 = vld [vmem:[%s29] sm:$0x1]
    %31 = vrot.lane.b32.xlu0 %v30, 80
    %v32 = vpop.permute.xlu0 %31
    %vm33 = vcmask 720512
    %34 = vst.msk [vmem:[#allocation0] sm:$0x1] %vm33, %v32
    %s35 = scalar_lea.vmem %s0, 9
    %v36 = vld [vmem:[%s35] sm:$0x1]
    %37 = vrot.lane.b32.xlu0 %v36, 72
    %v38 = vpop.permute.xlu0 %37
    %vm39 = vcmask 654912
    %40 = vst.msk [vmem:[#allocation0] sm:$0x1] %vm39, %v38
    %s41 = scalar_lea.vmem %s0, 8
    %v42 = vld [vmem:[%s41] sm:$0x1]
    %43 = vrot.lane.b32.xlu0 %v42, 64
    %v44 = vpop.permute.xlu0 %43
    %vm45 = vcmask 589312
    %46 = vst.msk [vmem:[#allocation0] sm:$0x1] %vm45, %v44
    %s47 = scalar_lea.vmem %s0, 7
    %v48 = vld [vmem:[%s47] sm:$0x1]
    %49 = vrot.lane.b32.xlu0 %v48, 56
    %v50 = vpop.permute.xlu0 %49
    %vm51 = vcmask 523712
    %52 = vst.msk [vmem:[#allocation0] sm:$0x1] %vm51, %v50
    %s53 = scalar_lea.vmem %s0, 6
    %v54 = vld [vmem:[%s53] sm:$0x1]
    %55 = vrot.lane.b32.xlu0 %v54, 48
    %v56 = vpop.permute.xlu0 %55
    %vm57 = vcmask 458112
    %58 = vst.msk [vmem:[#allocation0] sm:$0x1] %vm57, %v56
    %s59 = scalar_lea.vmem %s0, 5
    %v60 = vld [vmem:[%s59] sm:$0x1]
    %61 = vrot.lane.b32.xlu0 %v60, 40
    %v62 = vpop.permute.xlu0 %61
    %vm63 = vcmask 392512
    %64 = vst.msk [vmem:[#allocation0] sm:$0x1] %vm63, %v62
    %s65 = scalar_lea.vmem %s0, 4
    %v66 = vld [vmem:[%s65] sm:$0x1]
    %67 = vrot.lane.b32.xlu0 %v66, 32
    %v68 = vpop.permute.xlu0 %67
    %vm69 = vcmask 326912
    %70 = vst.msk [vmem:[#allocation0] sm:$0x1] %vm69, %v68
    %s71 = scalar_lea.vmem %s0, 3
    %v72 = vld [vmem:[%s71] sm:$0x1]
    %73 = vrot.lane.b32.xlu0 %v72, 24
    %v74 = vpop.permute.xlu0 %73
    %vm75 = vcmask 261312
    %76 = vst.msk [vmem:[#allocation0] sm:$0x1] %vm75, %v74
    %s77 = scalar_lea.vmem %s0, 2
    %v78 = vld [vmem:[%s77] sm:$0x1]
    %79 = vrot.lane.b32.xlu0 %v78, 16
    %v80 = vpop.permute.xlu0 %79
    %vm81 = vcmask 195712
    %82 = vst.msk [vmem:[#allocation0] sm:$0x1] %vm81, %v80
    %s83 = scalar_lea.vmem %s0, 1
    %v84 = vld [vmem:[%s83] sm:$0x1]
    %85 = vrot.lane.b32.xlu0 %v84, 8
    %v86 = vpop.permute.xlu0 %85
    %vm87 = vcmask 130112
    %88 = vst.msk [vmem:[#allocation0] sm:$0x1] %vm87, %v86
    %s90 = ssub.s32 2, 1
    %v91 = vld [vmem:[#allocation0] sm:%s90]
    %s93 = ssub.s32 2, 1
    %94 = vst [vmem:[%s1] sm:%s93] %v91

// kernel: tile.23
$region0: #{tile.23}
  #allocation0 [shape = 's32[1]{0}', space=sflag, size = 0x4, scoped, tag = 'scoped memory for tile.23']
  %s0 = inlined_call_operand.vmem [shape: f32[16], index: 0, kind: input, shape index: {}]
  %s1 = inlined_call_operand.vmem [shape: f32[6,16], index: 1, kind: output, shape index: {}]
  // Predicated region
  $region2: #{tile.23} parent=0 // pred_check
    _
  $region3: #{tile.23} parent=0 // pred_check_branch
    %3 = sbr.rel (0) target = $region5
  $region4: #{tile.23} parent=0 // pred_region
    _
  $region5: #{tile.23} parent=0 // pred_fallthru
    _
  %v4 = vld [vmem:[%s0] ss:$0 sm:$0xff]
  %5 = vst [vmem:[%s1] sm:$0xff] %v4

// kernel: tile.24
$region0: #{tile.24}
  %s0 = inlined_call_operand.vmem [shape: f32[6,16], index: 0, kind: input, shape index: {}]
  %s1 = inlined_call_operand.vmem [shape: f32[1,96], index: 1, kind: output, shape index: {}]
  $region1: #{tile.24} parent=0
    #allocation0 [shape = 'u8[4096]{0}', space=vmem, size = 0x1000, scoped, tag = 'scoped mem for output reshape']
    %v2 = vld [vmem:[%s0] sm:$0x1]
    %vm3 = vcmask 130048
    %4 = vst.msk [vmem:[#allocation0] sm:$0x1] %vm3, %v2
    %s5 = scalar_lea.vmem %s0, 5
    %v6 = vld [vmem:[%s5] sm:$0x1]
    %7 = vrot.lane.b32.xlu0 %v6, 80
    %v8 = vpop.permute.xlu0 %7
    %vm9 = vcmask 786048
    %10 = vst.msk [vmem:[#allocation0] sm:$0x1] %vm9, %v8
    %s11 = scalar_lea.vmem %s0, 4
    %v12 = vld [vmem:[%s11] sm:$0x1]
    %13 = vrot.lane.b32.xlu0 %v12, 64
    %v14 = vpop.permute.xlu0 %13
    %vm15 = vcmask 654848
    %16 = vst.msk [vmem:[#allocation0] sm:$0x1] %vm15, %v14
    %s17 = scalar_lea.vmem %s0, 3
    %v18 = vld [vmem:[%s17] sm:$0x1]
    %19 = vrot.lane.b32.xlu0 %v18, 48
    %v20 = vpop.permute.xlu0 %19
    %vm21 = vcmask 523648
    %22 = vst.msk [vmem:[#allocation0] sm:$0x1] %vm21, %v20
    %s23 = scalar_lea.vmem %s0, 2
    %v24 = vld [vmem:[%s23] sm:$0x1]
    %25 = vrot.lane.b32.xlu0 %v24, 32
    %v26 = vpop.permute.xlu0 %25
    %vm27 = vcmask 392448
    %28 = vst.msk [vmem:[#allocation0] sm:$0x1] %vm27, %v26
    %s29 = scalar_lea.vmem %s0, 1
    %v30 = vld [vmem:[%s29] sm:$0x1]
    %31 = vrot.lane.b32.xlu0 %v30, 16
    %v32 = vpop.permute.xlu0 %31
    %vm33 = vcmask 261248
    %34 = vst.msk [vmem:[#allocation0] sm:$0x1] %vm33, %v32
    %s36 = ssub.s32 2, 1
    %v37 = vld [vmem:[#allocation0] sm:%s36]
    %s39 = ssub.s32 2, 1
    %40 = vst [vmem:[%s1] sm:%s39] %v37

// kernel: tile.28
$region0: #{tile.28}
  #allocation0 [shape = 's32[1]{0}', space=sflag, size = 0x4, scoped, tag = 'scoped memory for tile.28']
  %s0 = inlined_call_operand.vmem [shape: f32[32], index: 0, kind: input, shape index: {}]
  %s1 = inlined_call_operand.vmem [shape: f32[2,32], index: 1, kind: output, shape index: {}]
  // Predicated region
  $region2: #{tile.28} parent=0 // pred_check
    _
  $region3: #{tile.28} parent=0 // pred_check_branch
    %3 = sbr.rel (0) target = $region5
  $region4: #{tile.28} parent=0 // pred_region
    _
  $region5: #{tile.28} parent=0 // pred_fallthru
    _
  %v4 = vld [vmem:[%s0] ss:$0 sm:$0xff]
  %5 = vst [vmem:[%s1] sm:$0x3] %v4

// kernel: tile.29
$region0: #{tile.29}
  %s0 = inlined_call_operand.vmem [shape: f32[2,32], index: 0, kind: input, shape index: {}]
  %s1 = inlined_call_operand.vmem [shape: f32[1,64], index: 1, kind: output, shape index: {}]
  $region1: #{tile.29} parent=0
    #allocation0 [shape = 'u8[4096]{0}', space=vmem, size = 0x1000, scoped, tag = 'scoped mem for output reshape']
    #allocation1 [shape = 'u8[4096]{0}', space=vmem, size = 0x1000, scoped, tag = 'scoped mem for input reshape']
    %s3 = ssub.s32 4, 1
    %v4 = vld [vmem:[%s0] sm:%s3]
    %5 = vst [vmem:[#allocation1] sm:%s3] %v4
    %v6 = vld [vmem:[#allocation1] sm:$0x1]
    %vm7 = vcmask 261120
    %8 = vst.msk [vmem:[#allocation0] sm:$0x1] %vm7, %v6
    %s9 = scalar_lea.vmem [#allocation1], 1
    %v10 = vld [vmem:[%s9] sm:$0x1]
    %11 = vrot.lane.b32.xlu0 %v10, 32
    %v12 = vpop.permute.xlu0 %11
    %vm13 = vcmask 523520
    %14 = vst.msk [vmem:[#allocation0] sm:$0x1] %vm13, %v12
    %s16 = ssub.s32 2, 1
    %v17 = vld [vmem:[#allocation0] sm:%s16]
    %s19 = ssub.s32 2, 1
    %20 = vst [vmem:[%s1] sm:%s19] %v17

// kernel: tiny_observation_encoder_forward.1
$region0: #{tiny_observation_encoder_forward.1}
  #allocation0 [shape = 'u32[]', space=smem, size = 0x4, offset = 0x4, fixed_abs, tag = 'smem constant byte address 0x4 - core index']
  #allocation1 [shape = 'u32[72,128]{1,0:T(1,128)}', space=vmem, size = 0x9000, scoped, tag = 'internal scratch']
  #allocation2 [shape = 'f32[61,120]{1,0:T(8,128)}', space=vmem, size = 0x8000, scoped, tag = 'scratch operand']
  #allocation3 [shape = 'f32[55,96]{1,0:T(8,128)}', space=vmem, size = 0x7000, scoped, tag = 'scratch operand']
  #allocation4 [shape = 'f32[43,64]{1,0:T(8,128)}', space=vmem, size = 0x6000, scoped, tag = 'scratch operand']
  %s0 = inlined_call_operand.vmem [shape: f32[64,128], index: 0, kind: input, shape index: {}]
  %s1 = inlined_call_operand.vmem [shape: f32[4,128,120], index: 1, kind: input, shape index: {}]
  %s2 = inlined_call_operand.vmem [shape: f32[1,120], index: 2, kind: input, shape index: {}]
  %s3 = inlined_call_operand.vmem [shape: f32[4,120,96], index: 3, kind: input, shape index: {}]
  %s4 = inlined_call_operand.vmem [shape: f32[1,96], index: 4, kind: input, shape index: {}]
  %s5 = inlined_call_operand.vmem [shape: f32[4,96,64], index: 5, kind: input, shape index: {}]
  %s6 = inlined_call_operand.vmem [shape: f32[1,64], index: 6, kind: input, shape index: {}]
  %s7 = inlined_call_operand.vmem [shape: f32[2,128], index: 7, kind: output, shape index: {}]
  %s8 = sld [smem:[#allocation0]]
  $region38: #{tiny_observation_encoder_forward.1} parent=0
    _
  %s10 = ssub.s32 1, %s8
  %s11 = scalar_select 0, %s10, %s8
  // Predicated region
  $region2: #{tiny_observation_encoder_forward.1} parent=0 // pred_check
    _
  $region3: #{tiny_observation_encoder_forward.1} parent=0 // pred_check_branch
    %13 = sbr.rel (0) target = $region5
  $region4: #{tiny_observation_encoder_forward.1} parent=0 // pred_region
    _
  $region5: #{tiny_observation_encoder_forward.1} parent=0 // pred_fallthru
    _
  // Predicated region
  $region6: #{tiny_observation_encoder_forward.1} parent=0 // pred_check
    _
  $region7: #{tiny_observation_encoder_forward.1} parent=0 // pred_check_branch
    %15 = sbr.rel (0) target = $region9
  $region8: #{tiny_observation_encoder_forward.1} parent=0 // pred_region
    _
  $region9: #{tiny_observation_encoder_forward.1} parent=0 // pred_fallthru
    _
  // Predicated region
  $region10: #{tiny_observation_encoder_forward.1} parent=0 // pred_check
    _
  $region11: #{tiny_observation_encoder_forward.1} parent=0 // pred_check_branch
    %17 = sbr.rel (0) target = $region13
  $region12: #{tiny_observation_encoder_forward.1} parent=0 // pred_region
    _
  $region13: #{tiny_observation_encoder_forward.1} parent=0 // pred_fallthru
    _
  // Predicated region
  $region14: #{tiny_observation_encoder_forward.1} parent=0 // pred_check
    _
  $region15: #{tiny_observation_encoder_forward.1} parent=0 // pred_check_branch
    %19 = sbr.rel (0) target = $region17
  $region16: #{tiny_observation_encoder_forward.1} parent=0 // pred_region
    _
  $region17: #{tiny_observation_encoder_forward.1} parent=0 // pred_fallthru
    _
  // Predicated region
  $region18: #{tiny_observation_encoder_forward.1} parent=0 // pred_check
    _
  $region19: #{tiny_observation_encoder_forward.1} parent=0 // pred_check_branch
    %21 = sbr.rel (0) target = $region21
  $region20: #{tiny_observation_encoder_forward.1} parent=0 // pred_region
    _
  $region21: #{tiny_observation_encoder_forward.1} parent=0 // pred_fallthru
    _
  // Predicated region
  $region22: #{tiny_observation_encoder_forward.1} parent=0 // pred_check
    _
  $region23: #{tiny_observation_encoder_forward.1} parent=0 // pred_check_branch
    %23 = sbr.rel (0) target = $region25
  $region24: #{tiny_observation_encoder_forward.1} parent=0 // pred_region
    _
  $region25: #{tiny_observation_encoder_forward.1} parent=0 // pred_fallthru
    _
  // Predicated region
  $region26: #{tiny_observation_encoder_forward.1} parent=0 // pred_check
    _
  $region27: #{tiny_observation_encoder_forward.1} parent=0 // pred_check_branch
    %25 = sbr.rel (0) target = $region29
  $region28: #{tiny_observation_encoder_forward.1} parent=0 // pred_region
    _
  $region29: #{tiny_observation_encoder_forward.1} parent=0 // pred_fallthru
    _
  %v26 = vld [vmem:[%s0] sm:$0xff]
  %v27 = vld [vmem:[%s0 + $0x8] sm:$0xff]
  %v28 = vld [vmem:[%s0 + $0x10] sm:$0xff]
  %v29 = vld [vmem:[%s0 + $0x18] sm:$0xff]
  %v30 = vld [vmem:[%s0 + $0x20] sm:$0xff]
  %v31 = vld [vmem:[%s0 + $0x28] sm:$0xff]
  %v32 = vld [vmem:[%s0 + $0x30] sm:$0xff]
  %v33 = vld [vmem:[%s0 + $0x38] sm:$0x1f]
  %v34 = vld [vmem:[%s1] sm:$0xff]
  %v35 = vld [vmem:[%s1 + $0x8] sm:$0xff]
  %v36 = vld [vmem:[%s1 + $0x10] sm:$0xff]
  %v37 = vld [vmem:[%s1 + $0x18] sm:$0xff]
  %v38 = vld [vmem:[%s1 + $0x20] sm:$0xff]
  %v39 = vld [vmem:[%s1 + $0x28] sm:$0xff]
  %v40 = vld [vmem:[%s1 + $0x30] sm:$0xff]
  %v41 = vld [vmem:[%s1 + $0x38] sm:$0xff]
  %v42 = vld [vmem:[%s1 + $0x40] sm:$0xff]
  %v43 = vld [vmem:[%s1 + $0x48] sm:$0xff]
  %v44 = vld [vmem:[%s1 + $0x50] sm:$0xff]
  %v45 = vld [vmem:[%s1 + $0x58] sm:$0xff]
  %v46 = vld [vmem:[%s1 + $0x60] sm:$0xff]
  %v47 = vld [vmem:[%s1 + $0x68] sm:$0xff]
  %v48 = vld [vmem:[%s1 + $0x70] sm:$0xff]
  %v49 = vld [vmem:[%s1 + $0x78] sm:$0xff]
  %v50 = vld [vmem:[%s0 + $0x1] sm:$0xff]
  %v51 = vld [vmem:[%s0 + $0x9] sm:$0xff]
  %v52 = vld [vmem:[%s0 + $0x11] sm:$0xff]
  %v53 = vld [vmem:[%s0 + $0x19] sm:$0xff]
  %v54 = vld [vmem:[%s0 + $0x21] sm:$0xff]
  %v55 = vld [vmem:[%s0 + $0x29] sm:$0xff]
  %v56 = vld [vmem:[%s0 + $0x31] sm:$0xff]
  %v57 = vld [vmem:[%s0 + $0x39] sm:$0x1f]
  %s58 = scalar_lea.vmem %s1, 128
  %v59 = vld [vmem:[%s58] sm:$0xff]
  %v60 = vld [vmem:[%s58 + $0x8] sm:$0xff]
  %v61 = vld [vmem:[%s58 + $0x10] sm:$0xff]
  %v62 = vld [vmem:[%s58 + $0x18] sm:$0xff]
  %v63 = vld [vmem:[%s58 + $0x20] sm:$0xff]
  %v64 = vld [vmem:[%s58 + $0x28] sm:$0xff]
  %v65 = vld [vmem:[%s58 + $0x30] sm:$0xff]
  %v66 = vld [vmem:[%s58 + $0x38] sm:$0xff]
  %v67 = vld [vmem:[%s58 + $0x40] sm:$0xff]
  %v68 = vld [vmem:[%s58 + $0x48] sm:$0xff]
  %v69 = vld [vmem:[%s58 + $0x50] sm:$0xff]
  %v70 = vld [vmem:[%s58 + $0x58] sm:$0xff]
  %v71 = vld [vmem:[%s58 + $0x60] sm:$0xff]
  %v72 = vld [vmem:[%s58 + $0x68] sm:$0xff]
  %v73 = vld [vmem:[%s58 + $0x70] sm:$0xff]
  %v74 = vld [vmem:[%s58 + $0x78] sm:$0xff]
  %v75 = vand.u32 %v74, 4294901760
  %76 = vmatpush.msra.mxu0 %v75
  %v77 = vand.u32 %v73, 4294901760
  %78 = vmatpush.msra.mxu0 %v77
  %v79 = vand.u32 %v72, 4294901760
  %80 = vmatpush.msra.mxu0 %v79
  %v81 = vand.u32 %v71, 4294901760
  %82 = vmatpush.msra.mxu0 %v81
  %v83 = vand.u32 %v70, 4294901760
  %84 = vmatpush.msra.mxu0 %v83
  %v85 = vand.u32 %v69, 4294901760
  %86 = vmatpush.msra.mxu0 %v85
  %v87 = vand.u32 %v68, 4294901760
  %88 = vmatpush.msra.mxu0 %v87
  %v89 = vand.u32 %v67, 4294901760
  %90 = vmatpush.msra.mxu0 %v89
  %v91 = vand.u32 %v66, 4294901760
  %92 = vmatpush.msra.mxu0 %v91
  %v93 = vand.u32 %v65, 4294901760
  %94 = vmatpush.msra.mxu0 %v93
  %v95 = vand.u32 %v64, 4294901760
  %96 = vmatpush.msra.mxu0 %v95
  %v97 = vand.u32 %v63, 4294901760
  %98 = vmatpush.msra.mxu0 %v97
  %v99 = vand.u32 %v62, 4294901760
  %100 = vmatpush.msra.mxu0 %v99
  %v101 = vand.u32 %v61, 4294901760
  %102 = vmatpush.msra.mxu0 %v101
  %v103 = vand.u32 %v60, 4294901760
  %104 = vmatpush.msra.mxu0 %v103
  %v105 = vand.u32 %v59, 4294901760
  %106 = vmatpush.msra.mxu0 %v105
  %v107 = vand.u32 %v50, 4294901760
  %v108 = vsub.f32 %v50, %v107
  %v109 = vand.u32 %v108, 4294901760
  %v110 = vsub.f32 %v108, %v109
  %v111 = vand.u32 %v110, 4294901760
  %112 = vmatmul.f32.gmra.mxu0 %v111
  %v113 = vpop.f32.mrf.mxu0
  %v114 = vadd.f32 0.0, %v113
  %v115 = vand.u32 %v51, 4294901760
  %v116 = vsub.f32 %v51, %v115
  %v117 = vand.u32 %v116, 4294901760
  %v118 = vsub.f32 %v116, %v117
  %v119 = vand.u32 %v118, 4294901760
  %120 = vmatmul.f32.gmra.mxu0 %v119
  %v121 = vpop.f32.mrf.mxu0
  %v122 = vadd.f32 0.0, %v121
  %v123 = vand.u32 %v52, 4294901760
  %v124 = vsub.f32 %v52, %v123
  %v125 = vand.u32 %v124, 4294901760
  %v126 = vsub.f32 %v124, %v125
  %v127 = vand.u32 %v126, 4294901760
  %128 = vmatmul.f32.gmra.mxu0 %v127
  %v129 = vpop.f32.mrf.mxu0
  %v130 = vadd.f32 0.0, %v129
  %v131 = vand.u32 %v53, 4294901760
  %v132 = vsub.f32 %v53, %v131
  %v133 = vand.u32 %v132, 4294901760
  %v134 = vsub.f32 %v132, %v133
  %v135 = vand.u32 %v134, 4294901760
  %136 = vmatmul.f32.gmra.mxu0 %v135
  %v137 = vpop.f32.mrf.mxu0
  %v138 = vadd.f32 0.0, %v137
  %v139 = vand.u32 %v54, 4294901760
  %v140 = vsub.f32 %v54, %v139
  %v141 = vand.u32 %v140, 4294901760
  %v142 = vsub.f32 %v140, %v141
  %v143 = vand.u32 %v142, 4294901760
  %144 = vmatmul.f32.gmra.mxu0 %v143
  %v145 = vpop.f32.mrf.mxu0
  %v146 = vadd.f32 0.0, %v145
  %v147 = vand.u32 %v55, 4294901760
  %v148 = vsub.f32 %v55, %v147
  %v149 = vand.u32 %v148, 4294901760
  %v150 = vsub.f32 %v148, %v149
  %v151 = vand.u32 %v150, 4294901760
  %152 = vmatmul.f32.gmra.mxu0 %v151
  %v153 = vpop.f32.mrf.mxu0
  %v154 = vadd.f32 0.0, %v153
  %v155 = vand.u32 %v56, 4294901760
  %v156 = vsub.f32 %v56, %v155
  %v157 = vand.u32 %v156, 4294901760
  %v158 = vsub.f32 %v156, %v157
  %v159 = vand.u32 %v158, 4294901760
  %160 = vmatmul.f32.gmra.mxu0 %v159
  %v161 = vpop.f32.mrf.mxu0
  %v162 = vadd.f32 0.0, %v161
  %v163 = vand.u32 %v57, 4294901760
  %v164 = vsub.f32 %v57, %v163
  %v165 = vand.u32 %v164, 4294901760
  %v166 = vsub.f32 %v164, %v165
  %v167 = vand.u32 %v166, 4294901760
  %168 = vmatmul.f32.gmra.mxu0 %v167
  %v169 = vpop.f32.mrf.mxu0
  %v170 = vadd.f32 0.0, %v169
  %171 = vdwg.mxu0
  %v172 = vand.u32 %v74, 4294901760
  %v173 = vsub.f32 %v74, %v172
  %v174 = vand.u32 %v173, 4294901760
  %v175 = vsub.f32 %v173, %v174
  %v176 = vand.u32 %v175, 4294901760
  %177 = vmatpush.msra.mxu0 %v176
  %v178 = vand.u32 %v73, 4294901760
  %v179 = vsub.f32 %v73, %v178
  %v180 = vand.u32 %v179, 4294901760
  %v181 = vsub.f32 %v179, %v180
  %v182 = vand.u32 %v181, 4294901760
  %183 = vmatpush.msra.mxu0 %v182
  %v184 = vand.u32 %v72, 4294901760
  %v185 = vsub.f32 %v72, %v184
  %v186 = vand.u32 %v185, 4294901760
  %v187 = vsub.f32 %v185, %v186
  %v188 = vand.u32 %v187, 4294901760
  %189 = vmatpush.msra.mxu0 %v188
  %v190 = vand.u32 %v71, 4294901760
  %v191 = vsub.f32 %v71, %v190
  %v192 = vand.u32 %v191, 4294901760
  %v193 = vsub.f32 %v191, %v192
  %v194 = vand.u32 %v193, 4294901760
  %195 = vmatpush.msra.mxu0 %v194
  %v196 = vand.u32 %v70, 4294901760
  %v197 = vsub.f32 %v70, %v196
  %v198 = vand.u32 %v197, 4294901760
  %v199 = vsub.f32 %v197, %v198
  %v200 = vand.u32 %v199, 4294901760
  %201 = vmatpush.msra.mxu0 %v200
  %v202 = vand.u32 %v69, 4294901760
  %v203 = vsub.f32 %v69, %v202
  %v204 = vand.u32 %v203, 4294901760
  %v205 = vsub.f32 %v203, %v204
  %v206 = vand.u32 %v205, 4294901760
  %207 = vmatpush.msra.mxu0 %v206
  %v208 = vand.u32 %v68, 4294901760
  %v209 = vsub.f32 %v68, %v208
  %v210 = vand.u32 %v209, 4294901760
  %v211 = vsub.f32 %v209, %v210
  %v212 = vand.u32 %v211, 4294901760
  %213 = vmatpush.msra.mxu0 %v212
  %v214 = vand.u32 %v67, 4294901760
  %v215 = vsub.f32 %v67, %v214
  %v216 = vand.u32 %v215, 4294901760
  %v217 = vsub.f32 %v215, %v216
  %v218 = vand.u32 %v217, 4294901760
  %219 = vmatpush.msra.mxu0 %v218
  %v220 = vand.u32 %v66, 4294901760
  %v221 = vsub.f32 %v66, %v220
  %v222 = vand.u32 %v221, 4294901760
  %v223 = vsub.f32 %v221, %v222
  %v224 = vand.u32 %v223, 4294901760
  %225 = vmatpush.msra.mxu0 %v224
  %v226 = vand.u32 %v65, 4294901760
  %v227 = vsub.f32 %v65, %v226
  %v228 = vand.u32 %v227, 4294901760
  %v229 = vsub.f32 %v227, %v228
  %v230 = vand.u32 %v229, 4294901760
  %231 = vmatpush.msra.mxu0 %v230
  %v232 = vand.u32 %v64, 4294901760
  %v233 = vsub.f32 %v64, %v232
  %v234 = vand.u32 %v233, 4294901760
  %v235 = vsub.f32 %v233, %v234
  %v236 = vand.u32 %v235, 4294901760
  %237 = vmatpush.msra.mxu0 %v236
  %v238 = vand.u32 %v63, 4294901760
  %v239 = vsub.f32 %v63, %v238
  %v240 = vand.u32 %v239, 4294901760
  %v241 = vsub.f32 %v239, %v240
  %v242 = vand.u32 %v241, 4294901760
  %243 = vmatpush.msra.mxu0 %v242
  %v244 = vand.u32 %v62, 4294901760
  %v245 = vsub.f32 %v62, %v244
  %v246 = vand.u32 %v245, 4294901760
  %v247 = vsub.f32 %v245, %v246
  %v248 = vand.u32 %v247, 4294901760
  %249 = vmatpush.msra.mxu0 %v248
  %v250 = vand.u32 %v61, 4294901760
  %v251 = vsub.f32 %v61, %v250
  %v252 = vand.u32 %v251, 4294901760
  %v253 = vsub.f32 %v251, %v252
  %v254 = vand.u32 %v253, 4294901760
  %255 = vmatpush.msra.mxu0 %v254
  %v256 = vand.u32 %v60, 4294901760
  %v257 = vsub.f32 %v60, %v256
  %v258 = vand.u32 %v257, 4294901760
  %v259 = vsub.f32 %v257, %v258
  %v260 = vand.u32 %v259, 4294901760
  %261 = vmatpush.msra.mxu0 %v260
  %v262 = vand.u32 %v59, 4294901760
  %v263 = vsub.f32 %v59, %v262
  %v264 = vand.u32 %v263, 4294901760
  %v265 = vsub.f32 %v263, %v264
  %v266 = vand.u32 %v265, 4294901760
  %267 = vmatpush.msra.mxu0 %v266
  %v268 = vand.u32 %v50, 4294901760
  %269 = vmatmul.f32.gmra.mxu0 %v268
  %v270 = vpop.f32.mrf.mxu0
  %v271 = vadd.f32 %v114, %v270
  %v272 = vand.u32 %v51, 4294901760
  %273 = vmatmul.f32.gmra.mxu0 %v272
  %v274 = vpop.f32.mrf.mxu0
  %v275 = vadd.f32 %v122, %v274
  %v276 = vand.u32 %v52, 4294901760
  %277 = vmatmul.f32.gmra.mxu0 %v276
  %v278 = vpop.f32.mrf.mxu0
  %v279 = vadd.f32 %v130, %v278
  %v280 = vand.u32 %v53, 4294901760
  %281 = vmatmul.f32.gmra.mxu0 %v280
  %v282 = vpop.f32.mrf.mxu0
  %v283 = vadd.f32 %v138, %v282
  %v284 = vand.u32 %v54, 4294901760
  %285 = vmatmul.f32.gmra.mxu0 %v284
  %v286 = vpop.f32.mrf.mxu0
  %v287 = vadd.f32 %v146, %v286
  %v288 = vand.u32 %v55, 4294901760
  %289 = vmatmul.f32.gmra.mxu0 %v288
  %v290 = vpop.f32.mrf.mxu0
  %v291 = vadd.f32 %v154, %v290
  %v292 = vand.u32 %v56, 4294901760
  %293 = vmatmul.f32.gmra.mxu0 %v292
  %v294 = vpop.f32.mrf.mxu0
  %v295 = vadd.f32 %v162, %v294
  %v296 = vand.u32 %v57, 4294901760
  %297 = vmatmul.f32.gmra.mxu0 %v296
  %v298 = vpop.f32.mrf.mxu0
  %v299 = vadd.f32 %v170, %v298
  %300 = vdwg.mxu0
  %v301 = vand.u32 %v74, 4294901760
  %v302 = vsub.f32 %v74, %v301
  %303 = vmatpush.msra.mxu0 %v302
  %v304 = vand.u32 %v73, 4294901760
  %v305 = vsub.f32 %v73, %v304
  %306 = vmatpush.msra.mxu0 %v305
  %v307 = vand.u32 %v72, 4294901760
  %v308 = vsub.f32 %v72, %v307
  %309 = vmatpush.msra.mxu0 %v308
  %v310 = vand.u32 %v71, 4294901760
  %v311 = vsub.f32 %v71, %v310
  %312 = vmatpush.msra.mxu0 %v311
  %v313 = vand.u32 %v70, 4294901760
  %v314 = vsub.f32 %v70, %v313
  %315 = vmatpush.msra.mxu0 %v314
  %v316 = vand.u32 %v69, 4294901760
  %v317 = vsub.f32 %v69, %v316
  %318 = vmatpush.msra.mxu0 %v317
  %v319 = vand.u32 %v68, 4294901760
  %v320 = vsub.f32 %v68, %v319
  %321 = vmatpush.msra.mxu0 %v320
  %v322 = vand.u32 %v67, 4294901760
  %v323 = vsub.f32 %v67, %v322
  %324 = vmatpush.msra.mxu0 %v323
  %v325 = vand.u32 %v66, 4294901760
  %v326 = vsub.f32 %v66, %v325
  %327 = vmatpush.msra.mxu0 %v326
  %v328 = vand.u32 %v65, 4294901760
  %v329 = vsub.f32 %v65, %v328
  %330 = vmatpush.msra.mxu0 %v329
  %v331 = vand.u32 %v64, 4294901760
  %v332 = vsub.f32 %v64, %v331
  %333 = vmatpush.msra.mxu0 %v332
  %v334 = vand.u32 %v63, 4294901760
  %v335 = vsub.f32 %v63, %v334
  %336 = vmatpush.msra.mxu0 %v335
  %v337 = vand.u32 %v62, 4294901760
  %v338 = vsub.f32 %v62, %v337
  %339 = vmatpush.msra.mxu0 %v338
  %v340 = vand.u32 %v61, 4294901760
  %v341 = vsub.f32 %v61, %v340
  %342 = vmatpush.msra.mxu0 %v341
  %v343 = vand.u32 %v60, 4294901760
  %v344 = vsub.f32 %v60, %v343
  %345 = vmatpush.msra.mxu0 %v344
  %v346 = vand.u32 %v59, 4294901760
  %v347 = vsub.f32 %v59, %v346
  %348 = vmatpush.msra.mxu0 %v347
  %v349 = vand.u32 %v50, 4294901760
  %v350 = vsub.f32 %v50, %v349
  %351 = vmatmul.f32.gmra.mxu0 %v350
  %v352 = vpop.f32.mrf.mxu0
  %v353 = vadd.f32 %v271, %v352
  %v354 = vand.u32 %v51, 4294901760
  %v355 = vsub.f32 %v51, %v354
  %356 = vmatmul.f32.gmra.mxu0 %v355
  %v357 = vpop.f32.mrf.mxu0
  %v358 = vadd.f32 %v275, %v357
  %v359 = vand.u32 %v52, 4294901760
  %v360 = vsub.f32 %v52, %v359
  %361 = vmatmul.f32.gmra.mxu0 %v360
  %v362 = vpop.f32.mrf.mxu0
  %v363 = vadd.f32 %v279, %v362
  %v364 = vand.u32 %v53, 4294901760
  %v365 = vsub.f32 %v53, %v364
  %366 = vmatmul.f32.gmra.mxu0 %v365
  %v367 = vpop.f32.mrf.mxu0
  %v368 = vadd.f32 %v283, %v367
  %v369 = vand.u32 %v54, 4294901760
  %v370 = vsub.f32 %v54, %v369
  %371 = vmatmul.f32.gmra.mxu0 %v370
  %v372 = vpop.f32.mrf.mxu0
  %v373 = vadd.f32 %v287, %v372
  %v374 = vand.u32 %v55, 4294901760
  %v375 = vsub.f32 %v55, %v374
  %376 = vmatmul.f32.gmra.mxu0 %v375
  %v377 = vpop.f32.mrf.mxu0
  %v378 = vadd.f32 %v291, %v377
  %v379 = vand.u32 %v56, 4294901760
  %v380 = vsub.f32 %v56, %v379
  %381 = vmatmul.f32.gmra.mxu0 %v380
  %v382 = vpop.f32.mrf.mxu0
  %v383 = vadd.f32 %v295, %v382
  %v384 = vand.u32 %v57, 4294901760
  %v385 = vsub.f32 %v57, %v384
  %386 = vmatmul.f32.gmra.mxu0 %v385
  %v387 = vpop.f32.mrf.mxu0
  %v388 = vadd.f32 %v299, %v387
  %389 = vdwg.mxu0
  %v390 = vand.u32 %v74, 4294901760
  %391 = vmatpush.msra.mxu0 %v390
  %v392 = vand.u32 %v73, 4294901760
  %393 = vmatpush.msra.mxu0 %v392
  %v394 = vand.u32 %v72, 4294901760
  %395 = vmatpush.msra.mxu0 %v394
  %v396 = vand.u32 %v71, 4294901760
  %397 = vmatpush.msra.mxu0 %v396
  %v398 = vand.u32 %v70, 4294901760
  %399 = vmatpush.msra.mxu0 %v398
  %v400 = vand.u32 %v69, 4294901760
  %401 = vmatpush.msra.mxu0 %v400
  %v402 = vand.u32 %v68, 4294901760
  %403 = vmatpush.msra.mxu0 %v402
  %v404 = vand.u32 %v67, 4294901760
  %405 = vmatpush.msra.mxu0 %v404
  %v406 = vand.u32 %v66, 4294901760
  %407 = vmatpush.msra.mxu0 %v406
  %v408 = vand.u32 %v65, 4294901760
  %409 = vmatpush.msra.mxu0 %v408
  %v410 = vand.u32 %v64, 4294901760
  %411 = vmatpush.msra.mxu0 %v410
  %v412 = vand.u32 %v63, 4294901760
  %413 = vmatpush.msra.mxu0 %v412
  %v414 = vand.u32 %v62, 4294901760
  %415 = vmatpush.msra.mxu0 %v414
  %v416 = vand.u32 %v61, 4294901760
  %417 = vmatpush.msra.mxu0 %v416
  %v418 = vand.u32 %v60, 4294901760
  %419 = vmatpush.msra.mxu0 %v418
  %v420 = vand.u32 %v59, 4294901760
  %421 = vmatpush.msra.mxu0 %v420
  %v422 = vand.u32 %v50, 4294901760
  %v423 = vsub.f32 %v50, %v422
  %v424 = vand.u32 %v423, 4294901760
  %425 = vmatmul.f32.gmra.mxu0 %v424
  %v426 = vpop.f32.mrf.mxu0
  %v427 = vadd.f32 %v353, %v426
  %v428 = vand.u32 %v51, 4294901760
  %v429 = vsub.f32 %v51, %v428
  %v430 = vand.u32 %v429, 4294901760
  %431 = vmatmul.f32.gmra.mxu0 %v430
  %v432 = vpop.f32.mrf.mxu0
  %v433 = vadd.f32 %v358, %v432
  %v434 = vand.u32 %v52, 4294901760
  %v435 = vsub.f32 %v52, %v434
  %v436 = vand.u32 %v435, 4294901760
  %437 = vmatmul.f32.gmra.mxu0 %v436
  %v438 = vpop.f32.mrf.mxu0
  %v439 = vadd.f32 %v363, %v438
  %v440 = vand.u32 %v53, 4294901760
  %v441 = vsub.f32 %v53, %v440
  %v442 = vand.u32 %v441, 4294901760
  %443 = vmatmul.f32.gmra.mxu0 %v442
  %v444 = vpop.f32.mrf.mxu0
  %v445 = vadd.f32 %v368, %v444
  %v446 = vand.u32 %v54, 4294901760
  %v447 = vsub.f32 %v54, %v446
  %v448 = vand.u32 %v447, 4294901760
  %449 = vmatmul.f32.gmra.mxu0 %v448
  %v450 = vpop.f32.mrf.mxu0
  %v451 = vadd.f32 %v373, %v450
  %v452 = vand.u32 %v55, 4294901760
  %v453 = vsub.f32 %v55, %v452
  %v454 = vand.u32 %v453, 4294901760
  %455 = vmatmul.f32.gmra.mxu0 %v454
  %v456 = vpop.f32.mrf.mxu0
  %v457 = vadd.f32 %v378, %v456
  %v458 = vand.u32 %v56, 4294901760
  %v459 = vsub.f32 %v56, %v458
  %v460 = vand.u32 %v459, 4294901760
  %461 = vmatmul.f32.gmra.mxu0 %v460
  %v462 = vpop.f32.mrf.mxu0
  %v463 = vadd.f32 %v383, %v462
  %v464 = vand.u32 %v57, 4294901760
  %v465 = vsub.f32 %v57, %v464
  %v466 = vand.u32 %v465, 4294901760
  %467 = vmatmul.f32.gmra.mxu0 %v466
  %v468 = vpop.f32.mrf.mxu0
  %v469 = vadd.f32 %v388, %v468
  %470 = vdwg.mxu0
  %v471 = vand.u32 %v74, 4294901760
  %v472 = vsub.f32 %v74, %v471
  %v473 = vand.u32 %v472, 4294901760
  %474 = vmatpush.msra.mxu0 %v473
  %v475 = vand.u32 %v73, 4294901760
  %v476 = vsub.f32 %v73, %v475
  %v477 = vand.u32 %v476, 4294901760
  %478 = vmatpush.msra.mxu0 %v477
  %v479 = vand.u32 %v72, 4294901760
  %v480 = vsub.f32 %v72, %v479
  %v481 = vand.u32 %v480, 4294901760
  %482 = vmatpush.msra.mxu0 %v481
  %v483 = vand.u32 %v71, 4294901760
  %v484 = vsub.f32 %v71, %v483
  %v485 = vand.u32 %v484, 4294901760
  %486 = vmatpush.msra.mxu0 %v485
  %v487 = vand.u32 %v70, 4294901760
  %v488 = vsub.f32 %v70, %v487
  %v489 = vand.u32 %v488, 4294901760
  %490 = vmatpush.msra.mxu0 %v489
  %v491 = vand.u32 %v69, 4294901760
  %v492 = vsub.f32 %v69, %v491
  %v493 = vand.u32 %v492, 4294901760
  %494 = vmatpush.msra.mxu0 %v493
  %v495 = vand.u32 %v68, 4294901760
  %v496 = vsub.f32 %v68, %v495
  %v497 = vand.u32 %v496, 4294901760
  %498 = vmatpush.msra.mxu0 %v497
  %v499 = vand.u32 %v67, 4294901760
  %v500 = vsub.f32 %v67, %v499
  %v501 = vand.u32 %v500, 4294901760
  %502 = vmatpush.msra.mxu0 %v501
  %v503 = vand.u32 %v66, 4294901760
  %v504 = vsub.f32 %v66, %v503
  %v505 = vand.u32 %v504, 4294901760
  %506 = vmatpush.msra.mxu0 %v505
  %v507 = vand.u32 %v65, 4294901760
  %v508 = vsub.f32 %v65, %v507
  %v509 = vand.u32 %v508, 4294901760
  %510 = vmatpush.msra.mxu0 %v509
  %v511 = vand.u32 %v64, 4294901760
  %v512 = vsub.f32 %v64, %v511
  %v513 = vand.u32 %v512, 4294901760
  %514 = vmatpush.msra.mxu0 %v513
  %v515 = vand.u32 %v63, 4294901760
  %v516 = vsub.f32 %v63, %v515
  %v517 = vand.u32 %v516, 4294901760
  %518 = vmatpush.msra.mxu0 %v517
  %v519 = vand.u32 %v62, 4294901760
  %v520 = vsub.f32 %v62, %v519
  %v521 = vand.u32 %v520, 4294901760
  %522 = vmatpush.msra.mxu0 %v521
  %v523 = vand.u32 %v61, 4294901760
  %v524 = vsub.f32 %v61, %v523
  %v525 = vand.u32 %v524, 4294901760
  %526 = vmatpush.msra.mxu0 %v525
  %v527 = vand.u32 %v60, 4294901760
  %v528 = vsub.f32 %v60, %v527
  %v529 = vand.u32 %v528, 4294901760
  %530 = vmatpush.msra.mxu0 %v529
  %v531 = vand.u32 %v59, 4294901760
  %v532 = vsub.f32 %v59, %v531
  %v533 = vand.u32 %v532, 4294901760
  %534 = vmatpush.msra.mxu0 %v533
  %v535 = vand.u32 %v50, 4294901760
  %536 = vmatmul.f32.gmra.mxu0 %v535
  %v537 = vpop.f32.mrf.mxu0
  %v538 = vadd.f32 %v427, %v537
  %v539 = vand.u32 %v51, 4294901760
  %540 = vmatmul.f32.gmra.mxu0 %v539
  %v541 = vpop.f32.mrf.mxu0
  %v542 = vadd.f32 %v433, %v541
  %v543 = vand.u32 %v52, 4294901760
  %544 = vmatmul.f32.gmra.mxu0 %v543
  %v545 = vpop.f32.mrf.mxu0
  %v546 = vadd.f32 %v439, %v545
  %v547 = vand.u32 %v53, 4294901760
  %548 = vmatmul.f32.gmra.mxu0 %v547
  %v549 = vpop.f32.mrf.mxu0
  %v550 = vadd.f32 %v445, %v549
  %v551 = vand.u32 %v54, 4294901760
  %552 = vmatmul.f32.gmra.mxu0 %v551
  %v553 = vpop.f32.mrf.mxu0
  %v554 = vadd.f32 %v451, %v553
  %v555 = vand.u32 %v55, 4294901760
  %556 = vmatmul.f32.gmra.mxu0 %v555
  %v557 = vpop.f32.mrf.mxu0
  %v558 = vadd.f32 %v457, %v557
  %v559 = vand.u32 %v56, 4294901760
  %560 = vmatmul.f32.gmra.mxu0 %v559
  %v561 = vpop.f32.mrf.mxu0
  %v562 = vadd.f32 %v463, %v561
  %v563 = vand.u32 %v57, 4294901760
  %564 = vmatmul.f32.gmra.mxu0 %v563
  %v565 = vpop.f32.mrf.mxu0
  %v566 = vadd.f32 %v469, %v565
  %567 = vdwg.mxu0
  %v568 = vand.u32 %v74, 4294901760
  %569 = vmatpush.msra.mxu0 %v568
  %v570 = vand.u32 %v73, 4294901760
  %571 = vmatpush.msra.mxu0 %v570
  %v572 = vand.u32 %v72, 4294901760
  %573 = vmatpush.msra.mxu0 %v572
  %v574 = vand.u32 %v71, 4294901760
  %575 = vmatpush.msra.mxu0 %v574
  %v576 = vand.u32 %v70, 4294901760
  %577 = vmatpush.msra.mxu0 %v576
  %v578 = vand.u32 %v69, 4294901760
  %579 = vmatpush.msra.mxu0 %v578
  %v580 = vand.u32 %v68, 4294901760
  %581 = vmatpush.msra.mxu0 %v580
  %v582 = vand.u32 %v67, 4294901760
  %583 = vmatpush.msra.mxu0 %v582
  %v584 = vand.u32 %v66, 4294901760
  %585 = vmatpush.msra.mxu0 %v584
  %v586 = vand.u32 %v65, 4294901760
  %587 = vmatpush.msra.mxu0 %v586
  %v588 = vand.u32 %v64, 4294901760
  %589 = vmatpush.msra.mxu0 %v588
  %v590 = vand.u32 %v63, 4294901760
  %591 = vmatpush.msra.mxu0 %v590
  %v592 = vand.u32 %v62, 4294901760
  %593 = vmatpush.msra.mxu0 %v592
  %v594 = vand.u32 %v61, 4294901760
  %595 = vmatpush.msra.mxu0 %v594
  %v596 = vand.u32 %v60, 4294901760
  %597 = vmatpush.msra.mxu0 %v596
  %v598 = vand.u32 %v59, 4294901760
  %599 = vmatpush.msra.mxu0 %v598
  %v600 = vand.u32 %v50, 4294901760
  %601 = vmatmul.f32.gmra.mxu0 %v600
  %v602 = vpop.f32.mrf.mxu0
  %v603 = vadd.f32 %v538, %v602
  %v604 = vand.u32 %v51, 4294901760
  %605 = vmatmul.f32.gmra.mxu0 %v604
  %v606 = vpop.f32.mrf.mxu0
  %v607 = vadd.f32 %v542, %v606
  %v608 = vand.u32 %v52, 4294901760
  %609 = vmatmul.f32.gmra.mxu0 %v608
  %v610 = vpop.f32.mrf.mxu0
  %v611 = vadd.f32 %v546, %v610
  %v612 = vand.u32 %v53, 4294901760
  %613 = vmatmul.f32.gmra.mxu0 %v612
  %v614 = vpop.f32.mrf.mxu0
  %v615 = vadd.f32 %v550, %v614
  %v616 = vand.u32 %v54, 4294901760
  %617 = vmatmul.f32.gmra.mxu0 %v616
  %v618 = vpop.f32.mrf.mxu0
  %v619 = vadd.f32 %v554, %v618
  %v620 = vand.u32 %v55, 4294901760
  %621 = vmatmul.f32.gmra.mxu0 %v620
  %v622 = vpop.f32.mrf.mxu0
  %v623 = vadd.f32 %v558, %v622
  %v624 = vand.u32 %v56, 4294901760
  %625 = vmatmul.f32.gmra.mxu0 %v624
  %v626 = vpop.f32.mrf.mxu0
  %v627 = vadd.f32 %v562, %v626
  %v628 = vand.u32 %v57, 4294901760
  %629 = vmatmul.f32.gmra.mxu0 %v628
  %v630 = vpop.f32.mrf.mxu0
  %v631 = vadd.f32 %v566, %v630
  %632 = vdwg.mxu0
  %v633 = vand.u32 %v49, 4294901760
  %634 = vmatpush.msra.mxu0 %v633
  %v635 = vand.u32 %v48, 4294901760
  %636 = vmatpush.msra.mxu0 %v635
  %v637 = vand.u32 %v47, 4294901760
  %638 = vmatpush.msra.mxu0 %v637
  %v639 = vand.u32 %v46, 4294901760
  %640 = vmatpush.msra.mxu0 %v639
  %v641 = vand.u32 %v45, 4294901760
  %642 = vmatpush.msra.mxu0 %v641
  %v643 = vand.u32 %v44, 4294901760
  %644 = vmatpush.msra.mxu0 %v643
  %v645 = vand.u32 %v43, 4294901760
  %646 = vmatpush.msra.mxu0 %v645
  %v647 = vand.u32 %v42, 4294901760
  %648 = vmatpush.msra.mxu0 %v647
  %v649 = vand.u32 %v41, 4294901760
  %650 = vmatpush.msra.mxu0 %v649
  %v651 = vand.u32 %v40, 4294901760
  %652 = vmatpush.msra.mxu0 %v651
  %v653 = vand.u32 %v39, 4294901760
  %654 = vmatpush.msra.mxu0 %v653
  %v655 = vand.u32 %v38, 4294901760
  %656 = vmatpush.msra.mxu0 %v655
  %v657 = vand.u32 %v37, 4294901760
  %658 = vmatpush.msra.mxu0 %v657
  %v659 = vand.u32 %v36, 4294901760
  %660 = vmatpush.msra.mxu0 %v659
  %v661 = vand.u32 %v35, 4294901760
  %662 = vmatpush.msra.mxu0 %v661
  %v663 = vand.u32 %v34, 4294901760
  %664 = vmatpush.msra.mxu0 %v663
  %v665 = vand.u32 %v26, 4294901760
  %v666 = vsub.f32 %v26, %v665
  %v667 = vand.u32 %v666, 4294901760
  %v668 = vsub.f32 %v666, %v667
  %v669 = vand.u32 %v668, 4294901760
  %670 = vmatmul.f32.gmra.mxu0 %v669
  %v671 = vpop.f32.mrf.mxu0
  %v672 = vadd.f32 %v603, %v671
  %v673 = vand.u32 %v27, 4294901760
  %v674 = vsub.f32 %v27, %v673
  %v675 = vand.u32 %v674, 4294901760
  %v676 = vsub.f32 %v674, %v675
  %v677 = vand.u32 %v676, 4294901760
  %678 = vmatmul.f32.gmra.mxu0 %v677
  %v679 = vpop.f32.mrf.mxu0
  %v680 = vadd.f32 %v607, %v679
  %v681 = vand.u32 %v28, 4294901760
  %v682 = vsub.f32 %v28, %v681
  %v683 = vand.u32 %v682, 4294901760
  %v684 = vsub.f32 %v682, %v683
  %v685 = vand.u32 %v684, 4294901760
  %686 = vmatmul.f32.gmra.mxu0 %v685
  %v687 = vpop.f32.mrf.mxu0
  %v688 = vadd.f32 %v611, %v687
  %v689 = vand.u32 %v29, 4294901760
  %v690 = vsub.f32 %v29, %v689
  %v691 = vand.u32 %v690, 4294901760
  %v692 = vsub.f32 %v690, %v691
  %v693 = vand.u32 %v692, 4294901760
  %694 = vmatmul.f32.gmra.mxu0 %v693
  %v695 = vpop.f32.mrf.mxu0
  %v696 = vadd.f32 %v615, %v695
  %v697 = vand.u32 %v30, 4294901760
  %v698 = vsub.f32 %v30, %v697
  %v699 = vand.u32 %v698, 4294901760
  %v700 = vsub.f32 %v698, %v699
  %v701 = vand.u32 %v700, 4294901760
  %702 = vmatmul.f32.gmra.mxu0 %v701
  %v703 = vpop.f32.mrf.mxu0
  %v704 = vadd.f32 %v619, %v703
  %v705 = vand.u32 %v31, 4294901760
  %v706 = vsub.f32 %v31, %v705
  %v707 = vand.u32 %v706, 4294901760
  %v708 = vsub.f32 %v706, %v707
  %v709 = vand.u32 %v708, 4294901760
  %710 = vmatmul.f32.gmra.mxu0 %v709
  %v711 = vpop.f32.mrf.mxu0
  %v712 = vadd.f32 %v623, %v711
  %v713 = vand.u32 %v32, 4294901760
  %v714 = vsub.f32 %v32, %v713
  %v715 = vand.u32 %v714, 4294901760
  %v716 = vsub.f32 %v714, %v715
  %v717 = vand.u32 %v716, 4294901760
  %718 = vmatmul.f32.gmra.mxu0 %v717
  %v719 = vpop.f32.mrf.mxu0
  %v720 = vadd.f32 %v627, %v719
  %v721 = vand.u32 %v33, 4294901760
  %v722 = vsub.f32 %v33, %v721
  %v723 = vand.u32 %v722, 4294901760
  %v724 = vsub.f32 %v722, %v723
  %v725 = vand.u32 %v724, 4294901760
  %726 = vmatmul.f32.gmra.mxu0 %v725
  %v727 = vpop.f32.mrf.mxu0
  %v728 = vadd.f32 %v631, %v727
  %729 = vdwg.mxu0
  %v730 = vand.u32 %v49, 4294901760
  %v731 = vsub.f32 %v49, %v730
  %v732 = vand.u32 %v731, 4294901760
  %v733 = vsub.f32 %v731, %v732
  %v734 = vand.u32 %v733, 4294901760
  %735 = vmatpush.msra.mxu0 %v734
  %v736 = vand.u32 %v48, 4294901760
  %v737 = vsub.f32 %v48, %v736
  %v738 = vand.u32 %v737, 4294901760
  %v739 = vsub.f32 %v737, %v738
  %v740 = vand.u32 %v739, 4294901760
  %741 = vmatpush.msra.mxu0 %v740
  %v742 = vand.u32 %v47, 4294901760
  %v743 = vsub.f32 %v47, %v742
  %v744 = vand.u32 %v743, 4294901760
  %v745 = vsub.f32 %v743, %v744
  %v746 = vand.u32 %v745, 4294901760
  %747 = vmatpush.msra.mxu0 %v746
  %v748 = vand.u32 %v46, 4294901760
  %v749 = vsub.f32 %v46, %v748
  %v750 = vand.u32 %v749, 4294901760
  %v751 = vsub.f32 %v749, %v750
  %v752 = vand.u32 %v751, 4294901760
  %753 = vmatpush.msra.mxu0 %v752
  %v754 = vand.u32 %v45, 4294901760
  %v755 = vsub.f32 %v45, %v754
  %v756 = vand.u32 %v755, 4294901760
  %v757 = vsub.f32 %v755, %v756
  %v758 = vand.u32 %v757, 4294901760
  %759 = vmatpush.msra.mxu0 %v758
  %v760 = vand.u32 %v44, 4294901760
  %v761 = vsub.f32 %v44, %v760
  %v762 = vand.u32 %v761, 4294901760
  %v763 = vsub.f32 %v761, %v762
  %v764 = vand.u32 %v763, 4294901760
  %765 = vmatpush.msra.mxu0 %v764
  %v766 = vand.u32 %v43, 4294901760
  %v767 = vsub.f32 %v43, %v766
  %v768 = vand.u32 %v767, 4294901760
  %v769 = vsub.f32 %v767, %v768
  %v770 = vand.u32 %v769, 4294901760
  %771 = vmatpush.msra.mxu0 %v770
  %v772 = vand.u32 %v42, 4294901760
  %v773 = vsub.f32 %v42, %v772
  %v774 = vand.u32 %v773, 4294901760
  %v775 = vsub.f32 %v773, %v774
  %v776 = vand.u32 %v775, 4294901760
  %777 = vmatpush.msra.mxu0 %v776
  %v778 = vand.u32 %v41, 4294901760
  %v779 = vsub.f32 %v41, %v778
  %v780 = vand.u32 %v779, 4294901760
  %v781 = vsub.f32 %v779, %v780
  %v782 = vand.u32 %v781, 4294901760
  %783 = vmatpush.msra.mxu0 %v782
  %v784 = vand.u32 %v40, 4294901760
  %v785 = vsub.f32 %v40, %v784
  %v786 = vand.u32 %v785, 4294901760
  %v787 = vsub.f32 %v785, %v786
  %v788 = vand.u32 %v787, 4294901760
  %789 = vmatpush.msra.mxu0 %v788
  %v790 = vand.u32 %v39, 4294901760
  %v791 = vsub.f32 %v39, %v790
  %v792 = vand.u32 %v791, 4294901760
  %v793 = vsub.f32 %v791, %v792
  %v794 = vand.u32 %v793, 4294901760
  %795 = vmatpush.msra.mxu0 %v794
  %v796 = vand.u32 %v38, 4294901760
  %v797 = vsub.f32 %v38, %v796
  %v798 = vand.u32 %v797, 4294901760
  %v799 = vsub.f32 %v797, %v798
  %v800 = vand.u32 %v799, 4294901760
  %801 = vmatpush.msra.mxu0 %v800
  %v802 = vand.u32 %v37, 4294901760
  %v803 = vsub.f32 %v37, %v802
  %v804 = vand.u32 %v803, 4294901760
  %v805 = vsub.f32 %v803, %v804
  %v806 = vand.u32 %v805, 4294901760
  %807 = vmatpush.msra.mxu0 %v806
  %v808 = vand.u32 %v36, 4294901760
  %v809 = vsub.f32 %v36, %v808
  %v810 = vand.u32 %v809, 4294901760
  %v811 = vsub.f32 %v809, %v810
  %v812 = vand.u32 %v811, 4294901760
  %813 = vmatpush.msra.mxu0 %v812
  %v814 = vand.u32 %v35, 4294901760
  %v815 = vsub.f32 %v35, %v814
  %v816 = vand.u32 %v815, 4294901760
  %v817 = vsub.f32 %v815, %v816
  %v818 = vand.u32 %v817, 4294901760
  %819 = vmatpush.msra.mxu0 %v818
  %v820 = vand.u32 %v34, 4294901760
  %v821 = vsub.f32 %v34, %v820
  %v822 = vand.u32 %v821, 4294901760
  %v823 = vsub.f32 %v821, %v822
  %v824 = vand.u32 %v823, 4294901760
  %825 = vmatpush.msra.mxu0 %v824
  %v826 = vand.u32 %v26, 4294901760
  %827 = vmatmul.f32.gmra.mxu0 %v826
  %v828 = vpop.f32.mrf.mxu0
  %v829 = vadd.f32 %v672, %v828
  %v830 = vand.u32 %v27, 4294901760
  %831 = vmatmul.f32.gmra.mxu0 %v830
  %v832 = vpop.f32.mrf.mxu0
  %v833 = vadd.f32 %v680, %v832
  %v834 = vand.u32 %v28, 4294901760
  %835 = vmatmul.f32.gmra.mxu0 %v834
  %v836 = vpop.f32.mrf.mxu0
  %v837 = vadd.f32 %v688, %v836
  %v838 = vand.u32 %v29, 4294901760
  %839 = vmatmul.f32.gmra.mxu0 %v838
  %v840 = vpop.f32.mrf.mxu0
  %v841 = vadd.f32 %v696, %v840
  %v842 = vand.u32 %v30, 4294901760
  %843 = vmatmul.f32.gmra.mxu0 %v842
  %v844 = vpop.f32.mrf.mxu0
  %v845 = vadd.f32 %v704, %v844
  %v846 = vand.u32 %v31, 4294901760
  %847 = vmatmul.f32.gmra.mxu0 %v846
  %v848 = vpop.f32.mrf.mxu0
  %v849 = vadd.f32 %v712, %v848
  %v850 = vand.u32 %v32, 4294901760
  %851 = vmatmul.f32.gmra.mxu0 %v850
  %v852 = vpop.f32.mrf.mxu0
  %v853 = vadd.f32 %v720, %v852
  %v854 = vand.u32 %v33, 4294901760
  %855 = vmatmul.f32.gmra.mxu0 %v854
  %v856 = vpop.f32.mrf.mxu0
  %v857 = vadd.f32 %v728, %v856
  %858 = vdwg.mxu0
  %v859 = vand.u32 %v49, 4294901760
  %v860 = vsub.f32 %v49, %v859
  %861 = vmatpush.msra.mxu0 %v860
  %v862 = vand.u32 %v48, 4294901760
  %v863 = vsub.f32 %v48, %v862
  %864 = vmatpush.msra.mxu0 %v863
  %v865 = vand.u32 %v47, 4294901760
  %v866 = vsub.f32 %v47, %v865
  %867 = vmatpush.msra.mxu0 %v866
  %v868 = vand.u32 %v46, 4294901760
  %v869 = vsub.f32 %v46, %v868
  %870 = vmatpush.msra.mxu0 %v869
  %v871 = vand.u32 %v45, 4294901760
  %v872 = vsub.f32 %v45, %v871
  %873 = vmatpush.msra.mxu0 %v872
  %v874 = vand.u32 %v44, 4294901760
  %v875 = vsub.f32 %v44, %v874
  %876 = vmatpush.msra.mxu0 %v875
  %v877 = vand.u32 %v43, 4294901760
  %v878 = vsub.f32 %v43, %v877
  %879 = vmatpush.msra.mxu0 %v878
  %v880 = vand.u32 %v42, 4294901760
  %v881 = vsub.f32 %v42, %v880
  %882 = vmatpush.msra.mxu0 %v881
  %v883 = vand.u32 %v41, 4294901760
  %v884 = vsub.f32 %v41, %v883
  %885 = vmatpush.msra.mxu0 %v884
  %v886 = vand.u32 %v40, 4294901760
  %v887 = vsub.f32 %v40, %v886
  %888 = vmatpush.msra.mxu0 %v887
  %v889 = vand.u32 %v39, 4294901760
  %v890 = vsub.f32 %v39, %v889
  %891 = vmatpush.msra.mxu0 %v890
  %v892 = vand.u32 %v38, 4294901760
  %v893 = vsub.f32 %v38, %v892
  %894 = vmatpush.msra.mxu0 %v893
  %v895 = vand.u32 %v37, 4294901760
  %v896 = vsub.f32 %v37, %v895
  %897 = vmatpush.msra.mxu0 %v896
  %v898 = vand.u32 %v36, 4294901760
  %v899 = vsub.f32 %v36, %v898
  %900 = vmatpush.msra.mxu0 %v899
  %v901 = vand.u32 %v35, 4294901760
  %v902 = vsub.f32 %v35, %v901
  %903 = vmatpush.msra.mxu0 %v902
  %v904 = vand.u32 %v34, 4294901760
  %v905 = vsub.f32 %v34, %v904
  %906 = vmatpush.msra.mxu0 %v905
  %v907 = vand.u32 %v26, 4294901760
  %v908 = vsub.f32 %v26, %v907
  %909 = vmatmul.f32.gmra.mxu0 %v908
  %v910 = vpop.f32.mrf.mxu0
  %v911 = vadd.f32 %v829, %v910
  %v912 = vand.u32 %v27, 4294901760
  %v913 = vsub.f32 %v27, %v912
  %914 = vmatmul.f32.gmra.mxu0 %v913
  %v915 = vpop.f32.mrf.mxu0
  %v916 = vadd.f32 %v833, %v915
  %v917 = vand.u32 %v28, 4294901760
  %v918 = vsub.f32 %v28, %v917
  %919 = vmatmul.f32.gmra.mxu0 %v918
  %v920 = vpop.f32.mrf.mxu0
  %v921 = vadd.f32 %v837, %v920
  %v922 = vand.u32 %v29, 4294901760
  %v923 = vsub.f32 %v29, %v922
  %924 = vmatmul.f32.gmra.mxu0 %v923
  %v925 = vpop.f32.mrf.mxu0
  %v926 = vadd.f32 %v841, %v925
  %v927 = vand.u32 %v30, 4294901760
  %v928 = vsub.f32 %v30, %v927
  %929 = vmatmul.f32.gmra.mxu0 %v928
  %v930 = vpop.f32.mrf.mxu0
  %v931 = vadd.f32 %v845, %v930
  %v932 = vand.u32 %v31, 4294901760
  %v933 = vsub.f32 %v31, %v932
  %934 = vmatmul.f32.gmra.mxu0 %v933
  %v935 = vpop.f32.mrf.mxu0
  %v936 = vadd.f32 %v849, %v935
  %v937 = vand.u32 %v32, 4294901760
  %v938 = vsub.f32 %v32, %v937
  %939 = vmatmul.f32.gmra.mxu0 %v938
  %v940 = vpop.f32.mrf.mxu0
  %v941 = vadd.f32 %v853, %v940
  %v942 = vand.u32 %v33, 4294901760
  %v943 = vsub.f32 %v33, %v942
  %944 = vmatmul.f32.gmra.mxu0 %v943
  %v945 = vpop.f32.mrf.mxu0
  %v946 = vadd.f32 %v857, %v945
  %947 = vdwg.mxu0
  %v948 = vand.u32 %v49, 4294901760
  %949 = vmatpush.msra.mxu0 %v948
  %v950 = vand.u32 %v48, 4294901760
  %951 = vmatpush.msra.mxu0 %v950
  %v952 = vand.u32 %v47, 4294901760
  %953 = vmatpush.msra.mxu0 %v952
  %v954 = vand.u32 %v46, 4294901760
  %955 = vmatpush.msra.mxu0 %v954
  %v956 = vand.u32 %v45, 4294901760
  %957 = vmatpush.msra.mxu0 %v956
  %v958 = vand.u32 %v44, 4294901760
  %959 = vmatpush.msra.mxu0 %v958
  %v960 = vand.u32 %v43, 4294901760
  %961 = vmatpush.msra.mxu0 %v960
  %v962 = vand.u32 %v42, 4294901760
  %963 = vmatpush.msra.mxu0 %v962
  %v964 = vand.u32 %v41, 4294901760
  %965 = vmatpush.msra.mxu0 %v964
  %v966 = vand.u32 %v40, 4294901760
  %967 = vmatpush.msra.mxu0 %v966
  %v968 = vand.u32 %v39, 4294901760
  %969 = vmatpush.msra.mxu0 %v968
  %v970 = vand.u32 %v38, 4294901760
  %971 = vmatpush.msra.mxu0 %v970
  %v972 = vand.u32 %v37, 4294901760
  %973 = vmatpush.msra.mxu0 %v972
  %v974 = vand.u32 %v36, 4294901760
  %975 = vmatpush.msra.mxu0 %v974
  %v976 = vand.u32 %v35, 4294901760
  %977 = vmatpush.msra.mxu0 %v976
  %v978 = vand.u32 %v34, 4294901760
  %979 = vmatpush.msra.mxu0 %v978
  %v980 = vand.u32 %v26, 4294901760
  %v981 = vsub.f32 %v26, %v980
  %v982 = vand.u32 %v981, 4294901760
  %983 = vmatmul.f32.gmra.mxu0 %v982
  %v984 = vpop.f32.mrf.mxu0
  %v985 = vadd.f32 %v911, %v984
  %v986 = vand.u32 %v27, 4294901760
  %v987 = vsub.f32 %v27, %v986
  %v988 = vand.u32 %v987, 4294901760
  %989 = vmatmul.f32.gmra.mxu0 %v988
  %v990 = vpop.f32.mrf.mxu0
  %v991 = vadd.f32 %v916, %v990
  %v992 = vand.u32 %v28, 4294901760
  %v993 = vsub.f32 %v28, %v992
  %v994 = vand.u32 %v993, 4294901760
  %995 = vmatmul.f32.gmra.mxu0 %v994
  %v996 = vpop.f32.mrf.mxu0
  %v997 = vadd.f32 %v921, %v996
  %v998 = vand.u32 %v29, 4294901760
  %v999 = vsub.f32 %v29, %v998
  %v1000 = vand.u32 %v999, 4294901760
  %1001 = vmatmul.f32.gmra.mxu0 %v1000
  %v1002 = vpop.f32.mrf.mxu0
  %v1003 = vadd.f32 %v926, %v1002
  %v1004 = vand.u32 %v30, 4294901760
  %v1005 = vsub.f32 %v30, %v1004
  %v1006 = vand.u32 %v1005, 4294901760
  %1007 = vmatmul.f32.gmra.mxu0 %v1006
  %v1008 = vpop.f32.mrf.mxu0
  %v1009 = vadd.f32 %v931, %v1008
  %v1010 = vand.u32 %v31, 4294901760
  %v1011 = vsub.f32 %v31, %v1010
  %v1012 = vand.u32 %v1011, 4294901760
  %1013 = vmatmul.f32.gmra.mxu0 %v1012
  %v1014 = vpop.f32.mrf.mxu0
  %v1015 = vadd.f32 %v936, %v1014
  %v1016 = vand.u32 %v32, 4294901760
  %v1017 = vsub.f32 %v32, %v1016
  %v1018 = vand.u32 %v1017, 4294901760
  %1019 = vmatmul.f32.gmra.mxu0 %v1018
  %v1020 = vpop.f32.mrf.mxu0
  %v1021 = vadd.f32 %v941, %v1020
  %v1022 = vand.u32 %v33, 4294901760
  %v1023 = vsub.f32 %v33, %v1022
  %v1024 = vand.u32 %v1023, 4294901760
  %1025 = vmatmul.f32.gmra.mxu0 %v1024
  %v1026 = vpop.f32.mrf.mxu0
  %v1027 = vadd.f32 %v946, %v1026
  %1028 = vdwg.mxu0
  %v1029 = vand.u32 %v49, 4294901760
  %v1030 = vsub.f32 %v49, %v1029
  %v1031 = vand.u32 %v1030, 4294901760
  %1032 = vmatpush.msra.mxu0 %v1031
  %v1033 = vand.u32 %v48, 4294901760
  %v1034 = vsub.f32 %v48, %v1033
  %v1035 = vand.u32 %v1034, 4294901760
  %1036 = vmatpush.msra.mxu0 %v1035
  %v1037 = vand.u32 %v47, 4294901760
  %v1038 = vsub.f32 %v47, %v1037
  %v1039 = vand.u32 %v1038, 4294901760
  %1040 = vmatpush.msra.mxu0 %v1039
  %v1041 = vand.u32 %v46, 4294901760
  %v1042 = vsub.f32 %v46, %v1041
  %v1043 = vand.u32 %v1042, 4294901760
  %1044 = vmatpush.msra.mxu0 %v1043
  %v1045 = vand.u32 %v45, 4294901760
  %v1046 = vsub.f32 %v45, %v1045
  %v1047 = vand.u32 %v1046, 4294901760
  %1048 = vmatpush.msra.mxu0 %v1047
  %v1049 = vand.u32 %v44, 4294901760
  %v1050 = vsub.f32 %v44, %v1049
  %v1051 = vand.u32 %v1050, 4294901760
  %1052 = vmatpush.msra.mxu0 %v1051
  %v1053 = vand.u32 %v43, 4294901760
  %v1054 = vsub.f32 %v43, %v1053
  %v1055 = vand.u32 %v1054, 4294901760
  %1056 = vmatpush.msra.mxu0 %v1055
  %v1057 = vand.u32 %v42, 4294901760
  %v1058 = vsub.f32 %v42, %v1057
  %v1059 = vand.u32 %v1058, 4294901760
  %1060 = vmatpush.msra.mxu0 %v1059
  %v1061 = vand.u32 %v41, 4294901760
  %v1062 = vsub.f32 %v41, %v1061
  %v1063 = vand.u32 %v1062, 4294901760
  %1064 = vmatpush.msra.mxu0 %v1063
  %v1065 = vand.u32 %v40, 4294901760
  %v1066 = vsub.f32 %v40, %v1065
  %v1067 = vand.u32 %v1066, 4294901760
  %1068 = vmatpush.msra.mxu0 %v1067
  %v1069 = vand.u32 %v39, 4294901760
  %v1070 = vsub.f32 %v39, %v1069
  %v1071 = vand.u32 %v1070, 4294901760
  %1072 = vmatpush.msra.mxu0 %v1071
  %v1073 = vand.u32 %v38, 4294901760
  %v1074 = vsub.f32 %v38, %v1073
  %v1075 = vand.u32 %v1074, 4294901760
  %1076 = vmatpush.msra.mxu0 %v1075
  %v1077 = vand.u32 %v37, 4294901760
  %v1078 = vsub.f32 %v37, %v1077
  %v1079 = vand.u32 %v1078, 4294901760
  %1080 = vmatpush.msra.mxu0 %v1079
  %v1081 = vand.u32 %v36, 4294901760
  %v1082 = vsub.f32 %v36, %v1081
  %v1083 = vand.u32 %v1082, 4294901760
  %1084 = vmatpush.msra.mxu0 %v1083
  %v1085 = vand.u32 %v35, 4294901760
  %v1086 = vsub.f32 %v35, %v1085
  %v1087 = vand.u32 %v1086, 4294901760
  %1088 = vmatpush.msra.mxu0 %v1087
  %v1089 = vand.u32 %v34, 4294901760
  %v1090 = vsub.f32 %v34, %v1089
  %v1091 = vand.u32 %v1090, 4294901760
  %1092 = vmatpush.msra.mxu0 %v1091
  %v1093 = vand.u32 %v26, 4294901760
  %1094 = vmatmul.f32.gmra.mxu0 %v1093
  %v1095 = vpop.f32.mrf.mxu0
  %v1096 = vadd.f32 %v985, %v1095
  %v1097 = vand.u32 %v27, 4294901760
  %1098 = vmatmul.f32.gmra.mxu0 %v1097
  %v1099 = vpop.f32.mrf.mxu0
  %v1100 = vadd.f32 %v991, %v1099
  %v1101 = vand.u32 %v28, 4294901760
  %1102 = vmatmul.f32.gmra.mxu0 %v1101
  %v1103 = vpop.f32.mrf.mxu0
  %v1104 = vadd.f32 %v997, %v1103
  %v1105 = vand.u32 %v29, 4294901760
  %1106 = vmatmul.f32.gmra.mxu0 %v1105
  %v1107 = vpop.f32.mrf.mxu0
  %v1108 = vadd.f32 %v1003, %v1107
  %v1109 = vand.u32 %v30, 4294901760
  %1110 = vmatmul.f32.gmra.mxu0 %v1109
  %v1111 = vpop.f32.mrf.mxu0
  %v1112 = vadd.f32 %v1009, %v1111
  %v1113 = vand.u32 %v31, 4294901760
  %1114 = vmatmul.f32.gmra.mxu0 %v1113
  %v1115 = vpop.f32.mrf.mxu0
  %v1116 = vadd.f32 %v1015, %v1115
  %v1117 = vand.u32 %v32, 4294901760
  %1118 = vmatmul.f32.gmra.mxu0 %v1117
  %v1119 = vpop.f32.mrf.mxu0
  %v1120 = vadd.f32 %v1021, %v1119
  %v1121 = vand.u32 %v33, 4294901760
  %1122 = vmatmul.f32.gmra.mxu0 %v1121
  %v1123 = vpop.f32.mrf.mxu0
  %v1124 = vadd.f32 %v1027, %v1123
  %1125 = vdwg.mxu0
  %v1126 = vand.u32 %v49, 4294901760
  %1127 = vmatpush.msra.mxu0 %v1126
  %v1128 = vand.u32 %v48, 4294901760
  %1129 = vmatpush.msra.mxu0 %v1128
  %v1130 = vand.u32 %v47, 4294901760
  %1131 = vmatpush.msra.mxu0 %v1130
  %v1132 = vand.u32 %v46, 4294901760
  %1133 = vmatpush.msra.mxu0 %v1132
  %v1134 = vand.u32 %v45, 4294901760
  %1135 = vmatpush.msra.mxu0 %v1134
  %v1136 = vand.u32 %v44, 4294901760
  %1137 = vmatpush.msra.mxu0 %v1136
  %v1138 = vand.u32 %v43, 4294901760
  %1139 = vmatpush.msra.mxu0 %v1138
  %v1140 = vand.u32 %v42, 4294901760
  %1141 = vmatpush.msra.mxu0 %v1140
  %v1142 = vand.u32 %v41, 4294901760
  %1143 = vmatpush.msra.mxu0 %v1142
  %v1144 = vand.u32 %v40, 4294901760
  %1145 = vmatpush.msra.mxu0 %v1144
  %v1146 = vand.u32 %v39, 4294901760
  %1147 = vmatpush.msra.mxu0 %v1146
  %v1148 = vand.u32 %v38, 4294901760
  %1149 = vmatpush.msra.mxu0 %v1148
  %v1150 = vand.u32 %v37, 4294901760
  %1151 = vmatpush.msra.mxu0 %v1150
  %v1152 = vand.u32 %v36, 4294901760
  %1153 = vmatpush.msra.mxu0 %v1152
  %v1154 = vand.u32 %v35, 4294901760
  %1155 = vmatpush.msra.mxu0 %v1154
  %v1156 = vand.u32 %v34, 4294901760
  %1157 = vmatpush.msra.mxu0 %v1156
  %v1158 = vand.u32 %v26, 4294901760
  %1159 = vmatmul.f32.gmra.mxu0 %v1158
  %v1160 = vpop.f32.mrf.mxu0
  %v1161 = vadd.f32 %v1096, %v1160
  %v1162 = vand.u32 %v27, 4294901760
  %1163 = vmatmul.f32.gmra.mxu0 %v1162
  %v1164 = vpop.f32.mrf.mxu0
  %v1165 = vadd.f32 %v1100, %v1164
  %v1166 = vand.u32 %v28, 4294901760
  %1167 = vmatmul.f32.gmra.mxu0 %v1166
  %v1168 = vpop.f32.mrf.mxu0
  %v1169 = vadd.f32 %v1104, %v1168
  %v1170 = vand.u32 %v29, 4294901760
  %1171 = vmatmul.f32.gmra.mxu0 %v1170
  %v1172 = vpop.f32.mrf.mxu0
  %v1173 = vadd.f32 %v1108, %v1172
  %v1174 = vand.u32 %v30, 4294901760
  %1175 = vmatmul.f32.gmra.mxu0 %v1174
  %v1176 = vpop.f32.mrf.mxu0
  %v1177 = vadd.f32 %v1112, %v1176
  %v1178 = vand.u32 %v31, 4294901760
  %1179 = vmatmul.f32.gmra.mxu0 %v1178
  %v1180 = vpop.f32.mrf.mxu0
  %v1181 = vadd.f32 %v1116, %v1180
  %v1182 = vand.u32 %v32, 4294901760
  %1183 = vmatmul.f32.gmra.mxu0 %v1182
  %v1184 = vpop.f32.mrf.mxu0
  %v1185 = vadd.f32 %v1120, %v1184
  %v1186 = vand.u32 %v33, 4294901760
  %1187 = vmatmul.f32.gmra.mxu0 %v1186
  %v1188 = vpop.f32.mrf.mxu0
  %v1189 = vadd.f32 %v1124, %v1188
  %1190 = vdwg.mxu0
  %v1191 = vld [vmem:[%s0 + $0x2] sm:$0xff]
  %v1192 = vld [vmem:[%s0 + $0xa] sm:$0xff]
  %v1193 = vld [vmem:[%s0 + $0x12] sm:$0xff]
  %v1194 = vld [vmem:[%s0 + $0x1a] sm:$0xff]
  %v1195 = vld [vmem:[%s0 + $0x22] sm:$0xff]
  %v1196 = vld [vmem:[%s0 + $0x2a] sm:$0xff]
  %v1197 = vld [vmem:[%s0 + $0x32] sm:$0xff]
  %v1198 = vld [vmem:[%s0 + $0x3a] sm:$0x1f]
  %s1199 = scalar_lea.vmem %s1, 256
  %v1200 = vld [vmem:[%s1199] sm:$0xff]
  %v1201 = vld [vmem:[%s1199 + $0x8] sm:$0xff]
  %v1202 = vld [vmem:[%s1199 + $0x10] sm:$0xff]
  %v1203 = vld [vmem:[%s1199 + $0x18] sm:$0xff]
  %v1204 = vld [vmem:[%s1199 + $0x20] sm:$0xff]
  %v1205 = vld [vmem:[%s1199 + $0x28] sm:$0xff]
  %v1206 = vld [vmem:[%s1199 + $0x30] sm:$0xff]
  %v1207 = vld [vmem:[%s1199 + $0x38] sm:$0xff]
  %v1208 = vld [vmem:[%s1199 + $0x40] sm:$0xff]
  %v1209 = vld [vmem:[%s1199 + $0x48] sm:$0xff]
  %v1210 = vld [vmem:[%s1199 + $0x50] sm:$0xff]
  %v1211 = vld [vmem:[%s1199 + $0x58] sm:$0xff]
  %v1212 = vld [vmem:[%s1199 + $0x60] sm:$0xff]
  %v1213 = vld [vmem:[%s1199 + $0x68] sm:$0xff]
  %v1214 = vld [vmem:[%s1199 + $0x70] sm:$0xff]
  %v1215 = vld [vmem:[%s1199 + $0x78] sm:$0xff]
  %v1216 = vand.u32 %v1215, 4294901760
  %1217 = vmatpush.msra.mxu0 %v1216
  %v1218 = vand.u32 %v1214, 4294901760
  %1219 = vmatpush.msra.mxu0 %v1218
  %v1220 = vand.u32 %v1213, 4294901760
  %1221 = vmatpush.msra.mxu0 %v1220
  %v1222 = vand.u32 %v1212, 4294901760
  %1223 = vmatpush.msra.mxu0 %v1222
  %v1224 = vand.u32 %v1211, 4294901760
  %1225 = vmatpush.msra.mxu0 %v1224
  %v1226 = vand.u32 %v1210, 4294901760
  %1227 = vmatpush.msra.mxu0 %v1226
  %v1228 = vand.u32 %v1209, 4294901760
  %1229 = vmatpush.msra.mxu0 %v1228
  %v1230 = vand.u32 %v1208, 4294901760
  %1231 = vmatpush.msra.mxu0 %v1230
  %v1232 = vand.u32 %v1207, 4294901760
  %1233 = vmatpush.msra.mxu0 %v1232
  %v1234 = vand.u32 %v1206, 4294901760
  %1235 = vmatpush.msra.mxu0 %v1234
  %v1236 = vand.u32 %v1205, 4294901760
  %1237 = vmatpush.msra.mxu0 %v1236
  %v1238 = vand.u32 %v1204, 4294901760
  %1239 = vmatpush.msra.mxu0 %v1238
  %v1240 = vand.u32 %v1203, 4294901760
  %1241 = vmatpush.msra.mxu0 %v1240
  %v1242 = vand.u32 %v1202, 4294901760
  %1243 = vmatpush.msra.mxu0 %v1242
  %v1244 = vand.u32 %v1201, 4294901760
  %1245 = vmatpush.msra.mxu0 %v1244
  %v1246 = vand.u32 %v1200, 4294901760
  %1247 = vmatpush.msra.mxu0 %v1246
  %v1248 = vand.u32 %v1191, 4294901760
  %v1249 = vsub.f32 %v1191, %v1248
  %v1250 = vand.u32 %v1249, 4294901760
  %v1251 = vsub.f32 %v1249, %v1250
  %v1252 = vand.u32 %v1251, 4294901760
  %1253 = vmatmul.f32.gmra.mxu0 %v1252
  %v1254 = vpop.f32.mrf.mxu0
  %v1255 = vadd.f32 0.0, %v1254
  %v1256 = vand.u32 %v1192, 4294901760
  %v1257 = vsub.f32 %v1192, %v1256
  %v1258 = vand.u32 %v1257, 4294901760
  %v1259 = vsub.f32 %v1257, %v1258
  %v1260 = vand.u32 %v1259, 4294901760
  %1261 = vmatmul.f32.gmra.mxu0 %v1260
  %v1262 = vpop.f32.mrf.mxu0
  %v1263 = vadd.f32 0.0, %v1262
  %v1264 = vand.u32 %v1193, 4294901760
  %v1265 = vsub.f32 %v1193, %v1264
  %v1266 = vand.u32 %v1265, 4294901760
  %v1267 = vsub.f32 %v1265, %v1266
  %v1268 = vand.u32 %v1267, 4294901760
  %1269 = vmatmul.f32.gmra.mxu0 %v1268
  %v1270 = vpop.f32.mrf.mxu0
  %v1271 = vadd.f32 0.0, %v1270
  %v1272 = vand.u32 %v1194, 4294901760
  %v1273 = vsub.f32 %v1194, %v1272
  %v1274 = vand.u32 %v1273, 4294901760
  %v1275 = vsub.f32 %v1273, %v1274
  %v1276 = vand.u32 %v1275, 4294901760
  %1277 = vmatmul.f32.gmra.mxu0 %v1276
  %v1278 = vpop.f32.mrf.mxu0
  %v1279 = vadd.f32 0.0, %v1278
  %v1280 = vand.u32 %v1195, 4294901760
  %v1281 = vsub.f32 %v1195, %v1280
  %v1282 = vand.u32 %v1281, 4294901760
  %v1283 = vsub.f32 %v1281, %v1282
  %v1284 = vand.u32 %v1283, 4294901760
  %1285 = vmatmul.f32.gmra.mxu0 %v1284
  %v1286 = vpop.f32.mrf.mxu0
  %v1287 = vadd.f32 0.0, %v1286
  %v1288 = vand.u32 %v1196, 4294901760
  %v1289 = vsub.f32 %v1196, %v1288
  %v1290 = vand.u32 %v1289, 4294901760
  %v1291 = vsub.f32 %v1289, %v1290
  %v1292 = vand.u32 %v1291, 4294901760
  %1293 = vmatmul.f32.gmra.mxu0 %v1292
  %v1294 = vpop.f32.mrf.mxu0
  %v1295 = vadd.f32 0.0, %v1294
  %v1296 = vand.u32 %v1197, 4294901760
  %v1297 = vsub.f32 %v1197, %v1296
  %v1298 = vand.u32 %v1297, 4294901760
  %v1299 = vsub.f32 %v1297, %v1298
  %v1300 = vand.u32 %v1299, 4294901760
  %1301 = vmatmul.f32.gmra.mxu0 %v1300
  %v1302 = vpop.f32.mrf.mxu0
  %v1303 = vadd.f32 0.0, %v1302
  %v1304 = vand.u32 %v1198, 4294901760
  %v1305 = vsub.f32 %v1198, %v1304
  %v1306 = vand.u32 %v1305, 4294901760
  %v1307 = vsub.f32 %v1305, %v1306
  %v1308 = vand.u32 %v1307, 4294901760
  %1309 = vmatmul.f32.gmra.mxu0 %v1308
  %v1310 = vpop.f32.mrf.mxu0
  %v1311 = vadd.f32 0.0, %v1310
  %1312 = vdwg.mxu0
  %v1313 = vand.u32 %v1215, 4294901760
  %v1314 = vsub.f32 %v1215, %v1313
  %v1315 = vand.u32 %v1314, 4294901760
  %v1316 = vsub.f32 %v1314, %v1315
  %v1317 = vand.u32 %v1316, 4294901760
  %1318 = vmatpush.msra.mxu0 %v1317
  %v1319 = vand.u32 %v1214, 4294901760
  %v1320 = vsub.f32 %v1214, %v1319
  %v1321 = vand.u32 %v1320, 4294901760
  %v1322 = vsub.f32 %v1320, %v1321
  %v1323 = vand.u32 %v1322, 4294901760
  %1324 = vmatpush.msra.mxu0 %v1323
  %v1325 = vand.u32 %v1213, 4294901760
  %v1326 = vsub.f32 %v1213, %v1325
  %v1327 = vand.u32 %v1326, 4294901760
  %v1328 = vsub.f32 %v1326, %v1327
  %v1329 = vand.u32 %v1328, 4294901760
  %1330 = vmatpush.msra.mxu0 %v1329
  %v1331 = vand.u32 %v1212, 4294901760
  %v1332 = vsub.f32 %v1212, %v1331
  %v1333 = vand.u32 %v1332, 4294901760
  %v1334 = vsub.f32 %v1332, %v1333
  %v1335 = vand.u32 %v1334, 4294901760
  %1336 = vmatpush.msra.mxu0 %v1335
  %v1337 = vand.u32 %v1211, 4294901760
  %v1338 = vsub.f32 %v1211, %v1337
  %v1339 = vand.u32 %v1338, 4294901760
  %v1340 = vsub.f32 %v1338, %v1339
  %v1341 = vand.u32 %v1340, 4294901760
  %1342 = vmatpush.msra.mxu0 %v1341
  %v1343 = vand.u32 %v1210, 4294901760
  %v1344 = vsub.f32 %v1210, %v1343
  %v1345 = vand.u32 %v1344, 4294901760
  %v1346 = vsub.f32 %v1344, %v1345
  %v1347 = vand.u32 %v1346, 4294901760
  %1348 = vmatpush.msra.mxu0 %v1347
  %v1349 = vand.u32 %v1209, 4294901760
  %v1350 = vsub.f32 %v1209, %v1349
  %v1351 = vand.u32 %v1350, 4294901760
  %v1352 = vsub.f32 %v1350, %v1351
  %v1353 = vand.u32 %v1352, 4294901760
  %1354 = vmatpush.msra.mxu0 %v1353
  %v1355 = vand.u32 %v1208, 4294901760
  %v1356 = vsub.f32 %v1208, %v1355
  %v1357 = vand.u32 %v1356, 4294901760
  %v1358 = vsub.f32 %v1356, %v1357
  %v1359 = vand.u32 %v1358, 4294901760
  %1360 = vmatpush.msra.mxu0 %v1359
  %v1361 = vand.u32 %v1207, 4294901760
  %v1362 = vsub.f32 %v1207, %v1361
  %v1363 = vand.u32 %v1362, 4294901760
  %v1364 = vsub.f32 %v1362, %v1363
  %v1365 = vand.u32 %v1364, 4294901760
  %1366 = vmatpush.msra.mxu0 %v1365
  %v1367 = vand.u32 %v1206, 4294901760
  %v1368 = vsub.f32 %v1206, %v1367
  %v1369 = vand.u32 %v1368, 4294901760
  %v1370 = vsub.f32 %v1368, %v1369
  %v1371 = vand.u32 %v1370, 4294901760
  %1372 = vmatpush.msra.mxu0 %v1371
  %v1373 = vand.u32 %v1205, 4294901760
  %v1374 = vsub.f32 %v1205, %v1373
  %v1375 = vand.u32 %v1374, 4294901760
  %v1376 = vsub.f32 %v1374, %v1375
  %v1377 = vand.u32 %v1376, 4294901760
  %1378 = vmatpush.msra.mxu0 %v1377
  %v1379 = vand.u32 %v1204, 4294901760
  %v1380 = vsub.f32 %v1204, %v1379
  %v1381 = vand.u32 %v1380, 4294901760
  %v1382 = vsub.f32 %v1380, %v1381
  %v1383 = vand.u32 %v1382, 4294901760
  %1384 = vmatpush.msra.mxu0 %v1383
  %v1385 = vand.u32 %v1203, 4294901760
  %v1386 = vsub.f32 %v1203, %v1385
  %v1387 = vand.u32 %v1386, 4294901760
  %v1388 = vsub.f32 %v1386, %v1387
  %v1389 = vand.u32 %v1388, 4294901760
  %1390 = vmatpush.msra.mxu0 %v1389
  %v1391 = vand.u32 %v1202, 4294901760
  %v1392 = vsub.f32 %v1202, %v1391
  %v1393 = vand.u32 %v1392, 4294901760
  %v1394 = vsub.f32 %v1392, %v1393
  %v1395 = vand.u32 %v1394, 4294901760
  %1396 = vmatpush.msra.mxu0 %v1395
  %v1397 = vand.u32 %v1201, 4294901760
  %v1398 = vsub.f32 %v1201, %v1397
  %v1399 = vand.u32 %v1398, 4294901760
  %v1400 = vsub.f32 %v1398, %v1399
  %v1401 = vand.u32 %v1400, 4294901760
  %1402 = vmatpush.msra.mxu0 %v1401
  %v1403 = vand.u32 %v1200, 4294901760
  %v1404 = vsub.f32 %v1200, %v1403
  %v1405 = vand.u32 %v1404, 4294901760
  %v1406 = vsub.f32 %v1404, %v1405
  %v1407 = vand.u32 %v1406, 4294901760
  %1408 = vmatpush.msra.mxu0 %v1407
  %v1409 = vand.u32 %v1191, 4294901760
  %1410 = vmatmul.f32.gmra.mxu0 %v1409
  %v1411 = vpop.f32.mrf.mxu0
  %v1412 = vadd.f32 %v1255, %v1411
  %v1413 = vand.u32 %v1192, 4294901760
  %1414 = vmatmul.f32.gmra.mxu0 %v1413
  %v1415 = vpop.f32.mrf.mxu0
  %v1416 = vadd.f32 %v1263, %v1415
  %v1417 = vand.u32 %v1193, 4294901760
  %1418 = vmatmul.f32.gmra.mxu0 %v1417
  %v1419 = vpop.f32.mrf.mxu0
  %v1420 = vadd.f32 %v1271, %v1419
  %v1421 = vand.u32 %v1194, 4294901760
  %1422 = vmatmul.f32.gmra.mxu0 %v1421
  %v1423 = vpop.f32.mrf.mxu0
  %v1424 = vadd.f32 %v1279, %v1423
  %v1425 = vand.u32 %v1195, 4294901760
  %1426 = vmatmul.f32.gmra.mxu0 %v1425
  %v1427 = vpop.f32.mrf.mxu0
  %v1428 = vadd.f32 %v1287, %v1427
  %v1429 = vand.u32 %v1196, 4294901760
  %1430 = vmatmul.f32.gmra.mxu0 %v1429
  %v1431 = vpop.f32.mrf.mxu0
  %v1432 = vadd.f32 %v1295, %v1431
  %v1433 = vand.u32 %v1197, 4294901760
  %1434 = vmatmul.f32.gmra.mxu0 %v1433
  %v1435 = vpop.f32.mrf.mxu0
  %v1436 = vadd.f32 %v1303, %v1435
  %v1437 = vand.u32 %v1198, 4294901760
  %1438 = vmatmul.f32.gmra.mxu0 %v1437
  %v1439 = vpop.f32.mrf.mxu0
  %v1440 = vadd.f32 %v1311, %v1439
  %1441 = vdwg.mxu0
  %v1442 = vand.u32 %v1215, 4294901760
  %v1443 = vsub.f32 %v1215, %v1442
  %1444 = vmatpush.msra.mxu0 %v1443
  %v1445 = vand.u32 %v1214, 4294901760
  %v1446 = vsub.f32 %v1214, %v1445
  %1447 = vmatpush.msra.mxu0 %v1446
  %v1448 = vand.u32 %v1213, 4294901760
  %v1449 = vsub.f32 %v1213, %v1448
  %1450 = vmatpush.msra.mxu0 %v1449
  %v1451 = vand.u32 %v1212, 4294901760
  %v1452 = vsub.f32 %v1212, %v1451
  %1453 = vmatpush.msra.mxu0 %v1452
  %v1454 = vand.u32 %v1211, 4294901760
  %v1455 = vsub.f32 %v1211, %v1454
  %1456 = vmatpush.msra.mxu0 %v1455
  %v1457 = vand.u32 %v1210, 4294901760
  %v1458 = vsub.f32 %v1210, %v1457
  %1459 = vmatpush.msra.mxu0 %v1458
  %v1460 = vand.u32 %v1209, 4294901760
  %v1461 = vsub.f32 %v1209, %v1460
  %1462 = vmatpush.msra.mxu0 %v1461
  %v1463 = vand.u32 %v1208, 4294901760
  %v1464 = vsub.f32 %v1208, %v1463
  %1465 = vmatpush.msra.mxu0 %v1464
  %v1466 = vand.u32 %v1207, 4294901760
  %v1467 = vsub.f32 %v1207, %v1466
  %1468 = vmatpush.msra.mxu0 %v1467
  %v1469 = vand.u32 %v1206, 4294901760
  %v1470 = vsub.f32 %v1206, %v1469
  %1471 = vmatpush.msra.mxu0 %v1470
  %v1472 = vand.u32 %v1205, 4294901760
  %v1473 = vsub.f32 %v1205, %v1472
  %1474 = vmatpush.msra.mxu0 %v1473
  %v1475 = vand.u32 %v1204, 4294901760
  %v1476 = vsub.f32 %v1204, %v1475
  %1477 = vmatpush.msra.mxu0 %v1476
  %v1478 = vand.u32 %v1203, 4294901760
  %v1479 = vsub.f32 %v1203, %v1478
  %1480 = vmatpush.msra.mxu0 %v1479
  %v1481 = vand.u32 %v1202, 4294901760
  %v1482 = vsub.f32 %v1202, %v1481
  %1483 = vmatpush.msra.mxu0 %v1482
  %v1484 = vand.u32 %v1201, 4294901760
  %v1485 = vsub.f32 %v1201, %v1484
  %1486 = vmatpush.msra.mxu0 %v1485
  %v1487 = vand.u32 %v1200, 4294901760
  %v1488 = vsub.f32 %v1200, %v1487
  %1489 = vmatpush.msra.mxu0 %v1488
  %v1490 = vand.u32 %v1191, 4294901760
  %v1491 = vsub.f32 %v1191, %v1490
  %1492 = vmatmul.f32.gmra.mxu0 %v1491
  %v1493 = vpop.f32.mrf.mxu0
  %v1494 = vadd.f32 %v1412, %v1493
  %v1495 = vand.u32 %v1192, 4294901760
  %v1496 = vsub.f32 %v1192, %v1495
  %1497 = vmatmul.f32.gmra.mxu0 %v1496
  %v1498 = vpop.f32.mrf.mxu0
  %v1499 = vadd.f32 %v1416, %v1498
  %v1500 = vand.u32 %v1193, 4294901760
  %v1501 = vsub.f32 %v1193, %v1500
  %1502 = vmatmul.f32.gmra.mxu0 %v1501
  %v1503 = vpop.f32.mrf.mxu0
  %v1504 = vadd.f32 %v1420, %v1503
  %v1505 = vand.u32 %v1194, 4294901760
  %v1506 = vsub.f32 %v1194, %v1505
  %1507 = vmatmul.f32.gmra.mxu0 %v1506
  %v1508 = vpop.f32.mrf.mxu0
  %v1509 = vadd.f32 %v1424, %v1508
  %v1510 = vand.u32 %v1195, 4294901760
  %v1511 = vsub.f32 %v1195, %v1510
  %1512 = vmatmul.f32.gmra.mxu0 %v1511
  %v1513 = vpop.f32.mrf.mxu0
  %v1514 = vadd.f32 %v1428, %v1513
  %v1515 = vand.u32 %v1196, 4294901760
  %v1516 = vsub.f32 %v1196, %v1515
  %1517 = vmatmul.f32.gmra.mxu0 %v1516
  %v1518 = vpop.f32.mrf.mxu0
  %v1519 = vadd.f32 %v1432, %v1518
  %v1520 = vand.u32 %v1197, 4294901760
  %v1521 = vsub.f32 %v1197, %v1520
  %1522 = vmatmul.f32.gmra.mxu0 %v1521
  %v1523 = vpop.f32.mrf.mxu0
  %v1524 = vadd.f32 %v1436, %v1523
  %v1525 = vand.u32 %v1198, 4294901760
  %v1526 = vsub.f32 %v1198, %v1525
  %1527 = vmatmul.f32.gmra.mxu0 %v1526
  %v1528 = vpop.f32.mrf.mxu0
  %v1529 = vadd.f32 %v1440, %v1528
  %1530 = vdwg.mxu0
  %v1531 = vand.u32 %v1215, 4294901760
  %1532 = vmatpush.msra.mxu0 %v1531
  %v1533 = vand.u32 %v1214, 4294901760
  %1534 = vmatpush.msra.mxu0 %v1533
  %v1535 = vand.u32 %v1213, 4294901760
  %1536 = vmatpush.msra.mxu0 %v1535
  %v1537 = vand.u32 %v1212, 4294901760
  %1538 = vmatpush.msra.mxu0 %v1537
  %v1539 = vand.u32 %v1211, 4294901760
  %1540 = vmatpush.msra.mxu0 %v1539
  %v1541 = vand.u32 %v1210, 4294901760
  %1542 = vmatpush.msra.mxu0 %v1541
  %v1543 = vand.u32 %v1209, 4294901760
  %1544 = vmatpush.msra.mxu0 %v1543
  %v1545 = vand.u32 %v1208, 4294901760
  %1546 = vmatpush.msra.mxu0 %v1545
  %v1547 = vand.u32 %v1207, 4294901760
  %1548 = vmatpush.msra.mxu0 %v1547
  %v1549 = vand.u32 %v1206, 4294901760
  %1550 = vmatpush.msra.mxu0 %v1549
  %v1551 = vand.u32 %v1205, 4294901760
  %1552 = vmatpush.msra.mxu0 %v1551
  %v1553 = vand.u32 %v1204, 4294901760
  %1554 = vmatpush.msra.mxu0 %v1553
  %v1555 = vand.u32 %v1203, 4294901760
  %1556 = vmatpush.msra.mxu0 %v1555
  %v1557 = vand.u32 %v1202, 4294901760
  %1558 = vmatpush.msra.mxu0 %v1557
  %v1559 = vand.u32 %v1201, 4294901760
  %1560 = vmatpush.msra.mxu0 %v1559
  %v1561 = vand.u32 %v1200, 4294901760
  %1562 = vmatpush.msra.mxu0 %v1561
  %v1563 = vand.u32 %v1191, 4294901760
  %v1564 = vsub.f32 %v1191, %v1563
  %v1565 = vand.u32 %v1564, 4294901760
  %1566 = vmatmul.f32.gmra.mxu0 %v1565
  %v1567 = vpop.f32.mrf.mxu0
  %v1568 = vadd.f32 %v1494, %v1567
  %v1569 = vand.u32 %v1192, 4294901760
  %v1570 = vsub.f32 %v1192, %v1569
  %v1571 = vand.u32 %v1570, 4294901760
  %1572 = vmatmul.f32.gmra.mxu0 %v1571
  %v1573 = vpop.f32.mrf.mxu0
  %v1574 = vadd.f32 %v1499, %v1573
  %v1575 = vand.u32 %v1193, 4294901760
  %v1576 = vsub.f32 %v1193, %v1575
  %v1577 = vand.u32 %v1576, 4294901760
  %1578 = vmatmul.f32.gmra.mxu0 %v1577
  %v1579 = vpop.f32.mrf.mxu0
  %v1580 = vadd.f32 %v1504, %v1579
  %v1581 = vand.u32 %v1194, 4294901760
  %v1582 = vsub.f32 %v1194, %v1581
  %v1583 = vand.u32 %v1582, 4294901760
  %1584 = vmatmul.f32.gmra.mxu0 %v1583
  %v1585 = vpop.f32.mrf.mxu0
  %v1586 = vadd.f32 %v1509, %v1585
  %v1587 = vand.u32 %v1195, 4294901760
  %v1588 = vsub.f32 %v1195, %v1587
  %v1589 = vand.u32 %v1588, 4294901760
  %1590 = vmatmul.f32.gmra.mxu0 %v1589
  %v1591 = vpop.f32.mrf.mxu0
  %v1592 = vadd.f32 %v1514, %v1591
  %v1593 = vand.u32 %v1196, 4294901760
  %v1594 = vsub.f32 %v1196, %v1593
  %v1595 = vand.u32 %v1594, 4294901760
  %1596 = vmatmul.f32.gmra.mxu0 %v1595
  %v1597 = vpop.f32.mrf.mxu0
  %v1598 = vadd.f32 %v1519, %v1597
  %v1599 = vand.u32 %v1197, 4294901760
  %v1600 = vsub.f32 %v1197, %v1599
  %v1601 = vand.u32 %v1600, 4294901760
  %1602 = vmatmul.f32.gmra.mxu0 %v1601
  %v1603 = vpop.f32.mrf.mxu0
  %v1604 = vadd.f32 %v1524, %v1603
  %v1605 = vand.u32 %v1198, 4294901760
  %v1606 = vsub.f32 %v1198, %v1605
  %v1607 = vand.u32 %v1606, 4294901760
  %1608 = vmatmul.f32.gmra.mxu0 %v1607
  %v1609 = vpop.f32.mrf.mxu0
  %v1610 = vadd.f32 %v1529, %v1609
  %1611 = vdwg.mxu0
  %v1612 = vand.u32 %v1215, 4294901760
  %v1613 = vsub.f32 %v1215, %v1612
  %v1614 = vand.u32 %v1613, 4294901760
  %1615 = vmatpush.msra.mxu0 %v1614
  %v1616 = vand.u32 %v1214, 4294901760
  %v1617 = vsub.f32 %v1214, %v1616
  %v1618 = vand.u32 %v1617, 4294901760
  %1619 = vmatpush.msra.mxu0 %v1618
  %v1620 = vand.u32 %v1213, 4294901760
  %v1621 = vsub.f32 %v1213, %v1620
  %v1622 = vand.u32 %v1621, 4294901760
  %1623 = vmatpush.msra.mxu0 %v1622
  %v1624 = vand.u32 %v1212, 4294901760
  %v1625 = vsub.f32 %v1212, %v1624
  %v1626 = vand.u32 %v1625, 4294901760
  %1627 = vmatpush.msra.mxu0 %v1626
  %v1628 = vand.u32 %v1211, 4294901760
  %v1629 = vsub.f32 %v1211, %v1628
  %v1630 = vand.u32 %v1629, 4294901760
  %1631 = vmatpush.msra.mxu0 %v1630
  %v1632 = vand.u32 %v1210, 4294901760
  %v1633 = vsub.f32 %v1210, %v1632
  %v1634 = vand.u32 %v1633, 4294901760
  %1635 = vmatpush.msra.mxu0 %v1634
  %v1636 = vand.u32 %v1209, 4294901760
  %v1637 = vsub.f32 %v1209, %v1636
  %v1638 = vand.u32 %v1637, 4294901760
  %1639 = vmatpush.msra.mxu0 %v1638
  %v1640 = vand.u32 %v1208, 4294901760
  %v1641 = vsub.f32 %v1208, %v1640
  %v1642 = vand.u32 %v1641, 4294901760
  %1643 = vmatpush.msra.mxu0 %v1642
  %v1644 = vand.u32 %v1207, 4294901760
  %v1645 = vsub.f32 %v1207, %v1644
  %v1646 = vand.u32 %v1645, 4294901760
  %1647 = vmatpush.msra.mxu0 %v1646
  %v1648 = vand.u32 %v1206, 4294901760
  %v1649 = vsub.f32 %v1206, %v1648
  %v1650 = vand.u32 %v1649, 4294901760
  %1651 = vmatpush.msra.mxu0 %v1650
  %v1652 = vand.u32 %v1205, 4294901760
  %v1653 = vsub.f32 %v1205, %v1652
  %v1654 = vand.u32 %v1653, 4294901760
  %1655 = vmatpush.msra.mxu0 %v1654
  %v1656 = vand.u32 %v1204, 4294901760
  %v1657 = vsub.f32 %v1204, %v1656
  %v1658 = vand.u32 %v1657, 4294901760
  %1659 = vmatpush.msra.mxu0 %v1658
  %v1660 = vand.u32 %v1203, 4294901760
  %v1661 = vsub.f32 %v1203, %v1660
  %v1662 = vand.u32 %v1661, 4294901760
  %1663 = vmatpush.msra.mxu0 %v1662
  %v1664 = vand.u32 %v1202, 4294901760
  %v1665 = vsub.f32 %v1202, %v1664
  %v1666 = vand.u32 %v1665, 4294901760
  %1667 = vmatpush.msra.mxu0 %v1666
  %v1668 = vand.u32 %v1201, 4294901760
  %v1669 = vsub.f32 %v1201, %v1668
  %v1670 = vand.u32 %v1669, 4294901760
  %1671 = vmatpush.msra.mxu0 %v1670
  %v1672 = vand.u32 %v1200, 4294901760
  %v1673 = vsub.f32 %v1200, %v1672
  %v1674 = vand.u32 %v1673, 4294901760
  %1675 = vmatpush.msra.mxu0 %v1674
  %v1676 = vand.u32 %v1191, 4294901760
  %1677 = vmatmul.f32.gmra.mxu0 %v1676
  %v1678 = vpop.f32.mrf.mxu0
  %v1679 = vadd.f32 %v1568, %v1678
  %v1680 = vand.u32 %v1192, 4294901760
  %1681 = vmatmul.f32.gmra.mxu0 %v1680
  %v1682 = vpop.f32.mrf.mxu0
  %v1683 = vadd.f32 %v1574, %v1682
  %v1684 = vand.u32 %v1193, 4294901760
  %1685 = vmatmul.f32.gmra.mxu0 %v1684
  %v1686 = vpop.f32.mrf.mxu0
  %v1687 = vadd.f32 %v1580, %v1686
  %v1688 = vand.u32 %v1194, 4294901760
  %1689 = vmatmul.f32.gmra.mxu0 %v1688
  %v1690 = vpop.f32.mrf.mxu0
  %v1691 = vadd.f32 %v1586, %v1690
  %v1692 = vand.u32 %v1195, 4294901760
  %1693 = vmatmul.f32.gmra.mxu0 %v1692
  %v1694 = vpop.f32.mrf.mxu0
  %v1695 = vadd.f32 %v1592, %v1694
  %v1696 = vand.u32 %v1196, 4294901760
  %1697 = vmatmul.f32.gmra.mxu0 %v1696
  %v1698 = vpop.f32.mrf.mxu0
  %v1699 = vadd.f32 %v1598, %v1698
  %v1700 = vand.u32 %v1197, 4294901760
  %1701 = vmatmul.f32.gmra.mxu0 %v1700
  %v1702 = vpop.f32.mrf.mxu0
  %v1703 = vadd.f32 %v1604, %v1702
  %v1704 = vand.u32 %v1198, 4294901760
  %1705 = vmatmul.f32.gmra.mxu0 %v1704
  %v1706 = vpop.f32.mrf.mxu0
  %v1707 = vadd.f32 %v1610, %v1706
  %1708 = vdwg.mxu0
  %v1709 = vand.u32 %v1215, 4294901760
  %1710 = vmatpush.msra.mxu0 %v1709
  %v1711 = vand.u32 %v1214, 4294901760
  %1712 = vmatpush.msra.mxu0 %v1711
  %v1713 = vand.u32 %v1213, 4294901760
  %1714 = vmatpush.msra.mxu0 %v1713
  %v1715 = vand.u32 %v1212, 4294901760
  %1716 = vmatpush.msra.mxu0 %v1715
  %v1717 = vand.u32 %v1211, 4294901760
  %1718 = vmatpush.msra.mxu0 %v1717
  %v1719 = vand.u32 %v1210, 4294901760
  %1720 = vmatpush.msra.mxu0 %v1719
  %v1721 = vand.u32 %v1209, 4294901760
  %1722 = vmatpush.msra.mxu0 %v1721
  %v1723 = vand.u32 %v1208, 4294901760
  %1724 = vmatpush.msra.mxu0 %v1723
  %v1725 = vand.u32 %v1207, 4294901760
  %1726 = vmatpush.msra.mxu0 %v1725
  %v1727 = vand.u32 %v1206, 4294901760
  %1728 = vmatpush.msra.mxu0 %v1727
  %v1729 = vand.u32 %v1205, 4294901760
  %1730 = vmatpush.msra.mxu0 %v1729
  %v1731 = vand.u32 %v1204, 4294901760
  %1732 = vmatpush.msra.mxu0 %v1731
  %v1733 = vand.u32 %v1203, 4294901760
  %1734 = vmatpush.msra.mxu0 %v1733
  %v1735 = vand.u32 %v1202, 4294901760
  %1736 = vmatpush.msra.mxu0 %v1735
  %v1737 = vand.u32 %v1201, 4294901760
  %1738 = vmatpush.msra.mxu0 %v1737
  %v1739 = vand.u32 %v1200, 4294901760
  %1740 = vmatpush.msra.mxu0 %v1739
  %v1741 = vand.u32 %v1191, 4294901760
  %1742 = vmatmul.f32.gmra.mxu0 %v1741
  %v1743 = vpop.f32.mrf.mxu0
  %v1744 = vadd.f32 %v1679, %v1743
  %v1745 = vand.u32 %v1192, 4294901760
  %1746 = vmatmul.f32.gmra.mxu0 %v1745
  %v1747 = vpop.f32.mrf.mxu0
  %v1748 = vadd.f32 %v1683, %v1747
  %v1749 = vand.u32 %v1193, 4294901760
  %1750 = vmatmul.f32.gmra.mxu0 %v1749
  %v1751 = vpop.f32.mrf.mxu0
  %v1752 = vadd.f32 %v1687, %v1751
  %v1753 = vand.u32 %v1194, 4294901760
  %1754 = vmatmul.f32.gmra.mxu0 %v1753
  %v1755 = vpop.f32.mrf.mxu0
  %v1756 = vadd.f32 %v1691, %v1755
  %v1757 = vand.u32 %v1195, 4294901760
  %1758 = vmatmul.f32.gmra.mxu0 %v1757
  %v1759 = vpop.f32.mrf.mxu0
  %v1760 = vadd.f32 %v1695, %v1759
  %v1761 = vand.u32 %v1196, 4294901760
  %1762 = vmatmul.f32.gmra.mxu0 %v1761
  %v1763 = vpop.f32.mrf.mxu0
  %v1764 = vadd.f32 %v1699, %v1763
  %v1765 = vand.u32 %v1197, 4294901760
  %1766 = vmatmul.f32.gmra.mxu0 %v1765
  %v1767 = vpop.f32.mrf.mxu0
  %v1768 = vadd.f32 %v1703, %v1767
  %v1769 = vand.u32 %v1198, 4294901760
  %1770 = vmatmul.f32.gmra.mxu0 %v1769
  %v1771 = vpop.f32.mrf.mxu0
  %v1772 = vadd.f32 %v1707, %v1771
  %1773 = vdwg.mxu0
  %v1774 = vadd.f32 %v1161, %v1744
  %v1775 = vadd.f32 %v1165, %v1748
  %v1776 = vadd.f32 %v1169, %v1752
  %v1777 = vadd.f32 %v1173, %v1756
  %v1778 = vadd.f32 %v1177, %v1760
  %v1779 = vadd.f32 %v1181, %v1764
  %v1780 = vadd.f32 %v1185, %v1768
  %v1781 = vadd.f32 %v1189, %v1772
  %v1782 = vld [vmem:[%s0 + $0x3] sm:$0xff]
  %v1783 = vld [vmem:[%s0 + $0xb] sm:$0xff]
  %v1784 = vld [vmem:[%s0 + $0x13] sm:$0xff]
  %v1785 = vld [vmem:[%s0 + $0x1b] sm:$0xff]
  %v1786 = vld [vmem:[%s0 + $0x23] sm:$0xff]
  %v1787 = vld [vmem:[%s0 + $0x2b] sm:$0xff]
  %v1788 = vld [vmem:[%s0 + $0x33] sm:$0xff]
  %v1789 = vld [vmem:[%s0 + $0x3b] sm:$0x1f]
  %s1790 = scalar_lea.vmem %s1, 384
  %v1791 = vld [vmem:[%s1790] sm:$0xff]
  %v1792 = vld [vmem:[%s1790 + $0x8] sm:$0xff]
  %v1793 = vld [vmem:[%s1790 + $0x10] sm:$0xff]
  %v1794 = vld [vmem:[%s1790 + $0x18] sm:$0xff]
  %v1795 = vld [vmem:[%s1790 + $0x20] sm:$0xff]
  %v1796 = vld [vmem:[%s1790 + $0x28] sm:$0xff]
  %v1797 = vld [vmem:[%s1790 + $0x30] sm:$0xff]
  %v1798 = vld [vmem:[%s1790 + $0x38] sm:$0xff]
  %v1799 = vld [vmem:[%s1790 + $0x40] sm:$0xff]
  %v1800 = vld [vmem:[%s1790 + $0x48] sm:$0xff]
  %v1801 = vld [vmem:[%s1790 + $0x50] sm:$0xff]
  %v1802 = vld [vmem:[%s1790 + $0x58] sm:$0xff]
  %v1803 = vld [vmem:[%s1790 + $0x60] sm:$0xff]
  %v1804 = vld [vmem:[%s1790 + $0x68] sm:$0xff]
  %v1805 = vld [vmem:[%s1790 + $0x70] sm:$0xff]
  %v1806 = vld [vmem:[%s1790 + $0x78] sm:$0xff]
  %v1807 = vand.u32 %v1806, 4294901760
  %1808 = vmatpush.msra.mxu0 %v1807
  %v1809 = vand.u32 %v1805, 4294901760
  %1810 = vmatpush.msra.mxu0 %v1809
  %v1811 = vand.u32 %v1804, 4294901760
  %1812 = vmatpush.msra.mxu0 %v1811
  %v1813 = vand.u32 %v1803, 4294901760
  %1814 = vmatpush.msra.mxu0 %v1813
  %v1815 = vand.u32 %v1802, 4294901760
  %1816 = vmatpush.msra.mxu0 %v1815
  %v1817 = vand.u32 %v1801, 4294901760
  %1818 = vmatpush.msra.mxu0 %v1817
  %v1819 = vand.u32 %v1800, 4294901760
  %1820 = vmatpush.msra.mxu0 %v1819
  %v1821 = vand.u32 %v1799, 4294901760
  %1822 = vmatpush.msra.mxu0 %v1821
  %v1823 = vand.u32 %v1798, 4294901760
  %1824 = vmatpush.msra.mxu0 %v1823
  %v1825 = vand.u32 %v1797, 4294901760
  %1826 = vmatpush.msra.mxu0 %v1825
  %v1827 = vand.u32 %v1796, 4294901760
  %1828 = vmatpush.msra.mxu0 %v1827
  %v1829 = vand.u32 %v1795, 4294901760
  %1830 = vmatpush.msra.mxu0 %v1829
  %v1831 = vand.u32 %v1794, 4294901760
  %1832 = vmatpush.msra.mxu0 %v1831
  %v1833 = vand.u32 %v1793, 4294901760
  %1834 = vmatpush.msra.mxu0 %v1833
  %v1835 = vand.u32 %v1792, 4294901760
  %1836 = vmatpush.msra.mxu0 %v1835
  %v1837 = vand.u32 %v1791, 4294901760
  %1838 = vmatpush.msra.mxu0 %v1837
  %v1839 = vand.u32 %v1782, 4294901760
  %v1840 = vsub.f32 %v1782, %v1839
  %v1841 = vand.u32 %v1840, 4294901760
  %v1842 = vsub.f32 %v1840, %v1841
  %v1843 = vand.u32 %v1842, 4294901760
  %1844 = vmatmul.f32.gmra.mxu0 %v1843
  %v1845 = vpop.f32.mrf.mxu0
  %v1846 = vadd.f32 0.0, %v1845
  %v1847 = vand.u32 %v1783, 4294901760
  %v1848 = vsub.f32 %v1783, %v1847
  %v1849 = vand.u32 %v1848, 4294901760
  %v1850 = vsub.f32 %v1848, %v1849
  %v1851 = vand.u32 %v1850, 4294901760
  %1852 = vmatmul.f32.gmra.mxu0 %v1851
  %v1853 = vpop.f32.mrf.mxu0
  %v1854 = vadd.f32 0.0, %v1853
  %v1855 = vand.u32 %v1784, 4294901760
  %v1856 = vsub.f32 %v1784, %v1855
  %v1857 = vand.u32 %v1856, 4294901760
  %v1858 = vsub.f32 %v1856, %v1857
  %v1859 = vand.u32 %v1858, 4294901760
  %1860 = vmatmul.f32.gmra.mxu0 %v1859
  %v1861 = vpop.f32.mrf.mxu0
  %v1862 = vadd.f32 0.0, %v1861
  %v1863 = vand.u32 %v1785, 4294901760
  %v1864 = vsub.f32 %v1785, %v1863
  %v1865 = vand.u32 %v1864, 4294901760
  %v1866 = vsub.f32 %v1864, %v1865
  %v1867 = vand.u32 %v1866, 4294901760
  %1868 = vmatmul.f32.gmra.mxu0 %v1867
  %v1869 = vpop.f32.mrf.mxu0
  %v1870 = vadd.f32 0.0, %v1869
  %v1871 = vand.u32 %v1786, 4294901760
  %v1872 = vsub.f32 %v1786, %v1871
  %v1873 = vand.u32 %v1872, 4294901760
  %v1874 = vsub.f32 %v1872, %v1873
  %v1875 = vand.u32 %v1874, 4294901760
  %1876 = vmatmul.f32.gmra.mxu0 %v1875
  %v1877 = vpop.f32.mrf.mxu0
  %v1878 = vadd.f32 0.0, %v1877
  %v1879 = vand.u32 %v1787, 4294901760
  %v1880 = vsub.f32 %v1787, %v1879
  %v1881 = vand.u32 %v1880, 4294901760
  %v1882 = vsub.f32 %v1880, %v1881
  %v1883 = vand.u32 %v1882, 4294901760
  %1884 = vmatmul.f32.gmra.mxu0 %v1883
  %v1885 = vpop.f32.mrf.mxu0
  %v1886 = vadd.f32 0.0, %v1885
  %v1887 = vand.u32 %v1788, 4294901760
  %v1888 = vsub.f32 %v1788, %v1887
  %v1889 = vand.u32 %v1888, 4294901760
  %v1890 = vsub.f32 %v1888, %v1889
  %v1891 = vand.u32 %v1890, 4294901760
  %1892 = vmatmul.f32.gmra.mxu0 %v1891
  %v1893 = vpop.f32.mrf.mxu0
  %v1894 = vadd.f32 0.0, %v1893
  %v1895 = vand.u32 %v1789, 4294901760
  %v1896 = vsub.f32 %v1789, %v1895
  %v1897 = vand.u32 %v1896, 4294901760
  %v1898 = vsub.f32 %v1896, %v1897
  %v1899 = vand.u32 %v1898, 4294901760
  %1900 = vmatmul.f32.gmra.mxu0 %v1899
  %v1901 = vpop.f32.mrf.mxu0
  %v1902 = vadd.f32 0.0, %v1901
  %1903 = vdwg.mxu0
  %v1904 = vand.u32 %v1806, 4294901760
  %v1905 = vsub.f32 %v1806, %v1904
  %v1906 = vand.u32 %v1905, 4294901760
  %v1907 = vsub.f32 %v1905, %v1906
  %v1908 = vand.u32 %v1907, 4294901760
  %1909 = vmatpush.msra.mxu0 %v1908
  %v1910 = vand.u32 %v1805, 4294901760
  %v1911 = vsub.f32 %v1805, %v1910
  %v1912 = vand.u32 %v1911, 4294901760
  %v1913 = vsub.f32 %v1911, %v1912
  %v1914 = vand.u32 %v1913, 4294901760
  %1915 = vmatpush.msra.mxu0 %v1914
  %v1916 = vand.u32 %v1804, 4294901760
  %v1917 = vsub.f32 %v1804, %v1916
  %v1918 = vand.u32 %v1917, 4294901760
  %v1919 = vsub.f32 %v1917, %v1918
  %v1920 = vand.u32 %v1919, 4294901760
  %1921 = vmatpush.msra.mxu0 %v1920
  %v1922 = vand.u32 %v1803, 4294901760
  %v1923 = vsub.f32 %v1803, %v1922
  %v1924 = vand.u32 %v1923, 4294901760
  %v1925 = vsub.f32 %v1923, %v1924
  %v1926 = vand.u32 %v1925, 4294901760
  %1927 = vmatpush.msra.mxu0 %v1926
  %v1928 = vand.u32 %v1802, 4294901760
  %v1929 = vsub.f32 %v1802, %v1928
  %v1930 = vand.u32 %v1929, 4294901760
  %v1931 = vsub.f32 %v1929, %v1930
  %v1932 = vand.u32 %v1931, 4294901760
  %1933 = vmatpush.msra.mxu0 %v1932
  %v1934 = vand.u32 %v1801, 4294901760
  %v1935 = vsub.f32 %v1801, %v1934
  %v1936 = vand.u32 %v1935, 4294901760
  %v1937 = vsub.f32 %v1935, %v1936
  %v1938 = vand.u32 %v1937, 4294901760
  %1939 = vmatpush.msra.mxu0 %v1938
  %v1940 = vand.u32 %v1800, 4294901760
  %v1941 = vsub.f32 %v1800, %v1940
  %v1942 = vand.u32 %v1941, 4294901760
  %v1943 = vsub.f32 %v1941, %v1942
  %v1944 = vand.u32 %v1943, 4294901760
  %1945 = vmatpush.msra.mxu0 %v1944
  %v1946 = vand.u32 %v1799, 4294901760
  %v1947 = vsub.f32 %v1799, %v1946
  %v1948 = vand.u32 %v1947, 4294901760
  %v1949 = vsub.f32 %v1947, %v1948
  %v1950 = vand.u32 %v1949, 4294901760
  %1951 = vmatpush.msra.mxu0 %v1950
  %v1952 = vand.u32 %v1798, 4294901760
  %v1953 = vsub.f32 %v1798, %v1952
  %v1954 = vand.u32 %v1953, 4294901760
  %v1955 = vsub.f32 %v1953, %v1954
  %v1956 = vand.u32 %v1955, 4294901760
  %1957 = vmatpush.msra.mxu0 %v1956
  %v1958 = vand.u32 %v1797, 4294901760
  %v1959 = vsub.f32 %v1797, %v1958
  %v1960 = vand.u32 %v1959, 4294901760
  %v1961 = vsub.f32 %v1959, %v1960
  %v1962 = vand.u32 %v1961, 4294901760
  %1963 = vmatpush.msra.mxu0 %v1962
  %v1964 = vand.u32 %v1796, 4294901760
  %v1965 = vsub.f32 %v1796, %v1964
  %v1966 = vand.u32 %v1965, 4294901760
  %v1967 = vsub.f32 %v1965, %v1966
  %v1968 = vand.u32 %v1967, 4294901760
  %1969 = vmatpush.msra.mxu0 %v1968
  %v1970 = vand.u32 %v1795, 4294901760
  %v1971 = vsub.f32 %v1795, %v1970
  %v1972 = vand.u32 %v1971, 4294901760
  %v1973 = vsub.f32 %v1971, %v1972
  %v1974 = vand.u32 %v1973, 4294901760
  %1975 = vmatpush.msra.mxu0 %v1974
  %v1976 = vand.u32 %v1794, 4294901760
  %v1977 = vsub.f32 %v1794, %v1976
  %v1978 = vand.u32 %v1977, 4294901760
  %v1979 = vsub.f32 %v1977, %v1978
  %v1980 = vand.u32 %v1979, 4294901760
  %1981 = vmatpush.msra.mxu0 %v1980
  %v1982 = vand.u32 %v1793, 4294901760
  %v1983 = vsub.f32 %v1793, %v1982
  %v1984 = vand.u32 %v1983, 4294901760
  %v1985 = vsub.f32 %v1983, %v1984
  %v1986 = vand.u32 %v1985, 4294901760
  %1987 = vmatpush.msra.mxu0 %v1986
  %v1988 = vand.u32 %v1792, 4294901760
  %v1989 = vsub.f32 %v1792, %v1988
  %v1990 = vand.u32 %v1989, 4294901760
  %v1991 = vsub.f32 %v1989, %v1990
  %v1992 = vand.u32 %v1991, 4294901760
  %1993 = vmatpush.msra.mxu0 %v1992
  %v1994 = vand.u32 %v1791, 4294901760
  %v1995 = vsub.f32 %v1791, %v1994
  %v1996 = vand.u32 %v1995, 4294901760
  %v1997 = vsub.f32 %v1995, %v1996
  %v1998 = vand.u32 %v1997, 4294901760
  %1999 = vmatpush.msra.mxu0 %v1998
  %v2000 = vand.u32 %v1782, 4294901760
  %2001 = vmatmul.f32.gmra.mxu0 %v2000
  %v2002 = vpop.f32.mrf.mxu0
  %v2003 = vadd.f32 %v1846, %v2002
  %v2004 = vand.u32 %v1783, 4294901760
  %2005 = vmatmul.f32.gmra.mxu0 %v2004
  %v2006 = vpop.f32.mrf.mxu0
  %v2007 = vadd.f32 %v1854, %v2006
  %v2008 = vand.u32 %v1784, 4294901760
  %2009 = vmatmul.f32.gmra.mxu0 %v2008
  %v2010 = vpop.f32.mrf.mxu0
  %v2011 = vadd.f32 %v1862, %v2010
  %v2012 = vand.u32 %v1785, 4294901760
  %2013 = vmatmul.f32.gmra.mxu0 %v2012
  %v2014 = vpop.f32.mrf.mxu0
  %v2015 = vadd.f32 %v1870, %v2014
  %v2016 = vand.u32 %v1786, 4294901760
  %2017 = vmatmul.f32.gmra.mxu0 %v2016
  %v2018 = vpop.f32.mrf.mxu0
  %v2019 = vadd.f32 %v1878, %v2018
  %v2020 = vand.u32 %v1787, 4294901760
  %2021 = vmatmul.f32.gmra.mxu0 %v2020
  %v2022 = vpop.f32.mrf.mxu0
  %v2023 = vadd.f32 %v1886, %v2022
  %v2024 = vand.u32 %v1788, 4294901760
  %2025 = vmatmul.f32.gmra.mxu0 %v2024
  %v2026 = vpop.f32.mrf.mxu0
  %v2027 = vadd.f32 %v1894, %v2026
  %v2028 = vand.u32 %v1789, 4294901760
  %2029 = vmatmul.f32.gmra.mxu0 %v2028
  %v2030 = vpop.f32.mrf.mxu0
  %v2031 = vadd.f32 %v1902, %v2030
  %2032 = vdwg.mxu0
  %v2033 = vand.u32 %v1806, 4294901760
  %v2034 = vsub.f32 %v1806, %v2033
  %2035 = vmatpush.msra.mxu0 %v2034
  %v2036 = vand.u32 %v1805, 4294901760
  %v2037 = vsub.f32 %v1805, %v2036
  %2038 = vmatpush.msra.mxu0 %v2037
  %v2039 = vand.u32 %v1804, 4294901760
  %v2040 = vsub.f32 %v1804, %v2039
  %2041 = vmatpush.msra.mxu0 %v2040
  %v2042 = vand.u32 %v1803, 4294901760
  %v2043 = vsub.f32 %v1803, %v2042
  %2044 = vmatpush.msra.mxu0 %v2043
  %v2045 = vand.u32 %v1802, 4294901760
  %v2046 = vsub.f32 %v1802, %v2045
  %2047 = vmatpush.msra.mxu0 %v2046
  %v2048 = vand.u32 %v1801, 4294901760
  %v2049 = vsub.f32 %v1801, %v2048
  %2050 = vmatpush.msra.mxu0 %v2049
  %v2051 = vand.u32 %v1800, 4294901760
  %v2052 = vsub.f32 %v1800, %v2051
  %2053 = vmatpush.msra.mxu0 %v2052
  %v2054 = vand.u32 %v1799, 4294901760
  %v2055 = vsub.f32 %v1799, %v2054
  %2056 = vmatpush.msra.mxu0 %v2055
  %v2057 = vand.u32 %v1798, 4294901760
  %v2058 = vsub.f32 %v1798, %v2057
  %2059 = vmatpush.msra.mxu0 %v2058
  %v2060 = vand.u32 %v1797, 4294901760
  %v2061 = vsub.f32 %v1797, %v2060
  %2062 = vmatpush.msra.mxu0 %v2061
  %v2063 = vand.u32 %v1796, 4294901760
  %v2064 = vsub.f32 %v1796, %v2063
  %2065 = vmatpush.msra.mxu0 %v2064
  %v2066 = vand.u32 %v1795, 4294901760
  %v2067 = vsub.f32 %v1795, %v2066
  %2068 = vmatpush.msra.mxu0 %v2067
  %v2069 = vand.u32 %v1794, 4294901760
  %v2070 = vsub.f32 %v1794, %v2069
  %2071 = vmatpush.msra.mxu0 %v2070
  %v2072 = vand.u32 %v1793, 4294901760
  %v2073 = vsub.f32 %v1793, %v2072
  %2074 = vmatpush.msra.mxu0 %v2073
  %v2075 = vand.u32 %v1792, 4294901760
  %v2076 = vsub.f32 %v1792, %v2075
  %2077 = vmatpush.msra.mxu0 %v2076
  %v2078 = vand.u32 %v1791, 4294901760
  %v2079 = vsub.f32 %v1791, %v2078
  %2080 = vmatpush.msra.mxu0 %v2079
  %v2081 = vand.u32 %v1782, 4294901760
  %v2082 = vsub.f32 %v1782, %v2081
  %2083 = vmatmul.f32.gmra.mxu0 %v2082
  %v2084 = vpop.f32.mrf.mxu0
  %v2085 = vadd.f32 %v2003, %v2084
  %v2086 = vand.u32 %v1783, 4294901760
  %v2087 = vsub.f32 %v1783, %v2086
  %2088 = vmatmul.f32.gmra.mxu0 %v2087
  %v2089 = vpop.f32.mrf.mxu0
  %v2090 = vadd.f32 %v2007, %v2089
  %v2091 = vand.u32 %v1784, 4294901760
  %v2092 = vsub.f32 %v1784, %v2091
  %2093 = vmatmul.f32.gmra.mxu0 %v2092
  %v2094 = vpop.f32.mrf.mxu0
  %v2095 = vadd.f32 %v2011, %v2094
  %v2096 = vand.u32 %v1785, 4294901760
  %v2097 = vsub.f32 %v1785, %v2096
  %2098 = vmatmul.f32.gmra.mxu0 %v2097
  %v2099 = vpop.f32.mrf.mxu0
  %v2100 = vadd.f32 %v2015, %v2099
  %v2101 = vand.u32 %v1786, 4294901760
  %v2102 = vsub.f32 %v1786, %v2101
  %2103 = vmatmul.f32.gmra.mxu0 %v2102
  %v2104 = vpop.f32.mrf.mxu0
  %v2105 = vadd.f32 %v2019, %v2104
  %v2106 = vand.u32 %v1787, 4294901760
  %v2107 = vsub.f32 %v1787, %v2106
  %2108 = vmatmul.f32.gmra.mxu0 %v2107
  %v2109 = vpop.f32.mrf.mxu0
  %v2110 = vadd.f32 %v2023, %v2109
  %v2111 = vand.u32 %v1788, 4294901760
  %v2112 = vsub.f32 %v1788, %v2111
  %2113 = vmatmul.f32.gmra.mxu0 %v2112
  %v2114 = vpop.f32.mrf.mxu0
  %v2115 = vadd.f32 %v2027, %v2114
  %v2116 = vand.u32 %v1789, 4294901760
  %v2117 = vsub.f32 %v1789, %v2116
  %2118 = vmatmul.f32.gmra.mxu0 %v2117
  %v2119 = vpop.f32.mrf.mxu0
  %v2120 = vadd.f32 %v2031, %v2119
  %2121 = vdwg.mxu0
  %v2122 = vand.u32 %v1806, 4294901760
  %2123 = vmatpush.msra.mxu0 %v2122
  %v2124 = vand.u32 %v1805, 4294901760
  %2125 = vmatpush.msra.mxu0 %v2124
  %v2126 = vand.u32 %v1804, 4294901760
  %2127 = vmatpush.msra.mxu0 %v2126
  %v2128 = vand.u32 %v1803, 4294901760
  %2129 = vmatpush.msra.mxu0 %v2128
  %v2130 = vand.u32 %v1802, 4294901760
  %2131 = vmatpush.msra.mxu0 %v2130
  %v2132 = vand.u32 %v1801, 4294901760
  %2133 = vmatpush.msra.mxu0 %v2132
  %v2134 = vand.u32 %v1800, 4294901760
  %2135 = vmatpush.msra.mxu0 %v2134
  %v2136 = vand.u32 %v1799, 4294901760
  %2137 = vmatpush.msra.mxu0 %v2136
  %v2138 = vand.u32 %v1798, 4294901760
  %2139 = vmatpush.msra.mxu0 %v2138
  %v2140 = vand.u32 %v1797, 4294901760
  %2141 = vmatpush.msra.mxu0 %v2140
  %v2142 = vand.u32 %v1796, 4294901760
  %2143 = vmatpush.msra.mxu0 %v2142
  %v2144 = vand.u32 %v1795, 4294901760
  %2145 = vmatpush.msra.mxu0 %v2144
  %v2146 = vand.u32 %v1794, 4294901760
  %2147 = vmatpush.msra.mxu0 %v2146
  %v2148 = vand.u32 %v1793, 4294901760
  %2149 = vmatpush.msra.mxu0 %v2148
  %v2150 = vand.u32 %v1792, 4294901760
  %2151 = vmatpush.msra.mxu0 %v2150
  %v2152 = vand.u32 %v1791, 4294901760
  %2153 = vmatpush.msra.mxu0 %v2152
  %v2154 = vand.u32 %v1782, 4294901760
  %v2155 = vsub.f32 %v1782, %v2154
  %v2156 = vand.u32 %v2155, 4294901760
  %2157 = vmatmul.f32.gmra.mxu0 %v2156
  %v2158 = vpop.f32.mrf.mxu0
  %v2159 = vadd.f32 %v2085, %v2158
  %v2160 = vand.u32 %v1783, 4294901760
  %v2161 = vsub.f32 %v1783, %v2160
  %v2162 = vand.u32 %v2161, 4294901760
  %2163 = vmatmul.f32.gmra.mxu0 %v2162
  %v2164 = vpop.f32.mrf.mxu0
  %v2165 = vadd.f32 %v2090, %v2164
  %v2166 = vand.u32 %v1784, 4294901760
  %v2167 = vsub.f32 %v1784, %v2166
  %v2168 = vand.u32 %v2167, 4294901760
  %2169 = vmatmul.f32.gmra.mxu0 %v2168
  %v2170 = vpop.f32.mrf.mxu0
  %v2171 = vadd.f32 %v2095, %v2170
  %v2172 = vand.u32 %v1785, 4294901760
  %v2173 = vsub.f32 %v1785, %v2172
  %v2174 = vand.u32 %v2173, 4294901760
  %2175 = vmatmul.f32.gmra.mxu0 %v2174
  %v2176 = vpop.f32.mrf.mxu0
  %v2177 = vadd.f32 %v2100, %v2176
  %v2178 = vand.u32 %v1786, 4294901760
  %v2179 = vsub.f32 %v1786, %v2178
  %v2180 = vand.u32 %v2179, 4294901760
  %2181 = vmatmul.f32.gmra.mxu0 %v2180
  %v2182 = vpop.f32.mrf.mxu0
  %v2183 = vadd.f32 %v2105, %v2182
  %v2184 = vand.u32 %v1787, 4294901760
  %v2185 = vsub.f32 %v1787, %v2184
  %v2186 = vand.u32 %v2185, 4294901760
  %2187 = vmatmul.f32.gmra.mxu0 %v2186
  %v2188 = vpop.f32.mrf.mxu0
  %v2189 = vadd.f32 %v2110, %v2188
  %v2190 = vand.u32 %v1788, 4294901760
  %v2191 = vsub.f32 %v1788, %v2190
  %v2192 = vand.u32 %v2191, 4294901760
  %2193 = vmatmul.f32.gmra.mxu0 %v2192
  %v2194 = vpop.f32.mrf.mxu0
  %v2195 = vadd.f32 %v2115, %v2194
  %v2196 = vand.u32 %v1789, 4294901760
  %v2197 = vsub.f32 %v1789, %v2196
  %v2198 = vand.u32 %v2197, 4294901760
  %2199 = vmatmul.f32.gmra.mxu0 %v2198
  %v2200 = vpop.f32.mrf.mxu0
  %v2201 = vadd.f32 %v2120, %v2200
  %2202 = vdwg.mxu0
  %v2203 = vand.u32 %v1806, 4294901760
  %v2204 = vsub.f32 %v1806, %v2203
  %v2205 = vand.u32 %v2204, 4294901760
  %2206 = vmatpush.msra.mxu0 %v2205
  %v2207 = vand.u32 %v1805, 4294901760
  %v2208 = vsub.f32 %v1805, %v2207
  %v2209 = vand.u32 %v2208, 4294901760
  %2210 = vmatpush.msra.mxu0 %v2209
  %v2211 = vand.u32 %v1804, 4294901760
  %v2212 = vsub.f32 %v1804, %v2211
  %v2213 = vand.u32 %v2212, 4294901760
  %2214 = vmatpush.msra.mxu0 %v2213
  %v2215 = vand.u32 %v1803, 4294901760
  %v2216 = vsub.f32 %v1803, %v2215
  %v2217 = vand.u32 %v2216, 4294901760
  %2218 = vmatpush.msra.mxu0 %v2217
  %v2219 = vand.u32 %v1802, 4294901760
  %v2220 = vsub.f32 %v1802, %v2219
  %v2221 = vand.u32 %v2220, 4294901760
  %2222 = vmatpush.msra.mxu0 %v2221
  %v2223 = vand.u32 %v1801, 4294901760
  %v2224 = vsub.f32 %v1801, %v2223
  %v2225 = vand.u32 %v2224, 4294901760
  %2226 = vmatpush.msra.mxu0 %v2225
  %v2227 = vand.u32 %v1800, 4294901760
  %v2228 = vsub.f32 %v1800, %v2227
  %v2229 = vand.u32 %v2228, 4294901760
  %2230 = vmatpush.msra.mxu0 %v2229
  %v2231 = vand.u32 %v1799, 4294901760
  %v2232 = vsub.f32 %v1799, %v2231
  %v2233 = vand.u32 %v2232, 4294901760
  %2234 = vmatpush.msra.mxu0 %v2233
  %v2235 = vand.u32 %v1798, 4294901760
  %v2236 = vsub.f32 %v1798, %v2235
  %v2237 = vand.u32 %v2236, 4294901760
  %2238 = vmatpush.msra.mxu0 %v2237
  %v2239 = vand.u32 %v1797, 4294901760
  %v2240 = vsub.f32 %v1797, %v2239
  %v2241 = vand.u32 %v2240, 4294901760
  %2242 = vmatpush.msra.mxu0 %v2241
  %v2243 = vand.u32 %v1796, 4294901760
  %v2244 = vsub.f32 %v1796, %v2243
  %v2245 = vand.u32 %v2244, 4294901760
  %2246 = vmatpush.msra.mxu0 %v2245
  %v2247 = vand.u32 %v1795, 4294901760
  %v2248 = vsub.f32 %v1795, %v2247
  %v2249 = vand.u32 %v2248, 4294901760
  %2250 = vmatpush.msra.mxu0 %v2249
  %v2251 = vand.u32 %v1794, 4294901760
  %v2252 = vsub.f32 %v1794, %v2251
  %v2253 = vand.u32 %v2252, 4294901760
  %2254 = vmatpush.msra.mxu0 %v2253
  %v2255 = vand.u32 %v1793, 4294901760
  %v2256 = vsub.f32 %v1793, %v2255
  %v2257 = vand.u32 %v2256, 4294901760
  %2258 = vmatpush.msra.mxu0 %v2257
  %v2259 = vand.u32 %v1792, 4294901760
  %v2260 = vsub.f32 %v1792, %v2259
  %v2261 = vand.u32 %v2260, 4294901760
  %2262 = vmatpush.msra.mxu0 %v2261
  %v2263 = vand.u32 %v1791, 4294901760
  %v2264 = vsub.f32 %v1791, %v2263
  %v2265 = vand.u32 %v2264, 4294901760
  %2266 = vmatpush.msra.mxu0 %v2265
  %v2267 = vand.u32 %v1782, 4294901760
  %2268 = vmatmul.f32.gmra.mxu0 %v2267
  %v2269 = vpop.f32.mrf.mxu0
  %v2270 = vadd.f32 %v2159, %v2269
  %v2271 = vand.u32 %v1783, 4294901760
  %2272 = vmatmul.f32.gmra.mxu0 %v2271
  %v2273 = vpop.f32.mrf.mxu0
  %v2274 = vadd.f32 %v2165, %v2273
  %v2275 = vand.u32 %v1784, 4294901760
  %2276 = vmatmul.f32.gmra.mxu0 %v2275
  %v2277 = vpop.f32.mrf.mxu0
  %v2278 = vadd.f32 %v2171, %v2277
  %v2279 = vand.u32 %v1785, 4294901760
  %2280 = vmatmul.f32.gmra.mxu0 %v2279
  %v2281 = vpop.f32.mrf.mxu0
  %v2282 = vadd.f32 %v2177, %v2281
  %v2283 = vand.u32 %v1786, 4294901760
  %2284 = vmatmul.f32.gmra.mxu0 %v2283
  %v2285 = vpop.f32.mrf.mxu0
  %v2286 = vadd.f32 %v2183, %v2285
  %v2287 = vand.u32 %v1787, 4294901760
  %2288 = vmatmul.f32.gmra.mxu0 %v2287
  %v2289 = vpop.f32.mrf.mxu0
  %v2290 = vadd.f32 %v2189, %v2289
  %v2291 = vand.u32 %v1788, 4294901760
  %2292 = vmatmul.f32.gmra.mxu0 %v2291
  %v2293 = vpop.f32.mrf.mxu0
  %v2294 = vadd.f32 %v2195, %v2293
  %v2295 = vand.u32 %v1789, 4294901760
  %2296 = vmatmul.f32.gmra.mxu0 %v2295
  %v2297 = vpop.f32.mrf.mxu0
  %v2298 = vadd.f32 %v2201, %v2297
  %2299 = vdwg.mxu0
  %v2300 = vand.u32 %v1806, 4294901760
  %2301 = vmatpush.msra.mxu0 %v2300
  %v2302 = vand.u32 %v1805, 4294901760
  %2303 = vmatpush.msra.mxu0 %v2302
  %v2304 = vand.u32 %v1804, 4294901760
  %2305 = vmatpush.msra.mxu0 %v2304
  %v2306 = vand.u32 %v1803, 4294901760
  %2307 = vmatpush.msra.mxu0 %v2306
  %v2308 = vand.u32 %v1802, 4294901760
  %2309 = vmatpush.msra.mxu0 %v2308
  %v2310 = vand.u32 %v1801, 4294901760
  %2311 = vmatpush.msra.mxu0 %v2310
  %v2312 = vand.u32 %v1800, 4294901760
  %2313 = vmatpush.msra.mxu0 %v2312
  %v2314 = vand.u32 %v1799, 4294901760
  %2315 = vmatpush.msra.mxu0 %v2314
  %v2316 = vand.u32 %v1798, 4294901760
  %2317 = vmatpush.msra.mxu0 %v2316
  %v2318 = vand.u32 %v1797, 4294901760
  %2319 = vmatpush.msra.mxu0 %v2318
  %v2320 = vand.u32 %v1796, 4294901760
  %2321 = vmatpush.msra.mxu0 %v2320
  %v2322 = vand.u32 %v1795, 4294901760
  %2323 = vmatpush.msra.mxu0 %v2322
  %v2324 = vand.u32 %v1794, 4294901760
  %2325 = vmatpush.msra.mxu0 %v2324
  %v2326 = vand.u32 %v1793, 4294901760
  %2327 = vmatpush.msra.mxu0 %v2326
  %v2328 = vand.u32 %v1792, 4294901760
  %2329 = vmatpush.msra.mxu0 %v2328
  %v2330 = vand.u32 %v1791, 4294901760
  %2331 = vmatpush.msra.mxu0 %v2330
  %v2332 = vand.u32 %v1782, 4294901760
  %2333 = vmatmul.f32.gmra.mxu0 %v2332
  %v2334 = vpop.f32.mrf.mxu0
  %v2335 = vadd.f32 %v2270, %v2334
  %v2336 = vand.u32 %v1783, 4294901760
  %2337 = vmatmul.f32.gmra.mxu0 %v2336
  %v2338 = vpop.f32.mrf.mxu0
  %v2339 = vadd.f32 %v2274, %v2338
  %v2340 = vand.u32 %v1784, 4294901760
  %2341 = vmatmul.f32.gmra.mxu0 %v2340
  %v2342 = vpop.f32.mrf.mxu0
  %v2343 = vadd.f32 %v2278, %v2342
  %v2344 = vand.u32 %v1785, 4294901760
  %2345 = vmatmul.f32.gmra.mxu0 %v2344
  %v2346 = vpop.f32.mrf.mxu0
  %v2347 = vadd.f32 %v2282, %v2346
  %v2348 = vand.u32 %v1786, 4294901760
  %2349 = vmatmul.f32.gmra.mxu0 %v2348
  %v2350 = vpop.f32.mrf.mxu0
  %v2351 = vadd.f32 %v2286, %v2350
  %v2352 = vand.u32 %v1787, 4294901760
  %2353 = vmatmul.f32.gmra.mxu0 %v2352
  %v2354 = vpop.f32.mrf.mxu0
  %v2355 = vadd.f32 %v2290, %v2354
  %v2356 = vand.u32 %v1788, 4294901760
  %2357 = vmatmul.f32.gmra.mxu0 %v2356
  %v2358 = vpop.f32.mrf.mxu0
  %v2359 = vadd.f32 %v2294, %v2358
  %v2360 = vand.u32 %v1789, 4294901760
  %2361 = vmatmul.f32.gmra.mxu0 %v2360
  %v2362 = vpop.f32.mrf.mxu0
  %v2363 = vadd.f32 %v2298, %v2362
  %2364 = vdwg.mxu0
  %v2365 = vadd.f32 %v1774, %v2335
  %v2366 = vadd.f32 %v1775, %v2339
  %v2367 = vadd.f32 %v1776, %v2343
  %v2368 = vadd.f32 %v1777, %v2347
  %v2369 = vadd.f32 %v1778, %v2351
  %v2370 = vadd.f32 %v1779, %v2355
  %v2371 = vadd.f32 %v1780, %v2359
  %v2372 = vadd.f32 %v1781, %v2363
  %v2373 = vld [vmem:[%s2] sm:$0x1]
  %v2375 = vperm.slane %v2373, 0
  %v2377 = vadd.f32 %v2365, %v2375
  %v2378 = vadd.f32 %v2366, %v2375
  %v2379 = vadd.f32 %v2367, %v2375
  %v2380 = vadd.f32 %v2368, %v2375
  %v2381 = vadd.f32 %v2369, %v2375
  %v2382 = vadd.f32 %v2370, %v2375
  %v2383 = vadd.f32 %v2371, %v2375
  %v2384 = vadd.f32 %v2372, %v2375
  %v2385 = vmax.f32 %v2377, 0.0
  %v2386 = vmax.f32 %v2378, 0.0
  %v2387 = vmax.f32 %v2379, 0.0
  %v2388 = vmax.f32 %v2380, 0.0
  %v2389 = vmax.f32 %v2381, 0.0
  %v2390 = vmax.f32 %v2382, 0.0
  %v2391 = vmax.f32 %v2383, 0.0
  %v2392 = vmax.f32 %v2384, 0.0
  %vm2393 = vcmask 982016
  %2394 = vst.msk [vmem:[#allocation2] sm:$0xff] %vm2393, %v2385
  %2395 = vst.msk [vmem:[#allocation2 + $0x8] sm:$0xff] %vm2393, %v2386
  %2396 = vst.msk [vmem:[#allocation2 + $0x10] sm:$0xff] %vm2393, %v2387
  %2397 = vst.msk [vmem:[#allocation2 + $0x18] sm:$0xff] %vm2393, %v2388
  %2398 = vst.msk [vmem:[#allocation2 + $0x20] sm:$0xff] %vm2393, %v2389
  %2399 = vst.msk [vmem:[#allocation2 + $0x28] sm:$0xff] %vm2393, %v2390
  %2400 = vst.msk [vmem:[#allocation2 + $0x30] sm:$0xff] %vm2393, %v2391
  %vm2401 = vcmask 978944
  %2402 = vst.msk [vmem:[#allocation2 + $0x38] sm:$0x1f] %vm2401, %v2392
  %v2403 = vld [vmem:[#allocation2] sm:$0xff]
  %v2404 = vld [vmem:[#allocation2 + $0x8] sm:$0xff]
  %v2405 = vld [vmem:[#allocation2 + $0x10] sm:$0xff]
  %v2406 = vld [vmem:[#allocation2 + $0x18] sm:$0xff]
  %v2407 = vld [vmem:[#allocation2 + $0x20] sm:$0xff]
  %v2408 = vld [vmem:[#allocation2 + $0x28] sm:$0xff]
  %v2409 = vld [vmem:[#allocation2 + $0x30] sm:$0x7f]
  %v2410 = vld [vmem:[%s3] sm:$0xff]
  %v2411 = vld [vmem:[%s3 + $0x8] sm:$0xff]
  %v2412 = vld [vmem:[%s3 + $0x10] sm:$0xff]
  %v2413 = vld [vmem:[%s3 + $0x18] sm:$0xff]
  %v2414 = vld [vmem:[%s3 + $0x20] sm:$0xff]
  %v2415 = vld [vmem:[%s3 + $0x28] sm:$0xff]
  %v2416 = vld [vmem:[%s3 + $0x30] sm:$0xff]
  %v2417 = vld [vmem:[%s3 + $0x38] sm:$0xff]
  %v2418 = vld [vmem:[%s3 + $0x40] sm:$0xff]
  %v2419 = vld [vmem:[%s3 + $0x48] sm:$0xff]
  %v2420 = vld [vmem:[%s3 + $0x50] sm:$0xff]
  %v2421 = vld [vmem:[%s3 + $0x58] sm:$0xff]
  %v2422 = vld [vmem:[%s3 + $0x60] sm:$0xff]
  %v2423 = vld [vmem:[%s3 + $0x68] sm:$0xff]
  %v2424 = vld [vmem:[%s3 + $0x70] sm:$0xff]
  %v2425 = vld [vmem:[#allocation2 + $0x2] sm:$0xff]
  %v2426 = vld [vmem:[#allocation2 + $0xa] sm:$0xff]
  %v2427 = vld [vmem:[#allocation2 + $0x12] sm:$0xff]
  %v2428 = vld [vmem:[#allocation2 + $0x1a] sm:$0xff]
  %v2429 = vld [vmem:[#allocation2 + $0x22] sm:$0xff]
  %v2430 = vld [vmem:[#allocation2 + $0x2a] sm:$0xff]
  %v2431 = vld [vmem:[#allocation2 + $0x32] sm:$0x7f]
  %s2432 = scalar_lea.vmem %s3, 120
  %v2433 = vld [vmem:[%s2432] sm:$0xff]
  %v2434 = vld [vmem:[%s2432 + $0x8] sm:$0xff]
  %v2435 = vld [vmem:[%s2432 + $0x10] sm:$0xff]
  %v2436 = vld [vmem:[%s2432 + $0x18] sm:$0xff]
  %v2437 = vld [vmem:[%s2432 + $0x20] sm:$0xff]
  %v2438 = vld [vmem:[%s2432 + $0x28] sm:$0xff]
  %v2439 = vld [vmem:[%s2432 + $0x30] sm:$0xff]
  %v2440 = vld [vmem:[%s2432 + $0x38] sm:$0xff]
  %v2441 = vld [vmem:[%s2432 + $0x40] sm:$0xff]
  %v2442 = vld [vmem:[%s2432 + $0x48] sm:$0xff]
  %v2443 = vld [vmem:[%s2432 + $0x50] sm:$0xff]
  %v2444 = vld [vmem:[%s2432 + $0x58] sm:$0xff]
  %v2445 = vld [vmem:[%s2432 + $0x60] sm:$0xff]
  %v2446 = vld [vmem:[%s2432 + $0x68] sm:$0xff]
  %v2447 = vld [vmem:[%s2432 + $0x70] sm:$0xff]
  %v2449 = vsel %vm2393, %v2425, 0
  %v2452 = vsel %vm2393, %v2426, 0
  %v2455 = vsel %vm2393, %v2427, 0
  %v2458 = vsel %vm2393, %v2428, 0
  %v2461 = vsel %vm2393, %v2429, 0
  %v2464 = vsel %vm2393, %v2430, 0
  %v2467 = vsel %vm2393, %v2431, 0
  %2469 = vmatpush.msra.mxu0 0.0
  %v2470 = vand.u32 %v2447, 4294901760
  %2471 = vmatpush.msra.mxu0 %v2470
  %v2472 = vand.u32 %v2446, 4294901760
  %2473 = vmatpush.msra.mxu0 %v2472
  %v2474 = vand.u32 %v2445, 4294901760
  %2475 = vmatpush.msra.mxu0 %v2474
  %v2476 = vand.u32 %v2444, 4294901760
  %2477 = vmatpush.msra.mxu0 %v2476
  %v2478 = vand.u32 %v2443, 4294901760
  %2479 = vmatpush.msra.mxu0 %v2478
  %v2480 = vand.u32 %v2442, 4294901760
  %2481 = vmatpush.msra.mxu0 %v2480
  %v2482 = vand.u32 %v2441, 4294901760
  %2483 = vmatpush.msra.mxu0 %v2482
  %v2484 = vand.u32 %v2440, 4294901760
  %2485 = vmatpush.msra.mxu0 %v2484
  %v2486 = vand.u32 %v2439, 4294901760
  %2487 = vmatpush.msra.mxu0 %v2486
  %v2488 = vand.u32 %v2438, 4294901760
  %2489 = vmatpush.msra.mxu0 %v2488
  %v2490 = vand.u32 %v2437, 4294901760
  %2491 = vmatpush.msra.mxu0 %v2490
  %v2492 = vand.u32 %v2436, 4294901760
  %2493 = vmatpush.msra.mxu0 %v2492
  %v2494 = vand.u32 %v2435, 4294901760
  %2495 = vmatpush.msra.mxu0 %v2494
  %v2496 = vand.u32 %v2434, 4294901760
  %2497 = vmatpush.msra.mxu0 %v2496
  %v2498 = vand.u32 %v2433, 4294901760
  %2499 = vmatpush.msra.mxu0 %v2498
  %v2500 = vand.u32 %v2449, 4294901760
  %v2501 = vsub.f32 %v2449, %v2500
  %v2502 = vand.u32 %v2501, 4294901760
  %v2503 = vsub.f32 %v2501, %v2502
  %v2504 = vand.u32 %v2503, 4294901760
  %2505 = vmatmul.f32.gmra.mxu0 %v2504
  %v2506 = vpop.f32.mrf.mxu0
  %v2507 = vadd.f32 0.0, %v2506
  %v2508 = vand.u32 %v2452, 4294901760
  %v2509 = vsub.f32 %v2452, %v2508
  %v2510 = vand.u32 %v2509, 4294901760
  %v2511 = vsub.f32 %v2509, %v2510
  %v2512 = vand.u32 %v2511, 4294901760
  %2513 = vmatmul.f32.gmra.mxu0 %v2512
  %v2514 = vpop.f32.mrf.mxu0
  %v2515 = vadd.f32 0.0, %v2514
  %v2516 = vand.u32 %v2455, 4294901760
  %v2517 = vsub.f32 %v2455, %v2516
  %v2518 = vand.u32 %v2517, 4294901760
  %v2519 = vsub.f32 %v2517, %v2518
  %v2520 = vand.u32 %v2519, 4294901760
  %2521 = vmatmul.f32.gmra.mxu0 %v2520
  %v2522 = vpop.f32.mrf.mxu0
  %v2523 = vadd.f32 0.0, %v2522
  %v2524 = vand.u32 %v2458, 4294901760
  %v2525 = vsub.f32 %v2458, %v2524
  %v2526 = vand.u32 %v2525, 4294901760
  %v2527 = vsub.f32 %v2525, %v2526
  %v2528 = vand.u32 %v2527, 4294901760
  %2529 = vmatmul.f32.gmra.mxu0 %v2528
  %v2530 = vpop.f32.mrf.mxu0
  %v2531 = vadd.f32 0.0, %v2530
  %v2532 = vand.u32 %v2461, 4294901760
  %v2533 = vsub.f32 %v2461, %v2532
  %v2534 = vand.u32 %v2533, 4294901760
  %v2535 = vsub.f32 %v2533, %v2534
  %v2536 = vand.u32 %v2535, 4294901760
  %2537 = vmatmul.f32.gmra.mxu0 %v2536
  %v2538 = vpop.f32.mrf.mxu0
  %v2539 = vadd.f32 0.0, %v2538
  %v2540 = vand.u32 %v2464, 4294901760
  %v2541 = vsub.f32 %v2464, %v2540
  %v2542 = vand.u32 %v2541, 4294901760
  %v2543 = vsub.f32 %v2541, %v2542
  %v2544 = vand.u32 %v2543, 4294901760
  %2545 = vmatmul.f32.gmra.mxu0 %v2544
  %v2546 = vpop.f32.mrf.mxu0
  %v2547 = vadd.f32 0.0, %v2546
  %v2548 = vand.u32 %v2467, 4294901760
  %v2549 = vsub.f32 %v2467, %v2548
  %v2550 = vand.u32 %v2549, 4294901760
  %v2551 = vsub.f32 %v2549, %v2550
  %v2552 = vand.u32 %v2551, 4294901760
  %2553 = vmatmul.f32.gmra.mxu0 %v2552
  %v2554 = vpop.f32.mrf.mxu0
  %v2555 = vadd.f32 0.0, %v2554
  %2556 = vdwg.mxu0
  %2557 = vmatpush.msra.mxu0 0.0
  %v2558 = vand.u32 %v2447, 4294901760
  %v2559 = vsub.f32 %v2447, %v2558
  %v2560 = vand.u32 %v2559, 4294901760
  %v2561 = vsub.f32 %v2559, %v2560
  %v2562 = vand.u32 %v2561, 4294901760
  %2563 = vmatpush.msra.mxu0 %v2562
  %v2564 = vand.u32 %v2446, 4294901760
  %v2565 = vsub.f32 %v2446, %v2564
  %v2566 = vand.u32 %v2565, 4294901760
  %v2567 = vsub.f32 %v2565, %v2566
  %v2568 = vand.u32 %v2567, 4294901760
  %2569 = vmatpush.msra.mxu0 %v2568
  %v2570 = vand.u32 %v2445, 4294901760
  %v2571 = vsub.f32 %v2445, %v2570
  %v2572 = vand.u32 %v2571, 4294901760
  %v2573 = vsub.f32 %v2571, %v2572
  %v2574 = vand.u32 %v2573, 4294901760
  %2575 = vmatpush.msra.mxu0 %v2574
  %v2576 = vand.u32 %v2444, 4294901760
  %v2577 = vsub.f32 %v2444, %v2576
  %v2578 = vand.u32 %v2577, 4294901760
  %v2579 = vsub.f32 %v2577, %v2578
  %v2580 = vand.u32 %v2579, 4294901760
  %2581 = vmatpush.msra.mxu0 %v2580
  %v2582 = vand.u32 %v2443, 4294901760
  %v2583 = vsub.f32 %v2443, %v2582
  %v2584 = vand.u32 %v2583, 4294901760
  %v2585 = vsub.f32 %v2583, %v2584
  %v2586 = vand.u32 %v2585, 4294901760
  %2587 = vmatpush.msra.mxu0 %v2586
  %v2588 = vand.u32 %v2442, 4294901760
  %v2589 = vsub.f32 %v2442, %v2588
  %v2590 = vand.u32 %v2589, 4294901760
  %v2591 = vsub.f32 %v2589, %v2590
  %v2592 = vand.u32 %v2591, 4294901760
  %2593 = vmatpush.msra.mxu0 %v2592
  %v2594 = vand.u32 %v2441, 4294901760
  %v2595 = vsub.f32 %v2441, %v2594
  %v2596 = vand.u32 %v2595, 4294901760
  %v2597 = vsub.f32 %v2595, %v2596
  %v2598 = vand.u32 %v2597, 4294901760
  %2599 = vmatpush.msra.mxu0 %v2598
  %v2600 = vand.u32 %v2440, 4294901760
  %v2601 = vsub.f32 %v2440, %v2600
  %v2602 = vand.u32 %v2601, 4294901760
  %v2603 = vsub.f32 %v2601, %v2602
  %v2604 = vand.u32 %v2603, 4294901760
  %2605 = vmatpush.msra.mxu0 %v2604
  %v2606 = vand.u32 %v2439, 4294901760
  %v2607 = vsub.f32 %v2439, %v2606
  %v2608 = vand.u32 %v2607, 4294901760
  %v2609 = vsub.f32 %v2607, %v2608
  %v2610 = vand.u32 %v2609, 4294901760
  %2611 = vmatpush.msra.mxu0 %v2610
  %v2612 = vand.u32 %v2438, 4294901760
  %v2613 = vsub.f32 %v2438, %v2612
  %v2614 = vand.u32 %v2613, 4294901760
  %v2615 = vsub.f32 %v2613, %v2614
  %v2616 = vand.u32 %v2615, 4294901760
  %2617 = vmatpush.msra.mxu0 %v2616
  %v2618 = vand.u32 %v2437, 4294901760
  %v2619 = vsub.f32 %v2437, %v2618
  %v2620 = vand.u32 %v2619, 4294901760
  %v2621 = vsub.f32 %v2619, %v2620
  %v2622 = vand.u32 %v2621, 4294901760
  %2623 = vmatpush.msra.mxu0 %v2622
  %v2624 = vand.u32 %v2436, 4294901760
  %v2625 = vsub.f32 %v2436, %v2624
  %v2626 = vand.u32 %v2625, 4294901760
  %v2627 = vsub.f32 %v2625, %v2626
  %v2628 = vand.u32 %v2627, 4294901760
  %2629 = vmatpush.msra.mxu0 %v2628
  %v2630 = vand.u32 %v2435, 4294901760
  %v2631 = vsub.f32 %v2435, %v2630
  %v2632 = vand.u32 %v2631, 4294901760
  %v2633 = vsub.f32 %v2631, %v2632
  %v2634 = vand.u32 %v2633, 4294901760
  %2635 = vmatpush.msra.mxu0 %v2634
  %v2636 = vand.u32 %v2434, 4294901760
  %v2637 = vsub.f32 %v2434, %v2636
  %v2638 = vand.u32 %v2637, 4294901760
  %v2639 = vsub.f32 %v2637, %v2638
  %v2640 = vand.u32 %v2639, 4294901760
  %2641 = vmatpush.msra.mxu0 %v2640
  %v2642 = vand.u32 %v2433, 4294901760
  %v2643 = vsub.f32 %v2433, %v2642
  %v2644 = vand.u32 %v2643, 4294901760
  %v2645 = vsub.f32 %v2643, %v2644
  %v2646 = vand.u32 %v2645, 4294901760
  %2647 = vmatpush.msra.mxu0 %v2646
  %v2648 = vand.u32 %v2449, 4294901760
  %2649 = vmatmul.f32.gmra.mxu0 %v2648
  %v2650 = vpop.f32.mrf.mxu0
  %v2651 = vadd.f32 %v2507, %v2650
  %v2652 = vand.u32 %v2452, 4294901760
  %2653 = vmatmul.f32.gmra.mxu0 %v2652
  %v2654 = vpop.f32.mrf.mxu0
  %v2655 = vadd.f32 %v2515, %v2654
  %v2656 = vand.u32 %v2455, 4294901760
  %2657 = vmatmul.f32.gmra.mxu0 %v2656
  %v2658 = vpop.f32.mrf.mxu0
  %v2659 = vadd.f32 %v2523, %v2658
  %v2660 = vand.u32 %v2458, 4294901760
  %2661 = vmatmul.f32.gmra.mxu0 %v2660
  %v2662 = vpop.f32.mrf.mxu0
  %v2663 = vadd.f32 %v2531, %v2662
  %v2664 = vand.u32 %v2461, 4294901760
  %2665 = vmatmul.f32.gmra.mxu0 %v2664
  %v2666 = vpop.f32.mrf.mxu0
  %v2667 = vadd.f32 %v2539, %v2666
  %v2668 = vand.u32 %v2464, 4294901760
  %2669 = vmatmul.f32.gmra.mxu0 %v2668
  %v2670 = vpop.f32.mrf.mxu0
  %v2671 = vadd.f32 %v2547, %v2670
  %v2672 = vand.u32 %v2467, 4294901760
  %2673 = vmatmul.f32.gmra.mxu0 %v2672
  %v2674 = vpop.f32.mrf.mxu0
  %v2675 = vadd.f32 %v2555, %v2674
  %2676 = vdwg.mxu0
  %2677 = vmatpush.msra.mxu0 0.0
  %v2678 = vand.u32 %v2447, 4294901760
  %v2679 = vsub.f32 %v2447, %v2678
  %2680 = vmatpush.msra.mxu0 %v2679
  %v2681 = vand.u32 %v2446, 4294901760
  %v2682 = vsub.f32 %v2446, %v2681
  %2683 = vmatpush.msra.mxu0 %v2682
  %v2684 = vand.u32 %v2445, 4294901760
  %v2685 = vsub.f32 %v2445, %v2684
  %2686 = vmatpush.msra.mxu0 %v2685
  %v2687 = vand.u32 %v2444, 4294901760
  %v2688 = vsub.f32 %v2444, %v2687
  %2689 = vmatpush.msra.mxu0 %v2688
  %v2690 = vand.u32 %v2443, 4294901760
  %v2691 = vsub.f32 %v2443, %v2690
  %2692 = vmatpush.msra.mxu0 %v2691
  %v2693 = vand.u32 %v2442, 4294901760
  %v2694 = vsub.f32 %v2442, %v2693
  %2695 = vmatpush.msra.mxu0 %v2694
  %v2696 = vand.u32 %v2441, 4294901760
  %v2697 = vsub.f32 %v2441, %v2696
  %2698 = vmatpush.msra.mxu0 %v2697
  %v2699 = vand.u32 %v2440, 4294901760
  %v2700 = vsub.f32 %v2440, %v2699
  %2701 = vmatpush.msra.mxu0 %v2700
  %v2702 = vand.u32 %v2439, 4294901760
  %v2703 = vsub.f32 %v2439, %v2702
  %2704 = vmatpush.msra.mxu0 %v2703
  %v2705 = vand.u32 %v2438, 4294901760
  %v2706 = vsub.f32 %v2438, %v2705
  %2707 = vmatpush.msra.mxu0 %v2706
  %v2708 = vand.u32 %v2437, 4294901760
  %v2709 = vsub.f32 %v2437, %v2708
  %2710 = vmatpush.msra.mxu0 %v2709
  %v2711 = vand.u32 %v2436, 4294901760
  %v2712 = vsub.f32 %v2436, %v2711
  %2713 = vmatpush.msra.mxu0 %v2712
  %v2714 = vand.u32 %v2435, 4294901760
  %v2715 = vsub.f32 %v2435, %v2714
  %2716 = vmatpush.msra.mxu0 %v2715
  %v2717 = vand.u32 %v2434, 4294901760
  %v2718 = vsub.f32 %v2434, %v2717
  %2719 = vmatpush.msra.mxu0 %v2718
  %v2720 = vand.u32 %v2433, 4294901760
  %v2721 = vsub.f32 %v2433, %v2720
  %2722 = vmatpush.msra.mxu0 %v2721
  %v2723 = vand.u32 %v2449, 4294901760
  %v2724 = vsub.f32 %v2449, %v2723
  %2725 = vmatmul.f32.gmra.mxu0 %v2724
  %v2726 = vpop.f32.mrf.mxu0
  %v2727 = vadd.f32 %v2651, %v2726
  %v2728 = vand.u32 %v2452, 4294901760
  %v2729 = vsub.f32 %v2452, %v2728
  %2730 = vmatmul.f32.gmra.mxu0 %v2729
  %v2731 = vpop.f32.mrf.mxu0
  %v2732 = vadd.f32 %v2655, %v2731
  %v2733 = vand.u32 %v2455, 4294901760
  %v2734 = vsub.f32 %v2455, %v2733
  %2735 = vmatmul.f32.gmra.mxu0 %v2734
  %v2736 = vpop.f32.mrf.mxu0
  %v2737 = vadd.f32 %v2659, %v2736
  %v2738 = vand.u32 %v2458, 4294901760
  %v2739 = vsub.f32 %v2458, %v2738
  %2740 = vmatmul.f32.gmra.mxu0 %v2739
  %v2741 = vpop.f32.mrf.mxu0
  %v2742 = vadd.f32 %v2663, %v2741
  %v2743 = vand.u32 %v2461, 4294901760
  %v2744 = vsub.f32 %v2461, %v2743
  %2745 = vmatmul.f32.gmra.mxu0 %v2744
  %v2746 = vpop.f32.mrf.mxu0
  %v2747 = vadd.f32 %v2667, %v2746
  %v2748 = vand.u32 %v2464, 4294901760
  %v2749 = vsub.f32 %v2464, %v2748
  %2750 = vmatmul.f32.gmra.mxu0 %v2749
  %v2751 = vpop.f32.mrf.mxu0
  %v2752 = vadd.f32 %v2671, %v2751
  %v2753 = vand.u32 %v2467, 4294901760
  %v2754 = vsub.f32 %v2467, %v2753
  %2755 = vmatmul.f32.gmra.mxu0 %v2754
  %v2756 = vpop.f32.mrf.mxu0
  %v2757 = vadd.f32 %v2675, %v2756
  %2758 = vdwg.mxu0
  %2759 = vmatpush.msra.mxu0 0.0
  %v2760 = vand.u32 %v2447, 4294901760
  %2761 = vmatpush.msra.mxu0 %v2760
  %v2762 = vand.u32 %v2446, 4294901760
  %2763 = vmatpush.msra.mxu0 %v2762
  %v2764 = vand.u32 %v2445, 4294901760
  %2765 = vmatpush.msra.mxu0 %v2764
  %v2766 = vand.u32 %v2444, 4294901760
  %2767 = vmatpush.msra.mxu0 %v2766
  %v2768 = vand.u32 %v2443, 4294901760
  %2769 = vmatpush.msra.mxu0 %v2768
  %v2770 = vand.u32 %v2442, 4294901760
  %2771 = vmatpush.msra.mxu0 %v2770
  %v2772 = vand.u32 %v2441, 4294901760
  %2773 = vmatpush.msra.mxu0 %v2772
  %v2774 = vand.u32 %v2440, 4294901760
  %2775 = vmatpush.msra.mxu0 %v2774
  %v2776 = vand.u32 %v2439, 4294901760
  %2777 = vmatpush.msra.mxu0 %v2776
  %v2778 = vand.u32 %v2438, 4294901760
  %2779 = vmatpush.msra.mxu0 %v2778
  %v2780 = vand.u32 %v2437, 4294901760
  %2781 = vmatpush.msra.mxu0 %v2780
  %v2782 = vand.u32 %v2436, 4294901760
  %2783 = vmatpush.msra.mxu0 %v2782
  %v2784 = vand.u32 %v2435, 4294901760
  %2785 = vmatpush.msra.mxu0 %v2784
  %v2786 = vand.u32 %v2434, 4294901760
  %2787 = vmatpush.msra.mxu0 %v2786
  %v2788 = vand.u32 %v2433, 4294901760
  %2789 = vmatpush.msra.mxu0 %v2788
  %v2790 = vand.u32 %v2449, 4294901760
  %v2791 = vsub.f32 %v2449, %v2790
  %v2792 = vand.u32 %v2791, 4294901760
  %2793 = vmatmul.f32.gmra.mxu0 %v2792
  %v2794 = vpop.f32.mrf.mxu0
  %v2795 = vadd.f32 %v2727, %v2794
  %v2796 = vand.u32 %v2452, 4294901760
  %v2797 = vsub.f32 %v2452, %v2796
  %v2798 = vand.u32 %v2797, 4294901760
  %2799 = vmatmul.f32.gmra.mxu0 %v2798
  %v2800 = vpop.f32.mrf.mxu0
  %v2801 = vadd.f32 %v2732, %v2800
  %v2802 = vand.u32 %v2455, 4294901760
  %v2803 = vsub.f32 %v2455, %v2802
  %v2804 = vand.u32 %v2803, 4294901760
  %2805 = vmatmul.f32.gmra.mxu0 %v2804
  %v2806 = vpop.f32.mrf.mxu0
  %v2807 = vadd.f32 %v2737, %v2806
  %v2808 = vand.u32 %v2458, 4294901760
  %v2809 = vsub.f32 %v2458, %v2808
  %v2810 = vand.u32 %v2809, 4294901760
  %2811 = vmatmul.f32.gmra.mxu0 %v2810
  %v2812 = vpop.f32.mrf.mxu0
  %v2813 = vadd.f32 %v2742, %v2812
  %v2814 = vand.u32 %v2461, 4294901760
  %v2815 = vsub.f32 %v2461, %v2814
  %v2816 = vand.u32 %v2815, 4294901760
  %2817 = vmatmul.f32.gmra.mxu0 %v2816
  %v2818 = vpop.f32.mrf.mxu0
  %v2819 = vadd.f32 %v2747, %v2818
  %v2820 = vand.u32 %v2464, 4294901760
  %v2821 = vsub.f32 %v2464, %v2820
  %v2822 = vand.u32 %v2821, 4294901760
  %2823 = vmatmul.f32.gmra.mxu0 %v2822
  %v2824 = vpop.f32.mrf.mxu0
  %v2825 = vadd.f32 %v2752, %v2824
  %v2826 = vand.u32 %v2467, 4294901760
  %v2827 = vsub.f32 %v2467, %v2826
  %v2828 = vand.u32 %v2827, 4294901760
  %2829 = vmatmul.f32.gmra.mxu0 %v2828
  %v2830 = vpop.f32.mrf.mxu0
  %v2831 = vadd.f32 %v2757, %v2830
  %2832 = vdwg.mxu0
  %2833 = vmatpush.msra.mxu0 0.0
  %v2834 = vand.u32 %v2447, 4294901760
  %v2835 = vsub.f32 %v2447, %v2834
  %v2836 = vand.u32 %v2835, 4294901760
  %2837 = vmatpush.msra.mxu0 %v2836
  %v2838 = vand.u32 %v2446, 4294901760
  %v2839 = vsub.f32 %v2446, %v2838
  %v2840 = vand.u32 %v2839, 4294901760
  %2841 = vmatpush.msra.mxu0 %v2840
  %v2842 = vand.u32 %v2445, 4294901760
  %v2843 = vsub.f32 %v2445, %v2842
  %v2844 = vand.u32 %v2843, 4294901760
  %2845 = vmatpush.msra.mxu0 %v2844
  %v2846 = vand.u32 %v2444, 4294901760
  %v2847 = vsub.f32 %v2444, %v2846
  %v2848 = vand.u32 %v2847, 4294901760
  %2849 = vmatpush.msra.mxu0 %v2848
  %v2850 = vand.u32 %v2443, 4294901760
  %v2851 = vsub.f32 %v2443, %v2850
  %v2852 = vand.u32 %v2851, 4294901760
  %2853 = vmatpush.msra.mxu0 %v2852
  %v2854 = vand.u32 %v2442, 4294901760
  %v2855 = vsub.f32 %v2442, %v2854
  %v2856 = vand.u32 %v2855, 4294901760
  %2857 = vmatpush.msra.mxu0 %v2856
  %v2858 = vand.u32 %v2441, 4294901760
  %v2859 = vsub.f32 %v2441, %v2858
  %v2860 = vand.u32 %v2859, 4294901760
  %2861 = vmatpush.msra.mxu0 %v2860
  %v2862 = vand.u32 %v2440, 4294901760
  %v2863 = vsub.f32 %v2440, %v2862
  %v2864 = vand.u32 %v2863, 4294901760
  %2865 = vmatpush.msra.mxu0 %v2864
  %v2866 = vand.u32 %v2439, 4294901760
  %v2867 = vsub.f32 %v2439, %v2866
  %v2868 = vand.u32 %v2867, 4294901760
  %2869 = vmatpush.msra.mxu0 %v2868
  %v2870 = vand.u32 %v2438, 4294901760
  %v2871 = vsub.f32 %v2438, %v2870
  %v2872 = vand.u32 %v2871, 4294901760
  %2873 = vmatpush.msra.mxu0 %v2872
  %v2874 = vand.u32 %v2437, 4294901760
  %v2875 = vsub.f32 %v2437, %v2874
  %v2876 = vand.u32 %v2875, 4294901760
  %2877 = vmatpush.msra.mxu0 %v2876
  %v2878 = vand.u32 %v2436, 4294901760
  %v2879 = vsub.f32 %v2436, %v2878
  %v2880 = vand.u32 %v2879, 4294901760
  %2881 = vmatpush.msra.mxu0 %v2880
  %v2882 = vand.u32 %v2435, 4294901760
  %v2883 = vsub.f32 %v2435, %v2882
  %v2884 = vand.u32 %v2883, 4294901760
  %2885 = vmatpush.msra.mxu0 %v2884
  %v2886 = vand.u32 %v2434, 4294901760
  %v2887 = vsub.f32 %v2434, %v2886
  %v2888 = vand.u32 %v2887, 4294901760
  %2889 = vmatpush.msra.mxu0 %v2888
  %v2890 = vand.u32 %v2433, 4294901760
  %v2891 = vsub.f32 %v2433, %v2890
  %v2892 = vand.u32 %v2891, 4294901760
  %2893 = vmatpush.msra.mxu0 %v2892
  %v2894 = vand.u32 %v2449, 4294901760
  %2895 = vmatmul.f32.gmra.mxu0 %v2894
  %v2896 = vpop.f32.mrf.mxu0
  %v2897 = vadd.f32 %v2795, %v2896
  %v2898 = vand.u32 %v2452, 4294901760
  %2899 = vmatmul.f32.gmra.mxu0 %v2898
  %v2900 = vpop.f32.mrf.mxu0
  %v2901 = vadd.f32 %v2801, %v2900
  %v2902 = vand.u32 %v2455, 4294901760
  %2903 = vmatmul.f32.gmra.mxu0 %v2902
  %v2904 = vpop.f32.mrf.mxu0
  %v2905 = vadd.f32 %v2807, %v2904
  %v2906 = vand.u32 %v2458, 4294901760
  %2907 = vmatmul.f32.gmra.mxu0 %v2906
  %v2908 = vpop.f32.mrf.mxu0
  %v2909 = vadd.f32 %v2813, %v2908
  %v2910 = vand.u32 %v2461, 4294901760
  %2911 = vmatmul.f32.gmra.mxu0 %v2910
  %v2912 = vpop.f32.mrf.mxu0
  %v2913 = vadd.f32 %v2819, %v2912
  %v2914 = vand.u32 %v2464, 4294901760
  %2915 = vmatmul.f32.gmra.mxu0 %v2914
  %v2916 = vpop.f32.mrf.mxu0
  %v2917 = vadd.f32 %v2825, %v2916
  %v2918 = vand.u32 %v2467, 4294901760
  %2919 = vmatmul.f32.gmra.mxu0 %v2918
  %v2920 = vpop.f32.mrf.mxu0
  %v2921 = vadd.f32 %v2831, %v2920
  %2922 = vdwg.mxu0
  %2923 = vmatpush.msra.mxu0 0.0
  %v2924 = vand.u32 %v2447, 4294901760
  %2925 = vmatpush.msra.mxu0 %v2924
  %v2926 = vand.u32 %v2446, 4294901760
  %2927 = vmatpush.msra.mxu0 %v2926
  %v2928 = vand.u32 %v2445, 4294901760
  %2929 = vmatpush.msra.mxu0 %v2928
  %v2930 = vand.u32 %v2444, 4294901760
  %2931 = vmatpush.msra.mxu0 %v2930
  %v2932 = vand.u32 %v2443, 4294901760
  %2933 = vmatpush.msra.mxu0 %v2932
  %v2934 = vand.u32 %v2442, 4294901760
  %2935 = vmatpush.msra.mxu0 %v2934
  %v2936 = vand.u32 %v2441, 4294901760
  %2937 = vmatpush.msra.mxu0 %v2936
  %v2938 = vand.u32 %v2440, 4294901760
  %2939 = vmatpush.msra.mxu0 %v2938
  %v2940 = vand.u32 %v2439, 4294901760
  %2941 = vmatpush.msra.mxu0 %v2940
  %v2942 = vand.u32 %v2438, 4294901760
  %2943 = vmatpush.msra.mxu0 %v2942
  %v2944 = vand.u32 %v2437, 4294901760
  %2945 = vmatpush.msra.mxu0 %v2944
  %v2946 = vand.u32 %v2436, 4294901760
  %2947 = vmatpush.msra.mxu0 %v2946
  %v2948 = vand.u32 %v2435, 4294901760
  %2949 = vmatpush.msra.mxu0 %v2948
  %v2950 = vand.u32 %v2434, 4294901760
  %2951 = vmatpush.msra.mxu0 %v2950
  %v2952 = vand.u32 %v2433, 4294901760
  %2953 = vmatpush.msra.mxu0 %v2952
  %v2954 = vand.u32 %v2449, 4294901760
  %2955 = vmatmul.f32.gmra.mxu0 %v2954
  %v2956 = vpop.f32.mrf.mxu0
  %v2957 = vadd.f32 %v2897, %v2956
  %v2958 = vand.u32 %v2452, 4294901760
  %2959 = vmatmul.f32.gmra.mxu0 %v2958
  %v2960 = vpop.f32.mrf.mxu0
  %v2961 = vadd.f32 %v2901, %v2960
  %v2962 = vand.u32 %v2455, 4294901760
  %2963 = vmatmul.f32.gmra.mxu0 %v2962
  %v2964 = vpop.f32.mrf.mxu0
  %v2965 = vadd.f32 %v2905, %v2964
  %v2966 = vand.u32 %v2458, 4294901760
  %2967 = vmatmul.f32.gmra.mxu0 %v2966
  %v2968 = vpop.f32.mrf.mxu0
  %v2969 = vadd.f32 %v2909, %v2968
  %v2970 = vand.u32 %v2461, 4294901760
  %2971 = vmatmul.f32.gmra.mxu0 %v2970
  %v2972 = vpop.f32.mrf.mxu0
  %v2973 = vadd.f32 %v2913, %v2972
  %v2974 = vand.u32 %v2464, 4294901760
  %2975 = vmatmul.f32.gmra.mxu0 %v2974
  %v2976 = vpop.f32.mrf.mxu0
  %v2977 = vadd.f32 %v2917, %v2976
  %v2978 = vand.u32 %v2467, 4294901760
  %2979 = vmatmul.f32.gmra.mxu0 %v2978
  %v2980 = vpop.f32.mrf.mxu0
  %v2981 = vadd.f32 %v2921, %v2980
  %2982 = vdwg.mxu0
  %v2984 = vsel %vm2393, %v2403, 0
  %v2987 = vsel %vm2393, %v2404, 0
  %v2990 = vsel %vm2393, %v2405, 0
  %v2993 = vsel %vm2393, %v2406, 0
  %v2996 = vsel %vm2393, %v2407, 0
  %v2999 = vsel %vm2393, %v2408, 0
  %v3002 = vsel %vm2393, %v2409, 0
  %3004 = vmatpush.msra.mxu0 0.0
  %v3005 = vand.u32 %v2424, 4294901760
  %3006 = vmatpush.msra.mxu0 %v3005
  %v3007 = vand.u32 %v2423, 4294901760
  %3008 = vmatpush.msra.mxu0 %v3007
  %v3009 = vand.u32 %v2422, 4294901760
  %3010 = vmatpush.msra.mxu0 %v3009
  %v3011 = vand.u32 %v2421, 4294901760
  %3012 = vmatpush.msra.mxu0 %v3011
  %v3013 = vand.u32 %v2420, 4294901760
  %3014 = vmatpush.msra.mxu0 %v3013
  %v3015 = vand.u32 %v2419, 4294901760
  %3016 = vmatpush.msra.mxu0 %v3015
  %v3017 = vand.u32 %v2418, 4294901760
  %3018 = vmatpush.msra.mxu0 %v3017
  %v3019 = vand.u32 %v2417, 4294901760
  %3020 = vmatpush.msra.mxu0 %v3019
  %v3021 = vand.u32 %v2416, 4294901760
  %3022 = vmatpush.msra.mxu0 %v3021
  %v3023 = vand.u32 %v2415, 4294901760
  %3024 = vmatpush.msra.mxu0 %v3023
  %v3025 = vand.u32 %v2414, 4294901760
  %3026 = vmatpush.msra.mxu0 %v3025
  %v3027 = vand.u32 %v2413, 4294901760
  %3028 = vmatpush.msra.mxu0 %v3027
  %v3029 = vand.u32 %v2412, 4294901760
  %3030 = vmatpush.msra.mxu0 %v3029
  %v3031 = vand.u32 %v2411, 4294901760
  %3032 = vmatpush.msra.mxu0 %v3031
  %v3033 = vand.u32 %v2410, 4294901760
  %3034 = vmatpush.msra.mxu0 %v3033
  %v3035 = vand.u32 %v2984, 4294901760
  %v3036 = vsub.f32 %v2984, %v3035
  %v3037 = vand.u32 %v3036, 4294901760
  %v3038 = vsub.f32 %v3036, %v3037
  %v3039 = vand.u32 %v3038, 4294901760
  %3040 = vmatmul.f32.gmra.mxu0 %v3039
  %v3041 = vpop.f32.mrf.mxu0
  %v3042 = vadd.f32 %v2957, %v3041
  %v3043 = vand.u32 %v2987, 4294901760
  %v3044 = vsub.f32 %v2987, %v3043
  %v3045 = vand.u32 %v3044, 4294901760
  %v3046 = vsub.f32 %v3044, %v3045
  %v3047 = vand.u32 %v3046, 4294901760
  %3048 = vmatmul.f32.gmra.mxu0 %v3047
  %v3049 = vpop.f32.mrf.mxu0
  %v3050 = vadd.f32 %v2961, %v3049
  %v3051 = vand.u32 %v2990, 4294901760
  %v3052 = vsub.f32 %v2990, %v3051
  %v3053 = vand.u32 %v3052, 4294901760
  %v3054 = vsub.f32 %v3052, %v3053
  %v3055 = vand.u32 %v3054, 4294901760
  %3056 = vmatmul.f32.gmra.mxu0 %v3055
  %v3057 = vpop.f32.mrf.mxu0
  %v3058 = vadd.f32 %v2965, %v3057
  %v3059 = vand.u32 %v2993, 4294901760
  %v3060 = vsub.f32 %v2993, %v3059
  %v3061 = vand.u32 %v3060, 4294901760
  %v3062 = vsub.f32 %v3060, %v3061
  %v3063 = vand.u32 %v3062, 4294901760
  %3064 = vmatmul.f32.gmra.mxu0 %v3063
  %v3065 = vpop.f32.mrf.mxu0
  %v3066 = vadd.f32 %v2969, %v3065
  %v3067 = vand.u32 %v2996, 4294901760
  %v3068 = vsub.f32 %v2996, %v3067
  %v3069 = vand.u32 %v3068, 4294901760
  %v3070 = vsub.f32 %v3068, %v3069
  %v3071 = vand.u32 %v3070, 4294901760
  %3072 = vmatmul.f32.gmra.mxu0 %v3071
  %v3073 = vpop.f32.mrf.mxu0
  %v3074 = vadd.f32 %v2973, %v3073
  %v3075 = vand.u32 %v2999, 4294901760
  %v3076 = vsub.f32 %v2999, %v3075
  %v3077 = vand.u32 %v3076, 4294901760
  %v3078 = vsub.f32 %v3076, %v3077
  %v3079 = vand.u32 %v3078, 4294901760
  %3080 = vmatmul.f32.gmra.mxu0 %v3079
  %v3081 = vpop.f32.mrf.mxu0
  %v3082 = vadd.f32 %v2977, %v3081
  %v3083 = vand.u32 %v3002, 4294901760
  %v3084 = vsub.f32 %v3002, %v3083
  %v3085 = vand.u32 %v3084, 4294901760
  %v3086 = vsub.f32 %v3084, %v3085
  %v3087 = vand.u32 %v3086, 4294901760
  %3088 = vmatmul.f32.gmra.mxu0 %v3087
  %v3089 = vpop.f32.mrf.mxu0
  %v3090 = vadd.f32 %v2981, %v3089
  %3091 = vdwg.mxu0
  %3092 = vmatpush.msra.mxu0 0.0
  %v3093 = vand.u32 %v2424, 4294901760
  %v3094 = vsub.f32 %v2424, %v3093
  %v3095 = vand.u32 %v3094, 4294901760
  %v3096 = vsub.f32 %v3094, %v3095
  %v3097 = vand.u32 %v3096, 4294901760
  %3098 = vmatpush.msra.mxu0 %v3097
  %v3099 = vand.u32 %v2423, 4294901760
  %v3100 = vsub.f32 %v2423, %v3099
  %v3101 = vand.u32 %v3100, 4294901760
  %v3102 = vsub.f32 %v3100, %v3101
  %v3103 = vand.u32 %v3102, 4294901760
  %3104 = vmatpush.msra.mxu0 %v3103
  %v3105 = vand.u32 %v2422, 4294901760
  %v3106 = vsub.f32 %v2422, %v3105
  %v3107 = vand.u32 %v3106, 4294901760
  %v3108 = vsub.f32 %v3106, %v3107
  %v3109 = vand.u32 %v3108, 4294901760
  %3110 = vmatpush.msra.mxu0 %v3109
  %v3111 = vand.u32 %v2421, 4294901760
  %v3112 = vsub.f32 %v2421, %v3111
  %v3113 = vand.u32 %v3112, 4294901760
  %v3114 = vsub.f32 %v3112, %v3113
  %v3115 = vand.u32 %v3114, 4294901760
  %3116 = vmatpush.msra.mxu0 %v3115
  %v3117 = vand.u32 %v2420, 4294901760
  %v3118 = vsub.f32 %v2420, %v3117
  %v3119 = vand.u32 %v3118, 4294901760
  %v3120 = vsub.f32 %v3118, %v3119
  %v3121 = vand.u32 %v3120, 4294901760
  %3122 = vmatpush.msra.mxu0 %v3121
  %v3123 = vand.u32 %v2419, 4294901760
  %v3124 = vsub.f32 %v2419, %v3123
  %v3125 = vand.u32 %v3124, 4294901760
  %v3126 = vsub.f32 %v3124, %v3125
  %v3127 = vand.u32 %v3126, 4294901760
  %3128 = vmatpush.msra.mxu0 %v3127
  %v3129 = vand.u32 %v2418, 4294901760
  %v3130 = vsub.f32 %v2418, %v3129
  %v3131 = vand.u32 %v3130, 4294901760
  %v3132 = vsub.f32 %v3130, %v3131
  %v3133 = vand.u32 %v3132, 4294901760
  %3134 = vmatpush.msra.mxu0 %v3133
  %v3135 = vand.u32 %v2417, 4294901760
  %v3136 = vsub.f32 %v2417, %v3135
  %v3137 = vand.u32 %v3136, 4294901760
  %v3138 = vsub.f32 %v3136, %v3137
  %v3139 = vand.u32 %v3138, 4294901760
  %3140 = vmatpush.msra.mxu0 %v3139
  %v3141 = vand.u32 %v2416, 4294901760
  %v3142 = vsub.f32 %v2416, %v3141
  %v3143 = vand.u32 %v3142, 4294901760
  %v3144 = vsub.f32 %v3142, %v3143
  %v3145 = vand.u32 %v3144, 4294901760
  %3146 = vmatpush.msra.mxu0 %v3145
  %v3147 = vand.u32 %v2415, 4294901760
  %v3148 = vsub.f32 %v2415, %v3147
  %v3149 = vand.u32 %v3148, 4294901760
  %v3150 = vsub.f32 %v3148, %v3149
  %v3151 = vand.u32 %v3150, 4294901760
  %3152 = vmatpush.msra.mxu0 %v3151
  %v3153 = vand.u32 %v2414, 4294901760
  %v3154 = vsub.f32 %v2414, %v3153
  %v3155 = vand.u32 %v3154, 4294901760
  %v3156 = vsub.f32 %v3154, %v3155
  %v3157 = vand.u32 %v3156, 4294901760
  %3158 = vmatpush.msra.mxu0 %v3157
  %v3159 = vand.u32 %v2413, 4294901760
  %v3160 = vsub.f32 %v2413, %v3159
  %v3161 = vand.u32 %v3160, 4294901760
  %v3162 = vsub.f32 %v3160, %v3161
  %v3163 = vand.u32 %v3162, 4294901760
  %3164 = vmatpush.msra.mxu0 %v3163
  %v3165 = vand.u32 %v2412, 4294901760
  %v3166 = vsub.f32 %v2412, %v3165
  %v3167 = vand.u32 %v3166, 4294901760
  %v3168 = vsub.f32 %v3166, %v3167
  %v3169 = vand.u32 %v3168, 4294901760
  %3170 = vmatpush.msra.mxu0 %v3169
  %v3171 = vand.u32 %v2411, 4294901760
  %v3172 = vsub.f32 %v2411, %v3171
  %v3173 = vand.u32 %v3172, 4294901760
  %v3174 = vsub.f32 %v3172, %v3173
  %v3175 = vand.u32 %v3174, 4294901760
  %3176 = vmatpush.msra.mxu0 %v3175
  %v3177 = vand.u32 %v2410, 4294901760
  %v3178 = vsub.f32 %v2410, %v3177
  %v3179 = vand.u32 %v3178, 4294901760
  %v3180 = vsub.f32 %v3178, %v3179
  %v3181 = vand.u32 %v3180, 4294901760
  %3182 = vmatpush.msra.mxu0 %v3181
  %v3183 = vand.u32 %v2984, 4294901760
  %3184 = vmatmul.f32.gmra.mxu0 %v3183
  %v3185 = vpop.f32.mrf.mxu0
  %v3186 = vadd.f32 %v3042, %v3185
  %v3187 = vand.u32 %v2987, 4294901760
  %3188 = vmatmul.f32.gmra.mxu0 %v3187
  %v3189 = vpop.f32.mrf.mxu0
  %v3190 = vadd.f32 %v3050, %v3189
  %v3191 = vand.u32 %v2990, 4294901760
  %3192 = vmatmul.f32.gmra.mxu0 %v3191
  %v3193 = vpop.f32.mrf.mxu0
  %v3194 = vadd.f32 %v3058, %v3193
  %v3195 = vand.u32 %v2993, 4294901760
  %3196 = vmatmul.f32.gmra.mxu0 %v3195
  %v3197 = vpop.f32.mrf.mxu0
  %v3198 = vadd.f32 %v3066, %v3197
  %v3199 = vand.u32 %v2996, 4294901760
  %3200 = vmatmul.f32.gmra.mxu0 %v3199
  %v3201 = vpop.f32.mrf.mxu0
  %v3202 = vadd.f32 %v3074, %v3201
  %v3203 = vand.u32 %v2999, 4294901760
  %3204 = vmatmul.f32.gmra.mxu0 %v3203
  %v3205 = vpop.f32.mrf.mxu0
  %v3206 = vadd.f32 %v3082, %v3205
  %v3207 = vand.u32 %v3002, 4294901760
  %3208 = vmatmul.f32.gmra.mxu0 %v3207
  %v3209 = vpop.f32.mrf.mxu0
  %v3210 = vadd.f32 %v3090, %v3209
  %3211 = vdwg.mxu0
  %3212 = vmatpush.msra.mxu0 0.0
  %v3213 = vand.u32 %v2424, 4294901760
  %v3214 = vsub.f32 %v2424, %v3213
  %3215 = vmatpush.msra.mxu0 %v3214
  %v3216 = vand.u32 %v2423, 4294901760
  %v3217 = vsub.f32 %v2423, %v3216
  %3218 = vmatpush.msra.mxu0 %v3217
  %v3219 = vand.u32 %v2422, 4294901760
  %v3220 = vsub.f32 %v2422, %v3219
  %3221 = vmatpush.msra.mxu0 %v3220
  %v3222 = vand.u32 %v2421, 4294901760
  %v3223 = vsub.f32 %v2421, %v3222
  %3224 = vmatpush.msra.mxu0 %v3223
  %v3225 = vand.u32 %v2420, 4294901760
  %v3226 = vsub.f32 %v2420, %v3225
  %3227 = vmatpush.msra.mxu0 %v3226
  %v3228 = vand.u32 %v2419, 4294901760
  %v3229 = vsub.f32 %v2419, %v3228
  %3230 = vmatpush.msra.mxu0 %v3229
  %v3231 = vand.u32 %v2418, 4294901760
  %v3232 = vsub.f32 %v2418, %v3231
  %3233 = vmatpush.msra.mxu0 %v3232
  %v3234 = vand.u32 %v2417, 4294901760
  %v3235 = vsub.f32 %v2417, %v3234
  %3236 = vmatpush.msra.mxu0 %v3235
  %v3237 = vand.u32 %v2416, 4294901760
  %v3238 = vsub.f32 %v2416, %v3237
  %3239 = vmatpush.msra.mxu0 %v3238
  %v3240 = vand.u32 %v2415, 4294901760
  %v3241 = vsub.f32 %v2415, %v3240
  %3242 = vmatpush.msra.mxu0 %v3241
  %v3243 = vand.u32 %v2414, 4294901760
  %v3244 = vsub.f32 %v2414, %v3243
  %3245 = vmatpush.msra.mxu0 %v3244
  %v3246 = vand.u32 %v2413, 4294901760
  %v3247 = vsub.f32 %v2413, %v3246
  %3248 = vmatpush.msra.mxu0 %v3247
  %v3249 = vand.u32 %v2412, 4294901760
  %v3250 = vsub.f32 %v2412, %v3249
  %3251 = vmatpush.msra.mxu0 %v3250
  %v3252 = vand.u32 %v2411, 4294901760
  %v3253 = vsub.f32 %v2411, %v3252
  %3254 = vmatpush.msra.mxu0 %v3253
  %v3255 = vand.u32 %v2410, 4294901760
  %v3256 = vsub.f32 %v2410, %v3255
  %3257 = vmatpush.msra.mxu0 %v3256
  %v3258 = vand.u32 %v2984, 4294901760
  %v3259 = vsub.f32 %v2984, %v3258
  %3260 = vmatmul.f32.gmra.mxu0 %v3259
  %v3261 = vpop.f32.mrf.mxu0
  %v3262 = vadd.f32 %v3186, %v3261
  %v3263 = vand.u32 %v2987, 4294901760
  %v3264 = vsub.f32 %v2987, %v3263
  %3265 = vmatmul.f32.gmra.mxu0 %v3264
  %v3266 = vpop.f32.mrf.mxu0
  %v3267 = vadd.f32 %v3190, %v3266
  %v3268 = vand.u32 %v2990, 4294901760
  %v3269 = vsub.f32 %v2990, %v3268
  %3270 = vmatmul.f32.gmra.mxu0 %v3269
  %v3271 = vpop.f32.mrf.mxu0
  %v3272 = vadd.f32 %v3194, %v3271
  %v3273 = vand.u32 %v2993, 4294901760
  %v3274 = vsub.f32 %v2993, %v3273
  %3275 = vmatmul.f32.gmra.mxu0 %v3274
  %v3276 = vpop.f32.mrf.mxu0
  %v3277 = vadd.f32 %v3198, %v3276
  %v3278 = vand.u32 %v2996, 4294901760
  %v3279 = vsub.f32 %v2996, %v3278
  %3280 = vmatmul.f32.gmra.mxu0 %v3279
  %v3281 = vpop.f32.mrf.mxu0
  %v3282 = vadd.f32 %v3202, %v3281
  %v3283 = vand.u32 %v2999, 4294901760
  %v3284 = vsub.f32 %v2999, %v3283
  %3285 = vmatmul.f32.gmra.mxu0 %v3284
  %v3286 = vpop.f32.mrf.mxu0
  %v3287 = vadd.f32 %v3206, %v3286
  %v3288 = vand.u32 %v3002, 4294901760
  %v3289 = vsub.f32 %v3002, %v3288
  %3290 = vmatmul.f32.gmra.mxu0 %v3289
  %v3291 = vpop.f32.mrf.mxu0
  %v3292 = vadd.f32 %v3210, %v3291
  %3293 = vdwg.mxu0
  %3294 = vmatpush.msra.mxu0 0.0
  %v3295 = vand.u32 %v2424, 4294901760
  %3296 = vmatpush.msra.mxu0 %v3295
  %v3297 = vand.u32 %v2423, 4294901760
  %3298 = vmatpush.msra.mxu0 %v3297
  %v3299 = vand.u32 %v2422, 4294901760
  %3300 = vmatpush.msra.mxu0 %v3299
  %v3301 = vand.u32 %v2421, 4294901760
  %3302 = vmatpush.msra.mxu0 %v3301
  %v3303 = vand.u32 %v2420, 4294901760
  %3304 = vmatpush.msra.mxu0 %v3303
  %v3305 = vand.u32 %v2419, 4294901760
  %3306 = vmatpush.msra.mxu0 %v3305
  %v3307 = vand.u32 %v2418, 4294901760
  %3308 = vmatpush.msra.mxu0 %v3307
  %v3309 = vand.u32 %v2417, 4294901760
  %3310 = vmatpush.msra.mxu0 %v3309
  %v3311 = vand.u32 %v2416, 4294901760
  %3312 = vmatpush.msra.mxu0 %v3311
  %v3313 = vand.u32 %v2415, 4294901760
  %3314 = vmatpush.msra.mxu0 %v3313
  %v3315 = vand.u32 %v2414, 4294901760
  %3316 = vmatpush.msra.mxu0 %v3315
  %v3317 = vand.u32 %v2413, 4294901760
  %3318 = vmatpush.msra.mxu0 %v3317
  %v3319 = vand.u32 %v2412, 4294901760
  %3320 = vmatpush.msra.mxu0 %v3319
  %v3321 = vand.u32 %v2411, 4294901760
  %3322 = vmatpush.msra.mxu0 %v3321
  %v3323 = vand.u32 %v2410, 4294901760
  %3324 = vmatpush.msra.mxu0 %v3323
  %v3325 = vand.u32 %v2984, 4294901760
  %v3326 = vsub.f32 %v2984, %v3325
  %v3327 = vand.u32 %v3326, 4294901760
  %3328 = vmatmul.f32.gmra.mxu0 %v3327
  %v3329 = vpop.f32.mrf.mxu0
  %v3330 = vadd.f32 %v3262, %v3329
  %v3331 = vand.u32 %v2987, 4294901760
  %v3332 = vsub.f32 %v2987, %v3331
  %v3333 = vand.u32 %v3332, 4294901760
  %3334 = vmatmul.f32.gmra.mxu0 %v3333
  %v3335 = vpop.f32.mrf.mxu0
  %v3336 = vadd.f32 %v3267, %v3335
  %v3337 = vand.u32 %v2990, 4294901760
  %v3338 = vsub.f32 %v2990, %v3337
  %v3339 = vand.u32 %v3338, 4294901760
  %3340 = vmatmul.f32.gmra.mxu0 %v3339
  %v3341 = vpop.f32.mrf.mxu0
  %v3342 = vadd.f32 %v3272, %v3341
  %v3343 = vand.u32 %v2993, 4294901760
  %v3344 = vsub.f32 %v2993, %v3343
  %v3345 = vand.u32 %v3344, 4294901760
  %3346 = vmatmul.f32.gmra.mxu0 %v3345
  %v3347 = vpop.f32.mrf.mxu0
  %v3348 = vadd.f32 %v3277, %v3347
  %v3349 = vand.u32 %v2996, 4294901760
  %v3350 = vsub.f32 %v2996, %v3349
  %v3351 = vand.u32 %v3350, 4294901760
  %3352 = vmatmul.f32.gmra.mxu0 %v3351
  %v3353 = vpop.f32.mrf.mxu0
  %v3354 = vadd.f32 %v3282, %v3353
  %v3355 = vand.u32 %v2999, 4294901760
  %v3356 = vsub.f32 %v2999, %v3355
  %v3357 = vand.u32 %v3356, 4294901760
  %3358 = vmatmul.f32.gmra.mxu0 %v3357
  %v3359 = vpop.f32.mrf.mxu0
  %v3360 = vadd.f32 %v3287, %v3359
  %v3361 = vand.u32 %v3002, 4294901760
  %v3362 = vsub.f32 %v3002, %v3361
  %v3363 = vand.u32 %v3362, 4294901760
  %3364 = vmatmul.f32.gmra.mxu0 %v3363
  %v3365 = vpop.f32.mrf.mxu0
  %v3366 = vadd.f32 %v3292, %v3365
  %3367 = vdwg.mxu0
  %3368 = vmatpush.msra.mxu0 0.0
  %v3369 = vand.u32 %v2424, 4294901760
  %v3370 = vsub.f32 %v2424, %v3369
  %v3371 = vand.u32 %v3370, 4294901760
  %3372 = vmatpush.msra.mxu0 %v3371
  %v3373 = vand.u32 %v2423, 4294901760
  %v3374 = vsub.f32 %v2423, %v3373
  %v3375 = vand.u32 %v3374, 4294901760
  %3376 = vmatpush.msra.mxu0 %v3375
  %v3377 = vand.u32 %v2422, 4294901760
  %v3378 = vsub.f32 %v2422, %v3377
  %v3379 = vand.u32 %v3378, 4294901760
  %3380 = vmatpush.msra.mxu0 %v3379
  %v3381 = vand.u32 %v2421, 4294901760
  %v3382 = vsub.f32 %v2421, %v3381
  %v3383 = vand.u32 %v3382, 4294901760
  %3384 = vmatpush.msra.mxu0 %v3383
  %v3385 = vand.u32 %v2420, 4294901760
  %v3386 = vsub.f32 %v2420, %v3385
  %v3387 = vand.u32 %v3386, 4294901760
  %3388 = vmatpush.msra.mxu0 %v3387
  %v3389 = vand.u32 %v2419, 4294901760
  %v3390 = vsub.f32 %v2419, %v3389
  %v3391 = vand.u32 %v3390, 4294901760
  %3392 = vmatpush.msra.mxu0 %v3391
  %v3393 = vand.u32 %v2418, 4294901760
  %v3394 = vsub.f32 %v2418, %v3393
  %v3395 = vand.u32 %v3394, 4294901760
  %3396 = vmatpush.msra.mxu0 %v3395
  %v3397 = vand.u32 %v2417, 4294901760
  %v3398 = vsub.f32 %v2417, %v3397
  %v3399 = vand.u32 %v3398, 4294901760
  %3400 = vmatpush.msra.mxu0 %v3399
  %v3401 = vand.u32 %v2416, 4294901760
  %v3402 = vsub.f32 %v2416, %v3401
  %v3403 = vand.u32 %v3402, 4294901760
  %3404 = vmatpush.msra.mxu0 %v3403
  %v3405 = vand.u32 %v2415, 4294901760
  %v3406 = vsub.f32 %v2415, %v3405
  %v3407 = vand.u32 %v3406, 4294901760
  %3408 = vmatpush.msra.mxu0 %v3407
  %v3409 = vand.u32 %v2414, 4294901760
  %v3410 = vsub.f32 %v2414, %v3409
  %v3411 = vand.u32 %v3410, 4294901760
  %3412 = vmatpush.msra.mxu0 %v3411
  %v3413 = vand.u32 %v2413, 4294901760
  %v3414 = vsub.f32 %v2413, %v3413
  %v3415 = vand.u32 %v3414, 4294901760
  %3416 = vmatpush.msra.mxu0 %v3415
  %v3417 = vand.u32 %v2412, 4294901760
  %v3418 = vsub.f32 %v2412, %v3417
  %v3419 = vand.u32 %v3418, 4294901760
  %3420 = vmatpush.msra.mxu0 %v3419
  %v3421 = vand.u32 %v2411, 4294901760
  %v3422 = vsub.f32 %v2411, %v3421
  %v3423 = vand.u32 %v3422, 4294901760
  %3424 = vmatpush.msra.mxu0 %v3423
  %v3425 = vand.u32 %v2410, 4294901760
  %v3426 = vsub.f32 %v2410, %v3425
  %v3427 = vand.u32 %v3426, 4294901760
  %3428 = vmatpush.msra.mxu0 %v3427
  %v3429 = vand.u32 %v2984, 4294901760
  %3430 = vmatmul.f32.gmra.mxu0 %v3429
  %v3431 = vpop.f32.mrf.mxu0
  %v3432 = vadd.f32 %v3330, %v3431
  %v3433 = vand.u32 %v2987, 4294901760
  %3434 = vmatmul.f32.gmra.mxu0 %v3433
  %v3435 = vpop.f32.mrf.mxu0
  %v3436 = vadd.f32 %v3336, %v3435
  %v3437 = vand.u32 %v2990, 4294901760
  %3438 = vmatmul.f32.gmra.mxu0 %v3437
  %v3439 = vpop.f32.mrf.mxu0
  %v3440 = vadd.f32 %v3342, %v3439
  %v3441 = vand.u32 %v2993, 4294901760
  %3442 = vmatmul.f32.gmra.mxu0 %v3441
  %v3443 = vpop.f32.mrf.mxu0
  %v3444 = vadd.f32 %v3348, %v3443
  %v3445 = vand.u32 %v2996, 4294901760
  %3446 = vmatmul.f32.gmra.mxu0 %v3445
  %v3447 = vpop.f32.mrf.mxu0
  %v3448 = vadd.f32 %v3354, %v3447
  %v3449 = vand.u32 %v2999, 4294901760
  %3450 = vmatmul.f32.gmra.mxu0 %v3449
  %v3451 = vpop.f32.mrf.mxu0
  %v3452 = vadd.f32 %v3360, %v3451
  %v3453 = vand.u32 %v3002, 4294901760
  %3454 = vmatmul.f32.gmra.mxu0 %v3453
  %v3455 = vpop.f32.mrf.mxu0
  %v3456 = vadd.f32 %v3366, %v3455
  %3457 = vdwg.mxu0
  %3458 = vmatpush.msra.mxu0 0.0
  %v3459 = vand.u32 %v2424, 4294901760
  %3460 = vmatpush.msra.mxu0 %v3459
  %v3461 = vand.u32 %v2423, 4294901760
  %3462 = vmatpush.msra.mxu0 %v3461
  %v3463 = vand.u32 %v2422, 4294901760
  %3464 = vmatpush.msra.mxu0 %v3463
  %v3465 = vand.u32 %v2421, 4294901760
  %3466 = vmatpush.msra.mxu0 %v3465
  %v3467 = vand.u32 %v2420, 4294901760
  %3468 = vmatpush.msra.mxu0 %v3467
  %v3469 = vand.u32 %v2419, 4294901760
  %3470 = vmatpush.msra.mxu0 %v3469
  %v3471 = vand.u32 %v2418, 4294901760
  %3472 = vmatpush.msra.mxu0 %v3471
  %v3473 = vand.u32 %v2417, 4294901760
  %3474 = vmatpush.msra.mxu0 %v3473
  %v3475 = vand.u32 %v2416, 4294901760
  %3476 = vmatpush.msra.mxu0 %v3475
  %v3477 = vand.u32 %v2415, 4294901760
  %3478 = vmatpush.msra.mxu0 %v3477
  %v3479 = vand.u32 %v2414, 4294901760
  %3480 = vmatpush.msra.mxu0 %v3479
  %v3481 = vand.u32 %v2413, 4294901760
  %3482 = vmatpush.msra.mxu0 %v3481
  %v3483 = vand.u32 %v2412, 4294901760
  %3484 = vmatpush.msra.mxu0 %v3483
  %v3485 = vand.u32 %v2411, 4294901760
  %3486 = vmatpush.msra.mxu0 %v3485
  %v3487 = vand.u32 %v2410, 4294901760
  %3488 = vmatpush.msra.mxu0 %v3487
  %v3489 = vand.u32 %v2984, 4294901760
  %3490 = vmatmul.f32.gmra.mxu0 %v3489
  %v3491 = vpop.f32.mrf.mxu0
  %v3492 = vadd.f32 %v3432, %v3491
  %v3493 = vand.u32 %v2987, 4294901760
  %3494 = vmatmul.f32.gmra.mxu0 %v3493
  %v3495 = vpop.f32.mrf.mxu0
  %v3496 = vadd.f32 %v3436, %v3495
  %v3497 = vand.u32 %v2990, 4294901760
  %3498 = vmatmul.f32.gmra.mxu0 %v3497
  %v3499 = vpop.f32.mrf.mxu0
  %v3500 = vadd.f32 %v3440, %v3499
  %v3501 = vand.u32 %v2993, 4294901760
  %3502 = vmatmul.f32.gmra.mxu0 %v3501
  %v3503 = vpop.f32.mrf.mxu0
  %v3504 = vadd.f32 %v3444, %v3503
  %v3505 = vand.u32 %v2996, 4294901760
  %3506 = vmatmul.f32.gmra.mxu0 %v3505
  %v3507 = vpop.f32.mrf.mxu0
  %v3508 = vadd.f32 %v3448, %v3507
  %v3509 = vand.u32 %v2999, 4294901760
  %3510 = vmatmul.f32.gmra.mxu0 %v3509
  %v3511 = vpop.f32.mrf.mxu0
  %v3512 = vadd.f32 %v3452, %v3511
  %v3513 = vand.u32 %v3002, 4294901760
  %3514 = vmatmul.f32.gmra.mxu0 %v3513
  %v3515 = vpop.f32.mrf.mxu0
  %v3516 = vadd.f32 %v3456, %v3515
  %3517 = vdwg.mxu0
  %v3518 = vld [vmem:[#allocation2 + $0x4] sm:$0xff]
  %v3519 = vld [vmem:[#allocation2 + $0xc] sm:$0xff]
  %v3520 = vld [vmem:[#allocation2 + $0x14] sm:$0xff]
  %v3521 = vld [vmem:[#allocation2 + $0x1c] sm:$0xff]
  %v3522 = vld [vmem:[#allocation2 + $0x24] sm:$0xff]
  %v3523 = vld [vmem:[#allocation2 + $0x2c] sm:$0xff]
  %v3524 = vld [vmem:[#allocation2 + $0x34] sm:$0x7f]
  %s3525 = scalar_lea.vmem %s3, 240
  %v3526 = vld [vmem:[%s3525] sm:$0xff]
  %v3527 = vld [vmem:[%s3525 + $0x8] sm:$0xff]
  %v3528 = vld [vmem:[%s3525 + $0x10] sm:$0xff]
  %v3529 = vld [vmem:[%s3525 + $0x18] sm:$0xff]
  %v3530 = vld [vmem:[%s3525 + $0x20] sm:$0xff]
  %v3531 = vld [vmem:[%s3525 + $0x28] sm:$0xff]
  %v3532 = vld [vmem:[%s3525 + $0x30] sm:$0xff]
  %v3533 = vld [vmem:[%s3525 + $0x38] sm:$0xff]
  %v3534 = vld [vmem:[%s3525 + $0x40] sm:$0xff]
  %v3535 = vld [vmem:[%s3525 + $0x48] sm:$0xff]
  %v3536 = vld [vmem:[%s3525 + $0x50] sm:$0xff]
  %v3537 = vld [vmem:[%s3525 + $0x58] sm:$0xff]
  %v3538 = vld [vmem:[%s3525 + $0x60] sm:$0xff]
  %v3539 = vld [vmem:[%s3525 + $0x68] sm:$0xff]
  %v3540 = vld [vmem:[%s3525 + $0x70] sm:$0xff]
  %v3542 = vsel %vm2393, %v3518, 0
  %v3545 = vsel %vm2393, %v3519, 0
  %v3548 = vsel %vm2393, %v3520, 0
  %v3551 = vsel %vm2393, %v3521, 0
  %v3554 = vsel %vm2393, %v3522, 0
  %v3557 = vsel %vm2393, %v3523, 0
  %v3560 = vsel %vm2393, %v3524, 0
  %3562 = vmatpush.msra.mxu0 0.0
  %v3563 = vand.u32 %v3540, 4294901760
  %3564 = vmatpush.msra.mxu0 %v3563
  %v3565 = vand.u32 %v3539, 4294901760
  %3566 = vmatpush.msra.mxu0 %v3565
  %v3567 = vand.u32 %v3538, 4294901760
  %3568 = vmatpush.msra.mxu0 %v3567
  %v3569 = vand.u32 %v3537, 4294901760
  %3570 = vmatpush.msra.mxu0 %v3569
  %v3571 = vand.u32 %v3536, 4294901760
  %3572 = vmatpush.msra.mxu0 %v3571
  %v3573 = vand.u32 %v3535, 4294901760
  %3574 = vmatpush.msra.mxu0 %v3573
  %v3575 = vand.u32 %v3534, 4294901760
  %3576 = vmatpush.msra.mxu0 %v3575
  %v3577 = vand.u32 %v3533, 4294901760
  %3578 = vmatpush.msra.mxu0 %v3577
  %v3579 = vand.u32 %v3532, 4294901760
  %3580 = vmatpush.msra.mxu0 %v3579
  %v3581 = vand.u32 %v3531, 4294901760
  %3582 = vmatpush.msra.mxu0 %v3581
  %v3583 = vand.u32 %v3530, 4294901760
  %3584 = vmatpush.msra.mxu0 %v3583
  %v3585 = vand.u32 %v3529, 4294901760
  %3586 = vmatpush.msra.mxu0 %v3585
  %v3587 = vand.u32 %v3528, 4294901760
  %3588 = vmatpush.msra.mxu0 %v3587
  %v3589 = vand.u32 %v3527, 4294901760
  %3590 = vmatpush.msra.mxu0 %v3589
  %v3591 = vand.u32 %v3526, 4294901760
  %3592 = vmatpush.msra.mxu0 %v3591
  %v3593 = vand.u32 %v3542, 4294901760
  %v3594 = vsub.f32 %v3542, %v3593
  %v3595 = vand.u32 %v3594, 4294901760
  %v3596 = vsub.f32 %v3594, %v3595
  %v3597 = vand.u32 %v3596, 4294901760
  %3598 = vmatmul.f32.gmra.mxu0 %v3597
  %v3599 = vpop.f32.mrf.mxu0
  %v3600 = vadd.f32 0.0, %v3599
  %v3601 = vand.u32 %v3545, 4294901760
  %v3602 = vsub.f32 %v3545, %v3601
  %v3603 = vand.u32 %v3602, 4294901760
  %v3604 = vsub.f32 %v3602, %v3603
  %v3605 = vand.u32 %v3604, 4294901760
  %3606 = vmatmul.f32.gmra.mxu0 %v3605
  %v3607 = vpop.f32.mrf.mxu0
  %v3608 = vadd.f32 0.0, %v3607
  %v3609 = vand.u32 %v3548, 4294901760
  %v3610 = vsub.f32 %v3548, %v3609
  %v3611 = vand.u32 %v3610, 4294901760
  %v3612 = vsub.f32 %v3610, %v3611
  %v3613 = vand.u32 %v3612, 4294901760
  %3614 = vmatmul.f32.gmra.mxu0 %v3613
  %v3615 = vpop.f32.mrf.mxu0
  %v3616 = vadd.f32 0.0, %v3615
  %v3617 = vand.u32 %v3551, 4294901760
  %v3618 = vsub.f32 %v3551, %v3617
  %v3619 = vand.u32 %v3618, 4294901760
  %v3620 = vsub.f32 %v3618, %v3619
  %v3621 = vand.u32 %v3620, 4294901760
  %3622 = vmatmul.f32.gmra.mxu0 %v3621
  %v3623 = vpop.f32.mrf.mxu0
  %v3624 = vadd.f32 0.0, %v3623
  %v3625 = vand.u32 %v3554, 4294901760
  %v3626 = vsub.f32 %v3554, %v3625
  %v3627 = vand.u32 %v3626, 4294901760
  %v3628 = vsub.f32 %v3626, %v3627
  %v3629 = vand.u32 %v3628, 4294901760
  %3630 = vmatmul.f32.gmra.mxu0 %v3629
  %v3631 = vpop.f32.mrf.mxu0
  %v3632 = vadd.f32 0.0, %v3631
  %v3633 = vand.u32 %v3557, 4294901760
  %v3634 = vsub.f32 %v3557, %v3633
  %v3635 = vand.u32 %v3634, 4294901760
  %v3636 = vsub.f32 %v3634, %v3635
  %v3637 = vand.u32 %v3636, 4294901760
  %3638 = vmatmul.f32.gmra.mxu0 %v3637
  %v3639 = vpop.f32.mrf.mxu0
  %v3640 = vadd.f32 0.0, %v3639
  %v3641 = vand.u32 %v3560, 4294901760
  %v3642 = vsub.f32 %v3560, %v3641
  %v3643 = vand.u32 %v3642, 4294901760
  %v3644 = vsub.f32 %v3642, %v3643
  %v3645 = vand.u32 %v3644, 4294901760
  %3646 = vmatmul.f32.gmra.mxu0 %v3645
  %v3647 = vpop.f32.mrf.mxu0
  %v3648 = vadd.f32 0.0, %v3647
  %3649 = vdwg.mxu0
  %3650 = vmatpush.msra.mxu0 0.0
  %v3651 = vand.u32 %v3540, 4294901760
  %v3652 = vsub.f32 %v3540, %v3651
  %v3653 = vand.u32 %v3652, 4294901760
  %v3654 = vsub.f32 %v3652, %v3653
  %v3655 = vand.u32 %v3654, 4294901760
  %3656 = vmatpush.msra.mxu0 %v3655
  %v3657 = vand.u32 %v3539, 4294901760
  %v3658 = vsub.f32 %v3539, %v3657
  %v3659 = vand.u32 %v3658, 4294901760
  %v3660 = vsub.f32 %v3658, %v3659
  %v3661 = vand.u32 %v3660, 4294901760
  %3662 = vmatpush.msra.mxu0 %v3661
  %v3663 = vand.u32 %v3538, 4294901760
  %v3664 = vsub.f32 %v3538, %v3663
  %v3665 = vand.u32 %v3664, 4294901760
  %v3666 = vsub.f32 %v3664, %v3665
  %v3667 = vand.u32 %v3666, 4294901760
  %3668 = vmatpush.msra.mxu0 %v3667
  %v3669 = vand.u32 %v3537, 4294901760
  %v3670 = vsub.f32 %v3537, %v3669
  %v3671 = vand.u32 %v3670, 4294901760
  %v3672 = vsub.f32 %v3670, %v3671
  %v3673 = vand.u32 %v3672, 4294901760
  %3674 = vmatpush.msra.mxu0 %v3673
  %v3675 = vand.u32 %v3536, 4294901760
  %v3676 = vsub.f32 %v3536, %v3675
  %v3677 = vand.u32 %v3676, 4294901760
  %v3678 = vsub.f32 %v3676, %v3677
  %v3679 = vand.u32 %v3678, 4294901760
  %3680 = vmatpush.msra.mxu0 %v3679
  %v3681 = vand.u32 %v3535, 4294901760
  %v3682 = vsub.f32 %v3535, %v3681
  %v3683 = vand.u32 %v3682, 4294901760
  %v3684 = vsub.f32 %v3682, %v3683
  %v3685 = vand.u32 %v3684, 4294901760
  %3686 = vmatpush.msra.mxu0 %v3685
  %v3687 = vand.u32 %v3534, 4294901760
  %v3688 = vsub.f32 %v3534, %v3687
  %v3689 = vand.u32 %v3688, 4294901760
  %v3690 = vsub.f32 %v3688, %v3689
  %v3691 = vand.u32 %v3690, 4294901760
  %3692 = vmatpush.msra.mxu0 %v3691
  %v3693 = vand.u32 %v3533, 4294901760
  %v3694 = vsub.f32 %v3533, %v3693
  %v3695 = vand.u32 %v3694, 4294901760
  %v3696 = vsub.f32 %v3694, %v3695
  %v3697 = vand.u32 %v3696, 4294901760
  %3698 = vmatpush.msra.mxu0 %v3697
  %v3699 = vand.u32 %v3532, 4294901760
  %v3700 = vsub.f32 %v3532, %v3699
  %v3701 = vand.u32 %v3700, 4294901760
  %v3702 = vsub.f32 %v3700, %v3701
  %v3703 = vand.u32 %v3702, 4294901760
  %3704 = vmatpush.msra.mxu0 %v3703
  %v3705 = vand.u32 %v3531, 4294901760
  %v3706 = vsub.f32 %v3531, %v3705
  %v3707 = vand.u32 %v3706, 4294901760
  %v3708 = vsub.f32 %v3706, %v3707
  %v3709 = vand.u32 %v3708, 4294901760
  %3710 = vmatpush.msra.mxu0 %v3709
  %v3711 = vand.u32 %v3530, 4294901760
  %v3712 = vsub.f32 %v3530, %v3711
  %v3713 = vand.u32 %v3712, 4294901760
  %v3714 = vsub.f32 %v3712, %v3713
  %v3715 = vand.u32 %v3714, 4294901760
  %3716 = vmatpush.msra.mxu0 %v3715
  %v3717 = vand.u32 %v3529, 4294901760
  %v3718 = vsub.f32 %v3529, %v3717
  %v3719 = vand.u32 %v3718, 4294901760
  %v3720 = vsub.f32 %v3718, %v3719
  %v3721 = vand.u32 %v3720, 4294901760
  %3722 = vmatpush.msra.mxu0 %v3721
  %v3723 = vand.u32 %v3528, 4294901760
  %v3724 = vsub.f32 %v3528, %v3723
  %v3725 = vand.u32 %v3724, 4294901760
  %v3726 = vsub.f32 %v3724, %v3725
  %v3727 = vand.u32 %v3726, 4294901760
  %3728 = vmatpush.msra.mxu0 %v3727
  %v3729 = vand.u32 %v3527, 4294901760
  %v3730 = vsub.f32 %v3527, %v3729
  %v3731 = vand.u32 %v3730, 4294901760
  %v3732 = vsub.f32 %v3730, %v3731
  %v3733 = vand.u32 %v3732, 4294901760
  %3734 = vmatpush.msra.mxu0 %v3733
  %v3735 = vand.u32 %v3526, 4294901760
  %v3736 = vsub.f32 %v3526, %v3735
  %v3737 = vand.u32 %v3736, 4294901760
  %v3738 = vsub.f32 %v3736, %v3737
  %v3739 = vand.u32 %v3738, 4294901760
  %3740 = vmatpush.msra.mxu0 %v3739
  %v3741 = vand.u32 %v3542, 4294901760
  %3742 = vmatmul.f32.gmra.mxu0 %v3741
  %v3743 = vpop.f32.mrf.mxu0
  %v3744 = vadd.f32 %v3600, %v3743
  %v3745 = vand.u32 %v3545, 4294901760
  %3746 = vmatmul.f32.gmra.mxu0 %v3745
  %v3747 = vpop.f32.mrf.mxu0
  %v3748 = vadd.f32 %v3608, %v3747
  %v3749 = vand.u32 %v3548, 4294901760
  %3750 = vmatmul.f32.gmra.mxu0 %v3749
  %v3751 = vpop.f32.mrf.mxu0
  %v3752 = vadd.f32 %v3616, %v3751
  %v3753 = vand.u32 %v3551, 4294901760
  %3754 = vmatmul.f32.gmra.mxu0 %v3753
  %v3755 = vpop.f32.mrf.mxu0
  %v3756 = vadd.f32 %v3624, %v3755
  %v3757 = vand.u32 %v3554, 4294901760
  %3758 = vmatmul.f32.gmra.mxu0 %v3757
  %v3759 = vpop.f32.mrf.mxu0
  %v3760 = vadd.f32 %v3632, %v3759
  %v3761 = vand.u32 %v3557, 4294901760
  %3762 = vmatmul.f32.gmra.mxu0 %v3761
  %v3763 = vpop.f32.mrf.mxu0
  %v3764 = vadd.f32 %v3640, %v3763
  %v3765 = vand.u32 %v3560, 4294901760
  %3766 = vmatmul.f32.gmra.mxu0 %v3765
  %v3767 = vpop.f32.mrf.mxu0
  %v3768 = vadd.f32 %v3648, %v3767
  %3769 = vdwg.mxu0
  %3770 = vmatpush.msra.mxu0 0.0
  %v3771 = vand.u32 %v3540, 4294901760
  %v3772 = vsub.f32 %v3540, %v3771
  %3773 = vmatpush.msra.mxu0 %v3772
  %v3774 = vand.u32 %v3539, 4294901760
  %v3775 = vsub.f32 %v3539, %v3774
  %3776 = vmatpush.msra.mxu0 %v3775
  %v3777 = vand.u32 %v3538, 4294901760
  %v3778 = vsub.f32 %v3538, %v3777
  %3779 = vmatpush.msra.mxu0 %v3778
  %v3780 = vand.u32 %v3537, 4294901760
  %v3781 = vsub.f32 %v3537, %v3780
  %3782 = vmatpush.msra.mxu0 %v3781
  %v3783 = vand.u32 %v3536, 4294901760
  %v3784 = vsub.f32 %v3536, %v3783
  %3785 = vmatpush.msra.mxu0 %v3784
  %v3786 = vand.u32 %v3535, 4294901760
  %v3787 = vsub.f32 %v3535, %v3786
  %3788 = vmatpush.msra.mxu0 %v3787
  %v3789 = vand.u32 %v3534, 4294901760
  %v3790 = vsub.f32 %v3534, %v3789
  %3791 = vmatpush.msra.mxu0 %v3790
  %v3792 = vand.u32 %v3533, 4294901760
  %v3793 = vsub.f32 %v3533, %v3792
  %3794 = vmatpush.msra.mxu0 %v3793
  %v3795 = vand.u32 %v3532, 4294901760
  %v3796 = vsub.f32 %v3532, %v3795
  %3797 = vmatpush.msra.mxu0 %v3796
  %v3798 = vand.u32 %v3531, 4294901760
  %v3799 = vsub.f32 %v3531, %v3798
  %3800 = vmatpush.msra.mxu0 %v3799
  %v3801 = vand.u32 %v3530, 4294901760
  %v3802 = vsub.f32 %v3530, %v3801
  %3803 = vmatpush.msra.mxu0 %v3802
  %v3804 = vand.u32 %v3529, 4294901760
  %v3805 = vsub.f32 %v3529, %v3804
  %3806 = vmatpush.msra.mxu0 %v3805
  %v3807 = vand.u32 %v3528, 4294901760
  %v3808 = vsub.f32 %v3528, %v3807
  %3809 = vmatpush.msra.mxu0 %v3808
  %v3810 = vand.u32 %v3527, 4294901760
  %v3811 = vsub.f32 %v3527, %v3810
  %3812 = vmatpush.msra.mxu0 %v3811
  %v3813 = vand.u32 %v3526, 4294901760
  %v3814 = vsub.f32 %v3526, %v3813
  %3815 = vmatpush.msra.mxu0 %v3814
  %v3816 = vand.u32 %v3542, 4294901760
  %v3817 = vsub.f32 %v3542, %v3816
  %3818 = vmatmul.f32.gmra.mxu0 %v3817
  %v3819 = vpop.f32.mrf.mxu0
  %v3820 = vadd.f32 %v3744, %v3819
  %v3821 = vand.u32 %v3545, 4294901760
  %v3822 = vsub.f32 %v3545, %v3821
  %3823 = vmatmul.f32.gmra.mxu0 %v3822
  %v3824 = vpop.f32.mrf.mxu0
  %v3825 = vadd.f32 %v3748, %v3824
  %v3826 = vand.u32 %v3548, 4294901760
  %v3827 = vsub.f32 %v3548, %v3826
  %3828 = vmatmul.f32.gmra.mxu0 %v3827
  %v3829 = vpop.f32.mrf.mxu0
  %v3830 = vadd.f32 %v3752, %v3829
  %v3831 = vand.u32 %v3551, 4294901760
  %v3832 = vsub.f32 %v3551, %v3831
  %3833 = vmatmul.f32.gmra.mxu0 %v3832
  %v3834 = vpop.f32.mrf.mxu0
  %v3835 = vadd.f32 %v3756, %v3834
  %v3836 = vand.u32 %v3554, 4294901760
  %v3837 = vsub.f32 %v3554, %v3836
  %3838 = vmatmul.f32.gmra.mxu0 %v3837
  %v3839 = vpop.f32.mrf.mxu0
  %v3840 = vadd.f32 %v3760, %v3839
  %v3841 = vand.u32 %v3557, 4294901760
  %v3842 = vsub.f32 %v3557, %v3841
  %3843 = vmatmul.f32.gmra.mxu0 %v3842
  %v3844 = vpop.f32.mrf.mxu0
  %v3845 = vadd.f32 %v3764, %v3844
  %v3846 = vand.u32 %v3560, 4294901760
  %v3847 = vsub.f32 %v3560, %v3846
  %3848 = vmatmul.f32.gmra.mxu0 %v3847
  %v3849 = vpop.f32.mrf.mxu0
  %v3850 = vadd.f32 %v3768, %v3849
  %3851 = vdwg.mxu0
  %3852 = vmatpush.msra.mxu0 0.0
  %v3853 = vand.u32 %v3540, 4294901760
  %3854 = vmatpush.msra.mxu0 %v3853
  %v3855 = vand.u32 %v3539, 4294901760
  %3856 = vmatpush.msra.mxu0 %v3855
  %v3857 = vand.u32 %v3538, 4294901760
  %3858 = vmatpush.msra.mxu0 %v3857
  %v3859 = vand.u32 %v3537, 4294901760
  %3860 = vmatpush.msra.mxu0 %v3859
  %v3861 = vand.u32 %v3536, 4294901760
  %3862 = vmatpush.msra.mxu0 %v3861
  %v3863 = vand.u32 %v3535, 4294901760
  %3864 = vmatpush.msra.mxu0 %v3863
  %v3865 = vand.u32 %v3534, 4294901760
  %3866 = vmatpush.msra.mxu0 %v3865
  %v3867 = vand.u32 %v3533, 4294901760
  %3868 = vmatpush.msra.mxu0 %v3867
  %v3869 = vand.u32 %v3532, 4294901760
  %3870 = vmatpush.msra.mxu0 %v3869
  %v3871 = vand.u32 %v3531, 4294901760
  %3872 = vmatpush.msra.mxu0 %v3871
  %v3873 = vand.u32 %v3530, 4294901760
  %3874 = vmatpush.msra.mxu0 %v3873
  %v3875 = vand.u32 %v3529, 4294901760
  %3876 = vmatpush.msra.mxu0 %v3875
  %v3877 = vand.u32 %v3528, 4294901760
  %3878 = vmatpush.msra.mxu0 %v3877
  %v3879 = vand.u32 %v3527, 4294901760
  %3880 = vmatpush.msra.mxu0 %v3879
  %v3881 = vand.u32 %v3526, 4294901760
  %3882 = vmatpush.msra.mxu0 %v3881
  %v3883 = vand.u32 %v3542, 4294901760
  %v3884 = vsub.f32 %v3542, %v3883
  %v3885 = vand.u32 %v3884, 4294901760
  %3886 = vmatmul.f32.gmra.mxu0 %v3885
  %v3887 = vpop.f32.mrf.mxu0
  %v3888 = vadd.f32 %v3820, %v3887
  %v3889 = vand.u32 %v3545, 4294901760
  %v3890 = vsub.f32 %v3545, %v3889
  %v3891 = vand.u32 %v3890, 4294901760
  %3892 = vmatmul.f32.gmra.mxu0 %v3891
  %v3893 = vpop.f32.mrf.mxu0
  %v3894 = vadd.f32 %v3825, %v3893
  %v3895 = vand.u32 %v3548, 4294901760
  %v3896 = vsub.f32 %v3548, %v3895
  %v3897 = vand.u32 %v3896, 4294901760
  %3898 = vmatmul.f32.gmra.mxu0 %v3897
  %v3899 = vpop.f32.mrf.mxu0
  %v3900 = vadd.f32 %v3830, %v3899
  %v3901 = vand.u32 %v3551, 4294901760
  %v3902 = vsub.f32 %v3551, %v3901
  %v3903 = vand.u32 %v3902, 4294901760
  %3904 = vmatmul.f32.gmra.mxu0 %v3903
  %v3905 = vpop.f32.mrf.mxu0
  %v3906 = vadd.f32 %v3835, %v3905
  %v3907 = vand.u32 %v3554, 4294901760
  %v3908 = vsub.f32 %v3554, %v3907
  %v3909 = vand.u32 %v3908, 4294901760
  %3910 = vmatmul.f32.gmra.mxu0 %v3909
  %v3911 = vpop.f32.mrf.mxu0
  %v3912 = vadd.f32 %v3840, %v3911
  %v3913 = vand.u32 %v3557, 4294901760
  %v3914 = vsub.f32 %v3557, %v3913
  %v3915 = vand.u32 %v3914, 4294901760
  %3916 = vmatmul.f32.gmra.mxu0 %v3915
  %v3917 = vpop.f32.mrf.mxu0
  %v3918 = vadd.f32 %v3845, %v3917
  %v3919 = vand.u32 %v3560, 4294901760
  %v3920 = vsub.f32 %v3560, %v3919
  %v3921 = vand.u32 %v3920, 4294901760
  %3922 = vmatmul.f32.gmra.mxu0 %v3921
  %v3923 = vpop.f32.mrf.mxu0
  %v3924 = vadd.f32 %v3850, %v3923
  %3925 = vdwg.mxu0
  %3926 = vmatpush.msra.mxu0 0.0
  %v3927 = vand.u32 %v3540, 4294901760
  %v3928 = vsub.f32 %v3540, %v3927
  %v3929 = vand.u32 %v3928, 4294901760
  %3930 = vmatpush.msra.mxu0 %v3929
  %v3931 = vand.u32 %v3539, 4294901760
  %v3932 = vsub.f32 %v3539, %v3931
  %v3933 = vand.u32 %v3932, 4294901760
  %3934 = vmatpush.msra.mxu0 %v3933
  %v3935 = vand.u32 %v3538, 4294901760
  %v3936 = vsub.f32 %v3538, %v3935
  %v3937 = vand.u32 %v3936, 4294901760
  %3938 = vmatpush.msra.mxu0 %v3937
  %v3939 = vand.u32 %v3537, 4294901760
  %v3940 = vsub.f32 %v3537, %v3939
  %v3941 = vand.u32 %v3940, 4294901760
  %3942 = vmatpush.msra.mxu0 %v3941
  %v3943 = vand.u32 %v3536, 4294901760
  %v3944 = vsub.f32 %v3536, %v3943
  %v3945 = vand.u32 %v3944, 4294901760
  %3946 = vmatpush.msra.mxu0 %v3945
  %v3947 = vand.u32 %v3535, 4294901760
  %v3948 = vsub.f32 %v3535, %v3947
  %v3949 = vand.u32 %v3948, 4294901760
  %3950 = vmatpush.msra.mxu0 %v3949
  %v3951 = vand.u32 %v3534, 4294901760
  %v3952 = vsub.f32 %v3534, %v3951
  %v3953 = vand.u32 %v3952, 4294901760
  %3954 = vmatpush.msra.mxu0 %v3953
  %v3955 = vand.u32 %v3533, 4294901760
  %v3956 = vsub.f32 %v3533, %v3955
  %v3957 = vand.u32 %v3956, 4294901760
  %3958 = vmatpush.msra.mxu0 %v3957
  %v3959 = vand.u32 %v3532, 4294901760
  %v3960 = vsub.f32 %v3532, %v3959
  %v3961 = vand.u32 %v3960, 4294901760
  %3962 = vmatpush.msra.mxu0 %v3961
  %v3963 = vand.u32 %v3531, 4294901760
  %v3964 = vsub.f32 %v3531, %v3963
  %v3965 = vand.u32 %v3964, 4294901760
  %3966 = vmatpush.msra.mxu0 %v3965
  %v3967 = vand.u32 %v3530, 4294901760
  %v3968 = vsub.f32 %v3530, %v3967
  %v3969 = vand.u32 %v3968, 4294901760
  %3970 = vmatpush.msra.mxu0 %v3969
  %v3971 = vand.u32 %v3529, 4294901760
  %v3972 = vsub.f32 %v3529, %v3971
  %v3973 = vand.u32 %v3972, 4294901760
  %3974 = vmatpush.msra.mxu0 %v3973
  %v3975 = vand.u32 %v3528, 4294901760
  %v3976 = vsub.f32 %v3528, %v3975
  %v3977 = vand.u32 %v3976, 4294901760
  %3978 = vmatpush.msra.mxu0 %v3977
  %v3979 = vand.u32 %v3527, 4294901760
  %v3980 = vsub.f32 %v3527, %v3979
  %v3981 = vand.u32 %v3980, 4294901760
  %3982 = vmatpush.msra.mxu0 %v3981
  %v3983 = vand.u32 %v3526, 4294901760
  %v3984 = vsub.f32 %v3526, %v3983
  %v3985 = vand.u32 %v3984, 4294901760
  %3986 = vmatpush.msra.mxu0 %v3985
  %v3987 = vand.u32 %v3542, 4294901760
  %3988 = vmatmul.f32.gmra.mxu0 %v3987
  %v3989 = vpop.f32.mrf.mxu0
  %v3990 = vadd.f32 %v3888, %v3989
  %v3991 = vand.u32 %v3545, 4294901760
  %3992 = vmatmul.f32.gmra.mxu0 %v3991
  %v3993 = vpop.f32.mrf.mxu0
  %v3994 = vadd.f32 %v3894, %v3993
  %v3995 = vand.u32 %v3548, 4294901760
  %3996 = vmatmul.f32.gmra.mxu0 %v3995
  %v3997 = vpop.f32.mrf.mxu0
  %v3998 = vadd.f32 %v3900, %v3997
  %v3999 = vand.u32 %v3551, 4294901760
  %4000 = vmatmul.f32.gmra.mxu0 %v3999
  %v4001 = vpop.f32.mrf.mxu0
  %v4002 = vadd.f32 %v3906, %v4001
  %v4003 = vand.u32 %v3554, 4294901760
  %4004 = vmatmul.f32.gmra.mxu0 %v4003
  %v4005 = vpop.f32.mrf.mxu0
  %v4006 = vadd.f32 %v3912, %v4005
  %v4007 = vand.u32 %v3557, 4294901760
  %4008 = vmatmul.f32.gmra.mxu0 %v4007
  %v4009 = vpop.f32.mrf.mxu0
  %v4010 = vadd.f32 %v3918, %v4009
  %v4011 = vand.u32 %v3560, 4294901760
  %4012 = vmatmul.f32.gmra.mxu0 %v4011
  %v4013 = vpop.f32.mrf.mxu0
  %v4014 = vadd.f32 %v3924, %v4013
  %4015 = vdwg.mxu0
  %4016 = vmatpush.msra.mxu0 0.0
  %v4017 = vand.u32 %v3540, 4294901760
  %4018 = vmatpush.msra.mxu0 %v4017
  %v4019 = vand.u32 %v3539, 4294901760
  %4020 = vmatpush.msra.mxu0 %v4019
  %v4021 = vand.u32 %v3538, 4294901760
  %4022 = vmatpush.msra.mxu0 %v4021
  %v4023 = vand.u32 %v3537, 4294901760
  %4024 = vmatpush.msra.mxu0 %v4023
  %v4025 = vand.u32 %v3536, 4294901760
  %4026 = vmatpush.msra.mxu0 %v4025
  %v4027 = vand.u32 %v3535, 4294901760
  %4028 = vmatpush.msra.mxu0 %v4027
  %v4029 = vand.u32 %v3534, 4294901760
  %4030 = vmatpush.msra.mxu0 %v4029
  %v4031 = vand.u32 %v3533, 4294901760
  %4032 = vmatpush.msra.mxu0 %v4031
  %v4033 = vand.u32 %v3532, 4294901760
  %4034 = vmatpush.msra.mxu0 %v4033
  %v4035 = vand.u32 %v3531, 4294901760
  %4036 = vmatpush.msra.mxu0 %v4035
  %v4037 = vand.u32 %v3530, 4294901760
  %4038 = vmatpush.msra.mxu0 %v4037
  %v4039 = vand.u32 %v3529, 4294901760
  %4040 = vmatpush.msra.mxu0 %v4039
  %v4041 = vand.u32 %v3528, 4294901760
  %4042 = vmatpush.msra.mxu0 %v4041
  %v4043 = vand.u32 %v3527, 4294901760
  %4044 = vmatpush.msra.mxu0 %v4043
  %v4045 = vand.u32 %v3526, 4294901760
  %4046 = vmatpush.msra.mxu0 %v4045
  %v4047 = vand.u32 %v3542, 4294901760
  %4048 = vmatmul.f32.gmra.mxu0 %v4047
  %v4049 = vpop.f32.mrf.mxu0
  %v4050 = vadd.f32 %v3990, %v4049
  %v4051 = vand.u32 %v3545, 4294901760
  %4052 = vmatmul.f32.gmra.mxu0 %v4051
  %v4053 = vpop.f32.mrf.mxu0
  %v4054 = vadd.f32 %v3994, %v4053
  %v4055 = vand.u32 %v3548, 4294901760
  %4056 = vmatmul.f32.gmra.mxu0 %v4055
  %v4057 = vpop.f32.mrf.mxu0
  %v4058 = vadd.f32 %v3998, %v4057
  %v4059 = vand.u32 %v3551, 4294901760
  %4060 = vmatmul.f32.gmra.mxu0 %v4059
  %v4061 = vpop.f32.mrf.mxu0
  %v4062 = vadd.f32 %v4002, %v4061
  %v4063 = vand.u32 %v3554, 4294901760
  %4064 = vmatmul.f32.gmra.mxu0 %v4063
  %v4065 = vpop.f32.mrf.mxu0
  %v4066 = vadd.f32 %v4006, %v4065
  %v4067 = vand.u32 %v3557, 4294901760
  %4068 = vmatmul.f32.gmra.mxu0 %v4067
  %v4069 = vpop.f32.mrf.mxu0
  %v4070 = vadd.f32 %v4010, %v4069
  %v4071 = vand.u32 %v3560, 4294901760
  %4072 = vmatmul.f32.gmra.mxu0 %v4071
  %v4073 = vpop.f32.mrf.mxu0
  %v4074 = vadd.f32 %v4014, %v4073
  %4075 = vdwg.mxu0
  %v4076 = vadd.f32 %v3492, %v4050
  %v4077 = vadd.f32 %v3496, %v4054
  %v4078 = vadd.f32 %v3500, %v4058
  %v4079 = vadd.f32 %v3504, %v4062
  %v4080 = vadd.f32 %v3508, %v4066
  %v4081 = vadd.f32 %v3512, %v4070
  %v4082 = vadd.f32 %v3516, %v4074
  %v4083 = vld [vmem:[#allocation2 + $0x6] sm:$0xff]
  %v4084 = vld [vmem:[#allocation2 + $0xe] sm:$0xff]
  %v4085 = vld [vmem:[#allocation2 + $0x16] sm:$0xff]
  %v4086 = vld [vmem:[#allocation2 + $0x1e] sm:$0xff]
  %v4087 = vld [vmem:[#allocation2 + $0x26] sm:$0xff]
  %v4088 = vld [vmem:[#allocation2 + $0x2e] sm:$0xff]
  %v4089 = vld [vmem:[#allocation2 + $0x36] sm:$0x7f]
  %s4090 = scalar_lea.vmem %s3, 360
  %v4091 = vld [vmem:[%s4090] sm:$0xff]
  %v4092 = vld [vmem:[%s4090 + $0x8] sm:$0xff]
  %v4093 = vld [vmem:[%s4090 + $0x10] sm:$0xff]
  %v4094 = vld [vmem:[%s4090 + $0x18] sm:$0xff]
  %v4095 = vld [vmem:[%s4090 + $0x20] sm:$0xff]
  %v4096 = vld [vmem:[%s4090 + $0x28] sm:$0xff]
  %v4097 = vld [vmem:[%s4090 + $0x30] sm:$0xff]
  %v4098 = vld [vmem:[%s4090 + $0x38] sm:$0xff]
  %v4099 = vld [vmem:[%s4090 + $0x40] sm:$0xff]
  %v4100 = vld [vmem:[%s4090 + $0x48] sm:$0xff]
  %v4101 = vld [vmem:[%s4090 + $0x50] sm:$0xff]
  %v4102 = vld [vmem:[%s4090 + $0x58] sm:$0xff]
  %v4103 = vld [vmem:[%s4090 + $0x60] sm:$0xff]
  %v4104 = vld [vmem:[%s4090 + $0x68] sm:$0xff]
  %v4105 = vld [vmem:[%s4090 + $0x70] sm:$0xff]
  %v4107 = vsel %vm2393, %v4083, 0
  %v4110 = vsel %vm2393, %v4084, 0
  %v4113 = vsel %vm2393, %v4085, 0
  %v4116 = vsel %vm2393, %v4086, 0
  %v4119 = vsel %vm2393, %v4087, 0
  %v4122 = vsel %vm2393, %v4088, 0
  %v4125 = vsel %vm2393, %v4089, 0
  %4127 = vmatpush.msra.mxu0 0.0
  %v4128 = vand.u32 %v4105, 4294901760
  %4129 = vmatpush.msra.mxu0 %v4128
  %v4130 = vand.u32 %v4104, 4294901760
  %4131 = vmatpush.msra.mxu0 %v4130
  %v4132 = vand.u32 %v4103, 4294901760
  %4133 = vmatpush.msra.mxu0 %v4132
  %v4134 = vand.u32 %v4102, 4294901760
  %4135 = vmatpush.msra.mxu0 %v4134
  %v4136 = vand.u32 %v4101, 4294901760
  %4137 = vmatpush.msra.mxu0 %v4136
  %v4138 = vand.u32 %v4100, 4294901760
  %4139 = vmatpush.msra.mxu0 %v4138
  %v4140 = vand.u32 %v4099, 4294901760
  %4141 = vmatpush.msra.mxu0 %v4140
  %v4142 = vand.u32 %v4098, 4294901760
  %4143 = vmatpush.msra.mxu0 %v4142
  %v4144 = vand.u32 %v4097, 4294901760
  %4145 = vmatpush.msra.mxu0 %v4144
  %v4146 = vand.u32 %v4096, 4294901760
  %4147 = vmatpush.msra.mxu0 %v4146
  %v4148 = vand.u32 %v4095, 4294901760
  %4149 = vmatpush.msra.mxu0 %v4148
  %v4150 = vand.u32 %v4094, 4294901760
  %4151 = vmatpush.msra.mxu0 %v4150
  %v4152 = vand.u32 %v4093, 4294901760
  %4153 = vmatpush.msra.mxu0 %v4152
  %v4154 = vand.u32 %v4092, 4294901760
  %4155 = vmatpush.msra.mxu0 %v4154
  %v4156 = vand.u32 %v4091, 4294901760
  %4157 = vmatpush.msra.mxu0 %v4156
  %v4158 = vand.u32 %v4107, 4294901760
  %v4159 = vsub.f32 %v4107, %v4158
  %v4160 = vand.u32 %v4159, 4294901760
  %v4161 = vsub.f32 %v4159, %v4160
  %v4162 = vand.u32 %v4161, 4294901760
  %4163 = vmatmul.f32.gmra.mxu0 %v4162
  %v4164 = vpop.f32.mrf.mxu0
  %v4165 = vadd.f32 0.0, %v4164
  %v4166 = vand.u32 %v4110, 4294901760
  %v4167 = vsub.f32 %v4110, %v4166
  %v4168 = vand.u32 %v4167, 4294901760
  %v4169 = vsub.f32 %v4167, %v4168
  %v4170 = vand.u32 %v4169, 4294901760
  %4171 = vmatmul.f32.gmra.mxu0 %v4170
  %v4172 = vpop.f32.mrf.mxu0
  %v4173 = vadd.f32 0.0, %v4172
  %v4174 = vand.u32 %v4113, 4294901760
  %v4175 = vsub.f32 %v4113, %v4174
  %v4176 = vand.u32 %v4175, 4294901760
  %v4177 = vsub.f32 %v4175, %v4176
  %v4178 = vand.u32 %v4177, 4294901760
  %4179 = vmatmul.f32.gmra.mxu0 %v4178
  %v4180 = vpop.f32.mrf.mxu0
  %v4181 = vadd.f32 0.0, %v4180
  %v4182 = vand.u32 %v4116, 4294901760
  %v4183 = vsub.f32 %v4116, %v4182
  %v4184 = vand.u32 %v4183, 4294901760
  %v4185 = vsub.f32 %v4183, %v4184
  %v4186 = vand.u32 %v4185, 4294901760
  %4187 = vmatmul.f32.gmra.mxu0 %v4186
  %v4188 = vpop.f32.mrf.mxu0
  %v4189 = vadd.f32 0.0, %v4188
  %v4190 = vand.u32 %v4119, 4294901760
  %v4191 = vsub.f32 %v4119, %v4190
  %v4192 = vand.u32 %v4191, 4294901760
  %v4193 = vsub.f32 %v4191, %v4192
  %v4194 = vand.u32 %v4193, 4294901760
  %4195 = vmatmul.f32.gmra.mxu0 %v4194
  %v4196 = vpop.f32.mrf.mxu0
  %v4197 = vadd.f32 0.0, %v4196
  %v4198 = vand.u32 %v4122, 4294901760
  %v4199 = vsub.f32 %v4122, %v4198
  %v4200 = vand.u32 %v4199, 4294901760
  %v4201 = vsub.f32 %v4199, %v4200
  %v4202 = vand.u32 %v4201, 4294901760
  %4203 = vmatmul.f32.gmra.mxu0 %v4202
  %v4204 = vpop.f32.mrf.mxu0
  %v4205 = vadd.f32 0.0, %v4204
  %v4206 = vand.u32 %v4125, 4294901760
  %v4207 = vsub.f32 %v4125, %v4206
  %v4208 = vand.u32 %v4207, 4294901760
  %v4209 = vsub.f32 %v4207, %v4208
  %v4210 = vand.u32 %v4209, 4294901760
  %4211 = vmatmul.f32.gmra.mxu0 %v4210
  %v4212 = vpop.f32.mrf.mxu0
  %v4213 = vadd.f32 0.0, %v4212
  %4214 = vdwg.mxu0
  %4215 = vmatpush.msra.mxu0 0.0
  %v4216 = vand.u32 %v4105, 4294901760
  %v4217 = vsub.f32 %v4105, %v4216
  %v4218 = vand.u32 %v4217, 4294901760
  %v4219 = vsub.f32 %v4217, %v4218
  %v4220 = vand.u32 %v4219, 4294901760
  %4221 = vmatpush.msra.mxu0 %v4220
  %v4222 = vand.u32 %v4104, 4294901760
  %v4223 = vsub.f32 %v4104, %v4222
  %v4224 = vand.u32 %v4223, 4294901760
  %v4225 = vsub.f32 %v4223, %v4224
  %v4226 = vand.u32 %v4225, 4294901760
  %4227 = vmatpush.msra.mxu0 %v4226
  %v4228 = vand.u32 %v4103, 4294901760
  %v4229 = vsub.f32 %v4103, %v4228
  %v4230 = vand.u32 %v4229, 4294901760
  %v4231 = vsub.f32 %v4229, %v4230
  %v4232 = vand.u32 %v4231, 4294901760
  %4233 = vmatpush.msra.mxu0 %v4232
  %v4234 = vand.u32 %v4102, 4294901760
  %v4235 = vsub.f32 %v4102, %v4234
  %v4236 = vand.u32 %v4235, 4294901760
  %v4237 = vsub.f32 %v4235, %v4236
  %v4238 = vand.u32 %v4237, 4294901760
  %4239 = vmatpush.msra.mxu0 %v4238
  %v4240 = vand.u32 %v4101, 4294901760
  %v4241 = vsub.f32 %v4101, %v4240
  %v4242 = vand.u32 %v4241, 4294901760
  %v4243 = vsub.f32 %v4241, %v4242
  %v4244 = vand.u32 %v4243, 4294901760
  %4245 = vmatpush.msra.mxu0 %v4244
  %v4246 = vand.u32 %v4100, 4294901760
  %v4247 = vsub.f32 %v4100, %v4246
  %v4248 = vand.u32 %v4247, 4294901760
  %v4249 = vsub.f32 %v4247, %v4248
  %v4250 = vand.u32 %v4249, 4294901760
  %4251 = vmatpush.msra.mxu0 %v4250
  %v4252 = vand.u32 %v4099, 4294901760
  %v4253 = vsub.f32 %v4099, %v4252
  %v4254 = vand.u32 %v4253, 4294901760
  %v4255 = vsub.f32 %v4253, %v4254
  %v4256 = vand.u32 %v4255, 4294901760
  %4257 = vmatpush.msra.mxu0 %v4256
  %v4258 = vand.u32 %v4098, 4294901760
  %v4259 = vsub.f32 %v4098, %v4258
  %v4260 = vand.u32 %v4259, 4294901760
  %v4261 = vsub.f32 %v4259, %v4260
  %v4262 = vand.u32 %v4261, 4294901760
  %4263 = vmatpush.msra.mxu0 %v4262
  %v4264 = vand.u32 %v4097, 4294901760
  %v4265 = vsub.f32 %v4097, %v4264
  %v4266 = vand.u32 %v4265, 4294901760
  %v4267 = vsub.f32 %v4265, %v4266
  %v4268 = vand.u32 %v4267, 4294901760
  %4269 = vmatpush.msra.mxu0 %v4268
  %v4270 = vand.u32 %v4096, 4294901760
  %v4271 = vsub.f32 %v4096, %v4270
  %v4272 = vand.u32 %v4271, 4294901760
  %v4273 = vsub.f32 %v4271, %v4272
  %v4274 = vand.u32 %v4273, 4294901760
  %4275 = vmatpush.msra.mxu0 %v4274
  %v4276 = vand.u32 %v4095, 4294901760
  %v4277 = vsub.f32 %v4095, %v4276
  %v4278 = vand.u32 %v4277, 4294901760
  %v4279 = vsub.f32 %v4277, %v4278
  %v4280 = vand.u32 %v4279, 4294901760
  %4281 = vmatpush.msra.mxu0 %v4280
  %v4282 = vand.u32 %v4094, 4294901760
  %v4283 = vsub.f32 %v4094, %v4282
  %v4284 = vand.u32 %v4283, 4294901760
  %v4285 = vsub.f32 %v4283, %v4284
  %v4286 = vand.u32 %v4285, 4294901760
  %4287 = vmatpush.msra.mxu0 %v4286
  %v4288 = vand.u32 %v4093, 4294901760
  %v4289 = vsub.f32 %v4093, %v4288
  %v4290 = vand.u32 %v4289, 4294901760
  %v4291 = vsub.f32 %v4289, %v4290
  %v4292 = vand.u32 %v4291, 4294901760
  %4293 = vmatpush.msra.mxu0 %v4292
  %v4294 = vand.u32 %v4092, 4294901760
  %v4295 = vsub.f32 %v4092, %v4294
  %v4296 = vand.u32 %v4295, 4294901760
  %v4297 = vsub.f32 %v4295, %v4296
  %v4298 = vand.u32 %v4297, 4294901760
  %4299 = vmatpush.msra.mxu0 %v4298
  %v4300 = vand.u32 %v4091, 4294901760
  %v4301 = vsub.f32 %v4091, %v4300
  %v4302 = vand.u32 %v4301, 4294901760
  %v4303 = vsub.f32 %v4301, %v4302
  %v4304 = vand.u32 %v4303, 4294901760
  %4305 = vmatpush.msra.mxu0 %v4304
  %v4306 = vand.u32 %v4107, 4294901760
  %4307 = vmatmul.f32.gmra.mxu0 %v4306
  %v4308 = vpop.f32.mrf.mxu0
  %v4309 = vadd.f32 %v4165, %v4308
  %v4310 = vand.u32 %v4110, 4294901760
  %4311 = vmatmul.f32.gmra.mxu0 %v4310
  %v4312 = vpop.f32.mrf.mxu0
  %v4313 = vadd.f32 %v4173, %v4312
  %v4314 = vand.u32 %v4113, 4294901760
  %4315 = vmatmul.f32.gmra.mxu0 %v4314
  %v4316 = vpop.f32.mrf.mxu0
  %v4317 = vadd.f32 %v4181, %v4316
  %v4318 = vand.u32 %v4116, 4294901760
  %4319 = vmatmul.f32.gmra.mxu0 %v4318
  %v4320 = vpop.f32.mrf.mxu0
  %v4321 = vadd.f32 %v4189, %v4320
  %v4322 = vand.u32 %v4119, 4294901760
  %4323 = vmatmul.f32.gmra.mxu0 %v4322
  %v4324 = vpop.f32.mrf.mxu0
  %v4325 = vadd.f32 %v4197, %v4324
  %v4326 = vand.u32 %v4122, 4294901760
  %4327 = vmatmul.f32.gmra.mxu0 %v4326
  %v4328 = vpop.f32.mrf.mxu0
  %v4329 = vadd.f32 %v4205, %v4328
  %v4330 = vand.u32 %v4125, 4294901760
  %4331 = vmatmul.f32.gmra.mxu0 %v4330
  %v4332 = vpop.f32.mrf.mxu0
  %v4333 = vadd.f32 %v4213, %v4332
  %4334 = vdwg.mxu0
  %4335 = vmatpush.msra.mxu0 0.0
  %v4336 = vand.u32 %v4105, 4294901760
  %v4337 = vsub.f32 %v4105, %v4336
  %4338 = vmatpush.msra.mxu0 %v4337
  %v4339 = vand.u32 %v4104, 4294901760
  %v4340 = vsub.f32 %v4104, %v4339
  %4341 = vmatpush.msra.mxu0 %v4340
  %v4342 = vand.u32 %v4103, 4294901760
  %v4343 = vsub.f32 %v4103, %v4342
  %4344 = vmatpush.msra.mxu0 %v4343
  %v4345 = vand.u32 %v4102, 4294901760
  %v4346 = vsub.f32 %v4102, %v4345
  %4347 = vmatpush.msra.mxu0 %v4346
  %v4348 = vand.u32 %v4101, 4294901760
  %v4349 = vsub.f32 %v4101, %v4348
  %4350 = vmatpush.msra.mxu0 %v4349
  %v4351 = vand.u32 %v4100, 4294901760
  %v4352 = vsub.f32 %v4100, %v4351
  %4353 = vmatpush.msra.mxu0 %v4352
  %v4354 = vand.u32 %v4099, 4294901760
  %v4355 = vsub.f32 %v4099, %v4354
  %4356 = vmatpush.msra.mxu0 %v4355
  %v4357 = vand.u32 %v4098, 4294901760
  %v4358 = vsub.f32 %v4098, %v4357
  %4359 = vmatpush.msra.mxu0 %v4358
  %v4360 = vand.u32 %v4097, 4294901760
  %v4361 = vsub.f32 %v4097, %v4360
  %4362 = vmatpush.msra.mxu0 %v4361
  %v4363 = vand.u32 %v4096, 4294901760
  %v4364 = vsub.f32 %v4096, %v4363
  %4365 = vmatpush.msra.mxu0 %v4364
  %v4366 = vand.u32 %v4095, 4294901760
  %v4367 = vsub.f32 %v4095, %v4366
  %4368 = vmatpush.msra.mxu0 %v4367
  %v4369 = vand.u32 %v4094, 4294901760
  %v4370 = vsub.f32 %v4094, %v4369
  %4371 = vmatpush.msra.mxu0 %v4370
  %v4372 = vand.u32 %v4093, 4294901760
  %v4373 = vsub.f32 %v4093, %v4372
  %4374 = vmatpush.msra.mxu0 %v4373
  %v4375 = vand.u32 %v4092, 4294901760
  %v4376 = vsub.f32 %v4092, %v4375
  %4377 = vmatpush.msra.mxu0 %v4376
  %v4378 = vand.u32 %v4091, 4294901760
  %v4379 = vsub.f32 %v4091, %v4378
  %4380 = vmatpush.msra.mxu0 %v4379
  %v4381 = vand.u32 %v4107, 4294901760
  %v4382 = vsub.f32 %v4107, %v4381
  %4383 = vmatmul.f32.gmra.mxu0 %v4382
  %v4384 = vpop.f32.mrf.mxu0
  %v4385 = vadd.f32 %v4309, %v4384
  %v4386 = vand.u32 %v4110, 4294901760
  %v4387 = vsub.f32 %v4110, %v4386
  %4388 = vmatmul.f32.gmra.mxu0 %v4387
  %v4389 = vpop.f32.mrf.mxu0
  %v4390 = vadd.f32 %v4313, %v4389
  %v4391 = vand.u32 %v4113, 4294901760
  %v4392 = vsub.f32 %v4113, %v4391
  %4393 = vmatmul.f32.gmra.mxu0 %v4392
  %v4394 = vpop.f32.mrf.mxu0
  %v4395 = vadd.f32 %v4317, %v4394
  %v4396 = vand.u32 %v4116, 4294901760
  %v4397 = vsub.f32 %v4116, %v4396
  %4398 = vmatmul.f32.gmra.mxu0 %v4397
  %v4399 = vpop.f32.mrf.mxu0
  %v4400 = vadd.f32 %v4321, %v4399
  %v4401 = vand.u32 %v4119, 4294901760
  %v4402 = vsub.f32 %v4119, %v4401
  %4403 = vmatmul.f32.gmra.mxu0 %v4402
  %v4404 = vpop.f32.mrf.mxu0
  %v4405 = vadd.f32 %v4325, %v4404
  %v4406 = vand.u32 %v4122, 4294901760
  %v4407 = vsub.f32 %v4122, %v4406
  %4408 = vmatmul.f32.gmra.mxu0 %v4407
  %v4409 = vpop.f32.mrf.mxu0
  %v4410 = vadd.f32 %v4329, %v4409
  %v4411 = vand.u32 %v4125, 4294901760
  %v4412 = vsub.f32 %v4125, %v4411
  %4413 = vmatmul.f32.gmra.mxu0 %v4412
  %v4414 = vpop.f32.mrf.mxu0
  %v4415 = vadd.f32 %v4333, %v4414
  %4416 = vdwg.mxu0
  %4417 = vmatpush.msra.mxu0 0.0
  %v4418 = vand.u32 %v4105, 4294901760
  %4419 = vmatpush.msra.mxu0 %v4418
  %v4420 = vand.u32 %v4104, 4294901760
  %4421 = vmatpush.msra.mxu0 %v4420
  %v4422 = vand.u32 %v4103, 4294901760
  %4423 = vmatpush.msra.mxu0 %v4422
  %v4424 = vand.u32 %v4102, 4294901760
  %4425 = vmatpush.msra.mxu0 %v4424
  %v4426 = vand.u32 %v4101, 4294901760
  %4427 = vmatpush.msra.mxu0 %v4426
  %v4428 = vand.u32 %v4100, 4294901760
  %4429 = vmatpush.msra.mxu0 %v4428
  %v4430 = vand.u32 %v4099, 4294901760
  %4431 = vmatpush.msra.mxu0 %v4430
  %v4432 = vand.u32 %v4098, 4294901760
  %4433 = vmatpush.msra.mxu0 %v4432
  %v4434 = vand.u32 %v4097, 4294901760
  %4435 = vmatpush.msra.mxu0 %v4434
  %v4436 = vand.u32 %v4096, 4294901760
  %4437 = vmatpush.msra.mxu0 %v4436
  %v4438 = vand.u32 %v4095, 4294901760
  %4439 = vmatpush.msra.mxu0 %v4438
  %v4440 = vand.u32 %v4094, 4294901760
  %4441 = vmatpush.msra.mxu0 %v4440
  %v4442 = vand.u32 %v4093, 4294901760
  %4443 = vmatpush.msra.mxu0 %v4442
  %v4444 = vand.u32 %v4092, 4294901760
  %4445 = vmatpush.msra.mxu0 %v4444
  %v4446 = vand.u32 %v4091, 4294901760
  %4447 = vmatpush.msra.mxu0 %v4446
  %v4448 = vand.u32 %v4107, 4294901760
  %v4449 = vsub.f32 %v4107, %v4448
  %v4450 = vand.u32 %v4449, 4294901760
  %4451 = vmatmul.f32.gmra.mxu0 %v4450
  %v4452 = vpop.f32.mrf.mxu0
  %v4453 = vadd.f32 %v4385, %v4452
  %v4454 = vand.u32 %v4110, 4294901760
  %v4455 = vsub.f32 %v4110, %v4454
  %v4456 = vand.u32 %v4455, 4294901760
  %4457 = vmatmul.f32.gmra.mxu0 %v4456
  %v4458 = vpop.f32.mrf.mxu0
  %v4459 = vadd.f32 %v4390, %v4458
  %v4460 = vand.u32 %v4113, 4294901760
  %v4461 = vsub.f32 %v4113, %v4460
  %v4462 = vand.u32 %v4461, 4294901760
  %4463 = vmatmul.f32.gmra.mxu0 %v4462
  %v4464 = vpop.f32.mrf.mxu0
  %v4465 = vadd.f32 %v4395, %v4464
  %v4466 = vand.u32 %v4116, 4294901760
  %v4467 = vsub.f32 %v4116, %v4466
  %v4468 = vand.u32 %v4467, 4294901760
  %4469 = vmatmul.f32.gmra.mxu0 %v4468
  %v4470 = vpop.f32.mrf.mxu0
  %v4471 = vadd.f32 %v4400, %v4470
  %v4472 = vand.u32 %v4119, 4294901760
  %v4473 = vsub.f32 %v4119, %v4472
  %v4474 = vand.u32 %v4473, 4294901760
  %4475 = vmatmul.f32.gmra.mxu0 %v4474
  %v4476 = vpop.f32.mrf.mxu0
  %v4477 = vadd.f32 %v4405, %v4476
  %v4478 = vand.u32 %v4122, 4294901760
  %v4479 = vsub.f32 %v4122, %v4478
  %v4480 = vand.u32 %v4479, 4294901760
  %4481 = vmatmul.f32.gmra.mxu0 %v4480
  %v4482 = vpop.f32.mrf.mxu0
  %v4483 = vadd.f32 %v4410, %v4482
  %v4484 = vand.u32 %v4125, 4294901760
  %v4485 = vsub.f32 %v4125, %v4484
  %v4486 = vand.u32 %v4485, 4294901760
  %4487 = vmatmul.f32.gmra.mxu0 %v4486
  %v4488 = vpop.f32.mrf.mxu0
  %v4489 = vadd.f32 %v4415, %v4488
  %4490 = vdwg.mxu0
  %4491 = vmatpush.msra.mxu0 0.0
  %v4492 = vand.u32 %v4105, 4294901760
  %v4493 = vsub.f32 %v4105, %v4492
  %v4494 = vand.u32 %v4493, 4294901760
  %4495 = vmatpush.msra.mxu0 %v4494
  %v4496 = vand.u32 %v4104, 4294901760
  %v4497 = vsub.f32 %v4104, %v4496
  %v4498 = vand.u32 %v4497, 4294901760
  %4499 = vmatpush.msra.mxu0 %v4498
  %v4500 = vand.u32 %v4103, 4294901760
  %v4501 = vsub.f32 %v4103, %v4500
  %v4502 = vand.u32 %v4501, 4294901760
  %4503 = vmatpush.msra.mxu0 %v4502
  %v4504 = vand.u32 %v4102, 4294901760
  %v4505 = vsub.f32 %v4102, %v4504
  %v4506 = vand.u32 %v4505, 4294901760
  %4507 = vmatpush.msra.mxu0 %v4506
  %v4508 = vand.u32 %v4101, 4294901760
  %v4509 = vsub.f32 %v4101, %v4508
  %v4510 = vand.u32 %v4509, 4294901760
  %4511 = vmatpush.msra.mxu0 %v4510
  %v4512 = vand.u32 %v4100, 4294901760
  %v4513 = vsub.f32 %v4100, %v4512
  %v4514 = vand.u32 %v4513, 4294901760
  %4515 = vmatpush.msra.mxu0 %v4514
  %v4516 = vand.u32 %v4099, 4294901760
  %v4517 = vsub.f32 %v4099, %v4516
  %v4518 = vand.u32 %v4517, 4294901760
  %4519 = vmatpush.msra.mxu0 %v4518
  %v4520 = vand.u32 %v4098, 4294901760
  %v4521 = vsub.f32 %v4098, %v4520
  %v4522 = vand.u32 %v4521, 4294901760
  %4523 = vmatpush.msra.mxu0 %v4522
  %v4524 = vand.u32 %v4097, 4294901760
  %v4525 = vsub.f32 %v4097, %v4524
  %v4526 = vand.u32 %v4525, 4294901760
  %4527 = vmatpush.msra.mxu0 %v4526
  %v4528 = vand.u32 %v4096, 4294901760
  %v4529 = vsub.f32 %v4096, %v4528
  %v4530 = vand.u32 %v4529, 4294901760
  %4531 = vmatpush.msra.mxu0 %v4530
  %v4532 = vand.u32 %v4095, 4294901760
  %v4533 = vsub.f32 %v4095, %v4532
  %v4534 = vand.u32 %v4533, 4294901760
  %4535 = vmatpush.msra.mxu0 %v4534
  %v4536 = vand.u32 %v4094, 4294901760
  %v4537 = vsub.f32 %v4094, %v4536
  %v4538 = vand.u32 %v4537, 4294901760
  %4539 = vmatpush.msra.mxu0 %v4538
  %v4540 = vand.u32 %v4093, 4294901760
  %v4541 = vsub.f32 %v4093, %v4540
  %v4542 = vand.u32 %v4541, 4294901760
  %4543 = vmatpush.msra.mxu0 %v4542
  %v4544 = vand.u32 %v4092, 4294901760
  %v4545 = vsub.f32 %v4092, %v4544
  %v4546 = vand.u32 %v4545, 4294901760
  %4547 = vmatpush.msra.mxu0 %v4546
  %v4548 = vand.u32 %v4091, 4294901760
  %v4549 = vsub.f32 %v4091, %v4548
  %v4550 = vand.u32 %v4549, 4294901760
  %4551 = vmatpush.msra.mxu0 %v4550
  %v4552 = vand.u32 %v4107, 4294901760
  %4553 = vmatmul.f32.gmra.mxu0 %v4552
  %v4554 = vpop.f32.mrf.mxu0
  %v4555 = vadd.f32 %v4453, %v4554
  %v4556 = vand.u32 %v4110, 4294901760
  %4557 = vmatmul.f32.gmra.mxu0 %v4556
  %v4558 = vpop.f32.mrf.mxu0
  %v4559 = vadd.f32 %v4459, %v4558
  %v4560 = vand.u32 %v4113, 4294901760
  %4561 = vmatmul.f32.gmra.mxu0 %v4560
  %v4562 = vpop.f32.mrf.mxu0
  %v4563 = vadd.f32 %v4465, %v4562
  %v4564 = vand.u32 %v4116, 4294901760
  %4565 = vmatmul.f32.gmra.mxu0 %v4564
  %v4566 = vpop.f32.mrf.mxu0
  %v4567 = vadd.f32 %v4471, %v4566
  %v4568 = vand.u32 %v4119, 4294901760
  %4569 = vmatmul.f32.gmra.mxu0 %v4568
  %v4570 = vpop.f32.mrf.mxu0
  %v4571 = vadd.f32 %v4477, %v4570
  %v4572 = vand.u32 %v4122, 4294901760
  %4573 = vmatmul.f32.gmra.mxu0 %v4572
  %v4574 = vpop.f32.mrf.mxu0
  %v4575 = vadd.f32 %v4483, %v4574
  %v4576 = vand.u32 %v4125, 4294901760
  %4577 = vmatmul.f32.gmra.mxu0 %v4576
  %v4578 = vpop.f32.mrf.mxu0
  %v4579 = vadd.f32 %v4489, %v4578
  %4580 = vdwg.mxu0
  %4581 = vmatpush.msra.mxu0 0.0
  %v4582 = vand.u32 %v4105, 4294901760
  %4583 = vmatpush.msra.mxu0 %v4582
  %v4584 = vand.u32 %v4104, 4294901760
  %4585 = vmatpush.msra.mxu0 %v4584
  %v4586 = vand.u32 %v4103, 4294901760
  %4587 = vmatpush.msra.mxu0 %v4586
  %v4588 = vand.u32 %v4102, 4294901760
  %4589 = vmatpush.msra.mxu0 %v4588
  %v4590 = vand.u32 %v4101, 4294901760
  %4591 = vmatpush.msra.mxu0 %v4590
  %v4592 = vand.u32 %v4100, 4294901760
  %4593 = vmatpush.msra.mxu0 %v4592
  %v4594 = vand.u32 %v4099, 4294901760
  %4595 = vmatpush.msra.mxu0 %v4594
  %v4596 = vand.u32 %v4098, 4294901760
  %4597 = vmatpush.msra.mxu0 %v4596
  %v4598 = vand.u32 %v4097, 4294901760
  %4599 = vmatpush.msra.mxu0 %v4598
  %v4600 = vand.u32 %v4096, 4294901760
  %4601 = vmatpush.msra.mxu0 %v4600
  %v4602 = vand.u32 %v4095, 4294901760
  %4603 = vmatpush.msra.mxu0 %v4602
  %v4604 = vand.u32 %v4094, 4294901760
  %4605 = vmatpush.msra.mxu0 %v4604
  %v4606 = vand.u32 %v4093, 4294901760
  %4607 = vmatpush.msra.mxu0 %v4606
  %v4608 = vand.u32 %v4092, 4294901760
  %4609 = vmatpush.msra.mxu0 %v4608
  %v4610 = vand.u32 %v4091, 4294901760
  %4611 = vmatpush.msra.mxu0 %v4610
  %v4612 = vand.u32 %v4107, 4294901760
  %4613 = vmatmul.f32.gmra.mxu0 %v4612
  %v4614 = vpop.f32.mrf.mxu0
  %v4615 = vadd.f32 %v4555, %v4614
  %v4616 = vand.u32 %v4110, 4294901760
  %4617 = vmatmul.f32.gmra.mxu0 %v4616
  %v4618 = vpop.f32.mrf.mxu0
  %v4619 = vadd.f32 %v4559, %v4618
  %v4620 = vand.u32 %v4113, 4294901760
  %4621 = vmatmul.f32.gmra.mxu0 %v4620
  %v4622 = vpop.f32.mrf.mxu0
  %v4623 = vadd.f32 %v4563, %v4622
  %v4624 = vand.u32 %v4116, 4294901760
  %4625 = vmatmul.f32.gmra.mxu0 %v4624
  %v4626 = vpop.f32.mrf.mxu0
  %v4627 = vadd.f32 %v4567, %v4626
  %v4628 = vand.u32 %v4119, 4294901760
  %4629 = vmatmul.f32.gmra.mxu0 %v4628
  %v4630 = vpop.f32.mrf.mxu0
  %v4631 = vadd.f32 %v4571, %v4630
  %v4632 = vand.u32 %v4122, 4294901760
  %4633 = vmatmul.f32.gmra.mxu0 %v4632
  %v4634 = vpop.f32.mrf.mxu0
  %v4635 = vadd.f32 %v4575, %v4634
  %v4636 = vand.u32 %v4125, 4294901760
  %4637 = vmatmul.f32.gmra.mxu0 %v4636
  %v4638 = vpop.f32.mrf.mxu0
  %v4639 = vadd.f32 %v4579, %v4638
  %4640 = vdwg.mxu0
  %v4641 = vadd.f32 %v4076, %v4615
  %v4642 = vadd.f32 %v4077, %v4619
  %v4643 = vadd.f32 %v4078, %v4623
  %v4644 = vadd.f32 %v4079, %v4627
  %v4645 = vadd.f32 %v4080, %v4631
  %v4646 = vadd.f32 %v4081, %v4635
  %v4647 = vadd.f32 %v4082, %v4639
  %v4648 = vld [vmem:[%s4] sm:$0x1]
  %v4650 = vperm.slane %v4648, 0
  %v4652 = vadd.f32 %v4641, %v4650
  %v4653 = vadd.f32 %v4642, %v4650
  %v4654 = vadd.f32 %v4643, %v4650
  %v4655 = vadd.f32 %v4644, %v4650
  %v4656 = vadd.f32 %v4645, %v4650
  %v4657 = vadd.f32 %v4646, %v4650
  %v4658 = vadd.f32 %v4647, %v4650
  %v4659 = vmax.f32 %v4652, 0.0
  %v4660 = vmax.f32 %v4653, 0.0
  %v4661 = vmax.f32 %v4654, 0.0
  %v4662 = vmax.f32 %v4655, 0.0
  %v4663 = vmax.f32 %v4656, 0.0
  %v4664 = vmax.f32 %v4657, 0.0
  %v4665 = vmax.f32 %v4658, 0.0
  %vm4666 = vcmask 785408
  %4667 = vst.msk [vmem:[#allocation3] sm:$0xff] %vm4666, %v4659
  %4668 = vst.msk [vmem:[#allocation3 + $0x8] sm:$0xff] %vm4666, %v4660
  %4669 = vst.msk [vmem:[#allocation3 + $0x10] sm:$0xff] %vm4666, %v4661
  %4670 = vst.msk [vmem:[#allocation3 + $0x18] sm:$0xff] %vm4666, %v4662
  %4671 = vst.msk [vmem:[#allocation3 + $0x20] sm:$0xff] %vm4666, %v4663
  %4672 = vst.msk [vmem:[#allocation3 + $0x28] sm:$0xff] %vm4666, %v4664
  %vm4673 = vcmask 784384
  %4674 = vst.msk [vmem:[#allocation3 + $0x30] sm:$0x7f] %vm4673, %v4665
  %v4675 = vld [vmem:[#allocation3] sm:$0xff]
  %v4676 = vld [vmem:[#allocation3 + $0x8] sm:$0xff]
  %v4677 = vld [vmem:[#allocation3 + $0x10] sm:$0xff]
  %v4678 = vld [vmem:[#allocation3 + $0x18] sm:$0xff]
  %v4679 = vld [vmem:[#allocation3 + $0x20] sm:$0xff]
  %v4680 = vld [vmem:[#allocation3 + $0x28] sm:$0x7]
  %v4681 = vld [vmem:[%s5] sm:$0xff]
  %v4682 = vld [vmem:[%s5 + $0x8] sm:$0xff]
  %v4683 = vld [vmem:[%s5 + $0x10] sm:$0xff]
  %v4684 = vld [vmem:[%s5 + $0x18] sm:$0xff]
  %v4685 = vld [vmem:[%s5 + $0x20] sm:$0xff]
  %v4686 = vld [vmem:[%s5 + $0x28] sm:$0xff]
  %v4687 = vld [vmem:[%s5 + $0x30] sm:$0xff]
  %v4688 = vld [vmem:[%s5 + $0x38] sm:$0xff]
  %v4689 = vld [vmem:[%s5 + $0x40] sm:$0xff]
  %v4690 = vld [vmem:[%s5 + $0x48] sm:$0xff]
  %v4691 = vld [vmem:[%s5 + $0x50] sm:$0xff]
  %v4692 = vld [vmem:[%s5 + $0x58] sm:$0xff]
  %v4693 = vld [vmem:[#allocation3 + $0x4] sm:$0xff]
  %v4694 = vld [vmem:[#allocation3 + $0xc] sm:$0xff]
  %v4695 = vld [vmem:[#allocation3 + $0x14] sm:$0xff]
  %v4696 = vld [vmem:[#allocation3 + $0x1c] sm:$0xff]
  %v4697 = vld [vmem:[#allocation3 + $0x24] sm:$0xff]
  %v4698 = vld [vmem:[#allocation3 + $0x2c] sm:$0x7]
  %s4699 = scalar_lea.vmem %s5, 96
  %v4700 = vld [vmem:[%s4699] sm:$0xff]
  %v4701 = vld [vmem:[%s4699 + $0x8] sm:$0xff]
  %v4702 = vld [vmem:[%s4699 + $0x10] sm:$0xff]
  %v4703 = vld [vmem:[%s4699 + $0x18] sm:$0xff]
  %v4704 = vld [vmem:[%s4699 + $0x20] sm:$0xff]
  %v4705 = vld [vmem:[%s4699 + $0x28] sm:$0xff]
  %v4706 = vld [vmem:[%s4699 + $0x30] sm:$0xff]
  %v4707 = vld [vmem:[%s4699 + $0x38] sm:$0xff]
  %v4708 = vld [vmem:[%s4699 + $0x40] sm:$0xff]
  %v4709 = vld [vmem:[%s4699 + $0x48] sm:$0xff]
  %v4710 = vld [vmem:[%s4699 + $0x50] sm:$0xff]
  %v4711 = vld [vmem:[%s4699 + $0x58] sm:$0xff]
  %v4713 = vsel %vm4666, %v4693, 0
  %v4716 = vsel %vm4666, %v4694, 0
  %v4719 = vsel %vm4666, %v4695, 0
  %v4722 = vsel %vm4666, %v4696, 0
  %v4725 = vsel %vm4666, %v4697, 0
  %v4728 = vsel %vm4666, %v4698, 0
  %4730 = vmatpush.msra.mxu0 0.0
  %4731 = vmatpush.msra.mxu0 0.0
  %4732 = vmatpush.msra.mxu0 0.0
  %4733 = vmatpush.msra.mxu0 0.0
  %v4734 = vand.u32 %v4711, 4294901760
  %4735 = vmatpush.msra.mxu0 %v4734
  %v4736 = vand.u32 %v4710, 4294901760
  %4737 = vmatpush.msra.mxu0 %v4736
  %v4738 = vand.u32 %v4709, 4294901760
  %4739 = vmatpush.msra.mxu0 %v4738
  %v4740 = vand.u32 %v4708, 4294901760
  %4741 = vmatpush.msra.mxu0 %v4740
  %v4742 = vand.u32 %v4707, 4294901760
  %4743 = vmatpush.msra.mxu0 %v4742
  %v4744 = vand.u32 %v4706, 4294901760
  %4745 = vmatpush.msra.mxu0 %v4744
  %v4746 = vand.u32 %v4705, 4294901760
  %4747 = vmatpush.msra.mxu0 %v4746
  %v4748 = vand.u32 %v4704, 4294901760
  %4749 = vmatpush.msra.mxu0 %v4748
  %v4750 = vand.u32 %v4703, 4294901760
  %4751 = vmatpush.msra.mxu0 %v4750
  %v4752 = vand.u32 %v4702, 4294901760
  %4753 = vmatpush.msra.mxu0 %v4752
  %v4754 = vand.u32 %v4701, 4294901760
  %4755 = vmatpush.msra.mxu0 %v4754
  %v4756 = vand.u32 %v4700, 4294901760
  %4757 = vmatpush.msra.mxu0 %v4756
  %v4758 = vand.u32 %v4713, 4294901760
  %v4759 = vsub.f32 %v4713, %v4758
  %v4760 = vand.u32 %v4759, 4294901760
  %v4761 = vsub.f32 %v4759, %v4760
  %v4762 = vand.u32 %v4761, 4294901760
  %4763 = vmatmul.f32.gmra.mxu0 %v4762
  %v4764 = vpop.f32.mrf.mxu0
  %v4765 = vadd.f32 0.0, %v4764
  %v4766 = vand.u32 %v4716, 4294901760
  %v4767 = vsub.f32 %v4716, %v4766
  %v4768 = vand.u32 %v4767, 4294901760
  %v4769 = vsub.f32 %v4767, %v4768
  %v4770 = vand.u32 %v4769, 4294901760
  %4771 = vmatmul.f32.gmra.mxu0 %v4770
  %v4772 = vpop.f32.mrf.mxu0
  %v4773 = vadd.f32 0.0, %v4772
  %v4774 = vand.u32 %v4719, 4294901760
  %v4775 = vsub.f32 %v4719, %v4774
  %v4776 = vand.u32 %v4775, 4294901760
  %v4777 = vsub.f32 %v4775, %v4776
  %v4778 = vand.u32 %v4777, 4294901760
  %4779 = vmatmul.f32.gmra.mxu0 %v4778
  %v4780 = vpop.f32.mrf.mxu0
  %v4781 = vadd.f32 0.0, %v4780
  %v4782 = vand.u32 %v4722, 4294901760
  %v4783 = vsub.f32 %v4722, %v4782
  %v4784 = vand.u32 %v4783, 4294901760
  %v4785 = vsub.f32 %v4783, %v4784
  %v4786 = vand.u32 %v4785, 4294901760
  %4787 = vmatmul.f32.gmra.mxu0 %v4786
  %v4788 = vpop.f32.mrf.mxu0
  %v4789 = vadd.f32 0.0, %v4788
  %v4790 = vand.u32 %v4725, 4294901760
  %v4791 = vsub.f32 %v4725, %v4790
  %v4792 = vand.u32 %v4791, 4294901760
  %v4793 = vsub.f32 %v4791, %v4792
  %v4794 = vand.u32 %v4793, 4294901760
  %4795 = vmatmul.f32.gmra.mxu0 %v4794
  %v4796 = vpop.f32.mrf.mxu0
  %v4797 = vadd.f32 0.0, %v4796
  %v4798 = vand.u32 %v4728, 4294901760
  %v4799 = vsub.f32 %v4728, %v4798
  %v4800 = vand.u32 %v4799, 4294901760
  %v4801 = vsub.f32 %v4799, %v4800
  %v4802 = vand.u32 %v4801, 4294901760
  %4803 = vmatmul.f32.gmra.mxu0 %v4802
  %v4804 = vpop.f32.mrf.mxu0
  %v4805 = vadd.f32 0.0, %v4804
  %4806 = vdwg.mxu0
  %4807 = vmatpush.msra.mxu0 0.0
  %4808 = vmatpush.msra.mxu0 0.0
  %4809 = vmatpush.msra.mxu0 0.0
  %4810 = vmatpush.msra.mxu0 0.0
  %v4811 = vand.u32 %v4711, 4294901760
  %v4812 = vsub.f32 %v4711, %v4811
  %v4813 = vand.u32 %v4812, 4294901760
  %v4814 = vsub.f32 %v4812, %v4813
  %v4815 = vand.u32 %v4814, 4294901760
  %4816 = vmatpush.msra.mxu0 %v4815
  %v4817 = vand.u32 %v4710, 4294901760
  %v4818 = vsub.f32 %v4710, %v4817
  %v4819 = vand.u32 %v4818, 4294901760
  %v4820 = vsub.f32 %v4818, %v4819
  %v4821 = vand.u32 %v4820, 4294901760
  %4822 = vmatpush.msra.mxu0 %v4821
  %v4823 = vand.u32 %v4709, 4294901760
  %v4824 = vsub.f32 %v4709, %v4823
  %v4825 = vand.u32 %v4824, 4294901760
  %v4826 = vsub.f32 %v4824, %v4825
  %v4827 = vand.u32 %v4826, 4294901760
  %4828 = vmatpush.msra.mxu0 %v4827
  %v4829 = vand.u32 %v4708, 4294901760
  %v4830 = vsub.f32 %v4708, %v4829
  %v4831 = vand.u32 %v4830, 4294901760
  %v4832 = vsub.f32 %v4830, %v4831
  %v4833 = vand.u32 %v4832, 4294901760
  %4834 = vmatpush.msra.mxu0 %v4833
  %v4835 = vand.u32 %v4707, 4294901760
  %v4836 = vsub.f32 %v4707, %v4835
  %v4837 = vand.u32 %v4836, 4294901760
  %v4838 = vsub.f32 %v4836, %v4837
  %v4839 = vand.u32 %v4838, 4294901760
  %4840 = vmatpush.msra.mxu0 %v4839
  %v4841 = vand.u32 %v4706, 4294901760
  %v4842 = vsub.f32 %v4706, %v4841
  %v4843 = vand.u32 %v4842, 4294901760
  %v4844 = vsub.f32 %v4842, %v4843
  %v4845 = vand.u32 %v4844, 4294901760
  %4846 = vmatpush.msra.mxu0 %v4845
  %v4847 = vand.u32 %v4705, 4294901760
  %v4848 = vsub.f32 %v4705, %v4847
  %v4849 = vand.u32 %v4848, 4294901760
  %v4850 = vsub.f32 %v4848, %v4849
  %v4851 = vand.u32 %v4850, 4294901760
  %4852 = vmatpush.msra.mxu0 %v4851
  %v4853 = vand.u32 %v4704, 4294901760
  %v4854 = vsub.f32 %v4704, %v4853
  %v4855 = vand.u32 %v4854, 4294901760
  %v4856 = vsub.f32 %v4854, %v4855
  %v4857 = vand.u32 %v4856, 4294901760
  %4858 = vmatpush.msra.mxu0 %v4857
  %v4859 = vand.u32 %v4703, 4294901760
  %v4860 = vsub.f32 %v4703, %v4859
  %v4861 = vand.u32 %v4860, 4294901760
  %v4862 = vsub.f32 %v4860, %v4861
  %v4863 = vand.u32 %v4862, 4294901760
  %4864 = vmatpush.msra.mxu0 %v4863
  %v4865 = vand.u32 %v4702, 4294901760
  %v4866 = vsub.f32 %v4702, %v4865
  %v4867 = vand.u32 %v4866, 4294901760
  %v4868 = vsub.f32 %v4866, %v4867
  %v4869 = vand.u32 %v4868, 4294901760
  %4870 = vmatpush.msra.mxu0 %v4869
  %v4871 = vand.u32 %v4701, 4294901760
  %v4872 = vsub.f32 %v4701, %v4871
  %v4873 = vand.u32 %v4872, 4294901760
  %v4874 = vsub.f32 %v4872, %v4873
  %v4875 = vand.u32 %v4874, 4294901760
  %4876 = vmatpush.msra.mxu0 %v4875
  %v4877 = vand.u32 %v4700, 4294901760
  %v4878 = vsub.f32 %v4700, %v4877
  %v4879 = vand.u32 %v4878, 4294901760
  %v4880 = vsub.f32 %v4878, %v4879
  %v4881 = vand.u32 %v4880, 4294901760
  %4882 = vmatpush.msra.mxu0 %v4881
  %v4883 = vand.u32 %v4713, 4294901760
  %4884 = vmatmul.f32.gmra.mxu0 %v4883
  %v4885 = vpop.f32.mrf.mxu0
  %v4886 = vadd.f32 %v4765, %v4885
  %v4887 = vand.u32 %v4716, 4294901760
  %4888 = vmatmul.f32.gmra.mxu0 %v4887
  %v4889 = vpop.f32.mrf.mxu0
  %v4890 = vadd.f32 %v4773, %v4889
  %v4891 = vand.u32 %v4719, 4294901760
  %4892 = vmatmul.f32.gmra.mxu0 %v4891
  %v4893 = vpop.f32.mrf.mxu0
  %v4894 = vadd.f32 %v4781, %v4893
  %v4895 = vand.u32 %v4722, 4294901760
  %4896 = vmatmul.f32.gmra.mxu0 %v4895
  %v4897 = vpop.f32.mrf.mxu0
  %v4898 = vadd.f32 %v4789, %v4897
  %v4899 = vand.u32 %v4725, 4294901760
  %4900 = vmatmul.f32.gmra.mxu0 %v4899
  %v4901 = vpop.f32.mrf.mxu0
  %v4902 = vadd.f32 %v4797, %v4901
  %v4903 = vand.u32 %v4728, 4294901760
  %4904 = vmatmul.f32.gmra.mxu0 %v4903
  %v4905 = vpop.f32.mrf.mxu0
  %v4906 = vadd.f32 %v4805, %v4905
  %4907 = vdwg.mxu0
  %4908 = vmatpush.msra.mxu0 0.0
  %4909 = vmatpush.msra.mxu0 0.0
  %4910 = vmatpush.msra.mxu0 0.0
  %4911 = vmatpush.msra.mxu0 0.0
  %v4912 = vand.u32 %v4711, 4294901760
  %v4913 = vsub.f32 %v4711, %v4912
  %4914 = vmatpush.msra.mxu0 %v4913
  %v4915 = vand.u32 %v4710, 4294901760
  %v4916 = vsub.f32 %v4710, %v4915
  %4917 = vmatpush.msra.mxu0 %v4916
  %v4918 = vand.u32 %v4709, 4294901760
  %v4919 = vsub.f32 %v4709, %v4918
  %4920 = vmatpush.msra.mxu0 %v4919
  %v4921 = vand.u32 %v4708, 4294901760
  %v4922 = vsub.f32 %v4708, %v4921
  %4923 = vmatpush.msra.mxu0 %v4922
  %v4924 = vand.u32 %v4707, 4294901760
  %v4925 = vsub.f32 %v4707, %v4924
  %4926 = vmatpush.msra.mxu0 %v4925
  %v4927 = vand.u32 %v4706, 4294901760
  %v4928 = vsub.f32 %v4706, %v4927
  %4929 = vmatpush.msra.mxu0 %v4928
  %v4930 = vand.u32 %v4705, 4294901760
  %v4931 = vsub.f32 %v4705, %v4930
  %4932 = vmatpush.msra.mxu0 %v4931
  %v4933 = vand.u32 %v4704, 4294901760
  %v4934 = vsub.f32 %v4704, %v4933
  %4935 = vmatpush.msra.mxu0 %v4934
  %v4936 = vand.u32 %v4703, 4294901760
  %v4937 = vsub.f32 %v4703, %v4936
  %4938 = vmatpush.msra.mxu0 %v4937
  %v4939 = vand.u32 %v4702, 4294901760
  %v4940 = vsub.f32 %v4702, %v4939
  %4941 = vmatpush.msra.mxu0 %v4940
  %v4942 = vand.u32 %v4701, 4294901760
  %v4943 = vsub.f32 %v4701, %v4942
  %4944 = vmatpush.msra.mxu0 %v4943
  %v4945 = vand.u32 %v4700, 4294901760
  %v4946 = vsub.f32 %v4700, %v4945
  %4947 = vmatpush.msra.mxu0 %v4946
  %v4948 = vand.u32 %v4713, 4294901760
  %v4949 = vsub.f32 %v4713, %v4948
  %4950 = vmatmul.f32.gmra.mxu0 %v4949
  %v4951 = vpop.f32.mrf.mxu0
  %v4952 = vadd.f32 %v4886, %v4951
  %v4953 = vand.u32 %v4716, 4294901760
  %v4954 = vsub.f32 %v4716, %v4953
  %4955 = vmatmul.f32.gmra.mxu0 %v4954
  %v4956 = vpop.f32.mrf.mxu0
  %v4957 = vadd.f32 %v4890, %v4956
  %v4958 = vand.u32 %v4719, 4294901760
  %v4959 = vsub.f32 %v4719, %v4958
  %4960 = vmatmul.f32.gmra.mxu0 %v4959
  %v4961 = vpop.f32.mrf.mxu0
  %v4962 = vadd.f32 %v4894, %v4961
  %v4963 = vand.u32 %v4722, 4294901760
  %v4964 = vsub.f32 %v4722, %v4963
  %4965 = vmatmul.f32.gmra.mxu0 %v4964
  %v4966 = vpop.f32.mrf.mxu0
  %v4967 = vadd.f32 %v4898, %v4966
  %v4968 = vand.u32 %v4725, 4294901760
  %v4969 = vsub.f32 %v4725, %v4968
  %4970 = vmatmul.f32.gmra.mxu0 %v4969
  %v4971 = vpop.f32.mrf.mxu0
  %v4972 = vadd.f32 %v4902, %v4971
  %v4973 = vand.u32 %v4728, 4294901760
  %v4974 = vsub.f32 %v4728, %v4973
  %4975 = vmatmul.f32.gmra.mxu0 %v4974
  %v4976 = vpop.f32.mrf.mxu0
  %v4977 = vadd.f32 %v4906, %v4976
  %4978 = vdwg.mxu0
  %4979 = vmatpush.msra.mxu0 0.0
  %4980 = vmatpush.msra.mxu0 0.0
  %4981 = vmatpush.msra.mxu0 0.0
  %4982 = vmatpush.msra.mxu0 0.0
  %v4983 = vand.u32 %v4711, 4294901760
  %4984 = vmatpush.msra.mxu0 %v4983
  %v4985 = vand.u32 %v4710, 4294901760
  %4986 = vmatpush.msra.mxu0 %v4985
  %v4987 = vand.u32 %v4709, 4294901760
  %4988 = vmatpush.msra.mxu0 %v4987
  %v4989 = vand.u32 %v4708, 4294901760
  %4990 = vmatpush.msra.mxu0 %v4989
  %v4991 = vand.u32 %v4707, 4294901760
  %4992 = vmatpush.msra.mxu0 %v4991
  %v4993 = vand.u32 %v4706, 4294901760
  %4994 = vmatpush.msra.mxu0 %v4993
  %v4995 = vand.u32 %v4705, 4294901760
  %4996 = vmatpush.msra.mxu0 %v4995
  %v4997 = vand.u32 %v4704, 4294901760
  %4998 = vmatpush.msra.mxu0 %v4997
  %v4999 = vand.u32 %v4703, 4294901760
  %5000 = vmatpush.msra.mxu0 %v4999
  %v5001 = vand.u32 %v4702, 4294901760
  %5002 = vmatpush.msra.mxu0 %v5001
  %v5003 = vand.u32 %v4701, 4294901760
  %5004 = vmatpush.msra.mxu0 %v5003
  %v5005 = vand.u32 %v4700, 4294901760
  %5006 = vmatpush.msra.mxu0 %v5005
  %v5007 = vand.u32 %v4713, 4294901760
  %v5008 = vsub.f32 %v4713, %v5007
  %v5009 = vand.u32 %v5008, 4294901760
  %5010 = vmatmul.f32.gmra.mxu0 %v5009
  %v5011 = vpop.f32.mrf.mxu0
  %v5012 = vadd.f32 %v4952, %v5011
  %v5013 = vand.u32 %v4716, 4294901760
  %v5014 = vsub.f32 %v4716, %v5013
  %v5015 = vand.u32 %v5014, 4294901760
  %5016 = vmatmul.f32.gmra.mxu0 %v5015
  %v5017 = vpop.f32.mrf.mxu0
  %v5018 = vadd.f32 %v4957, %v5017
  %v5019 = vand.u32 %v4719, 4294901760
  %v5020 = vsub.f32 %v4719, %v5019
  %v5021 = vand.u32 %v5020, 4294901760
  %5022 = vmatmul.f32.gmra.mxu0 %v5021
  %v5023 = vpop.f32.mrf.mxu0
  %v5024 = vadd.f32 %v4962, %v5023
  %v5025 = vand.u32 %v4722, 4294901760
  %v5026 = vsub.f32 %v4722, %v5025
  %v5027 = vand.u32 %v5026, 4294901760
  %5028 = vmatmul.f32.gmra.mxu0 %v5027
  %v5029 = vpop.f32.mrf.mxu0
  %v5030 = vadd.f32 %v4967, %v5029
  %v5031 = vand.u32 %v4725, 4294901760
  %v5032 = vsub.f32 %v4725, %v5031
  %v5033 = vand.u32 %v5032, 4294901760
  %5034 = vmatmul.f32.gmra.mxu0 %v5033
  %v5035 = vpop.f32.mrf.mxu0
  %v5036 = vadd.f32 %v4972, %v5035
  %v5037 = vand.u32 %v4728, 4294901760
  %v5038 = vsub.f32 %v4728, %v5037
  %v5039 = vand.u32 %v5038, 4294901760
  %5040 = vmatmul.f32.gmra.mxu0 %v5039
  %v5041 = vpop.f32.mrf.mxu0
  %v5042 = vadd.f32 %v4977, %v5041
  %5043 = vdwg.mxu0
  %5044 = vmatpush.msra.mxu0 0.0
  %5045 = vmatpush.msra.mxu0 0.0
  %5046 = vmatpush.msra.mxu0 0.0
  %5047 = vmatpush.msra.mxu0 0.0
  %v5048 = vand.u32 %v4711, 4294901760
  %v5049 = vsub.f32 %v4711, %v5048
  %v5050 = vand.u32 %v5049, 4294901760
  %5051 = vmatpush.msra.mxu0 %v5050
  %v5052 = vand.u32 %v4710, 4294901760
  %v5053 = vsub.f32 %v4710, %v5052
  %v5054 = vand.u32 %v5053, 4294901760
  %5055 = vmatpush.msra.mxu0 %v5054
  %v5056 = vand.u32 %v4709, 4294901760
  %v5057 = vsub.f32 %v4709, %v5056
  %v5058 = vand.u32 %v5057, 4294901760
  %5059 = vmatpush.msra.mxu0 %v5058
  %v5060 = vand.u32 %v4708, 4294901760
  %v5061 = vsub.f32 %v4708, %v5060
  %v5062 = vand.u32 %v5061, 4294901760
  %5063 = vmatpush.msra.mxu0 %v5062
  %v5064 = vand.u32 %v4707, 4294901760
  %v5065 = vsub.f32 %v4707, %v5064
  %v5066 = vand.u32 %v5065, 4294901760
  %5067 = vmatpush.msra.mxu0 %v5066
  %v5068 = vand.u32 %v4706, 4294901760
  %v5069 = vsub.f32 %v4706, %v5068
  %v5070 = vand.u32 %v5069, 4294901760
  %5071 = vmatpush.msra.mxu0 %v5070
  %v5072 = vand.u32 %v4705, 4294901760
  %v5073 = vsub.f32 %v4705, %v5072
  %v5074 = vand.u32 %v5073, 4294901760
  %5075 = vmatpush.msra.mxu0 %v5074
  %v5076 = vand.u32 %v4704, 4294901760
  %v5077 = vsub.f32 %v4704, %v5076
  %v5078 = vand.u32 %v5077, 4294901760
  %5079 = vmatpush.msra.mxu0 %v5078
  %v5080 = vand.u32 %v4703, 4294901760
  %v5081 = vsub.f32 %v4703, %v5080
  %v5082 = vand.u32 %v5081, 4294901760
  %5083 = vmatpush.msra.mxu0 %v5082
  %v5084 = vand.u32 %v4702, 4294901760
  %v5085 = vsub.f32 %v4702, %v5084
  %v5086 = vand.u32 %v5085, 4294901760
  %5087 = vmatpush.msra.mxu0 %v5086
  %v5088 = vand.u32 %v4701, 4294901760
  %v5089 = vsub.f32 %v4701, %v5088
  %v5090 = vand.u32 %v5089, 4294901760
  %5091 = vmatpush.msra.mxu0 %v5090
  %v5092 = vand.u32 %v4700, 4294901760
  %v5093 = vsub.f32 %v4700, %v5092
  %v5094 = vand.u32 %v5093, 4294901760
  %5095 = vmatpush.msra.mxu0 %v5094
  %v5096 = vand.u32 %v4713, 4294901760
  %5097 = vmatmul.f32.gmra.mxu0 %v5096
  %v5098 = vpop.f32.mrf.mxu0
  %v5099 = vadd.f32 %v5012, %v5098
  %v5100 = vand.u32 %v4716, 4294901760
  %5101 = vmatmul.f32.gmra.mxu0 %v5100
  %v5102 = vpop.f32.mrf.mxu0
  %v5103 = vadd.f32 %v5018, %v5102
  %v5104 = vand.u32 %v4719, 4294901760
  %5105 = vmatmul.f32.gmra.mxu0 %v5104
  %v5106 = vpop.f32.mrf.mxu0
  %v5107 = vadd.f32 %v5024, %v5106
  %v5108 = vand.u32 %v4722, 4294901760
  %5109 = vmatmul.f32.gmra.mxu0 %v5108
  %v5110 = vpop.f32.mrf.mxu0
  %v5111 = vadd.f32 %v5030, %v5110
  %v5112 = vand.u32 %v4725, 4294901760
  %5113 = vmatmul.f32.gmra.mxu0 %v5112
  %v5114 = vpop.f32.mrf.mxu0
  %v5115 = vadd.f32 %v5036, %v5114
  %v5116 = vand.u32 %v4728, 4294901760
  %5117 = vmatmul.f32.gmra.mxu0 %v5116
  %v5118 = vpop.f32.mrf.mxu0
  %v5119 = vadd.f32 %v5042, %v5118
  %5120 = vdwg.mxu0
  %5121 = vmatpush.msra.mxu0 0.0
  %5122 = vmatpush.msra.mxu0 0.0
  %5123 = vmatpush.msra.mxu0 0.0
  %5124 = vmatpush.msra.mxu0 0.0
  %v5125 = vand.u32 %v4711, 4294901760
  %5126 = vmatpush.msra.mxu0 %v5125
  %v5127 = vand.u32 %v4710, 4294901760
  %5128 = vmatpush.msra.mxu0 %v5127
  %v5129 = vand.u32 %v4709, 4294901760
  %5130 = vmatpush.msra.mxu0 %v5129
  %v5131 = vand.u32 %v4708, 4294901760
  %5132 = vmatpush.msra.mxu0 %v5131
  %v5133 = vand.u32 %v4707, 4294901760
  %5134 = vmatpush.msra.mxu0 %v5133
  %v5135 = vand.u32 %v4706, 4294901760
  %5136 = vmatpush.msra.mxu0 %v5135
  %v5137 = vand.u32 %v4705, 4294901760
  %5138 = vmatpush.msra.mxu0 %v5137
  %v5139 = vand.u32 %v4704, 4294901760
  %5140 = vmatpush.msra.mxu0 %v5139
  %v5141 = vand.u32 %v4703, 4294901760
  %5142 = vmatpush.msra.mxu0 %v5141
  %v5143 = vand.u32 %v4702, 4294901760
  %5144 = vmatpush.msra.mxu0 %v5143
  %v5145 = vand.u32 %v4701, 4294901760
  %5146 = vmatpush.msra.mxu0 %v5145
  %v5147 = vand.u32 %v4700, 4294901760
  %5148 = vmatpush.msra.mxu0 %v5147
  %v5149 = vand.u32 %v4713, 4294901760
  %5150 = vmatmul.f32.gmra.mxu0 %v5149
  %v5151 = vpop.f32.mrf.mxu0
  %v5152 = vadd.f32 %v5099, %v5151
  %v5153 = vand.u32 %v4716, 4294901760
  %5154 = vmatmul.f32.gmra.mxu0 %v5153
  %v5155 = vpop.f32.mrf.mxu0
  %v5156 = vadd.f32 %v5103, %v5155
  %v5157 = vand.u32 %v4719, 4294901760
  %5158 = vmatmul.f32.gmra.mxu0 %v5157
  %v5159 = vpop.f32.mrf.mxu0
  %v5160 = vadd.f32 %v5107, %v5159
  %v5161 = vand.u32 %v4722, 4294901760
  %5162 = vmatmul.f32.gmra.mxu0 %v5161
  %v5163 = vpop.f32.mrf.mxu0
  %v5164 = vadd.f32 %v5111, %v5163
  %v5165 = vand.u32 %v4725, 4294901760
  %5166 = vmatmul.f32.gmra.mxu0 %v5165
  %v5167 = vpop.f32.mrf.mxu0
  %v5168 = vadd.f32 %v5115, %v5167
  %v5169 = vand.u32 %v4728, 4294901760
  %5170 = vmatmul.f32.gmra.mxu0 %v5169
  %v5171 = vpop.f32.mrf.mxu0
  %v5172 = vadd.f32 %v5119, %v5171
  %5173 = vdwg.mxu0
  %v5175 = vsel %vm4666, %v4675, 0
  %v5178 = vsel %vm4666, %v4676, 0
  %v5181 = vsel %vm4666, %v4677, 0
  %v5184 = vsel %vm4666, %v4678, 0
  %v5187 = vsel %vm4666, %v4679, 0
  %v5190 = vsel %vm4666, %v4680, 0
  %5192 = vmatpush.msra.mxu0 0.0
  %5193 = vmatpush.msra.mxu0 0.0
  %5194 = vmatpush.msra.mxu0 0.0
  %5195 = vmatpush.msra.mxu0 0.0
  %v5196 = vand.u32 %v4692, 4294901760
  %5197 = vmatpush.msra.mxu0 %v5196
  %v5198 = vand.u32 %v4691, 4294901760
  %5199 = vmatpush.msra.mxu0 %v5198
  %v5200 = vand.u32 %v4690, 4294901760
  %5201 = vmatpush.msra.mxu0 %v5200
  %v5202 = vand.u32 %v4689, 4294901760
  %5203 = vmatpush.msra.mxu0 %v5202
  %v5204 = vand.u32 %v4688, 4294901760
  %5205 = vmatpush.msra.mxu0 %v5204
  %v5206 = vand.u32 %v4687, 4294901760
  %5207 = vmatpush.msra.mxu0 %v5206
  %v5208 = vand.u32 %v4686, 4294901760
  %5209 = vmatpush.msra.mxu0 %v5208
  %v5210 = vand.u32 %v4685, 4294901760
  %5211 = vmatpush.msra.mxu0 %v5210
  %v5212 = vand.u32 %v4684, 4294901760
  %5213 = vmatpush.msra.mxu0 %v5212
  %v5214 = vand.u32 %v4683, 4294901760
  %5215 = vmatpush.msra.mxu0 %v5214
  %v5216 = vand.u32 %v4682, 4294901760
  %5217 = vmatpush.msra.mxu0 %v5216
  %v5218 = vand.u32 %v4681, 4294901760
  %5219 = vmatpush.msra.mxu0 %v5218
  %v5220 = vand.u32 %v5175, 4294901760
  %v5221 = vsub.f32 %v5175, %v5220
  %v5222 = vand.u32 %v5221, 4294901760
  %v5223 = vsub.f32 %v5221, %v5222
  %v5224 = vand.u32 %v5223, 4294901760
  %5225 = vmatmul.f32.gmra.mxu0 %v5224
  %v5226 = vpop.f32.mrf.mxu0
  %v5227 = vadd.f32 %v5152, %v5226
  %v5228 = vand.u32 %v5178, 4294901760
  %v5229 = vsub.f32 %v5178, %v5228
  %v5230 = vand.u32 %v5229, 4294901760
  %v5231 = vsub.f32 %v5229, %v5230
  %v5232 = vand.u32 %v5231, 4294901760
  %5233 = vmatmul.f32.gmra.mxu0 %v5232
  %v5234 = vpop.f32.mrf.mxu0
  %v5235 = vadd.f32 %v5156, %v5234
  %v5236 = vand.u32 %v5181, 4294901760
  %v5237 = vsub.f32 %v5181, %v5236
  %v5238 = vand.u32 %v5237, 4294901760
  %v5239 = vsub.f32 %v5237, %v5238
  %v5240 = vand.u32 %v5239, 4294901760
  %5241 = vmatmul.f32.gmra.mxu0 %v5240
  %v5242 = vpop.f32.mrf.mxu0
  %v5243 = vadd.f32 %v5160, %v5242
  %v5244 = vand.u32 %v5184, 4294901760
  %v5245 = vsub.f32 %v5184, %v5244
  %v5246 = vand.u32 %v5245, 4294901760
  %v5247 = vsub.f32 %v5245, %v5246
  %v5248 = vand.u32 %v5247, 4294901760
  %5249 = vmatmul.f32.gmra.mxu0 %v5248
  %v5250 = vpop.f32.mrf.mxu0
  %v5251 = vadd.f32 %v5164, %v5250
  %v5252 = vand.u32 %v5187, 4294901760
  %v5253 = vsub.f32 %v5187, %v5252
  %v5254 = vand.u32 %v5253, 4294901760
  %v5255 = vsub.f32 %v5253, %v5254
  %v5256 = vand.u32 %v5255, 4294901760
  %5257 = vmatmul.f32.gmra.mxu0 %v5256
  %v5258 = vpop.f32.mrf.mxu0
  %v5259 = vadd.f32 %v5168, %v5258
  %v5260 = vand.u32 %v5190, 4294901760
  %v5261 = vsub.f32 %v5190, %v5260
  %v5262 = vand.u32 %v5261, 4294901760
  %v5263 = vsub.f32 %v5261, %v5262
  %v5264 = vand.u32 %v5263, 4294901760
  %5265 = vmatmul.f32.gmra.mxu0 %v5264
  %v5266 = vpop.f32.mrf.mxu0
  %v5267 = vadd.f32 %v5172, %v5266
  %5268 = vdwg.mxu0
  %5269 = vmatpush.msra.mxu0 0.0
  %5270 = vmatpush.msra.mxu0 0.0
  %5271 = vmatpush.msra.mxu0 0.0
  %5272 = vmatpush.msra.mxu0 0.0
  %v5273 = vand.u32 %v4692, 4294901760
  %v5274 = vsub.f32 %v4692, %v5273
  %v5275 = vand.u32 %v5274, 4294901760
  %v5276 = vsub.f32 %v5274, %v5275
  %v5277 = vand.u32 %v5276, 4294901760
  %5278 = vmatpush.msra.mxu0 %v5277
  %v5279 = vand.u32 %v4691, 4294901760
  %v5280 = vsub.f32 %v4691, %v5279
  %v5281 = vand.u32 %v5280, 4294901760
  %v5282 = vsub.f32 %v5280, %v5281
  %v5283 = vand.u32 %v5282, 4294901760
  %5284 = vmatpush.msra.mxu0 %v5283
  %v5285 = vand.u32 %v4690, 4294901760
  %v5286 = vsub.f32 %v4690, %v5285
  %v5287 = vand.u32 %v5286, 4294901760
  %v5288 = vsub.f32 %v5286, %v5287
  %v5289 = vand.u32 %v5288, 4294901760
  %5290 = vmatpush.msra.mxu0 %v5289
  %v5291 = vand.u32 %v4689, 4294901760
  %v5292 = vsub.f32 %v4689, %v5291
  %v5293 = vand.u32 %v5292, 4294901760
  %v5294 = vsub.f32 %v5292, %v5293
  %v5295 = vand.u32 %v5294, 4294901760
  %5296 = vmatpush.msra.mxu0 %v5295
  %v5297 = vand.u32 %v4688, 4294901760
  %v5298 = vsub.f32 %v4688, %v5297
  %v5299 = vand.u32 %v5298, 4294901760
  %v5300 = vsub.f32 %v5298, %v5299
  %v5301 = vand.u32 %v5300, 4294901760
  %5302 = vmatpush.msra.mxu0 %v5301
  %v5303 = vand.u32 %v4687, 4294901760
  %v5304 = vsub.f32 %v4687, %v5303
  %v5305 = vand.u32 %v5304, 4294901760
  %v5306 = vsub.f32 %v5304, %v5305
  %v5307 = vand.u32 %v5306, 4294901760
  %5308 = vmatpush.msra.mxu0 %v5307
  %v5309 = vand.u32 %v4686, 4294901760
  %v5310 = vsub.f32 %v4686, %v5309
  %v5311 = vand.u32 %v5310, 4294901760
  %v5312 = vsub.f32 %v5310, %v5311
  %v5313 = vand.u32 %v5312, 4294901760
  %5314 = vmatpush.msra.mxu0 %v5313
  %v5315 = vand.u32 %v4685, 4294901760
  %v5316 = vsub.f32 %v4685, %v5315
  %v5317 = vand.u32 %v5316, 4294901760
  %v5318 = vsub.f32 %v5316, %v5317
  %v5319 = vand.u32 %v5318, 4294901760
  %5320 = vmatpush.msra.mxu0 %v5319
  %v5321 = vand.u32 %v4684, 4294901760
  %v5322 = vsub.f32 %v4684, %v5321
  %v5323 = vand.u32 %v5322, 4294901760
  %v5324 = vsub.f32 %v5322, %v5323
  %v5325 = vand.u32 %v5324, 4294901760
  %5326 = vmatpush.msra.mxu0 %v5325
  %v5327 = vand.u32 %v4683, 4294901760
  %v5328 = vsub.f32 %v4683, %v5327
  %v5329 = vand.u32 %v5328, 4294901760
  %v5330 = vsub.f32 %v5328, %v5329
  %v5331 = vand.u32 %v5330, 4294901760
  %5332 = vmatpush.msra.mxu0 %v5331
  %v5333 = vand.u32 %v4682, 4294901760
  %v5334 = vsub.f32 %v4682, %v5333
  %v5335 = vand.u32 %v5334, 4294901760
  %v5336 = vsub.f32 %v5334, %v5335
  %v5337 = vand.u32 %v5336, 4294901760
  %5338 = vmatpush.msra.mxu0 %v5337
  %v5339 = vand.u32 %v4681, 4294901760
  %v5340 = vsub.f32 %v4681, %v5339
  %v5341 = vand.u32 %v5340, 4294901760
  %v5342 = vsub.f32 %v5340, %v5341
  %v5343 = vand.u32 %v5342, 4294901760
  %5344 = vmatpush.msra.mxu0 %v5343
  %v5345 = vand.u32 %v5175, 4294901760
  %5346 = vmatmul.f32.gmra.mxu0 %v5345
  %v5347 = vpop.f32.mrf.mxu0
  %v5348 = vadd.f32 %v5227, %v5347
  %v5349 = vand.u32 %v5178, 4294901760
  %5350 = vmatmul.f32.gmra.mxu0 %v5349
  %v5351 = vpop.f32.mrf.mxu0
  %v5352 = vadd.f32 %v5235, %v5351
  %v5353 = vand.u32 %v5181, 4294901760
  %5354 = vmatmul.f32.gmra.mxu0 %v5353
  %v5355 = vpop.f32.mrf.mxu0
  %v5356 = vadd.f32 %v5243, %v5355
  %v5357 = vand.u32 %v5184, 4294901760
  %5358 = vmatmul.f32.gmra.mxu0 %v5357
  %v5359 = vpop.f32.mrf.mxu0
  %v5360 = vadd.f32 %v5251, %v5359
  %v5361 = vand.u32 %v5187, 4294901760
  %5362 = vmatmul.f32.gmra.mxu0 %v5361
  %v5363 = vpop.f32.mrf.mxu0
  %v5364 = vadd.f32 %v5259, %v5363
  %v5365 = vand.u32 %v5190, 4294901760
  %5366 = vmatmul.f32.gmra.mxu0 %v5365
  %v5367 = vpop.f32.mrf.mxu0
  %v5368 = vadd.f32 %v5267, %v5367
  %5369 = vdwg.mxu0
  %5370 = vmatpush.msra.mxu0 0.0
  %5371 = vmatpush.msra.mxu0 0.0
  %5372 = vmatpush.msra.mxu0 0.0
  %5373 = vmatpush.msra.mxu0 0.0
  %v5374 = vand.u32 %v4692, 4294901760
  %v5375 = vsub.f32 %v4692, %v5374
  %5376 = vmatpush.msra.mxu0 %v5375
  %v5377 = vand.u32 %v4691, 4294901760
  %v5378 = vsub.f32 %v4691, %v5377
  %5379 = vmatpush.msra.mxu0 %v5378
  %v5380 = vand.u32 %v4690, 4294901760
  %v5381 = vsub.f32 %v4690, %v5380
  %5382 = vmatpush.msra.mxu0 %v5381
  %v5383 = vand.u32 %v4689, 4294901760
  %v5384 = vsub.f32 %v4689, %v5383
  %5385 = vmatpush.msra.mxu0 %v5384
  %v5386 = vand.u32 %v4688, 4294901760
  %v5387 = vsub.f32 %v4688, %v5386
  %5388 = vmatpush.msra.mxu0 %v5387
  %v5389 = vand.u32 %v4687, 4294901760
  %v5390 = vsub.f32 %v4687, %v5389
  %5391 = vmatpush.msra.mxu0 %v5390
  %v5392 = vand.u32 %v4686, 4294901760
  %v5393 = vsub.f32 %v4686, %v5392
  %5394 = vmatpush.msra.mxu0 %v5393
  %v5395 = vand.u32 %v4685, 4294901760
  %v5396 = vsub.f32 %v4685, %v5395
  %5397 = vmatpush.msra.mxu0 %v5396
  %v5398 = vand.u32 %v4684, 4294901760
  %v5399 = vsub.f32 %v4684, %v5398
  %5400 = vmatpush.msra.mxu0 %v5399
  %v5401 = vand.u32 %v4683, 4294901760
  %v5402 = vsub.f32 %v4683, %v5401
  %5403 = vmatpush.msra.mxu0 %v5402
  %v5404 = vand.u32 %v4682, 4294901760
  %v5405 = vsub.f32 %v4682, %v5404
  %5406 = vmatpush.msra.mxu0 %v5405
  %v5407 = vand.u32 %v4681, 4294901760
  %v5408 = vsub.f32 %v4681, %v5407
  %5409 = vmatpush.msra.mxu0 %v5408
  %v5410 = vand.u32 %v5175, 4294901760
  %v5411 = vsub.f32 %v5175, %v5410
  %5412 = vmatmul.f32.gmra.mxu0 %v5411
  %v5413 = vpop.f32.mrf.mxu0
  %v5414 = vadd.f32 %v5348, %v5413
  %v5415 = vand.u32 %v5178, 4294901760
  %v5416 = vsub.f32 %v5178, %v5415
  %5417 = vmatmul.f32.gmra.mxu0 %v5416
  %v5418 = vpop.f32.mrf.mxu0
  %v5419 = vadd.f32 %v5352, %v5418
  %v5420 = vand.u32 %v5181, 4294901760
  %v5421 = vsub.f32 %v5181, %v5420
  %5422 = vmatmul.f32.gmra.mxu0 %v5421
  %v5423 = vpop.f32.mrf.mxu0
  %v5424 = vadd.f32 %v5356, %v5423
  %v5425 = vand.u32 %v5184, 4294901760
  %v5426 = vsub.f32 %v5184, %v5425
  %5427 = vmatmul.f32.gmra.mxu0 %v5426
  %v5428 = vpop.f32.mrf.mxu0
  %v5429 = vadd.f32 %v5360, %v5428
  %v5430 = vand.u32 %v5187, 4294901760
  %v5431 = vsub.f32 %v5187, %v5430
  %5432 = vmatmul.f32.gmra.mxu0 %v5431
  %v5433 = vpop.f32.mrf.mxu0
  %v5434 = vadd.f32 %v5364, %v5433
  %v5435 = vand.u32 %v5190, 4294901760
  %v5436 = vsub.f32 %v5190, %v5435
  %5437 = vmatmul.f32.gmra.mxu0 %v5436
  %v5438 = vpop.f32.mrf.mxu0
  %v5439 = vadd.f32 %v5368, %v5438
  %5440 = vdwg.mxu0
  %5441 = vmatpush.msra.mxu0 0.0
  %5442 = vmatpush.msra.mxu0 0.0
  %5443 = vmatpush.msra.mxu0 0.0
  %5444 = vmatpush.msra.mxu0 0.0
  %v5445 = vand.u32 %v4692, 4294901760
  %5446 = vmatpush.msra.mxu0 %v5445
  %v5447 = vand.u32 %v4691, 4294901760
  %5448 = vmatpush.msra.mxu0 %v5447
  %v5449 = vand.u32 %v4690, 4294901760
  %5450 = vmatpush.msra.mxu0 %v5449
  %v5451 = vand.u32 %v4689, 4294901760
  %5452 = vmatpush.msra.mxu0 %v5451
  %v5453 = vand.u32 %v4688, 4294901760
  %5454 = vmatpush.msra.mxu0 %v5453
  %v5455 = vand.u32 %v4687, 4294901760
  %5456 = vmatpush.msra.mxu0 %v5455
  %v5457 = vand.u32 %v4686, 4294901760
  %5458 = vmatpush.msra.mxu0 %v5457
  %v5459 = vand.u32 %v4685, 4294901760
  %5460 = vmatpush.msra.mxu0 %v5459
  %v5461 = vand.u32 %v4684, 4294901760
  %5462 = vmatpush.msra.mxu0 %v5461
  %v5463 = vand.u32 %v4683, 4294901760
  %5464 = vmatpush.msra.mxu0 %v5463
  %v5465 = vand.u32 %v4682, 4294901760
  %5466 = vmatpush.msra.mxu0 %v5465
  %v5467 = vand.u32 %v4681, 4294901760
  %5468 = vmatpush.msra.mxu0 %v5467
  %v5469 = vand.u32 %v5175, 4294901760
  %v5470 = vsub.f32 %v5175, %v5469
  %v5471 = vand.u32 %v5470, 4294901760
  %5472 = vmatmul.f32.gmra.mxu0 %v5471
  %v5473 = vpop.f32.mrf.mxu0
  %v5474 = vadd.f32 %v5414, %v5473
  %v5475 = vand.u32 %v5178, 4294901760
  %v5476 = vsub.f32 %v5178, %v5475
  %v5477 = vand.u32 %v5476, 4294901760
  %5478 = vmatmul.f32.gmra.mxu0 %v5477
  %v5479 = vpop.f32.mrf.mxu0
  %v5480 = vadd.f32 %v5419, %v5479
  %v5481 = vand.u32 %v5181, 4294901760
  %v5482 = vsub.f32 %v5181, %v5481
  %v5483 = vand.u32 %v5482, 4294901760
  %5484 = vmatmul.f32.gmra.mxu0 %v5483
  %v5485 = vpop.f32.mrf.mxu0
  %v5486 = vadd.f32 %v5424, %v5485
  %v5487 = vand.u32 %v5184, 4294901760
  %v5488 = vsub.f32 %v5184, %v5487
  %v5489 = vand.u32 %v5488, 4294901760
  %5490 = vmatmul.f32.gmra.mxu0 %v5489
  %v5491 = vpop.f32.mrf.mxu0
  %v5492 = vadd.f32 %v5429, %v5491
  %v5493 = vand.u32 %v5187, 4294901760
  %v5494 = vsub.f32 %v5187, %v5493
  %v5495 = vand.u32 %v5494, 4294901760
  %5496 = vmatmul.f32.gmra.mxu0 %v5495
  %v5497 = vpop.f32.mrf.mxu0
  %v5498 = vadd.f32 %v5434, %v5497
  %v5499 = vand.u32 %v5190, 4294901760
  %v5500 = vsub.f32 %v5190, %v5499
  %v5501 = vand.u32 %v5500, 4294901760
  %5502 = vmatmul.f32.gmra.mxu0 %v5501
  %v5503 = vpop.f32.mrf.mxu0
  %v5504 = vadd.f32 %v5439, %v5503
  %5505 = vdwg.mxu0
  %5506 = vmatpush.msra.mxu0 0.0
  %5507 = vmatpush.msra.mxu0 0.0
  %5508 = vmatpush.msra.mxu0 0.0
  %5509 = vmatpush.msra.mxu0 0.0
  %v5510 = vand.u32 %v4692, 4294901760
  %v5511 = vsub.f32 %v4692, %v5510
  %v5512 = vand.u32 %v5511, 4294901760
  %5513 = vmatpush.msra.mxu0 %v5512
  %v5514 = vand.u32 %v4691, 4294901760
  %v5515 = vsub.f32 %v4691, %v5514
  %v5516 = vand.u32 %v5515, 4294901760
  %5517 = vmatpush.msra.mxu0 %v5516
  %v5518 = vand.u32 %v4690, 4294901760
  %v5519 = vsub.f32 %v4690, %v5518
  %v5520 = vand.u32 %v5519, 4294901760
  %5521 = vmatpush.msra.mxu0 %v5520
  %v5522 = vand.u32 %v4689, 4294901760
  %v5523 = vsub.f32 %v4689, %v5522
  %v5524 = vand.u32 %v5523, 4294901760
  %5525 = vmatpush.msra.mxu0 %v5524
  %v5526 = vand.u32 %v4688, 4294901760
  %v5527 = vsub.f32 %v4688, %v5526
  %v5528 = vand.u32 %v5527, 4294901760
  %5529 = vmatpush.msra.mxu0 %v5528
  %v5530 = vand.u32 %v4687, 4294901760
  %v5531 = vsub.f32 %v4687, %v5530
  %v5532 = vand.u32 %v5531, 4294901760
  %5533 = vmatpush.msra.mxu0 %v5532
  %v5534 = vand.u32 %v4686, 4294901760
  %v5535 = vsub.f32 %v4686, %v5534
  %v5536 = vand.u32 %v5535, 4294901760
  %5537 = vmatpush.msra.mxu0 %v5536
  %v5538 = vand.u32 %v4685, 4294901760
  %v5539 = vsub.f32 %v4685, %v5538
  %v5540 = vand.u32 %v5539, 4294901760
  %5541 = vmatpush.msra.mxu0 %v5540
  %v5542 = vand.u32 %v4684, 4294901760
  %v5543 = vsub.f32 %v4684, %v5542
  %v5544 = vand.u32 %v5543, 4294901760
  %5545 = vmatpush.msra.mxu0 %v5544
  %v5546 = vand.u32 %v4683, 4294901760
  %v5547 = vsub.f32 %v4683, %v5546
  %v5548 = vand.u32 %v5547, 4294901760
  %5549 = vmatpush.msra.mxu0 %v5548
  %v5550 = vand.u32 %v4682, 4294901760
  %v5551 = vsub.f32 %v4682, %v5550
  %v5552 = vand.u32 %v5551, 4294901760
  %5553 = vmatpush.msra.mxu0 %v5552
  %v5554 = vand.u32 %v4681, 4294901760
  %v5555 = vsub.f32 %v4681, %v5554
  %v5556 = vand.u32 %v5555, 4294901760
  %5557 = vmatpush.msra.mxu0 %v5556
  %v5558 = vand.u32 %v5175, 4294901760
  %5559 = vmatmul.f32.gmra.mxu0 %v5558
  %v5560 = vpop.f32.mrf.mxu0
  %v5561 = vadd.f32 %v5474, %v5560
  %v5562 = vand.u32 %v5178, 4294901760
  %5563 = vmatmul.f32.gmra.mxu0 %v5562
  %v5564 = vpop.f32.mrf.mxu0
  %v5565 = vadd.f32 %v5480, %v5564
  %v5566 = vand.u32 %v5181, 4294901760
  %5567 = vmatmul.f32.gmra.mxu0 %v5566
  %v5568 = vpop.f32.mrf.mxu0
  %v5569 = vadd.f32 %v5486, %v5568
  %v5570 = vand.u32 %v5184, 4294901760
  %5571 = vmatmul.f32.gmra.mxu0 %v5570
  %v5572 = vpop.f32.mrf.mxu0
  %v5573 = vadd.f32 %v5492, %v5572
  %v5574 = vand.u32 %v5187, 4294901760
  %5575 = vmatmul.f32.gmra.mxu0 %v5574
  %v5576 = vpop.f32.mrf.mxu0
  %v5577 = vadd.f32 %v5498, %v5576
  %v5578 = vand.u32 %v5190, 4294901760
  %5579 = vmatmul.f32.gmra.mxu0 %v5578
  %v5580 = vpop.f32.mrf.mxu0
  %v5581 = vadd.f32 %v5504, %v5580
  %5582 = vdwg.mxu0
  %5583 = vmatpush.msra.mxu0 0.0
  %5584 = vmatpush.msra.mxu0 0.0
  %5585 = vmatpush.msra.mxu0 0.0
  %5586 = vmatpush.msra.mxu0 0.0
  %v5587 = vand.u32 %v4692, 4294901760
  %5588 = vmatpush.msra.mxu0 %v5587
  %v5589 = vand.u32 %v4691, 4294901760
  %5590 = vmatpush.msra.mxu0 %v5589
  %v5591 = vand.u32 %v4690, 4294901760
  %5592 = vmatpush.msra.mxu0 %v5591
  %v5593 = vand.u32 %v4689, 4294901760
  %5594 = vmatpush.msra.mxu0 %v5593
  %v5595 = vand.u32 %v4688, 4294901760
  %5596 = vmatpush.msra.mxu0 %v5595
  %v5597 = vand.u32 %v4687, 4294901760
  %5598 = vmatpush.msra.mxu0 %v5597
  %v5599 = vand.u32 %v4686, 4294901760
  %5600 = vmatpush.msra.mxu0 %v5599
  %v5601 = vand.u32 %v4685, 4294901760
  %5602 = vmatpush.msra.mxu0 %v5601
  %v5603 = vand.u32 %v4684, 4294901760
  %5604 = vmatpush.msra.mxu0 %v5603
  %v5605 = vand.u32 %v4683, 4294901760
  %5606 = vmatpush.msra.mxu0 %v5605
  %v5607 = vand.u32 %v4682, 4294901760
  %5608 = vmatpush.msra.mxu0 %v5607
  %v5609 = vand.u32 %v4681, 4294901760
  %5610 = vmatpush.msra.mxu0 %v5609
  %v5611 = vand.u32 %v5175, 4294901760
  %5612 = vmatmul.f32.gmra.mxu0 %v5611
  %v5613 = vpop.f32.mrf.mxu0
  %v5614 = vadd.f32 %v5561, %v5613
  %v5615 = vand.u32 %v5178, 4294901760
  %5616 = vmatmul.f32.gmra.mxu0 %v5615
  %v5617 = vpop.f32.mrf.mxu0
  %v5618 = vadd.f32 %v5565, %v5617
  %v5619 = vand.u32 %v5181, 4294901760
  %5620 = vmatmul.f32.gmra.mxu0 %v5619
  %v5621 = vpop.f32.mrf.mxu0
  %v5622 = vadd.f32 %v5569, %v5621
  %v5623 = vand.u32 %v5184, 4294901760
  %5624 = vmatmul.f32.gmra.mxu0 %v5623
  %v5625 = vpop.f32.mrf.mxu0
  %v5626 = vadd.f32 %v5573, %v5625
  %v5627 = vand.u32 %v5187, 4294901760
  %5628 = vmatmul.f32.gmra.mxu0 %v5627
  %v5629 = vpop.f32.mrf.mxu0
  %v5630 = vadd.f32 %v5577, %v5629
  %v5631 = vand.u32 %v5190, 4294901760
  %5632 = vmatmul.f32.gmra.mxu0 %v5631
  %v5633 = vpop.f32.mrf.mxu0
  %v5634 = vadd.f32 %v5581, %v5633
  %5635 = vdwg.mxu0
  %v5636 = vld [vmem:[#allocation3 + $0x8] sm:$0xff]
  %v5637 = vld [vmem:[#allocation3 + $0x10] sm:$0xff]
  %v5638 = vld [vmem:[#allocation3 + $0x18] sm:$0xff]
  %v5639 = vld [vmem:[#allocation3 + $0x20] sm:$0xff]
  %v5640 = vld [vmem:[#allocation3 + $0x28] sm:$0xff]
  %v5641 = vld [vmem:[#allocation3 + $0x30] sm:$0x7]
  %s5642 = scalar_lea.vmem %s5, 192
  %v5643 = vld [vmem:[%s5642] sm:$0xff]
  %v5644 = vld [vmem:[%s5642 + $0x8] sm:$0xff]
  %v5645 = vld [vmem:[%s5642 + $0x10] sm:$0xff]
  %v5646 = vld [vmem:[%s5642 + $0x18] sm:$0xff]
  %v5647 = vld [vmem:[%s5642 + $0x20] sm:$0xff]
  %v5648 = vld [vmem:[%s5642 + $0x28] sm:$0xff]
  %v5649 = vld [vmem:[%s5642 + $0x30] sm:$0xff]
  %v5650 = vld [vmem:[%s5642 + $0x38] sm:$0xff]
  %v5651 = vld [vmem:[%s5642 + $0x40] sm:$0xff]
  %v5652 = vld [vmem:[%s5642 + $0x48] sm:$0xff]
  %v5653 = vld [vmem:[%s5642 + $0x50] sm:$0xff]
  %v5654 = vld [vmem:[%s5642 + $0x58] sm:$0xff]
  %v5656 = vsel %vm4666, %v5636, 0
  %v5659 = vsel %vm4666, %v5637, 0
  %v5662 = vsel %vm4666, %v5638, 0
  %v5665 = vsel %vm4666, %v5639, 0
  %v5668 = vsel %vm4666, %v5640, 0
  %v5671 = vsel %vm4666, %v5641, 0
  %5673 = vmatpush.msra.mxu0 0.0
  %5674 = vmatpush.msra.mxu0 0.0
  %5675 = vmatpush.msra.mxu0 0.0
  %5676 = vmatpush.msra.mxu0 0.0
  %v5677 = vand.u32 %v5654, 4294901760
  %5678 = vmatpush.msra.mxu0 %v5677
  %v5679 = vand.u32 %v5653, 4294901760
  %5680 = vmatpush.msra.mxu0 %v5679
  %v5681 = vand.u32 %v5652, 4294901760
  %5682 = vmatpush.msra.mxu0 %v5681
  %v5683 = vand.u32 %v5651, 4294901760
  %5684 = vmatpush.msra.mxu0 %v5683
  %v5685 = vand.u32 %v5650, 4294901760
  %5686 = vmatpush.msra.mxu0 %v5685
  %v5687 = vand.u32 %v5649, 4294901760
  %5688 = vmatpush.msra.mxu0 %v5687
  %v5689 = vand.u32 %v5648, 4294901760
  %5690 = vmatpush.msra.mxu0 %v5689
  %v5691 = vand.u32 %v5647, 4294901760
  %5692 = vmatpush.msra.mxu0 %v5691
  %v5693 = vand.u32 %v5646, 4294901760
  %5694 = vmatpush.msra.mxu0 %v5693
  %v5695 = vand.u32 %v5645, 4294901760
  %5696 = vmatpush.msra.mxu0 %v5695
  %v5697 = vand.u32 %v5644, 4294901760
  %5698 = vmatpush.msra.mxu0 %v5697
  %v5699 = vand.u32 %v5643, 4294901760
  %5700 = vmatpush.msra.mxu0 %v5699
  %v5701 = vand.u32 %v5656, 4294901760
  %v5702 = vsub.f32 %v5656, %v5701
  %v5703 = vand.u32 %v5702, 4294901760
  %v5704 = vsub.f32 %v5702, %v5703
  %v5705 = vand.u32 %v5704, 4294901760
  %5706 = vmatmul.f32.gmra.mxu0 %v5705
  %v5707 = vpop.f32.mrf.mxu0
  %v5708 = vadd.f32 0.0, %v5707
  %v5709 = vand.u32 %v5659, 4294901760
  %v5710 = vsub.f32 %v5659, %v5709
  %v5711 = vand.u32 %v5710, 4294901760
  %v5712 = vsub.f32 %v5710, %v5711
  %v5713 = vand.u32 %v5712, 4294901760
  %5714 = vmatmul.f32.gmra.mxu0 %v5713
  %v5715 = vpop.f32.mrf.mxu0
  %v5716 = vadd.f32 0.0, %v5715
  %v5717 = vand.u32 %v5662, 4294901760
  %v5718 = vsub.f32 %v5662, %v5717
  %v5719 = vand.u32 %v5718, 4294901760
  %v5720 = vsub.f32 %v5718, %v5719
  %v5721 = vand.u32 %v5720, 4294901760
  %5722 = vmatmul.f32.gmra.mxu0 %v5721
  %v5723 = vpop.f32.mrf.mxu0
  %v5724 = vadd.f32 0.0, %v5723
  %v5725 = vand.u32 %v5665, 4294901760
  %v5726 = vsub.f32 %v5665, %v5725
  %v5727 = vand.u32 %v5726, 4294901760
  %v5728 = vsub.f32 %v5726, %v5727
  %v5729 = vand.u32 %v5728, 4294901760
  %5730 = vmatmul.f32.gmra.mxu0 %v5729
  %v5731 = vpop.f32.mrf.mxu0
  %v5732 = vadd.f32 0.0, %v5731
  %v5733 = vand.u32 %v5668, 4294901760
  %v5734 = vsub.f32 %v5668, %v5733
  %v5735 = vand.u32 %v5734, 4294901760
  %v5736 = vsub.f32 %v5734, %v5735
  %v5737 = vand.u32 %v5736, 4294901760
  %5738 = vmatmul.f32.gmra.mxu0 %v5737
  %v5739 = vpop.f32.mrf.mxu0
  %v5740 = vadd.f32 0.0, %v5739
  %v5741 = vand.u32 %v5671, 4294901760
  %v5742 = vsub.f32 %v5671, %v5741
  %v5743 = vand.u32 %v5742, 4294901760
  %v5744 = vsub.f32 %v5742, %v5743
  %v5745 = vand.u32 %v5744, 4294901760
  %5746 = vmatmul.f32.gmra.mxu0 %v5745
  %v5747 = vpop.f32.mrf.mxu0
  %v5748 = vadd.f32 0.0, %v5747
  %5749 = vdwg.mxu0
  %5750 = vmatpush.msra.mxu0 0.0
  %5751 = vmatpush.msra.mxu0 0.0
  %5752 = vmatpush.msra.mxu0 0.0
  %5753 = vmatpush.msra.mxu0 0.0
  %v5754 = vand.u32 %v5654, 4294901760
  %v5755 = vsub.f32 %v5654, %v5754
  %v5756 = vand.u32 %v5755, 4294901760
  %v5757 = vsub.f32 %v5755, %v5756
  %v5758 = vand.u32 %v5757, 4294901760
  %5759 = vmatpush.msra.mxu0 %v5758
  %v5760 = vand.u32 %v5653, 4294901760
  %v5761 = vsub.f32 %v5653, %v5760
  %v5762 = vand.u32 %v5761, 4294901760
  %v5763 = vsub.f32 %v5761, %v5762
  %v5764 = vand.u32 %v5763, 4294901760
  %5765 = vmatpush.msra.mxu0 %v5764
  %v5766 = vand.u32 %v5652, 4294901760
  %v5767 = vsub.f32 %v5652, %v5766
  %v5768 = vand.u32 %v5767, 4294901760
  %v5769 = vsub.f32 %v5767, %v5768
  %v5770 = vand.u32 %v5769, 4294901760
  %5771 = vmatpush.msra.mxu0 %v5770
  %v5772 = vand.u32 %v5651, 4294901760
  %v5773 = vsub.f32 %v5651, %v5772
  %v5774 = vand.u32 %v5773, 4294901760
  %v5775 = vsub.f32 %v5773, %v5774
  %v5776 = vand.u32 %v5775, 4294901760
  %5777 = vmatpush.msra.mxu0 %v5776
  %v5778 = vand.u32 %v5650, 4294901760
  %v5779 = vsub.f32 %v5650, %v5778
  %v5780 = vand.u32 %v5779, 4294901760
  %v5781 = vsub.f32 %v5779, %v5780
  %v5782 = vand.u32 %v5781, 4294901760
  %5783 = vmatpush.msra.mxu0 %v5782
  %v5784 = vand.u32 %v5649, 4294901760
  %v5785 = vsub.f32 %v5649, %v5784
  %v5786 = vand.u32 %v5785, 4294901760
  %v5787 = vsub.f32 %v5785, %v5786
  %v5788 = vand.u32 %v5787, 4294901760
  %5789 = vmatpush.msra.mxu0 %v5788
  %v5790 = vand.u32 %v5648, 4294901760
  %v5791 = vsub.f32 %v5648, %v5790
  %v5792 = vand.u32 %v5791, 4294901760
  %v5793 = vsub.f32 %v5791, %v5792
  %v5794 = vand.u32 %v5793, 4294901760
  %5795 = vmatpush.msra.mxu0 %v5794
  %v5796 = vand.u32 %v5647, 4294901760
  %v5797 = vsub.f32 %v5647, %v5796
  %v5798 = vand.u32 %v5797, 4294901760
  %v5799 = vsub.f32 %v5797, %v5798
  %v5800 = vand.u32 %v5799, 4294901760
  %5801 = vmatpush.msra.mxu0 %v5800
  %v5802 = vand.u32 %v5646, 4294901760
  %v5803 = vsub.f32 %v5646, %v5802
  %v5804 = vand.u32 %v5803, 4294901760
  %v5805 = vsub.f32 %v5803, %v5804
  %v5806 = vand.u32 %v5805, 4294901760
  %5807 = vmatpush.msra.mxu0 %v5806
  %v5808 = vand.u32 %v5645, 4294901760
  %v5809 = vsub.f32 %v5645, %v5808
  %v5810 = vand.u32 %v5809, 4294901760
  %v5811 = vsub.f32 %v5809, %v5810
  %v5812 = vand.u32 %v5811, 4294901760
  %5813 = vmatpush.msra.mxu0 %v5812
  %v5814 = vand.u32 %v5644, 4294901760
  %v5815 = vsub.f32 %v5644, %v5814
  %v5816 = vand.u32 %v5815, 4294901760
  %v5817 = vsub.f32 %v5815, %v5816
  %v5818 = vand.u32 %v5817, 4294901760
  %5819 = vmatpush.msra.mxu0 %v5818
  %v5820 = vand.u32 %v5643, 4294901760
  %v5821 = vsub.f32 %v5643, %v5820
  %v5822 = vand.u32 %v5821, 4294901760
  %v5823 = vsub.f32 %v5821, %v5822
  %v5824 = vand.u32 %v5823, 4294901760
  %5825 = vmatpush.msra.mxu0 %v5824
  %v5826 = vand.u32 %v5656, 4294901760
  %5827 = vmatmul.f32.gmra.mxu0 %v5826
  %v5828 = vpop.f32.mrf.mxu0
  %v5829 = vadd.f32 %v5708, %v5828
  %v5830 = vand.u32 %v5659, 4294901760
  %5831 = vmatmul.f32.gmra.mxu0 %v5830
  %v5832 = vpop.f32.mrf.mxu0
  %v5833 = vadd.f32 %v5716, %v5832
  %v5834 = vand.u32 %v5662, 4294901760
  %5835 = vmatmul.f32.gmra.mxu0 %v5834
  %v5836 = vpop.f32.mrf.mxu0
  %v5837 = vadd.f32 %v5724, %v5836
  %v5838 = vand.u32 %v5665, 4294901760
  %5839 = vmatmul.f32.gmra.mxu0 %v5838
  %v5840 = vpop.f32.mrf.mxu0
  %v5841 = vadd.f32 %v5732, %v5840
  %v5842 = vand.u32 %v5668, 4294901760
  %5843 = vmatmul.f32.gmra.mxu0 %v5842
  %v5844 = vpop.f32.mrf.mxu0
  %v5845 = vadd.f32 %v5740, %v5844
  %v5846 = vand.u32 %v5671, 4294901760
  %5847 = vmatmul.f32.gmra.mxu0 %v5846
  %v5848 = vpop.f32.mrf.mxu0
  %v5849 = vadd.f32 %v5748, %v5848
  %5850 = vdwg.mxu0
  %5851 = vmatpush.msra.mxu0 0.0
  %5852 = vmatpush.msra.mxu0 0.0
  %5853 = vmatpush.msra.mxu0 0.0
  %5854 = vmatpush.msra.mxu0 0.0
  %v5855 = vand.u32 %v5654, 4294901760
  %v5856 = vsub.f32 %v5654, %v5855
  %5857 = vmatpush.msra.mxu0 %v5856
  %v5858 = vand.u32 %v5653, 4294901760
  %v5859 = vsub.f32 %v5653, %v5858
  %5860 = vmatpush.msra.mxu0 %v5859
  %v5861 = vand.u32 %v5652, 4294901760
  %v5862 = vsub.f32 %v5652, %v5861
  %5863 = vmatpush.msra.mxu0 %v5862
  %v5864 = vand.u32 %v5651, 4294901760
  %v5865 = vsub.f32 %v5651, %v5864
  %5866 = vmatpush.msra.mxu0 %v5865
  %v5867 = vand.u32 %v5650, 4294901760
  %v5868 = vsub.f32 %v5650, %v5867
  %5869 = vmatpush.msra.mxu0 %v5868
  %v5870 = vand.u32 %v5649, 4294901760
  %v5871 = vsub.f32 %v5649, %v5870
  %5872 = vmatpush.msra.mxu0 %v5871
  %v5873 = vand.u32 %v5648, 4294901760
  %v5874 = vsub.f32 %v5648, %v5873
  %5875 = vmatpush.msra.mxu0 %v5874
  %v5876 = vand.u32 %v5647, 4294901760
  %v5877 = vsub.f32 %v5647, %v5876
  %5878 = vmatpush.msra.mxu0 %v5877
  %v5879 = vand.u32 %v5646, 4294901760
  %v5880 = vsub.f32 %v5646, %v5879
  %5881 = vmatpush.msra.mxu0 %v5880
  %v5882 = vand.u32 %v5645, 4294901760
  %v5883 = vsub.f32 %v5645, %v5882
  %5884 = vmatpush.msra.mxu0 %v5883
  %v5885 = vand.u32 %v5644, 4294901760
  %v5886 = vsub.f32 %v5644, %v5885
  %5887 = vmatpush.msra.mxu0 %v5886
  %v5888 = vand.u32 %v5643, 4294901760
  %v5889 = vsub.f32 %v5643, %v5888
  %5890 = vmatpush.msra.mxu0 %v5889
  %v5891 = vand.u32 %v5656, 4294901760
  %v5892 = vsub.f32 %v5656, %v5891
  %5893 = vmatmul.f32.gmra.mxu0 %v5892
  %v5894 = vpop.f32.mrf.mxu0
  %v5895 = vadd.f32 %v5829, %v5894
  %v5896 = vand.u32 %v5659, 4294901760
  %v5897 = vsub.f32 %v5659, %v5896
  %5898 = vmatmul.f32.gmra.mxu0 %v5897
  %v5899 = vpop.f32.mrf.mxu0
  %v5900 = vadd.f32 %v5833, %v5899
  %v5901 = vand.u32 %v5662, 4294901760
  %v5902 = vsub.f32 %v5662, %v5901
  %5903 = vmatmul.f32.gmra.mxu0 %v5902
  %v5904 = vpop.f32.mrf.mxu0
  %v5905 = vadd.f32 %v5837, %v5904
  %v5906 = vand.u32 %v5665, 4294901760
  %v5907 = vsub.f32 %v5665, %v5906
  %5908 = vmatmul.f32.gmra.mxu0 %v5907
  %v5909 = vpop.f32.mrf.mxu0
  %v5910 = vadd.f32 %v5841, %v5909
  %v5911 = vand.u32 %v5668, 4294901760
  %v5912 = vsub.f32 %v5668, %v5911
  %5913 = vmatmul.f32.gmra.mxu0 %v5912
  %v5914 = vpop.f32.mrf.mxu0
  %v5915 = vadd.f32 %v5845, %v5914
  %v5916 = vand.u32 %v5671, 4294901760
  %v5917 = vsub.f32 %v5671, %v5916
  %5918 = vmatmul.f32.gmra.mxu0 %v5917
  %v5919 = vpop.f32.mrf.mxu0
  %v5920 = vadd.f32 %v5849, %v5919
  %5921 = vdwg.mxu0
  %5922 = vmatpush.msra.mxu0 0.0
  %5923 = vmatpush.msra.mxu0 0.0
  %5924 = vmatpush.msra.mxu0 0.0
  %5925 = vmatpush.msra.mxu0 0.0
  %v5926 = vand.u32 %v5654, 4294901760
  %5927 = vmatpush.msra.mxu0 %v5926
  %v5928 = vand.u32 %v5653, 4294901760
  %5929 = vmatpush.msra.mxu0 %v5928
  %v5930 = vand.u32 %v5652, 4294901760
  %5931 = vmatpush.msra.mxu0 %v5930
  %v5932 = vand.u32 %v5651, 4294901760
  %5933 = vmatpush.msra.mxu0 %v5932
  %v5934 = vand.u32 %v5650, 4294901760
  %5935 = vmatpush.msra.mxu0 %v5934
  %v5936 = vand.u32 %v5649, 4294901760
  %5937 = vmatpush.msra.mxu0 %v5936
  %v5938 = vand.u32 %v5648, 4294901760
  %5939 = vmatpush.msra.mxu0 %v5938
  %v5940 = vand.u32 %v5647, 4294901760
  %5941 = vmatpush.msra.mxu0 %v5940
  %v5942 = vand.u32 %v5646, 4294901760
  %5943 = vmatpush.msra.mxu0 %v5942
  %v5944 = vand.u32 %v5645, 4294901760
  %5945 = vmatpush.msra.mxu0 %v5944
  %v5946 = vand.u32 %v5644, 4294901760
  %5947 = vmatpush.msra.mxu0 %v5946
  %v5948 = vand.u32 %v5643, 4294901760
  %5949 = vmatpush.msra.mxu0 %v5948
  %v5950 = vand.u32 %v5656, 4294901760
  %v5951 = vsub.f32 %v5656, %v5950
  %v5952 = vand.u32 %v5951, 4294901760
  %5953 = vmatmul.f32.gmra.mxu0 %v5952
  %v5954 = vpop.f32.mrf.mxu0
  %v5955 = vadd.f32 %v5895, %v5954
  %v5956 = vand.u32 %v5659, 4294901760
  %v5957 = vsub.f32 %v5659, %v5956
  %v5958 = vand.u32 %v5957, 4294901760
  %5959 = vmatmul.f32.gmra.mxu0 %v5958
  %v5960 = vpop.f32.mrf.mxu0
  %v5961 = vadd.f32 %v5900, %v5960
  %v5962 = vand.u32 %v5662, 4294901760
  %v5963 = vsub.f32 %v5662, %v5962
  %v5964 = vand.u32 %v5963, 4294901760
  %5965 = vmatmul.f32.gmra.mxu0 %v5964
  %v5966 = vpop.f32.mrf.mxu0
  %v5967 = vadd.f32 %v5905, %v5966
  %v5968 = vand.u32 %v5665, 4294901760
  %v5969 = vsub.f32 %v5665, %v5968
  %v5970 = vand.u32 %v5969, 4294901760
  %5971 = vmatmul.f32.gmra.mxu0 %v5970
  %v5972 = vpop.f32.mrf.mxu0
  %v5973 = vadd.f32 %v5910, %v5972
  %v5974 = vand.u32 %v5668, 4294901760
  %v5975 = vsub.f32 %v5668, %v5974
  %v5976 = vand.u32 %v5975, 4294901760
  %5977 = vmatmul.f32.gmra.mxu0 %v5976
  %v5978 = vpop.f32.mrf.mxu0
  %v5979 = vadd.f32 %v5915, %v5978
  %v5980 = vand.u32 %v5671, 4294901760
  %v5981 = vsub.f32 %v5671, %v5980
  %v5982 = vand.u32 %v5981, 4294901760
  %5983 = vmatmul.f32.gmra.mxu0 %v5982
  %v5984 = vpop.f32.mrf.mxu0
  %v5985 = vadd.f32 %v5920, %v5984
  %5986 = vdwg.mxu0
  %5987 = vmatpush.msra.mxu0 0.0
  %5988 = vmatpush.msra.mxu0 0.0
  %5989 = vmatpush.msra.mxu0 0.0
  %5990 = vmatpush.msra.mxu0 0.0
  %v5991 = vand.u32 %v5654, 4294901760
  %v5992 = vsub.f32 %v5654, %v5991
  %v5993 = vand.u32 %v5992, 4294901760
  %5994 = vmatpush.msra.mxu0 %v5993
  %v5995 = vand.u32 %v5653, 4294901760
  %v5996 = vsub.f32 %v5653, %v5995
  %v5997 = vand.u32 %v5996, 4294901760
  %5998 = vmatpush.msra.mxu0 %v5997
  %v5999 = vand.u32 %v5652, 4294901760
  %v6000 = vsub.f32 %v5652, %v5999
  %v6001 = vand.u32 %v6000, 4294901760
  %6002 = vmatpush.msra.mxu0 %v6001
  %v6003 = vand.u32 %v5651, 4294901760
  %v6004 = vsub.f32 %v5651, %v6003
  %v6005 = vand.u32 %v6004, 4294901760
  %6006 = vmatpush.msra.mxu0 %v6005
  %v6007 = vand.u32 %v5650, 4294901760
  %v6008 = vsub.f32 %v5650, %v6007
  %v6009 = vand.u32 %v6008, 4294901760
  %6010 = vmatpush.msra.mxu0 %v6009
  %v6011 = vand.u32 %v5649, 4294901760
  %v6012 = vsub.f32 %v5649, %v6011
  %v6013 = vand.u32 %v6012, 4294901760
  %6014 = vmatpush.msra.mxu0 %v6013
  %v6015 = vand.u32 %v5648, 4294901760
  %v6016 = vsub.f32 %v5648, %v6015
  %v6017 = vand.u32 %v6016, 4294901760
  %6018 = vmatpush.msra.mxu0 %v6017
  %v6019 = vand.u32 %v5647, 4294901760
  %v6020 = vsub.f32 %v5647, %v6019
  %v6021 = vand.u32 %v6020, 4294901760
  %6022 = vmatpush.msra.mxu0 %v6021
  %v6023 = vand.u32 %v5646, 4294901760
  %v6024 = vsub.f32 %v5646, %v6023
  %v6025 = vand.u32 %v6024, 4294901760
  %6026 = vmatpush.msra.mxu0 %v6025
  %v6027 = vand.u32 %v5645, 4294901760
  %v6028 = vsub.f32 %v5645, %v6027
  %v6029 = vand.u32 %v6028, 4294901760
  %6030 = vmatpush.msra.mxu0 %v6029
  %v6031 = vand.u32 %v5644, 4294901760
  %v6032 = vsub.f32 %v5644, %v6031
  %v6033 = vand.u32 %v6032, 4294901760
  %6034 = vmatpush.msra.mxu0 %v6033
  %v6035 = vand.u32 %v5643, 4294901760
  %v6036 = vsub.f32 %v5643, %v6035
  %v6037 = vand.u32 %v6036, 4294901760
  %6038 = vmatpush.msra.mxu0 %v6037
  %v6039 = vand.u32 %v5656, 4294901760
  %6040 = vmatmul.f32.gmra.mxu0 %v6039
  %v6041 = vpop.f32.mrf.mxu0
  %v6042 = vadd.f32 %v5955, %v6041
  %v6043 = vand.u32 %v5659, 4294901760
  %6044 = vmatmul.f32.gmra.mxu0 %v6043
  %v6045 = vpop.f32.mrf.mxu0
  %v6046 = vadd.f32 %v5961, %v6045
  %v6047 = vand.u32 %v5662, 4294901760
  %6048 = vmatmul.f32.gmra.mxu0 %v6047
  %v6049 = vpop.f32.mrf.mxu0
  %v6050 = vadd.f32 %v5967, %v6049
  %v6051 = vand.u32 %v5665, 4294901760
  %6052 = vmatmul.f32.gmra.mxu0 %v6051
  %v6053 = vpop.f32.mrf.mxu0
  %v6054 = vadd.f32 %v5973, %v6053
  %v6055 = vand.u32 %v5668, 4294901760
  %6056 = vmatmul.f32.gmra.mxu0 %v6055
  %v6057 = vpop.f32.mrf.mxu0
  %v6058 = vadd.f32 %v5979, %v6057
  %v6059 = vand.u32 %v5671, 4294901760
  %6060 = vmatmul.f32.gmra.mxu0 %v6059
  %v6061 = vpop.f32.mrf.mxu0
  %v6062 = vadd.f32 %v5985, %v6061
  %6063 = vdwg.mxu0
  %6064 = vmatpush.msra.mxu0 0.0
  %6065 = vmatpush.msra.mxu0 0.0
  %6066 = vmatpush.msra.mxu0 0.0
  %6067 = vmatpush.msra.mxu0 0.0
  %v6068 = vand.u32 %v5654, 4294901760
  %6069 = vmatpush.msra.mxu0 %v6068
  %v6070 = vand.u32 %v5653, 4294901760
  %6071 = vmatpush.msra.mxu0 %v6070
  %v6072 = vand.u32 %v5652, 4294901760
  %6073 = vmatpush.msra.mxu0 %v6072
  %v6074 = vand.u32 %v5651, 4294901760
  %6075 = vmatpush.msra.mxu0 %v6074
  %v6076 = vand.u32 %v5650, 4294901760
  %6077 = vmatpush.msra.mxu0 %v6076
  %v6078 = vand.u32 %v5649, 4294901760
  %6079 = vmatpush.msra.mxu0 %v6078
  %v6080 = vand.u32 %v5648, 4294901760
  %6081 = vmatpush.msra.mxu0 %v6080
  %v6082 = vand.u32 %v5647, 4294901760
  %6083 = vmatpush.msra.mxu0 %v6082
  %v6084 = vand.u32 %v5646, 4294901760
  %6085 = vmatpush.msra.mxu0 %v6084
  %v6086 = vand.u32 %v5645, 4294901760
  %6087 = vmatpush.msra.mxu0 %v6086
  %v6088 = vand.u32 %v5644, 4294901760
  %6089 = vmatpush.msra.mxu0 %v6088
  %v6090 = vand.u32 %v5643, 4294901760
  %6091 = vmatpush.msra.mxu0 %v6090
  %v6092 = vand.u32 %v5656, 4294901760
  %6093 = vmatmul.f32.gmra.mxu0 %v6092
  %v6094 = vpop.f32.mrf.mxu0
  %v6095 = vadd.f32 %v6042, %v6094
  %v6096 = vand.u32 %v5659, 4294901760
  %6097 = vmatmul.f32.gmra.mxu0 %v6096
  %v6098 = vpop.f32.mrf.mxu0
  %v6099 = vadd.f32 %v6046, %v6098
  %v6100 = vand.u32 %v5662, 4294901760
  %6101 = vmatmul.f32.gmra.mxu0 %v6100
  %v6102 = vpop.f32.mrf.mxu0
  %v6103 = vadd.f32 %v6050, %v6102
  %v6104 = vand.u32 %v5665, 4294901760
  %6105 = vmatmul.f32.gmra.mxu0 %v6104
  %v6106 = vpop.f32.mrf.mxu0
  %v6107 = vadd.f32 %v6054, %v6106
  %v6108 = vand.u32 %v5668, 4294901760
  %6109 = vmatmul.f32.gmra.mxu0 %v6108
  %v6110 = vpop.f32.mrf.mxu0
  %v6111 = vadd.f32 %v6058, %v6110
  %v6112 = vand.u32 %v5671, 4294901760
  %6113 = vmatmul.f32.gmra.mxu0 %v6112
  %v6114 = vpop.f32.mrf.mxu0
  %v6115 = vadd.f32 %v6062, %v6114
  %6116 = vdwg.mxu0
  %v6117 = vadd.f32 %v5614, %v6095
  %v6118 = vadd.f32 %v5618, %v6099
  %v6119 = vadd.f32 %v5622, %v6103
  %v6120 = vadd.f32 %v5626, %v6107
  %v6121 = vadd.f32 %v5630, %v6111
  %v6122 = vadd.f32 %v5634, %v6115
  %v6123 = vld [vmem:[#allocation3 + $0xc] sm:$0xff]
  %v6124 = vld [vmem:[#allocation3 + $0x14] sm:$0xff]
  %v6125 = vld [vmem:[#allocation3 + $0x1c] sm:$0xff]
  %v6126 = vld [vmem:[#allocation3 + $0x24] sm:$0xff]
  %v6127 = vld [vmem:[#allocation3 + $0x2c] sm:$0xff]
  %v6128 = vld [vmem:[#allocation3 + $0x34] sm:$0x7]
  %s6129 = scalar_lea.vmem %s5, 288
  %v6130 = vld [vmem:[%s6129] sm:$0xff]
  %v6131 = vld [vmem:[%s6129 + $0x8] sm:$0xff]
  %v6132 = vld [vmem:[%s6129 + $0x10] sm:$0xff]
  %v6133 = vld [vmem:[%s6129 + $0x18] sm:$0xff]
  %v6134 = vld [vmem:[%s6129 + $0x20] sm:$0xff]
  %v6135 = vld [vmem:[%s6129 + $0x28] sm:$0xff]
  %v6136 = vld [vmem:[%s6129 + $0x30] sm:$0xff]
  %v6137 = vld [vmem:[%s6129 + $0x38] sm:$0xff]
  %v6138 = vld [vmem:[%s6129 + $0x40] sm:$0xff]
  %v6139 = vld [vmem:[%s6129 + $0x48] sm:$0xff]
  %v6140 = vld [vmem:[%s6129 + $0x50] sm:$0xff]
  %v6141 = vld [vmem:[%s6129 + $0x58] sm:$0xff]
  %v6143 = vsel %vm4666, %v6123, 0
  %v6146 = vsel %vm4666, %v6124, 0
  %v6149 = vsel %vm4666, %v6125, 0
  %v6152 = vsel %vm4666, %v6126, 0
  %v6155 = vsel %vm4666, %v6127, 0
  %v6158 = vsel %vm4666, %v6128, 0
  %6160 = vmatpush.msra.mxu0 0.0
  %6161 = vmatpush.msra.mxu0 0.0
  %6162 = vmatpush.msra.mxu0 0.0
  %6163 = vmatpush.msra.mxu0 0.0
  %v6164 = vand.u32 %v6141, 4294901760
  %6165 = vmatpush.msra.mxu0 %v6164
  %v6166 = vand.u32 %v6140, 4294901760
  %6167 = vmatpush.msra.mxu0 %v6166
  %v6168 = vand.u32 %v6139, 4294901760
  %6169 = vmatpush.msra.mxu0 %v6168
  %v6170 = vand.u32 %v6138, 4294901760
  %6171 = vmatpush.msra.mxu0 %v6170
  %v6172 = vand.u32 %v6137, 4294901760
  %6173 = vmatpush.msra.mxu0 %v6172
  %v6174 = vand.u32 %v6136, 4294901760
  %6175 = vmatpush.msra.mxu0 %v6174
  %v6176 = vand.u32 %v6135, 4294901760
  %6177 = vmatpush.msra.mxu0 %v6176
  %v6178 = vand.u32 %v6134, 4294901760
  %6179 = vmatpush.msra.mxu0 %v6178
  %v6180 = vand.u32 %v6133, 4294901760
  %6181 = vmatpush.msra.mxu0 %v6180
  %v6182 = vand.u32 %v6132, 4294901760
  %6183 = vmatpush.msra.mxu0 %v6182
  %v6184 = vand.u32 %v6131, 4294901760
  %6185 = vmatpush.msra.mxu0 %v6184
  %v6186 = vand.u32 %v6130, 4294901760
  %6187 = vmatpush.msra.mxu0 %v6186
  %v6188 = vand.u32 %v6143, 4294901760
  %v6189 = vsub.f32 %v6143, %v6188
  %v6190 = vand.u32 %v6189, 4294901760
  %v6191 = vsub.f32 %v6189, %v6190
  %v6192 = vand.u32 %v6191, 4294901760
  %6193 = vmatmul.f32.gmra.mxu0 %v6192
  %v6194 = vpop.f32.mrf.mxu0
  %v6195 = vadd.f32 0.0, %v6194
  %v6196 = vand.u32 %v6146, 4294901760
  %v6197 = vsub.f32 %v6146, %v6196
  %v6198 = vand.u32 %v6197, 4294901760
  %v6199 = vsub.f32 %v6197, %v6198
  %v6200 = vand.u32 %v6199, 4294901760
  %6201 = vmatmul.f32.gmra.mxu0 %v6200
  %v6202 = vpop.f32.mrf.mxu0
  %v6203 = vadd.f32 0.0, %v6202
  %v6204 = vand.u32 %v6149, 4294901760
  %v6205 = vsub.f32 %v6149, %v6204
  %v6206 = vand.u32 %v6205, 4294901760
  %v6207 = vsub.f32 %v6205, %v6206
  %v6208 = vand.u32 %v6207, 4294901760
  %6209 = vmatmul.f32.gmra.mxu0 %v6208
  %v6210 = vpop.f32.mrf.mxu0
  %v6211 = vadd.f32 0.0, %v6210
  %v6212 = vand.u32 %v6152, 4294901760
  %v6213 = vsub.f32 %v6152, %v6212
  %v6214 = vand.u32 %v6213, 4294901760
  %v6215 = vsub.f32 %v6213, %v6214
  %v6216 = vand.u32 %v6215, 4294901760
  %6217 = vmatmul.f32.gmra.mxu0 %v6216
  %v6218 = vpop.f32.mrf.mxu0
  %v6219 = vadd.f32 0.0, %v6218
  %v6220 = vand.u32 %v6155, 4294901760
  %v6221 = vsub.f32 %v6155, %v6220
  %v6222 = vand.u32 %v6221, 4294901760
  %v6223 = vsub.f32 %v6221, %v6222
  %v6224 = vand.u32 %v6223, 4294901760
  %6225 = vmatmul.f32.gmra.mxu0 %v6224
  %v6226 = vpop.f32.mrf.mxu0
  %v6227 = vadd.f32 0.0, %v6226
  %v6228 = vand.u32 %v6158, 4294901760
  %v6229 = vsub.f32 %v6158, %v6228
  %v6230 = vand.u32 %v6229, 4294901760
  %v6231 = vsub.f32 %v6229, %v6230
  %v6232 = vand.u32 %v6231, 4294901760
  %6233 = vmatmul.f32.gmra.mxu0 %v6232
  %v6234 = vpop.f32.mrf.mxu0
  %v6235 = vadd.f32 0.0, %v6234
  %6236 = vdwg.mxu0
  %6237 = vmatpush.msra.mxu0 0.0
  %6238 = vmatpush.msra.mxu0 0.0
  %6239 = vmatpush.msra.mxu0 0.0
  %6240 = vmatpush.msra.mxu0 0.0
  %v6241 = vand.u32 %v6141, 4294901760
  %v6242 = vsub.f32 %v6141, %v6241
  %v6243 = vand.u32 %v6242, 4294901760
  %v6244 = vsub.f32 %v6242, %v6243
  %v6245 = vand.u32 %v6244, 4294901760
  %6246 = vmatpush.msra.mxu0 %v6245
  %v6247 = vand.u32 %v6140, 4294901760
  %v6248 = vsub.f32 %v6140, %v6247
  %v6249 = vand.u32 %v6248, 4294901760
  %v6250 = vsub.f32 %v6248, %v6249
  %v6251 = vand.u32 %v6250, 4294901760
  %6252 = vmatpush.msra.mxu0 %v6251
  %v6253 = vand.u32 %v6139, 4294901760
  %v6254 = vsub.f32 %v6139, %v6253
  %v6255 = vand.u32 %v6254, 4294901760
  %v6256 = vsub.f32 %v6254, %v6255
  %v6257 = vand.u32 %v6256, 4294901760
  %6258 = vmatpush.msra.mxu0 %v6257
  %v6259 = vand.u32 %v6138, 4294901760
  %v6260 = vsub.f32 %v6138, %v6259
  %v6261 = vand.u32 %v6260, 4294901760
  %v6262 = vsub.f32 %v6260, %v6261
  %v6263 = vand.u32 %v6262, 4294901760
  %6264 = vmatpush.msra.mxu0 %v6263
  %v6265 = vand.u32 %v6137, 4294901760
  %v6266 = vsub.f32 %v6137, %v6265
  %v6267 = vand.u32 %v6266, 4294901760
  %v6268 = vsub.f32 %v6266, %v6267
  %v6269 = vand.u32 %v6268, 4294901760
  %6270 = vmatpush.msra.mxu0 %v6269
  %v6271 = vand.u32 %v6136, 4294901760
  %v6272 = vsub.f32 %v6136, %v6271
  %v6273 = vand.u32 %v6272, 4294901760
  %v6274 = vsub.f32 %v6272, %v6273
  %v6275 = vand.u32 %v6274, 4294901760
  %6276 = vmatpush.msra.mxu0 %v6275
  %v6277 = vand.u32 %v6135, 4294901760
  %v6278 = vsub.f32 %v6135, %v6277
  %v6279 = vand.u32 %v6278, 4294901760
  %v6280 = vsub.f32 %v6278, %v6279
  %v6281 = vand.u32 %v6280, 4294901760
  %6282 = vmatpush.msra.mxu0 %v6281
  %v6283 = vand.u32 %v6134, 4294901760
  %v6284 = vsub.f32 %v6134, %v6283
  %v6285 = vand.u32 %v6284, 4294901760
  %v6286 = vsub.f32 %v6284, %v6285
  %v6287 = vand.u32 %v6286, 4294901760
  %6288 = vmatpush.msra.mxu0 %v6287
  %v6289 = vand.u32 %v6133, 4294901760
  %v6290 = vsub.f32 %v6133, %v6289
  %v6291 = vand.u32 %v6290, 4294901760
  %v6292 = vsub.f32 %v6290, %v6291
  %v6293 = vand.u32 %v6292, 4294901760
  %6294 = vmatpush.msra.mxu0 %v6293
  %v6295 = vand.u32 %v6132, 4294901760
  %v6296 = vsub.f32 %v6132, %v6295
  %v6297 = vand.u32 %v6296, 4294901760
  %v6298 = vsub.f32 %v6296, %v6297
  %v6299 = vand.u32 %v6298, 4294901760
  %6300 = vmatpush.msra.mxu0 %v6299
  %v6301 = vand.u32 %v6131, 4294901760
  %v6302 = vsub.f32 %v6131, %v6301
  %v6303 = vand.u32 %v6302, 4294901760
  %v6304 = vsub.f32 %v6302, %v6303
  %v6305 = vand.u32 %v6304, 4294901760
  %6306 = vmatpush.msra.mxu0 %v6305
  %v6307 = vand.u32 %v6130, 4294901760
  %v6308 = vsub.f32 %v6130, %v6307
  %v6309 = vand.u32 %v6308, 4294901760
  %v6310 = vsub.f32 %v6308, %v6309
  %v6311 = vand.u32 %v6310, 4294901760
  %6312 = vmatpush.msra.mxu0 %v6311
  %v6313 = vand.u32 %v6143, 4294901760
  %6314 = vmatmul.f32.gmra.mxu0 %v6313
  %v6315 = vpop.f32.mrf.mxu0
  %v6316 = vadd.f32 %v6195, %v6315
  %v6317 = vand.u32 %v6146, 4294901760
  %6318 = vmatmul.f32.gmra.mxu0 %v6317
  %v6319 = vpop.f32.mrf.mxu0
  %v6320 = vadd.f32 %v6203, %v6319
  %v6321 = vand.u32 %v6149, 4294901760
  %6322 = vmatmul.f32.gmra.mxu0 %v6321
  %v6323 = vpop.f32.mrf.mxu0
  %v6324 = vadd.f32 %v6211, %v6323
  %v6325 = vand.u32 %v6152, 4294901760
  %6326 = vmatmul.f32.gmra.mxu0 %v6325
  %v6327 = vpop.f32.mrf.mxu0
  %v6328 = vadd.f32 %v6219, %v6327
  %v6329 = vand.u32 %v6155, 4294901760
  %6330 = vmatmul.f32.gmra.mxu0 %v6329
  %v6331 = vpop.f32.mrf.mxu0
  %v6332 = vadd.f32 %v6227, %v6331
  %v6333 = vand.u32 %v6158, 4294901760
  %6334 = vmatmul.f32.gmra.mxu0 %v6333
  %v6335 = vpop.f32.mrf.mxu0
  %v6336 = vadd.f32 %v6235, %v6335
  %6337 = vdwg.mxu0
  %6338 = vmatpush.msra.mxu0 0.0
  %6339 = vmatpush.msra.mxu0 0.0
  %6340 = vmatpush.msra.mxu0 0.0
  %6341 = vmatpush.msra.mxu0 0.0
  %v6342 = vand.u32 %v6141, 4294901760
  %v6343 = vsub.f32 %v6141, %v6342
  %6344 = vmatpush.msra.mxu0 %v6343
  %v6345 = vand.u32 %v6140, 4294901760
  %v6346 = vsub.f32 %v6140, %v6345
  %6347 = vmatpush.msra.mxu0 %v6346
  %v6348 = vand.u32 %v6139, 4294901760
  %v6349 = vsub.f32 %v6139, %v6348
  %6350 = vmatpush.msra.mxu0 %v6349
  %v6351 = vand.u32 %v6138, 4294901760
  %v6352 = vsub.f32 %v6138, %v6351
  %6353 = vmatpush.msra.mxu0 %v6352
  %v6354 = vand.u32 %v6137, 4294901760
  %v6355 = vsub.f32 %v6137, %v6354
  %6356 = vmatpush.msra.mxu0 %v6355
  %v6357 = vand.u32 %v6136, 4294901760
  %v6358 = vsub.f32 %v6136, %v6357
  %6359 = vmatpush.msra.mxu0 %v6358
  %v6360 = vand.u32 %v6135, 4294901760
  %v6361 = vsub.f32 %v6135, %v6360
  %6362 = vmatpush.msra.mxu0 %v6361
  %v6363 = vand.u32 %v6134, 4294901760
  %v6364 = vsub.f32 %v6134, %v6363
  %6365 = vmatpush.msra.mxu0 %v6364
  %v6366 = vand.u32 %v6133, 4294901760
  %v6367 = vsub.f32 %v6133, %v6366
  %6368 = vmatpush.msra.mxu0 %v6367
  %v6369 = vand.u32 %v6132, 4294901760
  %v6370 = vsub.f32 %v6132, %v6369
  %6371 = vmatpush.msra.mxu0 %v6370
  %v6372 = vand.u32 %v6131, 4294901760
  %v6373 = vsub.f32 %v6131, %v6372
  %6374 = vmatpush.msra.mxu0 %v6373
  %v6375 = vand.u32 %v6130, 4294901760
  %v6376 = vsub.f32 %v6130, %v6375
  %6377 = vmatpush.msra.mxu0 %v6376
  %v6378 = vand.u32 %v6143, 4294901760
  %v6379 = vsub.f32 %v6143, %v6378
  %6380 = vmatmul.f32.gmra.mxu0 %v6379
  %v6381 = vpop.f32.mrf.mxu0
  %v6382 = vadd.f32 %v6316, %v6381
  %v6383 = vand.u32 %v6146, 4294901760
  %v6384 = vsub.f32 %v6146, %v6383
  %6385 = vmatmul.f32.gmra.mxu0 %v6384
  %v6386 = vpop.f32.mrf.mxu0
  %v6387 = vadd.f32 %v6320, %v6386
  %v6388 = vand.u32 %v6149, 4294901760
  %v6389 = vsub.f32 %v6149, %v6388
  %6390 = vmatmul.f32.gmra.mxu0 %v6389
  %v6391 = vpop.f32.mrf.mxu0
  %v6392 = vadd.f32 %v6324, %v6391
  %v6393 = vand.u32 %v6152, 4294901760
  %v6394 = vsub.f32 %v6152, %v6393
  %6395 = vmatmul.f32.gmra.mxu0 %v6394
  %v6396 = vpop.f32.mrf.mxu0
  %v6397 = vadd.f32 %v6328, %v6396
  %v6398 = vand.u32 %v6155, 4294901760
  %v6399 = vsub.f32 %v6155, %v6398
  %6400 = vmatmul.f32.gmra.mxu0 %v6399
  %v6401 = vpop.f32.mrf.mxu0
  %v6402 = vadd.f32 %v6332, %v6401
  %v6403 = vand.u32 %v6158, 4294901760
  %v6404 = vsub.f32 %v6158, %v6403
  %6405 = vmatmul.f32.gmra.mxu0 %v6404
  %v6406 = vpop.f32.mrf.mxu0
  %v6407 = vadd.f32 %v6336, %v6406
  %6408 = vdwg.mxu0
  %6409 = vmatpush.msra.mxu0 0.0
  %6410 = vmatpush.msra.mxu0 0.0
  %6411 = vmatpush.msra.mxu0 0.0
  %6412 = vmatpush.msra.mxu0 0.0
  %v6413 = vand.u32 %v6141, 4294901760
  %6414 = vmatpush.msra.mxu0 %v6413
  %v6415 = vand.u32 %v6140, 4294901760
  %6416 = vmatpush.msra.mxu0 %v6415
  %v6417 = vand.u32 %v6139, 4294901760
  %6418 = vmatpush.msra.mxu0 %v6417
  %v6419 = vand.u32 %v6138, 4294901760
  %6420 = vmatpush.msra.mxu0 %v6419
  %v6421 = vand.u32 %v6137, 4294901760
  %6422 = vmatpush.msra.mxu0 %v6421
  %v6423 = vand.u32 %v6136, 4294901760
  %6424 = vmatpush.msra.mxu0 %v6423
  %v6425 = vand.u32 %v6135, 4294901760
  %6426 = vmatpush.msra.mxu0 %v6425
  %v6427 = vand.u32 %v6134, 4294901760
  %6428 = vmatpush.msra.mxu0 %v6427
  %v6429 = vand.u32 %v6133, 4294901760
  %6430 = vmatpush.msra.mxu0 %v6429
  %v6431 = vand.u32 %v6132, 4294901760
  %6432 = vmatpush.msra.mxu0 %v6431
  %v6433 = vand.u32 %v6131, 4294901760
  %6434 = vmatpush.msra.mxu0 %v6433
  %v6435 = vand.u32 %v6130, 4294901760
  %6436 = vmatpush.msra.mxu0 %v6435
  %v6437 = vand.u32 %v6143, 4294901760
  %v6438 = vsub.f32 %v6143, %v6437
  %v6439 = vand.u32 %v6438, 4294901760
  %6440 = vmatmul.f32.gmra.mxu0 %v6439
  %v6441 = vpop.f32.mrf.mxu0
  %v6442 = vadd.f32 %v6382, %v6441
  %v6443 = vand.u32 %v6146, 4294901760
  %v6444 = vsub.f32 %v6146, %v6443
  %v6445 = vand.u32 %v6444, 4294901760
  %6446 = vmatmul.f32.gmra.mxu0 %v6445
  %v6447 = vpop.f32.mrf.mxu0
  %v6448 = vadd.f32 %v6387, %v6447
  %v6449 = vand.u32 %v6149, 4294901760
  %v6450 = vsub.f32 %v6149, %v6449
  %v6451 = vand.u32 %v6450, 4294901760
  %6452 = vmatmul.f32.gmra.mxu0 %v6451
  %v6453 = vpop.f32.mrf.mxu0
  %v6454 = vadd.f32 %v6392, %v6453
  %v6455 = vand.u32 %v6152, 4294901760
  %v6456 = vsub.f32 %v6152, %v6455
  %v6457 = vand.u32 %v6456, 4294901760
  %6458 = vmatmul.f32.gmra.mxu0 %v6457
  %v6459 = vpop.f32.mrf.mxu0
  %v6460 = vadd.f32 %v6397, %v6459
  %v6461 = vand.u32 %v6155, 4294901760
  %v6462 = vsub.f32 %v6155, %v6461
  %v6463 = vand.u32 %v6462, 4294901760
  %6464 = vmatmul.f32.gmra.mxu0 %v6463
  %v6465 = vpop.f32.mrf.mxu0
  %v6466 = vadd.f32 %v6402, %v6465
  %v6467 = vand.u32 %v6158, 4294901760
  %v6468 = vsub.f32 %v6158, %v6467
  %v6469 = vand.u32 %v6468, 4294901760
  %6470 = vmatmul.f32.gmra.mxu0 %v6469
  %v6471 = vpop.f32.mrf.mxu0
  %v6472 = vadd.f32 %v6407, %v6471
  %6473 = vdwg.mxu0
  %6474 = vmatpush.msra.mxu0 0.0
  %6475 = vmatpush.msra.mxu0 0.0
  %6476 = vmatpush.msra.mxu0 0.0
  %6477 = vmatpush.msra.mxu0 0.0
  %v6478 = vand.u32 %v6141, 4294901760
  %v6479 = vsub.f32 %v6141, %v6478
  %v6480 = vand.u32 %v6479, 4294901760
  %6481 = vmatpush.msra.mxu0 %v6480
  %v6482 = vand.u32 %v6140, 4294901760
  %v6483 = vsub.f32 %v6140, %v6482
  %v6484 = vand.u32 %v6483, 4294901760
  %6485 = vmatpush.msra.mxu0 %v6484
  %v6486 = vand.u32 %v6139, 4294901760
  %v6487 = vsub.f32 %v6139, %v6486
  %v6488 = vand.u32 %v6487, 4294901760
  %6489 = vmatpush.msra.mxu0 %v6488
  %v6490 = vand.u32 %v6138, 4294901760
  %v6491 = vsub.f32 %v6138, %v6490
  %v6492 = vand.u32 %v6491, 4294901760
  %6493 = vmatpush.msra.mxu0 %v6492
  %v6494 = vand.u32 %v6137, 4294901760
  %v6495 = vsub.f32 %v6137, %v6494
  %v6496 = vand.u32 %v6495, 4294901760
  %6497 = vmatpush.msra.mxu0 %v6496
  %v6498 = vand.u32 %v6136, 4294901760
  %v6499 = vsub.f32 %v6136, %v6498
  %v6500 = vand.u32 %v6499, 4294901760
  %6501 = vmatpush.msra.mxu0 %v6500
  %v6502 = vand.u32 %v6135, 4294901760
  %v6503 = vsub.f32 %v6135, %v6502
  %v6504 = vand.u32 %v6503, 4294901760
  %6505 = vmatpush.msra.mxu0 %v6504
  %v6506 = vand.u32 %v6134, 4294901760
  %v6507 = vsub.f32 %v6134, %v6506
  %v6508 = vand.u32 %v6507, 4294901760
  %6509 = vmatpush.msra.mxu0 %v6508
  %v6510 = vand.u32 %v6133, 4294901760
  %v6511 = vsub.f32 %v6133, %v6510
  %v6512 = vand.u32 %v6511, 4294901760
  %6513 = vmatpush.msra.mxu0 %v6512
  %v6514 = vand.u32 %v6132, 4294901760
  %v6515 = vsub.f32 %v6132, %v6514
  %v6516 = vand.u32 %v6515, 4294901760
  %6517 = vmatpush.msra.mxu0 %v6516
  %v6518 = vand.u32 %v6131, 4294901760
  %v6519 = vsub.f32 %v6131, %v6518
  %v6520 = vand.u32 %v6519, 4294901760
  %6521 = vmatpush.msra.mxu0 %v6520
  %v6522 = vand.u32 %v6130, 4294901760
  %v6523 = vsub.f32 %v6130, %v6522
  %v6524 = vand.u32 %v6523, 4294901760
  %6525 = vmatpush.msra.mxu0 %v6524
  %v6526 = vand.u32 %v6143, 4294901760
  %6527 = vmatmul.f32.gmra.mxu0 %v6526
  %v6528 = vpop.f32.mrf.mxu0
  %v6529 = vadd.f32 %v6442, %v6528
  %v6530 = vand.u32 %v6146, 4294901760
  %6531 = vmatmul.f32.gmra.mxu0 %v6530
  %v6532 = vpop.f32.mrf.mxu0
  %v6533 = vadd.f32 %v6448, %v6532
  %v6534 = vand.u32 %v6149, 4294901760
  %6535 = vmatmul.f32.gmra.mxu0 %v6534
  %v6536 = vpop.f32.mrf.mxu0
  %v6537 = vadd.f32 %v6454, %v6536
  %v6538 = vand.u32 %v6152, 4294901760
  %6539 = vmatmul.f32.gmra.mxu0 %v6538
  %v6540 = vpop.f32.mrf.mxu0
  %v6541 = vadd.f32 %v6460, %v6540
  %v6542 = vand.u32 %v6155, 4294901760
  %6543 = vmatmul.f32.gmra.mxu0 %v6542
  %v6544 = vpop.f32.mrf.mxu0
  %v6545 = vadd.f32 %v6466, %v6544
  %v6546 = vand.u32 %v6158, 4294901760
  %6547 = vmatmul.f32.gmra.mxu0 %v6546
  %v6548 = vpop.f32.mrf.mxu0
  %v6549 = vadd.f32 %v6472, %v6548
  %6550 = vdwg.mxu0
  %6551 = vmatpush.msra.mxu0 0.0
  %6552 = vmatpush.msra.mxu0 0.0
  %6553 = vmatpush.msra.mxu0 0.0
  %6554 = vmatpush.msra.mxu0 0.0
  %v6555 = vand.u32 %v6141, 4294901760
  %6556 = vmatpush.msra.mxu0 %v6555
  %v6557 = vand.u32 %v6140, 4294901760
  %6558 = vmatpush.msra.mxu0 %v6557
  %v6559 = vand.u32 %v6139, 4294901760
  %6560 = vmatpush.msra.mxu0 %v6559
  %v6561 = vand.u32 %v6138, 4294901760
  %6562 = vmatpush.msra.mxu0 %v6561
  %v6563 = vand.u32 %v6137, 4294901760
  %6564 = vmatpush.msra.mxu0 %v6563
  %v6565 = vand.u32 %v6136, 4294901760
  %6566 = vmatpush.msra.mxu0 %v6565
  %v6567 = vand.u32 %v6135, 4294901760
  %6568 = vmatpush.msra.mxu0 %v6567
  %v6569 = vand.u32 %v6134, 4294901760
  %6570 = vmatpush.msra.mxu0 %v6569
  %v6571 = vand.u32 %v6133, 4294901760
  %6572 = vmatpush.msra.mxu0 %v6571
  %v6573 = vand.u32 %v6132, 4294901760
  %6574 = vmatpush.msra.mxu0 %v6573
  %v6575 = vand.u32 %v6131, 4294901760
  %6576 = vmatpush.msra.mxu0 %v6575
  %v6577 = vand.u32 %v6130, 4294901760
  %6578 = vmatpush.msra.mxu0 %v6577
  %v6579 = vand.u32 %v6143, 4294901760
  %6580 = vmatmul.f32.gmra.mxu0 %v6579
  %v6581 = vpop.f32.mrf.mxu0
  %v6582 = vadd.f32 %v6529, %v6581
  %v6583 = vand.u32 %v6146, 4294901760
  %6584 = vmatmul.f32.gmra.mxu0 %v6583
  %v6585 = vpop.f32.mrf.mxu0
  %v6586 = vadd.f32 %v6533, %v6585
  %v6587 = vand.u32 %v6149, 4294901760
  %6588 = vmatmul.f32.gmra.mxu0 %v6587
  %v6589 = vpop.f32.mrf.mxu0
  %v6590 = vadd.f32 %v6537, %v6589
  %v6591 = vand.u32 %v6152, 4294901760
  %6592 = vmatmul.f32.gmra.mxu0 %v6591
  %v6593 = vpop.f32.mrf.mxu0
  %v6594 = vadd.f32 %v6541, %v6593
  %v6595 = vand.u32 %v6155, 4294901760
  %6596 = vmatmul.f32.gmra.mxu0 %v6595
  %v6597 = vpop.f32.mrf.mxu0
  %v6598 = vadd.f32 %v6545, %v6597
  %v6599 = vand.u32 %v6158, 4294901760
  %6600 = vmatmul.f32.gmra.mxu0 %v6599
  %v6601 = vpop.f32.mrf.mxu0
  %v6602 = vadd.f32 %v6549, %v6601
  %6603 = vdwg.mxu0
  %v6604 = vadd.f32 %v6117, %v6582
  %v6605 = vadd.f32 %v6118, %v6586
  %v6606 = vadd.f32 %v6119, %v6590
  %v6607 = vadd.f32 %v6120, %v6594
  %v6608 = vadd.f32 %v6121, %v6598
  %v6609 = vadd.f32 %v6122, %v6602
  %v6610 = vld [vmem:[%s6] sm:$0x1]
  %v6612 = vperm.slane %v6610, 0
  %v6614 = vadd.f32 %v6604, %v6612
  %v6615 = vadd.f32 %v6605, %v6612
  %v6616 = vadd.f32 %v6606, %v6612
  %v6617 = vadd.f32 %v6607, %v6612
  %v6618 = vadd.f32 %v6608, %v6612
  %v6619 = vadd.f32 %v6609, %v6612
  %v6620 = vmax.f32 %v6614, 0.0
  %v6621 = vmax.f32 %v6615, 0.0
  %v6622 = vmax.f32 %v6616, 0.0
  %v6623 = vmax.f32 %v6617, 0.0
  %v6624 = vmax.f32 %v6618, 0.0
  %v6625 = vmax.f32 %v6619, 0.0
  %vm6626 = vcmask 523264
  %6627 = vst.msk [vmem:[#allocation4] sm:$0xff] %vm6626, %v6620
  %6628 = vst.msk [vmem:[#allocation4 + $0x8] sm:$0xff] %vm6626, %v6621
  %6629 = vst.msk [vmem:[#allocation4 + $0x10] sm:$0xff] %vm6626, %v6622
  %6630 = vst.msk [vmem:[#allocation4 + $0x18] sm:$0xff] %vm6626, %v6623
  %6631 = vst.msk [vmem:[#allocation4 + $0x20] sm:$0xff] %vm6626, %v6624
  %vm6632 = vcmask 518144
  %6633 = vst.msk [vmem:[#allocation4 + $0x28] sm:$0x7] %vm6632, %v6625
  %v6634 = vlaneseq
  %v6635 = vshrl.u32 %v6634, 7
  %v6636 = vlaneseq
  %v6637 = vand.u32 %v6636, 127
  %v6638 = vmul.u32 %v6635, 32
  %vm6639 = vcmp.eq.s32.totalorder %v6637, %v6638
  %v6640 = vsel %vm6639, 1, 0
  %v6641 = vcvt.s32.f32 %v6640
  %v6642 = vld [vmem:[#allocation4] sm:$0xff]
  %v6643 = vld [vmem:[#allocation4 + $0x8] sm:$0xff]
  %v6644 = vld [vmem:[#allocation4 + $0x10] sm:$0xff]
  %v6645 = vld [vmem:[#allocation4 + $0x18] sm:$0xff]
  %v6646 = vld [vmem:[#allocation4 + $0x20] sm:$0xff]
  %v6647 = vld [vmem:[#allocation4 + $0x28] sm:$0x7]
  %vm6648 = vcmask 351232
  %v6650 = vsel %vm6648, %v6641, 0
  %vm6652 = vcmask 1042432
  %v6654 = vsel %vm6652, %v6647, 0
  %6656 = vmatpush.msra.mxu0 0.0
  %6657 = vmatpush.msra.mxu0 0.0
  %6658 = vmatpush.msra.mxu0 0.0
  %6659 = vmatpush.msra.mxu0 0.0
  %6660 = vmatpush.msra.mxu0 0.0
  %6661 = vmatpush.msra.mxu0 0.0
  %6662 = vmatpush.msra.mxu0 0.0
  %6663 = vmatpush.msra.mxu0 0.0
  %6664 = vmatpush.msra.mxu0 0.0
  %6665 = vmatpush.msra.mxu0 0.0
  %v6666 = vand.u32 %v6654, 4294901760
  %6667 = vmatpush.msra.mxu0 %v6666
  %v6668 = vand.u32 %v6646, 4294901760
  %6669 = vmatpush.msra.mxu0 %v6668
  %v6670 = vand.u32 %v6645, 4294901760
  %6671 = vmatpush.msra.mxu0 %v6670
  %v6672 = vand.u32 %v6644, 4294901760
  %6673 = vmatpush.msra.mxu0 %v6672
  %v6674 = vand.u32 %v6643, 4294901760
  %6675 = vmatpush.msra.mxu0 %v6674
  %v6676 = vand.u32 %v6642, 4294901760
  %6677 = vmatpush.msra.mxu0 %v6676
  %v6678 = vand.u32 %v6650, 4294901760
  %v6679 = vsub.f32 %v6650, %v6678
  %v6680 = vand.u32 %v6679, 4294901760
  %v6681 = vsub.f32 %v6679, %v6680
  %v6682 = vand.u32 %v6681, 4294901760
  %6683 = vmatmul.f32.gmra.mxu0 %v6682
  %v6684 = vpop.f32.mrf.mxu0
  %v6685 = vadd.f32 0.0, %v6684
  %6686 = vdwg.mxu0
  %6687 = vmatpush.msra.mxu0 0.0
  %6688 = vmatpush.msra.mxu0 0.0
  %6689 = vmatpush.msra.mxu0 0.0
  %6690 = vmatpush.msra.mxu0 0.0
  %6691 = vmatpush.msra.mxu0 0.0
  %6692 = vmatpush.msra.mxu0 0.0
  %6693 = vmatpush.msra.mxu0 0.0
  %6694 = vmatpush.msra.mxu0 0.0
  %6695 = vmatpush.msra.mxu0 0.0
  %6696 = vmatpush.msra.mxu0 0.0
  %v6697 = vand.u32 %v6654, 4294901760
  %v6698 = vsub.f32 %v6654, %v6697
  %v6699 = vand.u32 %v6698, 4294901760
  %v6700 = vsub.f32 %v6698, %v6699
  %v6701 = vand.u32 %v6700, 4294901760
  %6702 = vmatpush.msra.mxu0 %v6701
  %v6703 = vand.u32 %v6646, 4294901760
  %v6704 = vsub.f32 %v6646, %v6703
  %v6705 = vand.u32 %v6704, 4294901760
  %v6706 = vsub.f32 %v6704, %v6705
  %v6707 = vand.u32 %v6706, 4294901760
  %6708 = vmatpush.msra.mxu0 %v6707
  %v6709 = vand.u32 %v6645, 4294901760
  %v6710 = vsub.f32 %v6645, %v6709
  %v6711 = vand.u32 %v6710, 4294901760
  %v6712 = vsub.f32 %v6710, %v6711
  %v6713 = vand.u32 %v6712, 4294901760
  %6714 = vmatpush.msra.mxu0 %v6713
  %v6715 = vand.u32 %v6644, 4294901760
  %v6716 = vsub.f32 %v6644, %v6715
  %v6717 = vand.u32 %v6716, 4294901760
  %v6718 = vsub.f32 %v6716, %v6717
  %v6719 = vand.u32 %v6718, 4294901760
  %6720 = vmatpush.msra.mxu0 %v6719
  %v6721 = vand.u32 %v6643, 4294901760
  %v6722 = vsub.f32 %v6643, %v6721
  %v6723 = vand.u32 %v6722, 4294901760
  %v6724 = vsub.f32 %v6722, %v6723
  %v6725 = vand.u32 %v6724, 4294901760
  %6726 = vmatpush.msra.mxu0 %v6725
  %v6727 = vand.u32 %v6642, 4294901760
  %v6728 = vsub.f32 %v6642, %v6727
  %v6729 = vand.u32 %v6728, 4294901760
  %v6730 = vsub.f32 %v6728, %v6729
  %v6731 = vand.u32 %v6730, 4294901760
  %6732 = vmatpush.msra.mxu0 %v6731
  %v6733 = vand.u32 %v6650, 4294901760
  %6734 = vmatmul.f32.gmra.mxu0 %v6733
  %v6735 = vpop.f32.mrf.mxu0
  %v6736 = vadd.f32 %v6685, %v6735
  %6737 = vdwg.mxu0
  %6738 = vmatpush.msra.mxu0 0.0
  %6739 = vmatpush.msra.mxu0 0.0
  %6740 = vmatpush.msra.mxu0 0.0
  %6741 = vmatpush.msra.mxu0 0.0
  %6742 = vmatpush.msra.mxu0 0.0
  %6743 = vmatpush.msra.mxu0 0.0
  %6744 = vmatpush.msra.mxu0 0.0
  %6745 = vmatpush.msra.mxu0 0.0
  %6746 = vmatpush.msra.mxu0 0.0
  %6747 = vmatpush.msra.mxu0 0.0
  %v6748 = vand.u32 %v6654, 4294901760
  %v6749 = vsub.f32 %v6654, %v6748
  %6750 = vmatpush.msra.mxu0 %v6749
  %v6751 = vand.u32 %v6646, 4294901760
  %v6752 = vsub.f32 %v6646, %v6751
  %6753 = vmatpush.msra.mxu0 %v6752
  %v6754 = vand.u32 %v6645, 4294901760
  %v6755 = vsub.f32 %v6645, %v6754
  %6756 = vmatpush.msra.mxu0 %v6755
  %v6757 = vand.u32 %v6644, 4294901760
  %v6758 = vsub.f32 %v6644, %v6757
  %6759 = vmatpush.msra.mxu0 %v6758
  %v6760 = vand.u32 %v6643, 4294901760
  %v6761 = vsub.f32 %v6643, %v6760
  %6762 = vmatpush.msra.mxu0 %v6761
  %v6763 = vand.u32 %v6642, 4294901760
  %v6764 = vsub.f32 %v6642, %v6763
  %6765 = vmatpush.msra.mxu0 %v6764
  %v6766 = vand.u32 %v6650, 4294901760
  %v6767 = vsub.f32 %v6650, %v6766
  %6768 = vmatmul.f32.gmra.mxu0 %v6767
  %v6769 = vpop.f32.mrf.mxu0
  %v6770 = vadd.f32 %v6736, %v6769
  %6771 = vdwg.mxu0
  %6772 = vmatpush.msra.mxu0 0.0
  %6773 = vmatpush.msra.mxu0 0.0
  %6774 = vmatpush.msra.mxu0 0.0
  %6775 = vmatpush.msra.mxu0 0.0
  %6776 = vmatpush.msra.mxu0 0.0
  %6777 = vmatpush.msra.mxu0 0.0
  %6778 = vmatpush.msra.mxu0 0.0
  %6779 = vmatpush.msra.mxu0 0.0
  %6780 = vmatpush.msra.mxu0 0.0
  %6781 = vmatpush.msra.mxu0 0.0
  %v6782 = vand.u32 %v6654, 4294901760
  %6783 = vmatpush.msra.mxu0 %v6782
  %v6784 = vand.u32 %v6646, 4294901760
  %6785 = vmatpush.msra.mxu0 %v6784
  %v6786 = vand.u32 %v6645, 4294901760
  %6787 = vmatpush.msra.mxu0 %v6786
  %v6788 = vand.u32 %v6644, 4294901760
  %6789 = vmatpush.msra.mxu0 %v6788
  %v6790 = vand.u32 %v6643, 4294901760
  %6791 = vmatpush.msra.mxu0 %v6790
  %v6792 = vand.u32 %v6642, 4294901760
  %6793 = vmatpush.msra.mxu0 %v6792
  %v6794 = vand.u32 %v6650, 4294901760
  %v6795 = vsub.f32 %v6650, %v6794
  %v6796 = vand.u32 %v6795, 4294901760
  %6797 = vmatmul.f32.gmra.mxu0 %v6796
  %v6798 = vpop.f32.mrf.mxu0
  %v6799 = vadd.f32 %v6770, %v6798
  %6800 = vdwg.mxu0
  %6801 = vmatpush.msra.mxu0 0.0
  %6802 = vmatpush.msra.mxu0 0.0
  %6803 = vmatpush.msra.mxu0 0.0
  %6804 = vmatpush.msra.mxu0 0.0
  %6805 = vmatpush.msra.mxu0 0.0
  %6806 = vmatpush.msra.mxu0 0.0
  %6807 = vmatpush.msra.mxu0 0.0
  %6808 = vmatpush.msra.mxu0 0.0
  %6809 = vmatpush.msra.mxu0 0.0
  %6810 = vmatpush.msra.mxu0 0.0
  %v6811 = vand.u32 %v6654, 4294901760
  %v6812 = vsub.f32 %v6654, %v6811
  %v6813 = vand.u32 %v6812, 4294901760
  %6814 = vmatpush.msra.mxu0 %v6813
  %v6815 = vand.u32 %v6646, 4294901760
  %v6816 = vsub.f32 %v6646, %v6815
  %v6817 = vand.u32 %v6816, 4294901760
  %6818 = vmatpush.msra.mxu0 %v6817
  %v6819 = vand.u32 %v6645, 4294901760
  %v6820 = vsub.f32 %v6645, %v6819
  %v6821 = vand.u32 %v6820, 4294901760
  %6822 = vmatpush.msra.mxu0 %v6821
  %v6823 = vand.u32 %v6644, 4294901760
  %v6824 = vsub.f32 %v6644, %v6823
  %v6825 = vand.u32 %v6824, 4294901760
  %6826 = vmatpush.msra.mxu0 %v6825
  %v6827 = vand.u32 %v6643, 4294901760
  %v6828 = vsub.f32 %v6643, %v6827
  %v6829 = vand.u32 %v6828, 4294901760
  %6830 = vmatpush.msra.mxu0 %v6829
  %v6831 = vand.u32 %v6642, 4294901760
  %v6832 = vsub.f32 %v6642, %v6831
  %v6833 = vand.u32 %v6832, 4294901760
  %6834 = vmatpush.msra.mxu0 %v6833
  %v6835 = vand.u32 %v6650, 4294901760
  %6836 = vmatmul.f32.gmra.mxu0 %v6835
  %v6837 = vpop.f32.mrf.mxu0
  %v6838 = vadd.f32 %v6799, %v6837
  %6839 = vdwg.mxu0
  %6840 = vmatpush.msra.mxu0 0.0
  %6841 = vmatpush.msra.mxu0 0.0
  %6842 = vmatpush.msra.mxu0 0.0
  %6843 = vmatpush.msra.mxu0 0.0
  %6844 = vmatpush.msra.mxu0 0.0
  %6845 = vmatpush.msra.mxu0 0.0
  %6846 = vmatpush.msra.mxu0 0.0
  %6847 = vmatpush.msra.mxu0 0.0
  %6848 = vmatpush.msra.mxu0 0.0
  %6849 = vmatpush.msra.mxu0 0.0
  %v6850 = vand.u32 %v6654, 4294901760
  %6851 = vmatpush.msra.mxu0 %v6850
  %v6852 = vand.u32 %v6646, 4294901760
  %6853 = vmatpush.msra.mxu0 %v6852
  %v6854 = vand.u32 %v6645, 4294901760
  %6855 = vmatpush.msra.mxu0 %v6854
  %v6856 = vand.u32 %v6644, 4294901760
  %6857 = vmatpush.msra.mxu0 %v6856
  %v6858 = vand.u32 %v6643, 4294901760
  %6859 = vmatpush.msra.mxu0 %v6858
  %v6860 = vand.u32 %v6642, 4294901760
  %6861 = vmatpush.msra.mxu0 %v6860
  %v6862 = vand.u32 %v6650, 4294901760
  %6863 = vmatmul.f32.gmra.mxu0 %v6862
  %v6864 = vpop.f32.mrf.mxu0
  %v6865 = vadd.f32 %v6838, %v6864
  %6866 = vdwg.mxu0
  %v6867 = vadd.s32 %v6638, 8
  %vm6868 = vcmp.eq.s32.totalorder %v6637, %v6867
  %v6869 = vsel %vm6868, 1, 0
  %v6870 = vcvt.s32.f32 %v6869
  %v6872 = vsel %vm6648, %v6870, 0
  %6874 = vmatpush.msra.mxu0 0.0
  %6875 = vmatpush.msra.mxu0 0.0
  %6876 = vmatpush.msra.mxu0 0.0
  %6877 = vmatpush.msra.mxu0 0.0
  %6878 = vmatpush.msra.mxu0 0.0
  %6879 = vmatpush.msra.mxu0 0.0
  %6880 = vmatpush.msra.mxu0 0.0
  %6881 = vmatpush.msra.mxu0 0.0
  %6882 = vmatpush.msra.mxu0 0.0
  %6883 = vmatpush.msra.mxu0 0.0
  %v6884 = vand.u32 %v6654, 4294901760
  %6885 = vmatpush.msra.mxu0 %v6884
  %v6886 = vand.u32 %v6646, 4294901760
  %6887 = vmatpush.msra.mxu0 %v6886
  %v6888 = vand.u32 %v6645, 4294901760
  %6889 = vmatpush.msra.mxu0 %v6888
  %v6890 = vand.u32 %v6644, 4294901760
  %6891 = vmatpush.msra.mxu0 %v6890
  %v6892 = vand.u32 %v6643, 4294901760
  %6893 = vmatpush.msra.mxu0 %v6892
  %v6894 = vand.u32 %v6642, 4294901760
  %6895 = vmatpush.msra.mxu0 %v6894
  %v6896 = vand.u32 %v6872, 4294901760
  %v6897 = vsub.f32 %v6872, %v6896
  %v6898 = vand.u32 %v6897, 4294901760
  %v6899 = vsub.f32 %v6897, %v6898
  %v6900 = vand.u32 %v6899, 4294901760
  %6901 = vmatmul.f32.gmra.mxu0 %v6900
  %v6902 = vpop.f32.mrf.mxu0
  %v6903 = vadd.f32 0.0, %v6902
  %6904 = vdwg.mxu0
  %6905 = vmatpush.msra.mxu0 0.0
  %6906 = vmatpush.msra.mxu0 0.0
  %6907 = vmatpush.msra.mxu0 0.0
  %6908 = vmatpush.msra.mxu0 0.0
  %6909 = vmatpush.msra.mxu0 0.0
  %6910 = vmatpush.msra.mxu0 0.0
  %6911 = vmatpush.msra.mxu0 0.0
  %6912 = vmatpush.msra.mxu0 0.0
  %6913 = vmatpush.msra.mxu0 0.0
  %6914 = vmatpush.msra.mxu0 0.0
  %v6915 = vand.u32 %v6654, 4294901760
  %v6916 = vsub.f32 %v6654, %v6915
  %v6917 = vand.u32 %v6916, 4294901760
  %v6918 = vsub.f32 %v6916, %v6917
  %v6919 = vand.u32 %v6918, 4294901760
  %6920 = vmatpush.msra.mxu0 %v6919
  %v6921 = vand.u32 %v6646, 4294901760
  %v6922 = vsub.f32 %v6646, %v6921
  %v6923 = vand.u32 %v6922, 4294901760
  %v6924 = vsub.f32 %v6922, %v6923
  %v6925 = vand.u32 %v6924, 4294901760
  %6926 = vmatpush.msra.mxu0 %v6925
  %v6927 = vand.u32 %v6645, 4294901760
  %v6928 = vsub.f32 %v6645, %v6927
  %v6929 = vand.u32 %v6928, 4294901760
  %v6930 = vsub.f32 %v6928, %v6929
  %v6931 = vand.u32 %v6930, 4294901760
  %6932 = vmatpush.msra.mxu0 %v6931
  %v6933 = vand.u32 %v6644, 4294901760
  %v6934 = vsub.f32 %v6644, %v6933
  %v6935 = vand.u32 %v6934, 4294901760
  %v6936 = vsub.f32 %v6934, %v6935
  %v6937 = vand.u32 %v6936, 4294901760
  %6938 = vmatpush.msra.mxu0 %v6937
  %v6939 = vand.u32 %v6643, 4294901760
  %v6940 = vsub.f32 %v6643, %v6939
  %v6941 = vand.u32 %v6940, 4294901760
  %v6942 = vsub.f32 %v6940, %v6941
  %v6943 = vand.u32 %v6942, 4294901760
  %6944 = vmatpush.msra.mxu0 %v6943
  %v6945 = vand.u32 %v6642, 4294901760
  %v6946 = vsub.f32 %v6642, %v6945
  %v6947 = vand.u32 %v6946, 4294901760
  %v6948 = vsub.f32 %v6946, %v6947
  %v6949 = vand.u32 %v6948, 4294901760
  %6950 = vmatpush.msra.mxu0 %v6949
  %v6951 = vand.u32 %v6872, 4294901760
  %6952 = vmatmul.f32.gmra.mxu0 %v6951
  %v6953 = vpop.f32.mrf.mxu0
  %v6954 = vadd.f32 %v6903, %v6953
  %6955 = vdwg.mxu0
  %6956 = vmatpush.msra.mxu0 0.0
  %6957 = vmatpush.msra.mxu0 0.0
  %6958 = vmatpush.msra.mxu0 0.0
  %6959 = vmatpush.msra.mxu0 0.0
  %6960 = vmatpush.msra.mxu0 0.0
  %6961 = vmatpush.msra.mxu0 0.0
  %6962 = vmatpush.msra.mxu0 0.0
  %6963 = vmatpush.msra.mxu0 0.0
  %6964 = vmatpush.msra.mxu0 0.0
  %6965 = vmatpush.msra.mxu0 0.0
  %v6966 = vand.u32 %v6654, 4294901760
  %v6967 = vsub.f32 %v6654, %v6966
  %6968 = vmatpush.msra.mxu0 %v6967
  %v6969 = vand.u32 %v6646, 4294901760
  %v6970 = vsub.f32 %v6646, %v6969
  %6971 = vmatpush.msra.mxu0 %v6970
  %v6972 = vand.u32 %v6645, 4294901760
  %v6973 = vsub.f32 %v6645, %v6972
  %6974 = vmatpush.msra.mxu0 %v6973
  %v6975 = vand.u32 %v6644, 4294901760
  %v6976 = vsub.f32 %v6644, %v6975
  %6977 = vmatpush.msra.mxu0 %v6976
  %v6978 = vand.u32 %v6643, 4294901760
  %v6979 = vsub.f32 %v6643, %v6978
  %6980 = vmatpush.msra.mxu0 %v6979
  %v6981 = vand.u32 %v6642, 4294901760
  %v6982 = vsub.f32 %v6642, %v6981
  %6983 = vmatpush.msra.mxu0 %v6982
  %v6984 = vand.u32 %v6872, 4294901760
  %v6985 = vsub.f32 %v6872, %v6984
  %6986 = vmatmul.f32.gmra.mxu0 %v6985
  %v6987 = vpop.f32.mrf.mxu0
  %v6988 = vadd.f32 %v6954, %v6987
  %6989 = vdwg.mxu0
  %6990 = vmatpush.msra.mxu0 0.0
  %6991 = vmatpush.msra.mxu0 0.0
  %6992 = vmatpush.msra.mxu0 0.0
  %6993 = vmatpush.msra.mxu0 0.0
  %6994 = vmatpush.msra.mxu0 0.0
  %6995 = vmatpush.msra.mxu0 0.0
  %6996 = vmatpush.msra.mxu0 0.0
  %6997 = vmatpush.msra.mxu0 0.0
  %6998 = vmatpush.msra.mxu0 0.0
  %6999 = vmatpush.msra.mxu0 0.0
  %v7000 = vand.u32 %v6654, 4294901760
  %7001 = vmatpush.msra.mxu0 %v7000
  %v7002 = vand.u32 %v6646, 4294901760
  %7003 = vmatpush.msra.mxu0 %v7002
  %v7004 = vand.u32 %v6645, 4294901760
  %7005 = vmatpush.msra.mxu0 %v7004
  %v7006 = vand.u32 %v6644, 4294901760
  %7007 = vmatpush.msra.mxu0 %v7006
  %v7008 = vand.u32 %v6643, 4294901760
  %7009 = vmatpush.msra.mxu0 %v7008
  %v7010 = vand.u32 %v6642, 4294901760
  %7011 = vmatpush.msra.mxu0 %v7010
  %v7012 = vand.u32 %v6872, 4294901760
  %v7013 = vsub.f32 %v6872, %v7012
  %v7014 = vand.u32 %v7013, 4294901760
  %7015 = vmatmul.f32.gmra.mxu0 %v7014
  %v7016 = vpop.f32.mrf.mxu0
  %v7017 = vadd.f32 %v6988, %v7016
  %7018 = vdwg.mxu0
  %7019 = vmatpush.msra.mxu0 0.0
  %7020 = vmatpush.msra.mxu0 0.0
  %7021 = vmatpush.msra.mxu0 0.0
  %7022 = vmatpush.msra.mxu0 0.0
  %7023 = vmatpush.msra.mxu0 0.0
  %7024 = vmatpush.msra.mxu0 0.0
  %7025 = vmatpush.msra.mxu0 0.0
  %7026 = vmatpush.msra.mxu0 0.0
  %7027 = vmatpush.msra.mxu0 0.0
  %7028 = vmatpush.msra.mxu0 0.0
  %v7029 = vand.u32 %v6654, 4294901760
  %v7030 = vsub.f32 %v6654, %v7029
  %v7031 = vand.u32 %v7030, 4294901760
  %7032 = vmatpush.msra.mxu0 %v7031
  %v7033 = vand.u32 %v6646, 4294901760
  %v7034 = vsub.f32 %v6646, %v7033
  %v7035 = vand.u32 %v7034, 4294901760
  %7036 = vmatpush.msra.mxu0 %v7035
  %v7037 = vand.u32 %v6645, 4294901760
  %v7038 = vsub.f32 %v6645, %v7037
  %v7039 = vand.u32 %v7038, 4294901760
  %7040 = vmatpush.msra.mxu0 %v7039
  %v7041 = vand.u32 %v6644, 4294901760
  %v7042 = vsub.f32 %v6644, %v7041
  %v7043 = vand.u32 %v7042, 4294901760
  %7044 = vmatpush.msra.mxu0 %v7043
  %v7045 = vand.u32 %v6643, 4294901760
  %v7046 = vsub.f32 %v6643, %v7045
  %v7047 = vand.u32 %v7046, 4294901760
  %7048 = vmatpush.msra.mxu0 %v7047
  %v7049 = vand.u32 %v6642, 4294901760
  %v7050 = vsub.f32 %v6642, %v7049
  %v7051 = vand.u32 %v7050, 4294901760
  %7052 = vmatpush.msra.mxu0 %v7051
  %v7053 = vand.u32 %v6872, 4294901760
  %7054 = vmatmul.f32.gmra.mxu0 %v7053
  %v7055 = vpop.f32.mrf.mxu0
  %v7056 = vadd.f32 %v7017, %v7055
  %7057 = vdwg.mxu0
  %7058 = vmatpush.msra.mxu0 0.0
  %7059 = vmatpush.msra.mxu0 0.0
  %7060 = vmatpush.msra.mxu0 0.0
  %7061 = vmatpush.msra.mxu0 0.0
  %7062 = vmatpush.msra.mxu0 0.0
  %7063 = vmatpush.msra.mxu0 0.0
  %7064 = vmatpush.msra.mxu0 0.0
  %7065 = vmatpush.msra.mxu0 0.0
  %7066 = vmatpush.msra.mxu0 0.0
  %7067 = vmatpush.msra.mxu0 0.0
  %v7068 = vand.u32 %v6654, 4294901760
  %7069 = vmatpush.msra.mxu0 %v7068
  %v7070 = vand.u32 %v6646, 4294901760
  %7071 = vmatpush.msra.mxu0 %v7070
  %v7072 = vand.u32 %v6645, 4294901760
  %7073 = vmatpush.msra.mxu0 %v7072
  %v7074 = vand.u32 %v6644, 4294901760
  %7075 = vmatpush.msra.mxu0 %v7074
  %v7076 = vand.u32 %v6643, 4294901760
  %7077 = vmatpush.msra.mxu0 %v7076
  %v7078 = vand.u32 %v6642, 4294901760
  %7079 = vmatpush.msra.mxu0 %v7078
  %v7080 = vand.u32 %v6872, 4294901760
  %7081 = vmatmul.f32.gmra.mxu0 %v7080
  %v7082 = vpop.f32.mrf.mxu0
  %v7083 = vadd.f32 %v7056, %v7082
  %7084 = vdwg.mxu0
  %7086 = vrot.lane.b32.xlu0 %v7083, 64
  %v7087 = vpop.permute.xlu0 %7086
  %v7089 = vsel %vm6626, %v6865, %v7087
  %7090 = vst [vmem:[%s7] sm:$0x3] %v7089
  // Predicated region
  $region30: #{tiny_observation_encoder_forward.1} parent=0 // pred_check
    _
  $region31: #{tiny_observation_encoder_forward.1} parent=0 // pred_check_branch
    %7092 = sbr.rel (0) target = $region33
  $region32: #{tiny_observation_encoder_forward.1} parent=0 // pred_region
    _
  $region33: #{tiny_observation_encoder_forward.1} parent=0 // pred_fallthru
    _
  // Predicated region
  $region34: #{tiny_observation_encoder_forward.1} parent=0 // pred_check
    _
  $region35: #{tiny_observation_encoder_forward.1} parent=0 // pred_check_branch
    %7094 = sbr.rel (0) target = $region37
  $region36: #{tiny_observation_encoder_forward.1} parent=0 // pred_region
    _
  $region37: #{tiny_observation_encoder_forward.1} parent=0 // pred_fallthru
    _

</llo_original>
